<compile_context>
chip_gen: v7x
topology: tpu7x:2x2x1
jax: 0.10.0
libtpu: 0.0.40
codegen_flags: <defaults>
</compile_context>

<pallas_src>
import functools

import jax
import jax.numpy as jnp
from jax.experimental import pallas as pl
from jax.experimental.pallas import tpu as pltpu


def _rdb_kernel(xr_ref, xb_ref, xh_ref,
                w1, b1, w2, b2, w3, b3, w4, b4, w5, b5,
                out_ref, feat_ref,
                *, nf, gc, T, W, CH):
    """One (tile_h x W) output strip of the dense block, resident in VMEM."""
    R = T + 10                       # rows computed for every dense level
    Ctot = nf + 4 * gc

    # ---- stage x (body + 6-row halos, already W-padded, bf16) into scratch ----
    feat_ref[0:6, :, 0:nf] = xh_ref[0, 0, 0:6]
    feat_ref[6:6 + T, :, 0:nf] = xb_ref[0]
    feat_ref[6 + T:12 + T, :, 0:nf] = xh_ref[0, 0, 6:12]

    # Zero ONLY the 1-pixel halo ring of the x1..x4 channel slots; their
    # interiors are fully overwritten below and x's halo is real/padded data.
    feat_ref[0:1, :, nf:Ctot] = jnp.zeros((1, W + 2, 4 * gc), feat_ref.dtype)
    feat_ref[T + 11:T + 12, :, nf:Ctot] = jnp.zeros((1, W + 2, 4 * gc), feat_ref.dtype)
    feat_ref[:, 0:1, nf:Ctot] = jnp.zeros((T + 12, 1, 4 * gc), feat_ref.dtype)
    feat_ref[:, W + 1:W + 2, nf:Ctot] = jnp.zeros((T + 12, 1, 4 * gc), feat_ref.dtype)

    i = pl.program_id(1)
    is_first = i == 0
    is_last = i == pl.num_programs(1) - 1

    def conv3x3(cin, cout, w_ref, b_ref, r_lo, n_rows, epilogue):
        # w_ref: (3*cin, 3*cout) bf16 -- dx folded into K, dy folded into N.
        # Computes conv outputs for "computed rows" r_lo .. r_lo+n_rows-1
        # (feat centre rows r_lo+1 .. r_lo+n_rows) in CH-row chunks so the
        # patch / result temporaries stay small.
        for r0 in range(0, n_rows, CH):
            rr = min(CH, n_rows - r0)
            fr = r_lo + r0
            patch = jnp.concatenate(
                [feat_ref[fr:fr + rr + 2, dx:dx + W, 0:cin] for dx in range(3)],
                axis=-1)                                    # (rr+2, W, 3*cin) bf16
            Y = jnp.dot(patch.reshape((rr + 2) * W, 3 * cin), w_ref[...],
                        preferred_element_type=jnp.float32)
            Y = Y.reshape(rr + 2, W, 3 * cout)
            # out[r] = Y[r, 0:c] + Y[r+1, c:2c] + Y[r+2, 2c:3c] (+ bias)
            y = (Y[0:rr, :, 0:cout]
                 + Y[1:rr + 1, :, cout:2 * cout]
                 + (Y[2:rr + 2, :, 2 * cout:3 * cout] + b_ref[...]))
            epilogue(r0, rr, y)

    def zero_border_rows(off):
        # SAME-padding fix-up: level outputs computed from beyond the image
        # border must read back as zero in the next conv.  Only the first /
        # last strip has such rows (exactly 5 on each affected side).
        @pl.when(is_first)
        def _():
            feat_ref[1:6, 1:W + 1, off:off + gc] = jnp.zeros(
                (5, W, gc), feat_ref.dtype)

        @pl.when(is_last)
        def _():
            feat_ref[T + 6:T + 11, 1:W + 1, off:off + gc] = jnp.zeros(
                (5, W, gc), feat_ref.dtype)

    # ---- dense chain x1..x4 (LeakyReLU 0.2), appended along the channel axis ----
    off = nf
    for w_ref, b_ref in ((w1, b1), (w2, b2), (w3, b3), (w4, b4)):
        def store_level(r0, rr, y, off=off):
            y = jnp.where(y > 0, y, 0.2 * y)                 # LeakyReLU(0.2), f32
            feat_ref[1 + r0:1 + r0 + rr, 1:W + 1, off:off + gc] = (
                y.astype(feat_ref.dtype))

        conv3x3(off, gc, w_ref, b_ref, 0, R, store_level)
        zero_border_rows(off)
        off += gc

    # ---- conv5 (no activation) only over the T output rows + fused residual ----
    def write_out(r0, rr, y):
        res = xr_ref[0, r0:r0 + rr, :] + 0.2 * y.reshape(rr, W * nf)
        out_ref[0, r0:r0 + rr, :] = res.astype(out_ref.dtype)

    conv3x3(Ctot, nf, w5, b5, 5, T, write_out)


# ------------------------- wrapper / sizing heuristics -------------------------

def _vmem_capacity_bytes():
    try:
        info = pltpu.get_tpu_info()
        cap = int(getattr(info, "vmem_capacity_bytes", 0))
        if cap > 0:
            return cap
    except Exception:
        pass
    return 64 * 1024 * 1024          # conservative fallback (v7x per-TC size)


def _choose_chunk_rows(n_rows, W, nf, gc, budget_bytes=4 << 20):
    """Bound the per-matmul patch / result temporaries to a few MiB."""
    ctot = nf + 4 * gc
    per_row = W * (3 * ctot * 2      # bf16 dx-folded patch row
                   + 3 * nf * 4      # f32 matmul result row (conv5 is widest)
                   + 2 * nf * 4)     # epilogue temporaries
    ch = max(8, budget_bytes // max(per_row, 1))
    ch = max(8, (ch // 8) * 8)
    return int(min(n_rows, ch))


def _vmem_bytes_estimate(T, ch, W, nf, gc):
    ctot = nf + 4 * gc
    feat = (T + 12) * (W + 2) * ctot * 2
    io = 2 * (T * (W + 2) * nf * 2           # body strip (double-buffered)
              + 12 * (W + 2) * nf * 2        # halo strip
              + 2 * T * W * nf * 4)          # residual-x block + output block
    cins = [nf, nf + gc, nf + 2 * gc, nf + 3 * gc, nf + 4 * gc]
    couts = [gc, gc, gc, gc, nf]
    wts = sum(9 * ci * co * 2 + co * 4 for ci, co in zip(cins, couts))
    tmp = (ch + 2) * W * (3 * ctot * 2 + 3 * nf * 4) + 2 * ch * W * nf * 4
    return feat + io + wts + tmp


def _choose_tile_h(N, H, W, nf, gc, vmem_cap):
    budget = int(0.55 * vmem_cap)            # headroom for compiler scratch
    cands = sorted({d for d in range(8, H + 1) if H % d == 0 and d % 8 == 0}
                   | {H}, reverse=True)
    fitting = [T for T in cands
               if _vmem_bytes_estimate(T, _choose_chunk_rows(T + 10, W, nf, gc),
                                       W, nf, gc) <= budget]
    if not fitting:
        return min(cands)
    # Prefer >= 2 grid steps so both of v7x's TensorCores get work.
    for T in fitting:
        if N * (H // T) >= 2:
            return T
    return fitting[0]


@functools.partial(jax.jit, static_argnames=("nf", "gc", "tile_h", "chunk_rows"))
def residual_dense_block(x, params, *, nf, gc, tile_h=None, chunk_rows=None):
    """x: (N, H, W, nf) float32 NHWC.

    params: HWIO weights w1..w5 of shape (3, 3, cin_k, cout_k) and biases
    b1..b5 of shape (cout_k,), matching nn.Conv2d(cin_k, cout_k, 3, 1, 1).
    """
    N, H, W, _ = x.shape
    vmem_cap = _vmem_capacity_bytes()
    if tile_h is None:
        tile_h = _choose_tile_h(N, H, W, nf, gc, vmem_cap)
    assert H % tile_h == 0, "tile_h must divide H"
    assert tile_h % 8 == 0 or tile_h == H, "tile_h must be a multiple of 8 (or H)"
    T = tile_h
    S = H // T
    if chunk_rows is None:
        chunk_rows = _choose_chunk_rows(T + 10, W, nf, gc)
    CH = int(chunk_rows)
    Ctot = nf + 4 * gc

    # Lane-dense residual/output views: (N, H, W*nf) so the kernel's residual
    # load and final store use a last dim that is a large multiple of 128.
    x2d = x.reshape(N, H, W * nf)

    # bf16 conv input: pad W by 1 (SAME) once; body strips stream directly from
    # this array (no overlapping host strip materialisation).  Only the 6-row
    # top/bottom halos per strip are gathered into a small tensor.
    xb = jnp.pad(x, ((0, 0), (0, 0), (1, 1), (0, 0))).astype(jnp.bfloat16)
    xhp = jnp.pad(xb, ((0, 0), (6, 6), (0, 0), (0, 0)))      # H zero-padded by 6
    halos = jnp.stack(
        [jnp.concatenate([xhp[:, i * T:i * T + 6],
                          xhp[:, i * T + T + 6:i * T + T + 12]], axis=1)
         for i in range(S)],
        axis=1)                                               # (N, S, 12, W+2, nf)

    # Fold dx into K and dy into N: (3,3,cin,cout) -> (3*cin, 3*cout) bf16.
    cins = [nf, nf + gc, nf + 2 * gc, nf + 3 * gc, nf + 4 * gc]
    couts = [gc, gc, gc, gc, nf]
    wb = []
    flops = 0
    weight_bytes = 0
    for k, (cin, cout) in enumerate(zip(cins, couts), start=1):
        w = params[f"w{k}"]
        b = params[f"b{k}"]
        wb += [jnp.transpose(w, (1, 2, 0, 3)).reshape(3 * cin, 3 * cout)
                  .astype(jnp.bfloat16),
               b.reshape(1, cout).astype(jnp.float32)]
        flops += 2 * 9 * cin * cout * N * H * W
        weight_bytes += w.size * 2 + b.size * 4

    vmem_spec = pl.BlockSpec(memory_space=pltpu.MemorySpace.VMEM)
    kernel = functools.partial(_rdb_kernel, nf=nf, gc=gc, T=T, W=W, CH=CH)
    bytes_accessed = 2 * x.size * 4 + xb.size * 2 + halos.size * 2 + weight_bytes
    vmem_limit = int(min(vmem_cap * 0.85, 112 * 1024 * 1024))

    out = pl.pallas_call(
        kernel,
        out_shape=jax.ShapeDtypeStruct((N, H, W * nf), x.dtype),
        grid=(N, S),
        in_specs=[
            pl.BlockSpec((1, T, W * nf), lambda n, i: (n, i, 0)),         # residual x
            pl.BlockSpec((1, T, W + 2, nf), lambda n, i: (n, i, 0, 0)),   # body rows
            pl.BlockSpec((1, 1, 12, W + 2, nf),
                         lambda n, i: (n, i, 0, 0, 0)),                   # 6+6 halo rows
        ] + [vmem_spec] * 10,                                             # weights/biases
        out_specs=pl.BlockSpec((1, T, W * nf), lambda n, i: (n, i, 0)),
        scratch_shapes=[pltpu.VMEM((T + 12, W + 2, Ctot), jnp.bfloat16)],
        input_output_aliases={0: 0},           # output reuses x2d's HBM buffer
        compiler_params=pltpu.CompilerParams(
            dimension_semantics=("parallel", "parallel"),
            vmem_limit_bytes=vmem_limit),
        cost_estimate=pl.CostEstimate(flops=flops, transcendentals=0,
                                      bytes_accessed=bytes_accessed),
    )(x2d, xb, halos, *wb)

    return out.reshape(N, H, W, nf)


# ----------------------------- reference (plain JAX) -----------------------------

def _conv3x3_ref(x, w_hwio, b):
    y = jax.lax.conv_general_dilated(
        x, w_hwio, window_strides=(1, 1), padding="SAME",
        dimension_numbers=("NHWC", "HWIO", "NHWC"),
        precision=jax.lax.Precision.HIGHEST)
    return y + b


def _rdb_ref_bf16(x, params):
    """Reference matching the kernel's numerics: bf16-stored features/weights,
    f32 accumulation, f32 residual add."""
    bf = lambda a: a.astype(jnp.bfloat16).astype(jnp.float32)
    lrelu = lambda y: jnp.where(y > 0, y, 0.2 * y)
    w = {k: (bf(v) if k.startswith("w") else v.astype(jnp.float32))
         for k, v in params.items()}
    xc = bf(x)
    x1 = bf(lrelu(_conv3x3_ref(xc, w["w1"], w["b1"])))
    x2 = bf(lrelu(_conv3x3_ref(jnp.concatenate([xc, x1], -1), w["w2"], w["b2"])))
    x3 = bf(lrelu(_conv3x3_ref(jnp.concatenate([xc, x1, x2], -1), w["w3"], w["b3"])))
    x4 = bf(lrelu(_conv3x3_ref(jnp.concatenate([xc, x1, x2, x3], -1), w["w4"], w["b4"])))
    x5 = _conv3x3_ref(jnp.concatenate([xc, x1, x2, x3, x4], -1), w["w5"], w["b5"])
    return x + 0.2 * x5


# ----------------------------------- main -----------------------------------

if __name__ == "__main__":
    # Small shapes consistent with the module structure (nf, gc scaled down).
    N, H, W = 2, 16, 16
    nf, gc = 16, 8

    key = jax.random.PRNGKey(0)
    keys = jax.random.split(key, 11)

    cins = [nf, nf + gc, nf + 2 * gc, nf + 3 * gc, nf + 4 * gc]
    couts = [gc, gc, gc, gc, nf]

    params = {}
    for i, (cin, cout) in enumerate(zip(cins, couts), start=1):
        params[f"w{i}"] = 0.05 * jax.random.normal(
            keys[2 * i - 2], (3, 3, cin, cout), jnp.float32)
        params[f"b{i}"] = 0.01 * jax.random.normal(
            keys[2 * i - 1], (cout,), jnp.float32)

    x = jax.random.normal(keys[-1], (N, H, W, nf), jnp.float32)

    ref = jax.block_until_ready(_rdb_ref_bf16(x, params))

    out = residual_dense_block(x, params, nf=nf, gc=gc, tile_h=8)
    out = jax.block_until_ready(out)

    assert out.shape == (N, H, W, nf)
    err = jnp.max(jnp.abs(out - ref))
    assert jnp.allclose(out, ref, atol=2e-3, rtol=2e-3), f"max abs err {err}"

    print("KERNEL_OK")
</pallas_src>

<mosaic_0001>
module attributes {stable_mosaic.version = 11 : i64} {
  func.func @_rdb_kernel(%arg0: i32, %arg1: i32, %arg2: memref<1x8x256xf32, #tpu.memory_space<vmem>>, %arg3: memref<1x8x18x16xbf16, #tpu.memory_space<vmem>>, %arg4: memref<1x1x12x18x16xbf16, #tpu.memory_space<vmem>>, %arg5: memref<48x24xbf16, #tpu.memory_space<vmem>>, %arg6: memref<1x8xf32, #tpu.memory_space<vmem>>, %arg7: memref<72x24xbf16, #tpu.memory_space<vmem>>, %arg8: memref<1x8xf32, #tpu.memory_space<vmem>>, %arg9: memref<96x24xbf16, #tpu.memory_space<vmem>>, %arg10: memref<1x8xf32, #tpu.memory_space<vmem>>, %arg11: memref<120x24xbf16, #tpu.memory_space<vmem>>, %arg12: memref<1x8xf32, #tpu.memory_space<vmem>>, %arg13: memref<144x48xbf16, #tpu.memory_space<vmem>>, %arg14: memref<1x16xf32, #tpu.memory_space<vmem>>, %arg15: memref<1x8x256xf32, #tpu.memory_space<vmem>>, %arg16: memref<20x18x48xbf16, #tpu.memory_space<vmem>>) attributes {dimension_semantics = [#tpu.dimension_semantics<parallel>, #tpu.dimension_semantics<parallel>], iteration_bounds = array<i64: 2, 2>, scalar_prefetch = 0 : i64, scratch_operands = 1 : i64, tpu.core_type = #tpu.core_type<tc>, window_params = [{transform_indices = @transform_0, window_bounds = array<i64: 1, 8, 256>}, {transform_indices = @transform_1, window_bounds = array<i64: 1, 8, 18, 16>}, {transform_indices = @transform_2, window_bounds = array<i64: 1, 1, 12, 18, 16>}, {pipeline_mode = #tpu.pipeline_mode<synchronous>, transform_indices = @transform_3, window_bounds = array<i64: 48, 24>}, {pipeline_mode = #tpu.pipeline_mode<synchronous>, transform_indices = @transform_4, window_bounds = array<i64: 1, 8>}, {pipeline_mode = #tpu.pipeline_mode<synchronous>, transform_indices = @transform_5, window_bounds = array<i64: 72, 24>}, {pipeline_mode = #tpu.pipeline_mode<synchronous>, transform_indices = @transform_6, window_bounds = array<i64: 1, 8>}, {pipeline_mode = #tpu.pipeline_mode<synchronous>, transform_indices = @transform_7, window_bounds = array<i64: 96, 24>}, {pipeline_mode = #tpu.pipeline_mode<synchronous>, transform_indices = @transform_8, window_bounds = array<i64: 1, 8>}, {pipeline_mode = #tpu.pipeline_mode<synchronous>, transform_indices = @transform_9, window_bounds = array<i64: 120, 24>}, {pipeline_mode = #tpu.pipeline_mode<synchronous>, transform_indices = @transform_10, window_bounds = array<i64: 1, 8>}, {pipeline_mode = #tpu.pipeline_mode<synchronous>, transform_indices = @transform_11, window_bounds = array<i64: 144, 48>}, {pipeline_mode = #tpu.pipeline_mode<synchronous>, transform_indices = @transform_12, window_bounds = array<i64: 1, 16>}, {transform_indices = @transform_13, window_bounds = array<i64: 1, 8, 256>}]} {
    %c0 = arith.constant 0 : index
    %c0_0 = arith.constant 0 : index
    %c0_1 = arith.constant 0 : index
    %c0_2 = arith.constant 0 : index
    %c0_3 = arith.constant 0 : index
    %0 = vector.load %arg4[%c0, %c0_0, %c0_1, %c0_2, %c0_3] : memref<1x1x12x18x16xbf16, #tpu.memory_space<vmem>>, vector<1x1x6x18x16xbf16>
    %1 = vector.shape_cast %0 : vector<1x1x6x18x16xbf16> to vector<6x18x16xbf16>
    %c0_4 = arith.constant 0 : index
    %c0_5 = arith.constant 0 : index
    %c0_6 = arith.constant 0 : index
    %2 = vector.load %arg16[%c0_4, %c0_5, %c0_6] : memref<20x18x48xbf16, #tpu.memory_space<vmem>>, vector<6x18x16xbf16>
    tpu.vector_store %arg16[%c0_4, %c0_5, %c0_6], %1 {strides = array<i32>} : memref<20x18x48xbf16, #tpu.memory_space<vmem>>, vector<6x18x16xbf16>,
    %c0_7 = arith.constant 0 : index
    %c0_8 = arith.constant 0 : index
    %c0_9 = arith.constant 0 : index
    %c0_10 = arith.constant 0 : index
    %3 = vector.load %arg3[%c0_7, %c0_8, %c0_9, %c0_10] : memref<1x8x18x16xbf16, #tpu.memory_space<vmem>>, vector<1x8x18x16xbf16>
    %4 = vector.shape_cast %3 : vector<1x8x18x16xbf16> to vector<8x18x16xbf16>
    %c6 = arith.constant 6 : index
    %c0_11 = arith.constant 0 : index
    %c0_12 = arith.constant 0 : index
    %5 = vector.load %arg16[%c6, %c0_11, %c0_12] : memref<20x18x48xbf16, #tpu.memory_space<vmem>>, vector<8x18x16xbf16>
    tpu.vector_store %arg16[%c6, %c0_11, %c0_12], %4 {strides = array<i32>} : memref<20x18x48xbf16, #tpu.memory_space<vmem>>, vector<8x18x16xbf16>,
    %c0_13 = arith.constant 0 : index
    %c0_14 = arith.constant 0 : index
    %c6_15 = arith.constant 6 : index
    %c0_16 = arith.constant 0 : index
    %c0_17 = arith.constant 0 : index
    %6 = vector.load %arg4[%c0_13, %c0_14, %c6_15, %c0_16, %c0_17] : memref<1x1x12x18x16xbf16, #tpu.memory_space<vmem>>, vector<1x1x6x18x16xbf16>
    %7 = vector.shape_cast %6 : vector<1x1x6x18x16xbf16> to vector<6x18x16xbf16>
    %c14 = arith.constant 14 : index
    %c0_18 = arith.constant 0 : index
    %c0_19 = arith.constant 0 : index
    %8 = vector.load %arg16[%c14, %c0_18, %c0_19] : memref<20x18x48xbf16, #tpu.memory_space<vmem>>, vector<6x18x16xbf16>
    tpu.vector_store %arg16[%c14, %c0_18, %c0_19], %7 {strides = array<i32>} : memref<20x18x48xbf16, #tpu.memory_space<vmem>>, vector<6x18x16xbf16>,
    %cst = arith.constant 0.000000e+00 : bf16
    %9 = vector.broadcast %cst : bf16 to vector<1x18x32xbf16>
    %c0_20 = arith.constant 0 : index
    %c0_21 = arith.constant 0 : index
    %c16 = arith.constant 16 : index
    %10 = vector.load %arg16[%c0_20, %c0_21, %c16] : memref<20x18x48xbf16, #tpu.memory_space<vmem>>, vector<1x18x32xbf16>
    tpu.vector_store %arg16[%c0_20, %c0_21, %c16], %9 {strides = array<i32>} : memref<20x18x48xbf16, #tpu.memory_space<vmem>>, vector<1x18x32xbf16>,
    %cst_22 = arith.constant 0.000000e+00 : bf16
    %11 = vector.broadcast %cst_22 : bf16 to vector<1x18x32xbf16>
    %c19 = arith.constant 19 : index
    %c0_23 = arith.constant 0 : index
    %c16_24 = arith.constant 16 : index
    %12 = vector.load %arg16[%c19, %c0_23, %c16_24] : memref<20x18x48xbf16, #tpu.memory_space<vmem>>, vector<1x18x32xbf16>
    tpu.vector_store %arg16[%c19, %c0_23, %c16_24], %11 {strides = array<i32>} : memref<20x18x48xbf16, #tpu.memory_space<vmem>>, vector<1x18x32xbf16>,
    %cst_25 = arith.constant 0.000000e+00 : bf16
    %13 = vector.broadcast %cst_25 : bf16 to vector<20x1x32xbf16>
    %c0_26 = arith.constant 0 : index
    %c0_27 = arith.constant 0 : index
    %c16_28 = arith.constant 16 : index
    %14 = vector.load %arg16[%c0_26, %c0_27, %c16_28] : memref<20x18x48xbf16, #tpu.memory_space<vmem>>, vector<20x1x32xbf16>
    tpu.vector_store %arg16[%c0_26, %c0_27, %c16_28], %13 {strides = array<i32>} : memref<20x18x48xbf16, #tpu.memory_space<vmem>>, vector<20x1x32xbf16>,
    %cst_29 = arith.constant 0.000000e+00 : bf16
    %15 = vector.broadcast %cst_29 : bf16 to vector<20x1x32xbf16>
    %c0_30 = arith.constant 0 : index
    %c17 = arith.constant 17 : index
    %c16_31 = arith.constant 16 : index
    %16 = vector.load %arg16[%c0_30, %c17, %c16_31] : memref<20x18x48xbf16, #tpu.memory_space<vmem>>, vector<20x1x32xbf16>
    tpu.vector_store %arg16[%c0_30, %c17, %c16_31], %15 {strides = array<i32>} : memref<20x18x48xbf16, #tpu.memory_space<vmem>>, vector<20x1x32xbf16>,
    %c0_i32 = arith.constant 0 : i32
    %17 = arith.cmpi eq, %arg1, %c0_i32 : i32
    %c1_i32 = arith.constant 1 : i32
    %18 = arith.cmpi eq, %arg1, %c1_i32 : i32
    %c0_32 = arith.constant 0 : index
    %c0_33 = arith.constant 0 : index
    %c0_34 = arith.constant 0 : index
    %19 = vector.load %arg16[%c0_32, %c0_33, %c0_34] : memref<20x18x48xbf16, #tpu.memory_space<vmem>>, vector<20x16x16xbf16>
    %c0_35 = arith.constant 0 : index
    %c1 = arith.constant 1 : index
    %c0_36 = arith.constant 0 : index
    %20 = vector.load %arg16[%c0_35, %c1, %c0_36] : memref<20x18x48xbf16, #tpu.memory_space<vmem>>, vector<20x16x16xbf16>
    %c0_37 = arith.constant 0 : index
    %c2 = arith.constant 2 : index
    %c0_38 = arith.constant 0 : index
    %21 = vector.load %arg16[%c0_37, %c2, %c0_38] : memref<20x18x48xbf16, #tpu.memory_space<vmem>>, vector<20x16x16xbf16>
    %22 = tpu.concatenate %19, %20, %21 in 2 : vector<20x16x16xbf16>, vector<20x16x16xbf16>, vector<20x16x16xbf16> -> vector<20x16x48xbf16>
    %23 = vector.shape_cast %22 : vector<20x16x48xbf16> to vector<320x48xbf16>
    %c0_39 = arith.constant 0 : index
    %c0_40 = arith.constant 0 : index
    %24 = vector.load %arg5[%c0_39, %c0_40] : memref<48x24xbf16, #tpu.memory_space<vmem>>, vector<48x24xbf16>
    %cst_41 = arith.constant dense<0.000000e+00> : vector<320x24xf32>
    %25 = tpu.matmul %23, %24, %cst_41 {dimension_numbers = #tpu.dot_dimension_numbers<[1], [0], [0], [1], [0, 0, 1, 1], [], []>} : vector<320x48xbf16>, vector<48x24xbf16>, vector<320x24xf32> -> vector<320x24xf32>
    %26 = vector.shape_cast %25 : vector<320x24xf32> to vector<20x16x24xf32>
    %27 = vector.extract_strided_slice %26 {offsets = [0, 0, 0], sizes = [18, 16, 8], strides = [1, 1, 1]} : vector<20x16x24xf32> to vector<18x16x8xf32>
    %28 = vector.extract_strided_slice %26 {offsets = [1, 0, 8], sizes = [18, 16, 8], strides = [1, 1, 1]} : vector<20x16x24xf32> to vector<18x16x8xf32>
    %29 = arith.addf %27, %28 : vector<18x16x8xf32>
    %30 = vector.extract_strided_slice %26 {offsets = [2, 0, 16], sizes = [18, 16, 8], strides = [1, 1, 1]} : vector<20x16x24xf32> to vector<18x16x8xf32>
    %c0_42 = arith.constant 0 : index
    %c0_43 = arith.constant 0 : index
    %31 = vector.load %arg6[%c0_42, %c0_43] : memref<1x8xf32, #tpu.memory_space<vmem>>, vector<1x8xf32>
    %32 = vector.shape_cast %31 : vector<1x8xf32> to vector<1x1x8xf32>
    %33 = vector.broadcast %32 : vector<1x1x8xf32> to vector<18x16x8xf32>
    %34 = arith.addf %30, %33 : vector<18x16x8xf32>
    %35 = arith.addf %29, %34 : vector<18x16x8xf32>
    %cst_44 = arith.constant 0.000000e+00 : f32
    %36 = vector.broadcast %cst_44 : f32 to vector<18x16x8xf32>
    %37 = arith.cmpf ogt, %35, %36 : vector<18x16x8xf32>
    %cst_45 = arith.constant 2.000000e-01 : f32
    %38 = vector.broadcast %cst_45 : f32 to vector<18x16x8xf32>
    %39 = arith.mulf %38, %35 : vector<18x16x8xf32>
    %40 = arith.select %37, %35, %39 : vector<18x16x8xi1>, vector<18x16x8xf32>
    %41 = arith.truncf %40 : vector<18x16x8xf32> to vector<18x16x8xbf16>
    %c1_46 = arith.constant 1 : index
    %c1_47 = arith.constant 1 : index
    %c16_48 = arith.constant 16 : index
    %42 = vector.load %arg16[%c1_46, %c1_47, %c16_48] : memref<20x18x48xbf16, #tpu.memory_space<vmem>>, vector<18x16x8xbf16>
    tpu.vector_store %arg16[%c1_46, %c1_47, %c16_48], %41 {strides = array<i32>} : memref<20x18x48xbf16, #tpu.memory_space<vmem>>, vector<18x16x8xbf16>,
    %43 = arith.extui %17 : i1 to i32
    %c0_i32_49 = arith.constant 0 : i32
    %44 = arith.cmpi ne, %43, %c0_i32_49 : i32
    scf.if %44 {
      %cst_131 = arith.constant 0.000000e+00 : bf16
      %157 = vector.broadcast %cst_131 : bf16 to vector<5x16x8xbf16>
      %c1_132 = arith.constant 1 : index
      %c1_133 = arith.constant 1 : index
      %c16_134 = arith.constant 16 : index
      %158 = vector.load %arg16[%c1_132, %c1_133, %c16_134] : memref<20x18x48xbf16, #tpu.memory_space<vmem>>, vector<5x16x8xbf16>
      tpu.vector_store %arg16[%c1_132, %c1_133, %c16_134], %157 {strides = array<i32>} : memref<20x18x48xbf16, #tpu.memory_space<vmem>>, vector<5x16x8xbf16>,
    } else {
    }
    %45 = arith.extui %18 : i1 to i32
    %c0_i32_50 = arith.constant 0 : i32
    %46 = arith.cmpi ne, %45, %c0_i32_50 : i32
    scf.if %46 {
      %cst_131 = arith.constant 0.000000e+00 : bf16
      %157 = vector.broadcast %cst_131 : bf16 to vector<5x16x8xbf16>
      %c14_132 = arith.constant 14 : index
      %c1_133 = arith.constant 1 : index
      %c16_134 = arith.constant 16 : index
      %158 = vector.load %arg16[%c14_132, %c1_133, %c16_134] : memref<20x18x48xbf16, #tpu.memory_space<vmem>>, vector<5x16x8xbf16>
      tpu.vector_store %arg16[%c14_132, %c1_133, %c16_134], %157 {strides = array<i32>} : memref<20x18x48xbf16, #tpu.memory_space<vmem>>, vector<5x16x8xbf16>,
    } else {
    }
    %c0_51 = arith.constant 0 : index
    %c0_52 = arith.constant 0 : index
    %c0_53 = arith.constant 0 : index
    %47 = vector.load %arg16[%c0_51, %c0_52, %c0_53] : memref<20x18x48xbf16, #tpu.memory_space<vmem>>, vector<20x16x24xbf16>
    %c0_54 = arith.constant 0 : index
    %c1_55 = arith.constant 1 : index
    %c0_56 = arith.constant 0 : index
    %48 = vector.load %arg16[%c0_54, %c1_55, %c0_56] : memref<20x18x48xbf16, #tpu.memory_space<vmem>>, vector<20x16x24xbf16>
    %c0_57 = arith.constant 0 : index
    %c2_58 = arith.constant 2 : index
    %c0_59 = arith.constant 0 : index
    %49 = vector.load %arg16[%c0_57, %c2_58, %c0_59] : memref<20x18x48xbf16, #tpu.memory_space<vmem>>, vector<20x16x24xbf16>
    %50 = tpu.concatenate %47, %48, %49 in 2 : vector<20x16x24xbf16>, vector<20x16x24xbf16>, vector<20x16x24xbf16> -> vector<20x16x72xbf16>
    %51 = vector.shape_cast %50 : vector<20x16x72xbf16> to vector<320x72xbf16>
    %c0_60 = arith.constant 0 : index
    %c0_61 = arith.constant 0 : index
    %52 = vector.load %arg7[%c0_60, %c0_61] : memref<72x24xbf16, #tpu.memory_space<vmem>>, vector<72x24xbf16>
    %cst_62 = arith.constant dense<0.000000e+00> : vector<320x24xf32>
    %53 = tpu.matmul %51, %52, %cst_62 {dimension_numbers = #tpu.dot_dimension_numbers<[1], [0], [0], [1], [0, 0, 1, 1], [], []>} : vector<320x72xbf16>, vector<72x24xbf16>, vector<320x24xf32> -> vector<320x24xf32>
    %54 = vector.shape_cast %53 : vector<320x24xf32> to vector<20x16x24xf32>
    %55 = vector.extract_strided_slice %54 {offsets = [0, 0, 0], sizes = [18, 16, 8], strides = [1, 1, 1]} : vector<20x16x24xf32> to vector<18x16x8xf32>
    %56 = vector.extract_strided_slice %54 {offsets = [1, 0, 8], sizes = [18, 16, 8], strides = [1, 1, 1]} : vector<20x16x24xf32> to vector<18x16x8xf32>
    %57 = arith.addf %55, %56 : vector<18x16x8xf32>
    %58 = vector.extract_strided_slice %54 {offsets = [2, 0, 16], sizes = [18, 16, 8], strides = [1, 1, 1]} : vector<20x16x24xf32> to vector<18x16x8xf32>
    %c0_63 = arith.constant 0 : index
    %c0_64 = arith.constant 0 : index
    %59 = vector.load %arg8[%c0_63, %c0_64] : memref<1x8xf32, #tpu.memory_space<vmem>>, vector<1x8xf32>
    %60 = vector.shape_cast %59 : vector<1x8xf32> to vector<1x1x8xf32>
    %61 = vector.broadcast %60 : vector<1x1x8xf32> to vector<18x16x8xf32>
    %62 = arith.addf %58, %61 : vector<18x16x8xf32>
    %63 = arith.addf %57, %62 : vector<18x16x8xf32>
    %cst_65 = arith.constant 0.000000e+00 : f32
    %64 = vector.broadcast %cst_65 : f32 to vector<18x16x8xf32>
    %65 = arith.cmpf ogt, %63, %64 : vector<18x16x8xf32>
    %cst_66 = arith.constant 2.000000e-01 : f32
    %66 = vector.broadcast %cst_66 : f32 to vector<18x16x8xf32>
    %67 = arith.mulf %66, %63 : vector<18x16x8xf32>
    %68 = arith.select %65, %63, %67 : vector<18x16x8xi1>, vector<18x16x8xf32>
    %69 = arith.truncf %68 : vector<18x16x8xf32> to vector<18x16x8xbf16>
    %c1_67 = arith.constant 1 : index
    %c1_68 = arith.constant 1 : index
    %c24 = arith.constant 24 : index
    %70 = vector.load %arg16[%c1_67, %c1_68, %c24] : memref<20x18x48xbf16, #tpu.memory_space<vmem>>, vector<18x16x8xbf16>
    tpu.vector_store %arg16[%c1_67, %c1_68, %c24], %69 {strides = array<i32>} : memref<20x18x48xbf16, #tpu.memory_space<vmem>>, vector<18x16x8xbf16>,
    %71 = arith.extui %17 : i1 to i32
    %c0_i32_69 = arith.constant 0 : i32
    %72 = arith.cmpi ne, %71, %c0_i32_69 : i32
    scf.if %72 {
      %cst_131 = arith.constant 0.000000e+00 : bf16
      %157 = vector.broadcast %cst_131 : bf16 to vector<5x16x8xbf16>
      %c1_132 = arith.constant 1 : index
      %c1_133 = arith.constant 1 : index
      %c24_134 = arith.constant 24 : index
      %158 = vector.load %arg16[%c1_132, %c1_133, %c24_134] : memref<20x18x48xbf16, #tpu.memory_space<vmem>>, vector<5x16x8xbf16>
      tpu.vector_store %arg16[%c1_132, %c1_133, %c24_134], %157 {strides = array<i32>} : memref<20x18x48xbf16, #tpu.memory_space<vmem>>, vector<5x16x8xbf16>,
    } else {
    }
    %73 = arith.extui %18 : i1 to i32
    %c0_i32_70 = arith.constant 0 : i32
    %74 = arith.cmpi ne, %73, %c0_i32_70 : i32
    scf.if %74 {
      %cst_131 = arith.constant 0.000000e+00 : bf16
      %157 = vector.broadcast %cst_131 : bf16 to vector<5x16x8xbf16>
      %c14_132 = arith.constant 14 : index
      %c1_133 = arith.constant 1 : index
      %c24_134 = arith.constant 24 : index
      %158 = vector.load %arg16[%c14_132, %c1_133, %c24_134] : memref<20x18x48xbf16, #tpu.memory_space<vmem>>, vector<5x16x8xbf16>
      tpu.vector_store %arg16[%c14_132, %c1_133, %c24_134], %157 {strides = array<i32>} : memref<20x18x48xbf16, #tpu.memory_space<vmem>>, vector<5x16x8xbf16>,
    } else {
    }
    %c0_71 = arith.constant 0 : index
    %c0_72 = arith.constant 0 : index
    %c0_73 = arith.constant 0 : index
    %75 = vector.load %arg16[%c0_71, %c0_72, %c0_73] : memref<20x18x48xbf16, #tpu.memory_space<vmem>>, vector<20x16x32xbf16>
    %c0_74 = arith.constant 0 : index
    %c1_75 = arith.constant 1 : index
    %c0_76 = arith.constant 0 : index
    %76 = vector.load %arg16[%c0_74, %c1_75, %c0_76] : memref<20x18x48xbf16, #tpu.memory_space<vmem>>, vector<20x16x32xbf16>
    %c0_77 = arith.constant 0 : index
    %c2_78 = arith.constant 2 : index
    %c0_79 = arith.constant 0 : index
    %77 = vector.load %arg16[%c0_77, %c2_78, %c0_79] : memref<20x18x48xbf16, #tpu.memory_space<vmem>>, vector<20x16x32xbf16>
    %78 = tpu.concatenate %75, %76, %77 in 2 : vector<20x16x32xbf16>, vector<20x16x32xbf16>, vector<20x16x32xbf16> -> vector<20x16x96xbf16>
    %79 = vector.shape_cast %78 : vector<20x16x96xbf16> to vector<320x96xbf16>
    %c0_80 = arith.constant 0 : index
    %c0_81 = arith.constant 0 : index
    %80 = vector.load %arg9[%c0_80, %c0_81] : memref<96x24xbf16, #tpu.memory_space<vmem>>, vector<96x24xbf16>
    %cst_82 = arith.constant dense<0.000000e+00> : vector<320x24xf32>
    %81 = tpu.matmul %79, %80, %cst_82 {dimension_numbers = #tpu.dot_dimension_numbers<[1], [0], [0], [1], [0, 0, 1, 1], [], []>} : vector<320x96xbf16>, vector<96x24xbf16>, vector<320x24xf32> -> vector<320x24xf32>
    %82 = vector.shape_cast %81 : vector<320x24xf32> to vector<20x16x24xf32>
    %83 = vector.extract_strided_slice %82 {offsets = [0, 0, 0], sizes = [18, 16, 8], strides = [1, 1, 1]} : vector<20x16x24xf32> to vector<18x16x8xf32>
    %84 = vector.extract_strided_slice %82 {offsets = [1, 0, 8], sizes = [18, 16, 8], strides = [1, 1, 1]} : vector<20x16x24xf32> to vector<18x16x8xf32>
    %85 = arith.addf %83, %84 : vector<18x16x8xf32>
    %86 = vector.extract_strided_slice %82 {offsets = [2, 0, 16], sizes = [18, 16, 8], strides = [1, 1, 1]} : vector<20x16x24xf32> to vector<18x16x8xf32>
    %c0_83 = arith.constant 0 : index
    %c0_84 = arith.constant 0 : index
    %87 = vector.load %arg10[%c0_83, %c0_84] : memref<1x8xf32, #tpu.memory_space<vmem>>, vector<1x8xf32>
    %88 = vector.shape_cast %87 : vector<1x8xf32> to vector<1x1x8xf32>
    %89 = vector.broadcast %88 : vector<1x1x8xf32> to vector<18x16x8xf32>
    %90 = arith.addf %86, %89 : vector<18x16x8xf32>
    %91 = arith.addf %85, %90 : vector<18x16x8xf32>
    %cst_85 = arith.constant 0.000000e+00 : f32
    %92 = vector.broadcast %cst_85 : f32 to vector<18x16x8xf32>
    %93 = arith.cmpf ogt, %91, %92 : vector<18x16x8xf32>
    %cst_86 = arith.constant 2.000000e-01 : f32
    %94 = vector.broadcast %cst_86 : f32 to vector<18x16x8xf32>
    %95 = arith.mulf %94, %91 : vector<18x16x8xf32>
    %96 = arith.select %93, %91, %95 : vector<18x16x8xi1>, vector<18x16x8xf32>
    %97 = arith.truncf %96 : vector<18x16x8xf32> to vector<18x16x8xbf16>
    %c1_87 = arith.constant 1 : index
    %c1_88 = arith.constant 1 : index
    %c32 = arith.constant 32 : index
    %98 = vector.load %arg16[%c1_87, %c1_88, %c32] : memref<20x18x48xbf16, #tpu.memory_space<vmem>>, vector<18x16x8xbf16>
    tpu.vector_store %arg16[%c1_87, %c1_88, %c32], %97 {strides = array<i32>} : memref<20x18x48xbf16, #tpu.memory_space<vmem>>, vector<18x16x8xbf16>,
    %99 = arith.extui %17 : i1 to i32
    %c0_i32_89 = arith.constant 0 : i32
    %100 = arith.cmpi ne, %99, %c0_i32_89 : i32
    scf.if %100 {
      %cst_131 = arith.constant 0.000000e+00 : bf16
      %157 = vector.broadcast %cst_131 : bf16 to vector<5x16x8xbf16>
      %c1_132 = arith.constant 1 : index
      %c1_133 = arith.constant 1 : index
      %c32_134 = arith.constant 32 : index
      %158 = vector.load %arg16[%c1_132, %c1_133, %c32_134] : memref<20x18x48xbf16, #tpu.memory_space<vmem>>, vector<5x16x8xbf16>
      tpu.vector_store %arg16[%c1_132, %c1_133, %c32_134], %157 {strides = array<i32>} : memref<20x18x48xbf16, #tpu.memory_space<vmem>>, vector<5x16x8xbf16>,
    } else {
    }
    %101 = arith.extui %18 : i1 to i32
    %c0_i32_90 = arith.constant 0 : i32
    %102 = arith.cmpi ne, %101, %c0_i32_90 : i32
    scf.if %102 {
      %cst_131 = arith.constant 0.000000e+00 : bf16
      %157 = vector.broadcast %cst_131 : bf16 to vector<5x16x8xbf16>
      %c14_132 = arith.constant 14 : index
      %c1_133 = arith.constant 1 : index
      %c32_134 = arith.constant 32 : index
      %158 = vector.load %arg16[%c14_132, %c1_133, %c32_134] : memref<20x18x48xbf16, #tpu.memory_space<vmem>>, vector<5x16x8xbf16>
      tpu.vector_store %arg16[%c14_132, %c1_133, %c32_134], %157 {strides = array<i32>} : memref<20x18x48xbf16, #tpu.memory_space<vmem>>, vector<5x16x8xbf16>,
    } else {
    }
    %c0_91 = arith.constant 0 : index
    %c0_92 = arith.constant 0 : index
    %c0_93 = arith.constant 0 : index
    %103 = vector.load %arg16[%c0_91, %c0_92, %c0_93] : memref<20x18x48xbf16, #tpu.memory_space<vmem>>, vector<20x16x40xbf16>
    %c0_94 = arith.constant 0 : index
    %c1_95 = arith.constant 1 : index
    %c0_96 = arith.constant 0 : index
    %104 = vector.load %arg16[%c0_94, %c1_95, %c0_96] : memref<20x18x48xbf16, #tpu.memory_space<vmem>>, vector<20x16x40xbf16>
    %c0_97 = arith.constant 0 : index
    %c2_98 = arith.constant 2 : index
    %c0_99 = arith.constant 0 : index
    %105 = vector.load %arg16[%c0_97, %c2_98, %c0_99] : memref<20x18x48xbf16, #tpu.memory_space<vmem>>, vector<20x16x40xbf16>
    %106 = tpu.concatenate %103, %104, %105 in 2 : vector<20x16x40xbf16>, vector<20x16x40xbf16>, vector<20x16x40xbf16> -> vector<20x16x120xbf16>
    %107 = vector.shape_cast %106 : vector<20x16x120xbf16> to vector<320x120xbf16>
    %c0_100 = arith.constant 0 : index
    %c0_101 = arith.constant 0 : index
    %108 = vector.load %arg11[%c0_100, %c0_101] : memref<120x24xbf16, #tpu.memory_space<vmem>>, vector<120x24xbf16>
    %cst_102 = arith.constant dense<0.000000e+00> : vector<320x24xf32>
    %109 = tpu.matmul %107, %108, %cst_102 {dimension_numbers = #tpu.dot_dimension_numbers<[1], [0], [0], [1], [0, 0, 1, 1], [], []>} : vector<320x120xbf16>, vector<120x24xbf16>, vector<320x24xf32> -> vector<320x24xf32>
    %110 = vector.shape_cast %109 : vector<320x24xf32> to vector<20x16x24xf32>
    %111 = vector.extract_strided_slice %110 {offsets = [0, 0, 0], sizes = [18, 16, 8], strides = [1, 1, 1]} : vector<20x16x24xf32> to vector<18x16x8xf32>
    %112 = vector.extract_strided_slice %110 {offsets = [1, 0, 8], sizes = [18, 16, 8], strides = [1, 1, 1]} : vector<20x16x24xf32> to vector<18x16x8xf32>
    %113 = arith.addf %111, %112 : vector<18x16x8xf32>
    %114 = vector.extract_strided_slice %110 {offsets = [2, 0, 16], sizes = [18, 16, 8], strides = [1, 1, 1]} : vector<20x16x24xf32> to vector<18x16x8xf32>
    %c0_103 = arith.constant 0 : index
    %c0_104 = arith.constant 0 : index
    %115 = vector.load %arg12[%c0_103, %c0_104] : memref<1x8xf32, #tpu.memory_space<vmem>>, vector<1x8xf32>
    %116 = vector.shape_cast %115 : vector<1x8xf32> to vector<1x1x8xf32>
    %117 = vector.broadcast %116 : vector<1x1x8xf32> to vector<18x16x8xf32>
    %118 = arith.addf %114, %117 : vector<18x16x8xf32>
    %119 = arith.addf %113, %118 : vector<18x16x8xf32>
    %cst_105 = arith.constant 0.000000e+00 : f32
    %120 = vector.broadcast %cst_105 : f32 to vector<18x16x8xf32>
    %121 = arith.cmpf ogt, %119, %120 : vector<18x16x8xf32>
    %cst_106 = arith.constant 2.000000e-01 : f32
    %122 = vector.broadcast %cst_106 : f32 to vector<18x16x8xf32>
    %123 = arith.mulf %122, %119 : vector<18x16x8xf32>
    %124 = arith.select %121, %119, %123 : vector<18x16x8xi1>, vector<18x16x8xf32>
    %125 = arith.truncf %124 : vector<18x16x8xf32> to vector<18x16x8xbf16>
    %c1_107 = arith.constant 1 : index
    %c1_108 = arith.constant 1 : index
    %c40 = arith.constant 40 : index
    %126 = vector.load %arg16[%c1_107, %c1_108, %c40] : memref<20x18x48xbf16, #tpu.memory_space<vmem>>, vector<18x16x8xbf16>
    tpu.vector_store %arg16[%c1_107, %c1_108, %c40], %125 {strides = array<i32>} : memref<20x18x48xbf16, #tpu.memory_space<vmem>>, vector<18x16x8xbf16>,
    %127 = arith.extui %17 : i1 to i32
    %c0_i32_109 = arith.constant 0 : i32
    %128 = arith.cmpi ne, %127, %c0_i32_109 : i32
    scf.if %128 {
      %cst_131 = arith.constant 0.000000e+00 : bf16
      %157 = vector.broadcast %cst_131 : bf16 to vector<5x16x8xbf16>
      %c1_132 = arith.constant 1 : index
      %c1_133 = arith.constant 1 : index
      %c40_134 = arith.constant 40 : index
      %158 = vector.load %arg16[%c1_132, %c1_133, %c40_134] : memref<20x18x48xbf16, #tpu.memory_space<vmem>>, vector<5x16x8xbf16>
      tpu.vector_store %arg16[%c1_132, %c1_133, %c40_134], %157 {strides = array<i32>} : memref<20x18x48xbf16, #tpu.memory_space<vmem>>, vector<5x16x8xbf16>,
    } else {
    }
    %129 = arith.extui %18 : i1 to i32
    %c0_i32_110 = arith.constant 0 : i32
    %130 = arith.cmpi ne, %129, %c0_i32_110 : i32
    scf.if %130 {
      %cst_131 = arith.constant 0.000000e+00 : bf16
      %157 = vector.broadcast %cst_131 : bf16 to vector<5x16x8xbf16>
      %c14_132 = arith.constant 14 : index
      %c1_133 = arith.constant 1 : index
      %c40_134 = arith.constant 40 : index
      %158 = vector.load %arg16[%c14_132, %c1_133, %c40_134] : memref<20x18x48xbf16, #tpu.memory_space<vmem>>, vector<5x16x8xbf16>
      tpu.vector_store %arg16[%c14_132, %c1_133, %c40_134], %157 {strides = array<i32>} : memref<20x18x48xbf16, #tpu.memory_space<vmem>>, vector<5x16x8xbf16>,
    } else {
    }
    %c5 = arith.constant 5 : index
    %c0_111 = arith.constant 0 : index
    %c0_112 = arith.constant 0 : index
    %131 = vector.load %arg16[%c5, %c0_111, %c0_112] : memref<20x18x48xbf16, #tpu.memory_space<vmem>>, vector<10x16x48xbf16>
    %c5_113 = arith.constant 5 : index
    %c1_114 = arith.constant 1 : index
    %c0_115 = arith.constant 0 : index
    %132 = vector.load %arg16[%c5_113, %c1_114, %c0_115] : memref<20x18x48xbf16, #tpu.memory_space<vmem>>, vector<10x16x48xbf16>
    %c5_116 = arith.constant 5 : index
    %c2_117 = arith.constant 2 : index
    %c0_118 = arith.constant 0 : index
    %133 = vector.load %arg16[%c5_116, %c2_117, %c0_118] : memref<20x18x48xbf16, #tpu.memory_space<vmem>>, vector<10x16x48xbf16>
    %134 = tpu.concatenate %131, %132, %133 in 2 : vector<10x16x48xbf16>, vector<10x16x48xbf16>, vector<10x16x48xbf16> -> vector<10x16x144xbf16>
    %135 = vector.shape_cast %134 : vector<10x16x144xbf16> to vector<160x144xbf16>
    %c0_119 = arith.constant 0 : index
    %c0_120 = arith.constant 0 : index
    %136 = vector.load %arg13[%c0_119, %c0_120] : memref<144x48xbf16, #tpu.memory_space<vmem>>, vector<144x48xbf16>
    %cst_121 = arith.constant dense<0.000000e+00> : vector<160x48xf32>
    %137 = tpu.matmul %135, %136, %cst_121 {dimension_numbers = #tpu.dot_dimension_numbers<[1], [0], [0], [1], [0, 0, 1, 1], [], []>} : vector<160x144xbf16>, vector<144x48xbf16>, vector<160x48xf32> -> vector<160x48xf32>
    %138 = vector.shape_cast %137 : vector<160x48xf32> to vector<10x16x48xf32>
    %139 = vector.extract_strided_slice %138 {offsets = [0, 0, 0], sizes = [8, 16, 16], strides = [1, 1, 1]} : vector<10x16x48xf32> to vector<8x16x16xf32>
    %140 = vector.extract_strided_slice %138 {offsets = [1, 0, 16], sizes = [8, 16, 16], strides = [1, 1, 1]} : vector<10x16x48xf32> to vector<8x16x16xf32>
    %141 = arith.addf %139, %140 : vector<8x16x16xf32>
    %142 = vector.extract_strided_slice %138 {offsets = [2, 0, 32], sizes = [8, 16, 16], strides = [1, 1, 1]} : vector<10x16x48xf32> to vector<8x16x16xf32>
    %c0_122 = arith.constant 0 : index
    %c0_123 = arith.constant 0 : index
    %143 = vector.load %arg14[%c0_122, %c0_123] : memref<1x16xf32, #tpu.memory_space<vmem>>, vector<1x16xf32>
    %144 = vector.shape_cast %143 : vector<1x16xf32> to vector<1x1x16xf32>
    %145 = vector.broadcast %144 : vector<1x1x16xf32> to vector<8x16x16xf32>
    %146 = arith.addf %142, %145 : vector<8x16x16xf32>
    %147 = arith.addf %141, %146 : vector<8x16x16xf32>
    %c0_124 = arith.constant 0 : index
    %c0_125 = arith.constant 0 : index
    %c0_126 = arith.constant 0 : index
    %148 = vector.load %arg2[%c0_124, %c0_125, %c0_126] : memref<1x8x256xf32, #tpu.memory_space<vmem>>, vector<1x8x256xf32>
    %149 = vector.shape_cast %148 : vector<1x8x256xf32> to vector<8x256xf32>
    %150 = vector.shape_cast %147 : vector<8x16x16xf32> to vector<8x256xf32>
    %cst_127 = arith.constant 2.000000e-01 : f32
    %151 = vector.broadcast %cst_127 : f32 to vector<8x256xf32>
    %152 = arith.mulf %151, %150 : vector<8x256xf32>
    %153 = arith.addf %149, %152 : vector<8x256xf32>
    %c0_128 = arith.constant 0 : index
    %c0_129 = arith.constant 0 : index
    %c0_130 = arith.constant 0 : index
    %154 = vector.load %arg15[%c0_128, %c0_129, %c0_130] : memref<1x8x256xf32, #tpu.memory_space<vmem>>, vector<1x8x256xf32>
    %155 = vector.shape_cast %154 : vector<1x8x256xf32> to vector<8x256xf32>
    %156 = vector.shape_cast %153 : vector<8x256xf32> to vector<1x8x256xf32>
    tpu.vector_store %arg15[%c0_128, %c0_129, %c0_130], %156 {strides = array<i32>} : memref<1x8x256xf32, #tpu.memory_space<vmem>>, vector<1x8x256xf32>,
    return
  }
  func.func @transform_0(%arg0: i32, %arg1: i32) -> (i32, i32, i32) {
    %c0_i32 = arith.constant 0 : i32
    %c0_i32_0 = arith.constant 0 : i32
    return %arg0, %arg1, %c0_i32 : i32, i32, i32
  }
  func.func @transform_1(%arg0: i32, %arg1: i32) -> (i32, i32, i32, i32) {
    %c0_i32 = arith.constant 0 : i32
    %c0_i32_0 = arith.constant 0 : i32
    %c0_i32_1 = arith.constant 0 : i32
    return %arg0, %arg1, %c0_i32, %c0_i32_0 : i32, i32, i32, i32
  }
  func.func @transform_2(%arg0: i32, %arg1: i32) -> (i32, i32, i32, i32, i32) {
    %c0_i32 = arith.constant 0 : i32
    %c0_i32_0 = arith.constant 0 : i32
    %c0_i32_1 = arith.constant 0 : i32
    %c0_i32_2 = arith.constant 0 : i32
    return %arg0, %arg1, %c0_i32, %c0_i32_0, %c0_i32_1 : i32, i32, i32, i32, i32
  }
  func.func @transform_3(%arg0: i32, %arg1: i32) -> (i32, i32) {
    %c0_i32 = arith.constant 0 : i32
    %c0_i32_0 = arith.constant 0 : i32
    %c0_i32_1 = arith.constant 0 : i32
    return %c0_i32, %c0_i32_0 : i32, i32
  }
  func.func @transform_4(%arg0: i32, %arg1: i32) -> (i32, i32) {
    %c0_i32 = arith.constant 0 : i32
    %c0_i32_0 = arith.constant 0 : i32
    %c0_i32_1 = arith.constant 0 : i32
    return %c0_i32, %c0_i32_0 : i32, i32
  }
  func.func @transform_5(%arg0: i32, %arg1: i32) -> (i32, i32) {
    %c0_i32 = arith.constant 0 : i32
    %c0_i32_0 = arith.constant 0 : i32
    %c0_i32_1 = arith.constant 0 : i32
    return %c0_i32, %c0_i32_0 : i32, i32
  }
  func.func @transform_6(%arg0: i32, %arg1: i32) -> (i32, i32) {
    %c0_i32 = arith.constant 0 : i32
    %c0_i32_0 = arith.constant 0 : i32
    %c0_i32_1 = arith.constant 0 : i32
    return %c0_i32, %c0_i32_0 : i32, i32
  }
  func.func @transform_7(%arg0: i32, %arg1: i32) -> (i32, i32) {
    %c0_i32 = arith.constant 0 : i32
    %c0_i32_0 = arith.constant 0 : i32
    %c0_i32_1 = arith.constant 0 : i32
    return %c0_i32, %c0_i32_0 : i32, i32
  }
  func.func @transform_8(%arg0: i32, %arg1: i32) -> (i32, i32) {
    %c0_i32 = arith.constant 0 : i32
    %c0_i32_0 = arith.constant 0 : i32
    %c0_i32_1 = arith.constant 0 : i32
    return %c0_i32, %c0_i32_0 : i32, i32
  }
  func.func @transform_9(%arg0: i32, %arg1: i32) -> (i32, i32) {
    %c0_i32 = arith.constant 0 : i32
    %c0_i32_0 = arith.constant 0 : i32
    %c0_i32_1 = arith.constant 0 : i32
    return %c0_i32, %c0_i32_0 : i32, i32
  }
  func.func @transform_10(%arg0: i32, %arg1: i32) -> (i32, i32) {
    %c0_i32 = arith.constant 0 : i32
    %c0_i32_0 = arith.constant 0 : i32
    %c0_i32_1 = arith.constant 0 : i32
    return %c0_i32, %c0_i32_0 : i32, i32
  }
  func.func @transform_11(%arg0: i32, %arg1: i32) -> (i32, i32) {
    %c0_i32 = arith.constant 0 : i32
    %c0_i32_0 = arith.constant 0 : i32
    %c0_i32_1 = arith.constant 0 : i32
    return %c0_i32, %c0_i32_0 : i32, i32
  }
  func.func @transform_12(%arg0: i32, %arg1: i32) -> (i32, i32) {
    %c0_i32 = arith.constant 0 : i32
    %c0_i32_0 = arith.constant 0 : i32
    %c0_i32_1 = arith.constant 0 : i32
    return %c0_i32, %c0_i32_0 : i32, i32
  }
  func.func @transform_13(%arg0: i32, %arg1: i32) -> (i32, i32, i32) {
    %c0_i32 = arith.constant 0 : i32
    %c0_i32_0 = arith.constant 0 : i32
    return %arg0, %arg1, %c0_i32 : i32, i32, i32
  }
}

</mosaic_0001>

<llo_original>
// kernel: residual_dense_block.1
$region0: #{residual_dense_block.1}
  #allocation0 [shape = 'u32[]', space=smem, size = 0x4, offset = 0x4, fixed_abs, tag = 'smem constant byte address 0x4 - core index']
  #allocation1 [shape = 'u32[144,128]{1,0:T(1,128)}', space=vmem, size = 0x12000, scoped, tag = 'internal scratch']
  #allocation2 [shape = 'bf16[20,18,48]{2,1,0:T(8,128)(2,1)}', space=vmem, size = 0x1e000, scoped, tag = 'scratch operand']
  %s0 = inlined_call_operand.vmem [shape: f32[2,16,256], index: 0, kind: input, shape index: {}, may-alias: {0,13}]
  %s1 = inlined_call_operand.vmem [shape: bf16[2,16,18,16], index: 1, kind: input, shape index: {}]
  %s2 = inlined_call_operand.vmem [shape: bf16[2,2,12,18,16], index: 2, kind: input, shape index: {}]
  %s3 = inlined_call_operand.vmem [shape: bf16[48,24], index: 3, kind: input, shape index: {}]
  %s4 = inlined_call_operand.vmem [shape: f32[1,8], index: 4, kind: input, shape index: {}]
  %s5 = inlined_call_operand.vmem [shape: bf16[72,24], index: 5, kind: input, shape index: {}]
  %s6 = inlined_call_operand.vmem [shape: f32[1,8], index: 6, kind: input, shape index: {}]
  %s7 = inlined_call_operand.vmem [shape: bf16[96,24], index: 7, kind: input, shape index: {}]
  %s8 = inlined_call_operand.vmem [shape: f32[1,8], index: 8, kind: input, shape index: {}]
  %s9 = inlined_call_operand.vmem [shape: bf16[120,24], index: 9, kind: input, shape index: {}]
  %s10 = inlined_call_operand.vmem [shape: f32[1,8], index: 10, kind: input, shape index: {}]
  %s11 = inlined_call_operand.vmem [shape: bf16[144,48], index: 11, kind: input, shape index: {}]
  %s12 = inlined_call_operand.vmem [shape: f32[1,16], index: 12, kind: input, shape index: {}]
  %s13 = inlined_call_operand.vmem [shape: f32[2,16,256], index: 13, kind: output, shape index: {}, may-alias: {0,13}]
  %s14 = sld [smem:[#allocation0]]
  $region117: #{residual_dense_block.1} parent=0
    _
  %s16 = ssub.s32 1, %s14
  %s17 = scalar_select 0, %s16, %s14
  loop: start=0, step=1, limit=6
  $region2: #{residual_dense_block.1} parent=0 // loop_pre_header
    _
  $region3: #{residual_dense_block.1} parent=0 // loop_header
    %s19 = sphi 0, %s23
    %p20 = scmp.ge.s32.totalorder %s19, 6
    %s26 = sphi 0, %s38
    %s27 = sphi 0, %s34
    %s28 = sphi 0, %s26
    %s29 = sphi 0, %s27
    %s30 = sphi 0, %s28
    %s31 = sphi 0, %s29
    %s43 = sphi 0, %s45
    %s46 = sphi 0, %s43
    %s47 = sphi 0, %s46
    %s63 = sphi 0, %s47
    %s71 = sphi 0, %s73
    %s74 = sphi 0, %s71
    %s75 = sphi 0, %s74
    %s91 = sphi 0, %s75
    %s99 = sphi 0, %s101
    %s102 = sphi 0, %s99
    %s103 = sphi 0, %s102
    %s119 = sphi 0, %s103
    %s123 = sphi 0, %s123
    %s125 = sphi 0, %s123
    %s126 = sphi 0, %s125
    %s140 = sphi 0, %s126
    %s144 = sphi 0, %s144
    %s146 = sphi 0, %s144
    %s147 = sphi 0, %s146
    %s161 = sphi 0, %s147
    %s165 = sphi 0, %s165
    %s167 = sphi 0, %s165
    %s168 = sphi 0, %s167
    %s182 = sphi 0, %s168
    %s186 = sphi 0, %s186
    %s188 = sphi 0, %s186
    %s189 = sphi 0, %s188
    %s203 = sphi 0, %s189
    %s207 = sphi 0, %s207
    %s209 = sphi 0, %s207
    %s210 = sphi 0, %s209
    %s224 = sphi 0, %s210
    %s228 = sphi 0, %s228
    %s230 = sphi 0, %s228
    %s231 = sphi 0, %s230
    %s245 = sphi 0, %s231
    %s249 = sphi 0, %s249
    %s251 = sphi 0, %s249
    %s252 = sphi 0, %s251
    %s266 = sphi 0, %s252
    %s270 = sphi 0, %s270
    %s272 = sphi 0, %s270
    %s273 = sphi 0, %s272
    %s287 = sphi 0, %s273
    %s291 = sphi 0, %s291
    %s293 = sphi 0, %s291
    %s294 = sphi 0, %s293
    %s308 = sphi 0, %s294
    %s312 = sphi 0, %s312
    %s314 = sphi 0, %s312
    %s315 = sphi 0, %s314
    %s329 = sphi 0, %s315
    %s337 = sphi 0, %s339
    %s340 = sphi 0, %s337
    %s341 = sphi 0, %s340
    %s357 = sphi 0, %s341
  $region4: #{residual_dense_block.1} parent=0 // loop_header_branch
    %22 = sbr.rel (%p20) target = $region8
  $region5: #{residual_dense_block.1} parent=0 // loop_body
    %s24 = ssub.s32 %s19, 1
    %s25 = ssub.s32 %s19, 2
    %s32 = sadd.s32 1, %s27
    %p33 = scmp.ge.s32.totalorder %s32, 2
    %s34 = scalar_select %p33, 0, %s32
    %s35 = sadd.s32 1, %s26
    %s36 = scalar_select %p33, %s35, %s26
    %p37 = scmp.ge.s32.totalorder %s36, 2
    %s38 = scalar_select %p37, 0, %s36
    %s39 = ssub.s32 %s26, %s38
    %s40 = ssub.s32 %s27, %s34
    %s41 = sor.u32 %s39, %s40
    %p42 = scmp.eq.s32.totalorder %s41, 0
    %s44 = sadd.s32 %s43, 1
    %s45 = scalar_select %p42, %s43, %s44
    %p48 = pneg %p42
    %p49 = scmp.eq.s32.totalorder %s19, 3
    %p50 = por %p48, %p49
    %p51 = scmp.ne.s32.totalorder %s43, %s46
    %p52 = scmp.eq.s32.totalorder %s19, 0
    %p53 = por %p51, %p52
    %p54 = scmp.ne.s32.totalorder %s43, %s46
    %p55 = scmp.eq.s32.totalorder %s24, 3
    %p56 = por %p54, %p55
    %p57 = scmp.ne.s32.totalorder %s46, %s47
    %p58 = scmp.eq.s32.totalorder %s24, 0
    %p59 = por %p57, %p58
    %p60 = scmp.ne.s32.totalorder %s46, %s47
    %p61 = scmp.eq.s32.totalorder %s25, 3
    %p62 = por %p60, %p61
    %p64 = scmp.ne.s32.totalorder %s47, %s63
    %p65 = scmp.eq.s32.totalorder %s25, 0
    %p66 = por %p64, %p65
    %s67 = ssub.s32 %s26, %s38
    %s68 = ssub.s32 %s27, %s34
    %s69 = sor.u32 %s67, %s68
    %p70 = scmp.eq.s32.totalorder %s69, 0
    %s72 = sadd.s32 %s71, 1
    %s73 = scalar_select %p70, %s71, %s72
    %p76 = pneg %p70
    %p77 = scmp.eq.s32.totalorder %s19, 3
    %p78 = por %p76, %p77
    %p79 = scmp.ne.s32.totalorder %s71, %s74
    %p80 = scmp.eq.s32.totalorder %s19, 0
    %p81 = por %p79, %p80
    %p82 = scmp.ne.s32.totalorder %s71, %s74
    %p83 = scmp.eq.s32.totalorder %s24, 3
    %p84 = por %p82, %p83
    %p85 = scmp.ne.s32.totalorder %s74, %s75
    %p86 = scmp.eq.s32.totalorder %s24, 0
    %p87 = por %p85, %p86
    %p88 = scmp.ne.s32.totalorder %s74, %s75
    %p89 = scmp.eq.s32.totalorder %s25, 3
    %p90 = por %p88, %p89
    %p92 = scmp.ne.s32.totalorder %s75, %s91
    %p93 = scmp.eq.s32.totalorder %s25, 0
    %p94 = por %p92, %p93
    %s95 = ssub.s32 %s26, %s38
    %s96 = ssub.s32 %s27, %s34
    %s97 = sor.u32 %s95, %s96
    %p98 = scmp.eq.s32.totalorder %s97, 0
    %s100 = sadd.s32 %s99, 1
    %s101 = scalar_select %p98, %s99, %s100
    %p104 = pneg %p98
    %p105 = scmp.eq.s32.totalorder %s19, 3
    %p106 = por %p104, %p105
    %p107 = scmp.ne.s32.totalorder %s99, %s102
    %p108 = scmp.eq.s32.totalorder %s19, 0
    %p109 = por %p107, %p108
    %p110 = scmp.ne.s32.totalorder %s99, %s102
    %p111 = scmp.eq.s32.totalorder %s24, 3
    %p112 = por %p110, %p111
    %p113 = scmp.ne.s32.totalorder %s102, %s103
    %p114 = scmp.eq.s32.totalorder %s24, 0
    %p115 = por %p113, %p114
    %p116 = scmp.ne.s32.totalorder %s102, %s103
    %p117 = scmp.eq.s32.totalorder %s25, 3
    %p118 = por %p116, %p117
    %p120 = scmp.ne.s32.totalorder %s103, %s119
    %p121 = scmp.eq.s32.totalorder %s25, 0
    %p122 = por %p120, %p121
    %s124 = sadd.s32 %s123, 1
    %p127 = scmp.eq.s32.totalorder %s19, 3
    %p128 = scmp.ne.s32.totalorder %s123, %s125
    %p129 = scmp.eq.s32.totalorder %s19, 0
    %p130 = por %p128, %p129
    %p131 = scmp.ne.s32.totalorder %s123, %s125
    %p132 = scmp.eq.s32.totalorder %s24, 3
    %p133 = por %p131, %p132
    %p134 = scmp.ne.s32.totalorder %s125, %s126
    %p135 = scmp.eq.s32.totalorder %s24, 0
    %p136 = por %p134, %p135
    %p137 = scmp.ne.s32.totalorder %s125, %s126
    %p138 = scmp.eq.s32.totalorder %s25, 3
    %p139 = por %p137, %p138
    %p141 = scmp.ne.s32.totalorder %s126, %s140
    %p142 = scmp.eq.s32.totalorder %s25, 0
    %p143 = por %p141, %p142
    %s145 = sadd.s32 %s144, 1
    %p148 = scmp.eq.s32.totalorder %s19, 3
    %p149 = scmp.ne.s32.totalorder %s144, %s146
    %p150 = scmp.eq.s32.totalorder %s19, 0
    %p151 = por %p149, %p150
    %p152 = scmp.ne.s32.totalorder %s144, %s146
    %p153 = scmp.eq.s32.totalorder %s24, 3
    %p154 = por %p152, %p153
    %p155 = scmp.ne.s32.totalorder %s146, %s147
    %p156 = scmp.eq.s32.totalorder %s24, 0
    %p157 = por %p155, %p156
    %p158 = scmp.ne.s32.totalorder %s146, %s147
    %p159 = scmp.eq.s32.totalorder %s25, 3
    %p160 = por %p158, %p159
    %p162 = scmp.ne.s32.totalorder %s147, %s161
    %p163 = scmp.eq.s32.totalorder %s25, 0
    %p164 = por %p162, %p163
    %s166 = sadd.s32 %s165, 1
    %p169 = scmp.eq.s32.totalorder %s19, 3
    %p170 = scmp.ne.s32.totalorder %s165, %s167
    %p171 = scmp.eq.s32.totalorder %s19, 0
    %p172 = por %p170, %p171
    %p173 = scmp.ne.s32.totalorder %s165, %s167
    %p174 = scmp.eq.s32.totalorder %s24, 3
    %p175 = por %p173, %p174
    %p176 = scmp.ne.s32.totalorder %s167, %s168
    %p177 = scmp.eq.s32.totalorder %s24, 0
    %p178 = por %p176, %p177
    %p179 = scmp.ne.s32.totalorder %s167, %s168
    %p180 = scmp.eq.s32.totalorder %s25, 3
    %p181 = por %p179, %p180
    %p183 = scmp.ne.s32.totalorder %s168, %s182
    %p184 = scmp.eq.s32.totalorder %s25, 0
    %p185 = por %p183, %p184
    %s187 = sadd.s32 %s186, 1
    %p190 = scmp.eq.s32.totalorder %s19, 3
    %p191 = scmp.ne.s32.totalorder %s186, %s188
    %p192 = scmp.eq.s32.totalorder %s19, 0
    %p193 = por %p191, %p192
    %p194 = scmp.ne.s32.totalorder %s186, %s188
    %p195 = scmp.eq.s32.totalorder %s24, 3
    %p196 = por %p194, %p195
    %p197 = scmp.ne.s32.totalorder %s188, %s189
    %p198 = scmp.eq.s32.totalorder %s24, 0
    %p199 = por %p197, %p198
    %p200 = scmp.ne.s32.totalorder %s188, %s189
    %p201 = scmp.eq.s32.totalorder %s25, 3
    %p202 = por %p200, %p201
    %p204 = scmp.ne.s32.totalorder %s189, %s203
    %p205 = scmp.eq.s32.totalorder %s25, 0
    %p206 = por %p204, %p205
    %s208 = sadd.s32 %s207, 1
    %p211 = scmp.eq.s32.totalorder %s19, 3
    %p212 = scmp.ne.s32.totalorder %s207, %s209
    %p213 = scmp.eq.s32.totalorder %s19, 0
    %p214 = por %p212, %p213
    %p215 = scmp.ne.s32.totalorder %s207, %s209
    %p216 = scmp.eq.s32.totalorder %s24, 3
    %p217 = por %p215, %p216
    %p218 = scmp.ne.s32.totalorder %s209, %s210
    %p219 = scmp.eq.s32.totalorder %s24, 0
    %p220 = por %p218, %p219
    %p221 = scmp.ne.s32.totalorder %s209, %s210
    %p222 = scmp.eq.s32.totalorder %s25, 3
    %p223 = por %p221, %p222
    %p225 = scmp.ne.s32.totalorder %s210, %s224
    %p226 = scmp.eq.s32.totalorder %s25, 0
    %p227 = por %p225, %p226
    %s229 = sadd.s32 %s228, 1
    %p232 = scmp.eq.s32.totalorder %s19, 3
    %p233 = scmp.ne.s32.totalorder %s228, %s230
    %p234 = scmp.eq.s32.totalorder %s19, 0
    %p235 = por %p233, %p234
    %p236 = scmp.ne.s32.totalorder %s228, %s230
    %p237 = scmp.eq.s32.totalorder %s24, 3
    %p238 = por %p236, %p237
    %p239 = scmp.ne.s32.totalorder %s230, %s231
    %p240 = scmp.eq.s32.totalorder %s24, 0
    %p241 = por %p239, %p240
    %p242 = scmp.ne.s32.totalorder %s230, %s231
    %p243 = scmp.eq.s32.totalorder %s25, 3
    %p244 = por %p242, %p243
    %p246 = scmp.ne.s32.totalorder %s231, %s245
    %p247 = scmp.eq.s32.totalorder %s25, 0
    %p248 = por %p246, %p247
    %s250 = sadd.s32 %s249, 1
    %p253 = scmp.eq.s32.totalorder %s19, 3
    %p254 = scmp.ne.s32.totalorder %s249, %s251
    %p255 = scmp.eq.s32.totalorder %s19, 0
    %p256 = por %p254, %p255
    %p257 = scmp.ne.s32.totalorder %s249, %s251
    %p258 = scmp.eq.s32.totalorder %s24, 3
    %p259 = por %p257, %p258
    %p260 = scmp.ne.s32.totalorder %s251, %s252
    %p261 = scmp.eq.s32.totalorder %s24, 0
    %p262 = por %p260, %p261
    %p263 = scmp.ne.s32.totalorder %s251, %s252
    %p264 = scmp.eq.s32.totalorder %s25, 3
    %p265 = por %p263, %p264
    %p267 = scmp.ne.s32.totalorder %s252, %s266
    %p268 = scmp.eq.s32.totalorder %s25, 0
    %p269 = por %p267, %p268
    %s271 = sadd.s32 %s270, 1
    %p274 = scmp.eq.s32.totalorder %s19, 3
    %p275 = scmp.ne.s32.totalorder %s270, %s272
    %p276 = scmp.eq.s32.totalorder %s19, 0
    %p277 = por %p275, %p276
    %p278 = scmp.ne.s32.totalorder %s270, %s272
    %p279 = scmp.eq.s32.totalorder %s24, 3
    %p280 = por %p278, %p279
    %p281 = scmp.ne.s32.totalorder %s272, %s273
    %p282 = scmp.eq.s32.totalorder %s24, 0
    %p283 = por %p281, %p282
    %p284 = scmp.ne.s32.totalorder %s272, %s273
    %p285 = scmp.eq.s32.totalorder %s25, 3
    %p286 = por %p284, %p285
    %p288 = scmp.ne.s32.totalorder %s273, %s287
    %p289 = scmp.eq.s32.totalorder %s25, 0
    %p290 = por %p288, %p289
    %s292 = sadd.s32 %s291, 1
    %p295 = scmp.eq.s32.totalorder %s19, 3
    %p296 = scmp.ne.s32.totalorder %s291, %s293
    %p297 = scmp.eq.s32.totalorder %s19, 0
    %p298 = por %p296, %p297
    %p299 = scmp.ne.s32.totalorder %s291, %s293
    %p300 = scmp.eq.s32.totalorder %s24, 3
    %p301 = por %p299, %p300
    %p302 = scmp.ne.s32.totalorder %s293, %s294
    %p303 = scmp.eq.s32.totalorder %s24, 0
    %p304 = por %p302, %p303
    %p305 = scmp.ne.s32.totalorder %s293, %s294
    %p306 = scmp.eq.s32.totalorder %s25, 3
    %p307 = por %p305, %p306
    %p309 = scmp.ne.s32.totalorder %s294, %s308
    %p310 = scmp.eq.s32.totalorder %s25, 0
    %p311 = por %p309, %p310
    %s313 = sadd.s32 %s312, 1
    %p316 = scmp.eq.s32.totalorder %s19, 3
    %p317 = scmp.ne.s32.totalorder %s312, %s314
    %p318 = scmp.eq.s32.totalorder %s19, 0
    %p319 = por %p317, %p318
    %p320 = scmp.ne.s32.totalorder %s312, %s314
    %p321 = scmp.eq.s32.totalorder %s24, 3
    %p322 = por %p320, %p321
    %p323 = scmp.ne.s32.totalorder %s314, %s315
    %p324 = scmp.eq.s32.totalorder %s24, 0
    %p325 = por %p323, %p324
    %p326 = scmp.ne.s32.totalorder %s314, %s315
    %p327 = scmp.eq.s32.totalorder %s25, 3
    %p328 = por %p326, %p327
    %p330 = scmp.ne.s32.totalorder %s315, %s329
    %p331 = scmp.eq.s32.totalorder %s25, 0
    %p332 = por %p330, %p331
    %s333 = ssub.s32 %s26, %s38
    %s334 = ssub.s32 %s27, %s34
    %s335 = sor.u32 %s333, %s334
    %p336 = scmp.eq.s32.totalorder %s335, 0
    %s338 = sadd.s32 %s337, 1
    %s339 = scalar_select %p336, %s337, %s338
    %p342 = pneg %p336
    %p343 = scmp.eq.s32.totalorder %s19, 3
    %p344 = por %p342, %p343
    %p345 = scmp.ne.s32.totalorder %s337, %s340
    %p346 = scmp.eq.s32.totalorder %s19, 0
    %p347 = por %p345, %p346
    %p348 = scmp.ne.s32.totalorder %s337, %s340
    %p349 = scmp.eq.s32.totalorder %s24, 3
    %p350 = por %p348, %p349
    %p351 = scmp.ne.s32.totalorder %s340, %s341
    %p352 = scmp.eq.s32.totalorder %s24, 0
    %p353 = por %p351, %p352
    %p354 = scmp.ne.s32.totalorder %s340, %s341
    %p355 = scmp.eq.s32.totalorder %s25, 3
    %p356 = por %p354, %p355
    %p358 = scmp.ne.s32.totalorder %s341, %s357
    %p359 = scmp.eq.s32.totalorder %s25, 0
    %p360 = por %p358, %p359
    %p361 = scmp.le.s32.totalorder 1, %s19
    %p362 = scmp.lt.s32.totalorder %s19, 5
    %p363 = pnand %p361, %p362
    %p364 = pneg %p363
    // Predicated region
    $region9: #{residual_dense_block.1} parent=5 // pred_check
      _
    $region10: #{residual_dense_block.1} parent=5 // pred_check_branch
      %366 = sbr.rel (%p363) target = $region12
    $region11: #{residual_dense_block.1} parent=5 // pred_region
      %s367 = ssub.s32 %s19, 1
      // Predicated region
      $region13: #{residual_dense_block.1} parent=11 // pred_check
        %p368 = pneg %p136
      $region14: #{residual_dense_block.1} parent=11 // pred_check_branch
        %370 = sbr.rel (%p368) target = $region16
      $region15: #{residual_dense_block.1} parent=11 // pred_region
        _
      $region16: #{residual_dense_block.1} parent=11 // pred_fallthru
        _
      // Predicated region
      $region17: #{residual_dense_block.1} parent=11 // pred_check
        %p371 = pneg %p157
      $region18: #{residual_dense_block.1} parent=11 // pred_check_branch
        %373 = sbr.rel (%p371) target = $region20
      $region19: #{residual_dense_block.1} parent=11 // pred_region
        _
      $region20: #{residual_dense_block.1} parent=11 // pred_fallthru
        _
      // Predicated region
      $region21: #{residual_dense_block.1} parent=11 // pred_check
        %p374 = pneg %p178
      $region22: #{residual_dense_block.1} parent=11 // pred_check_branch
        %376 = sbr.rel (%p374) target = $region24
      $region23: #{residual_dense_block.1} parent=11 // pred_region
        _
      $region24: #{residual_dense_block.1} parent=11 // pred_fallthru
        _
      // Predicated region
      $region25: #{residual_dense_block.1} parent=11 // pred_check
        %p377 = pneg %p199
      $region26: #{residual_dense_block.1} parent=11 // pred_check_branch
        %379 = sbr.rel (%p377) target = $region28
      $region27: #{residual_dense_block.1} parent=11 // pred_region
        _
      $region28: #{residual_dense_block.1} parent=11 // pred_fallthru
        _
      // Predicated region
      $region29: #{residual_dense_block.1} parent=11 // pred_check
        %p380 = pneg %p220
      $region30: #{residual_dense_block.1} parent=11 // pred_check_branch
        %382 = sbr.rel (%p380) target = $region32
      $region31: #{residual_dense_block.1} parent=11 // pred_region
        _
      $region32: #{residual_dense_block.1} parent=11 // pred_fallthru
        _
      // Predicated region
      $region33: #{residual_dense_block.1} parent=11 // pred_check
        %p383 = pneg %p241
      $region34: #{residual_dense_block.1} parent=11 // pred_check_branch
        %385 = sbr.rel (%p383) target = $region36
      $region35: #{residual_dense_block.1} parent=11 // pred_region
        _
      $region36: #{residual_dense_block.1} parent=11 // pred_fallthru
        _
      // Predicated region
      $region37: #{residual_dense_block.1} parent=11 // pred_check
        %p386 = pneg %p262
      $region38: #{residual_dense_block.1} parent=11 // pred_check_branch
        %388 = sbr.rel (%p386) target = $region40
      $region39: #{residual_dense_block.1} parent=11 // pred_region
        _
      $region40: #{residual_dense_block.1} parent=11 // pred_fallthru
        _
      // Predicated region
      $region41: #{residual_dense_block.1} parent=11 // pred_check
        %p389 = pneg %p283
      $region42: #{residual_dense_block.1} parent=11 // pred_check_branch
        %391 = sbr.rel (%p389) target = $region44
      $region43: #{residual_dense_block.1} parent=11 // pred_region
        _
      $region44: #{residual_dense_block.1} parent=11 // pred_fallthru
        _
      // Predicated region
      $region45: #{residual_dense_block.1} parent=11 // pred_check
        %p392 = pneg %p304
      $region46: #{residual_dense_block.1} parent=11 // pred_check_branch
        %394 = sbr.rel (%p392) target = $region48
      $region47: #{residual_dense_block.1} parent=11 // pred_region
        _
      $region48: #{residual_dense_block.1} parent=11 // pred_fallthru
        _
      // Predicated region
      $region49: #{residual_dense_block.1} parent=11 // pred_check
        %p395 = pneg %p325
      $region50: #{residual_dense_block.1} parent=11 // pred_check_branch
        %397 = sbr.rel (%p395) target = $region52
      $region51: #{residual_dense_block.1} parent=11 // pred_region
        _
      $region52: #{residual_dense_block.1} parent=11 // pred_fallthru
        _
    $region12: #{residual_dense_block.1} parent=5 // pred_fallthru
      _
    %p398 = scmp.lt.s32.totalorder %s19, 4
    // Predicated region
    $region53: #{residual_dense_block.1} parent=5 // pred_check
      %p399 = pneg %p398
    $region54: #{residual_dense_block.1} parent=5 // pred_check_branch
      %401 = sbr.rel (%p399) target = $region56
    $region55: #{residual_dense_block.1} parent=5 // pred_region
      // Predicated region
      $region57: #{residual_dense_block.1} parent=55 // pred_check
        %p402 = pneg %p53
      $region58: #{residual_dense_block.1} parent=55 // pred_check_branch
        %404 = sbr.rel (%p402) target = $region60
      $region59: #{residual_dense_block.1} parent=55 // pred_region
        %p405 = scmp.lt.s32.totalorder %s26, 1
        %s406 = scalar_select %p405, %s26, 1
        %p407 = scmp.lt.s32.totalorder %s27, 1
        %s408 = scalar_select %p407, %s27, 1
        %s409 = smul.addr %s408, 2
        %s410 = smul.addr %s406, 4
        %s411 = sadd.s32 %s409, %s410
        %s412 = smul.addr %s411, 8
        %s413 = scalar_lea.vmem %s0, %s412
      $region60: #{residual_dense_block.1} parent=55 // pred_fallthru
        _
      // Predicated region
      $region61: #{residual_dense_block.1} parent=55 // pred_check
        %p414 = pneg %p81
      $region62: #{residual_dense_block.1} parent=55 // pred_check_branch
        %416 = sbr.rel (%p414) target = $region64
      $region63: #{residual_dense_block.1} parent=55 // pred_region
        %s417 = smul.u32 8, %s27
        %p418 = scmp.lt.s32.totalorder %s26, 1
        %s419 = scalar_select %p418, %s26, 1
        %p420 = scmp.lt.s32.totalorder %s417, 15
        %s421 = scalar_select %p420, %s417, 15
        %s422 = smul.addr %s421, 3
        %s423 = smul.addr %s419, 48
        %s424 = sadd.s32 %s422, %s423
        %s425 = smul.addr %s424, 4
        %s426 = scalar_lea.vmem %s1, %s425
        %s427 = smul.u32 8, %s27
      $region64: #{residual_dense_block.1} parent=55 // pred_fallthru
        _
      // Predicated region
      $region65: #{residual_dense_block.1} parent=55 // pred_check
        %p428 = pneg %p109
      $region66: #{residual_dense_block.1} parent=55 // pred_check_branch
        %430 = sbr.rel (%p428) target = $region68
      $region67: #{residual_dense_block.1} parent=55 // pred_region
        %p431 = scmp.lt.s32.totalorder %s26, 1
        %s432 = scalar_select %p431, %s26, 1
        %p433 = scmp.lt.s32.totalorder %s27, 1
        %s434 = scalar_select %p433, %s27, 1
        %s435 = smul.addr %s434, 36
        %s436 = smul.addr %s432, 72
        %s437 = sadd.s32 %s435, %s436
        %s438 = smul.addr %s437, 4
        %s439 = scalar_lea.vmem %s2, %s438
      $region68: #{residual_dense_block.1} parent=55 // pred_fallthru
        _
    $region56: #{residual_dense_block.1} parent=5 // pred_fallthru
      _
    %p440 = scmp.le.s32.totalorder 1, %s19
    %p441 = scmp.lt.s32.totalorder %s19, 5
    %p442 = pnand %p440, %p441
    %p443 = pneg %p442
    // Predicated region
    $region69: #{residual_dense_block.1} parent=5 // pred_check
      _
    $region70: #{residual_dense_block.1} parent=5 // pred_check_branch
      %445 = sbr.rel (%p442) target = $region72
    $region71: #{residual_dense_block.1} parent=5 // pred_region
      %s446 = ssub.s32 %s19, 1
      %p447 = scmp.lt.s32.totalorder %s28, 1
      %s448 = scalar_select %p447, %s28, 1
      %p449 = scmp.lt.s32.totalorder %s29, 1
      %s450 = scalar_select %p449, %s29, 1
      %s451 = smul.addr %s450, 2
      %s452 = smul.addr %s448, 4
      %s453 = sadd.s32 %s451, %s452
      %s454 = smul.addr %s453, 8
      %s455 = scalar_lea.vmem %s0, %s454
      %p456 = pneg %p59
      %p457 = pneg %p56
      %s458 = smul.u32 8, %s29
      %p459 = scmp.lt.s32.totalorder %s28, 1
      %s460 = scalar_select %p459, %s28, 1
      %p461 = scmp.lt.s32.totalorder %s458, 15
      %s462 = scalar_select %p461, %s458, 15
      %s463 = smul.addr %s462, 3
      %s464 = smul.addr %s460, 48
      %s465 = sadd.s32 %s463, %s464
      %s466 = smul.addr %s465, 4
      %s467 = scalar_lea.vmem %s1, %s466
      %p468 = pneg %p87
      %p469 = pneg %p84
      %p470 = scmp.lt.s32.totalorder %s28, 1
      %s471 = scalar_select %p470, %s28, 1
      %p472 = scmp.lt.s32.totalorder %s29, 1
      %s473 = scalar_select %p472, %s29, 1
      %s474 = smul.addr %s473, 36
      %s475 = smul.addr %s471, 72
      %s476 = sadd.s32 %s474, %s475
      %s477 = smul.addr %s476, 4
      %s478 = scalar_lea.vmem %s2, %s477
      %p479 = pneg %p115
      %p480 = pneg %p112
      %p481 = pneg %p136
      %p482 = pneg %p133
      %p483 = pneg %p157
      %p484 = pneg %p154
      %p485 = pneg %p178
      %p486 = pneg %p175
      %p487 = pneg %p199
      %p488 = pneg %p196
      %p489 = pneg %p220
      %p490 = pneg %p217
      %p491 = pneg %p241
      %p492 = pneg %p238
      %p493 = pneg %p262
      %p494 = pneg %p259
      %p495 = pneg %p283
      %p496 = pneg %p280
      %p497 = pneg %p304
      %p498 = pneg %p301
      %p499 = pneg %p325
      %p500 = pneg %p322
      %p501 = pneg %p353
      %p502 = pneg %p350
      %p503 = scmp.lt.s32.totalorder %s28, 1
      %s504 = scalar_select %p503, %s28, 1
      %p505 = scmp.lt.s32.totalorder %s29, 1
      %s506 = scalar_select %p505, %s29, 1
      %s507 = smul.addr %s506, 2
      %s508 = smul.addr %s504, 4
      %s509 = sadd.s32 %s507, %s508
      %s510 = smul.addr %s509, 8
      %s511 = scalar_lea.vmem %s13, %s510
      %p512 = scmp.lt.s32.totalorder %s28, 1
      %s513 = scalar_select %p512, %s28, 1
      %p514 = scmp.lt.s32.totalorder %s29, 1
      %s515 = scalar_select %p514, %s29, 1
      %s516 = smul.addr %s515, 2
      %s517 = smul.addr %s513, 4
      %s518 = sadd.s32 %s516, %s517
      %s519 = smul.addr %s518, 8
      %s520 = scalar_lea.vmem %s0, %s519
      %s521 = smul.u32 8, %s29
      %p522 = scmp.lt.s32.totalorder %s28, 1
      %s523 = scalar_select %p522, %s28, 1
      %p524 = scmp.lt.s32.totalorder %s521, 15
      %s525 = scalar_select %p524, %s521, 15
      %s526 = smul.addr %s525, 3
      %s527 = smul.addr %s523, 48
      %s528 = sadd.s32 %s526, %s527
      %s529 = smul.addr %s528, 4
      %s530 = scalar_lea.vmem %s1, %s529
      %s531 = smul.u32 8, %s29
      %p532 = scmp.lt.s32.totalorder %s28, 1
      %s533 = scalar_select %p532, %s28, 1
      %p534 = scmp.lt.s32.totalorder %s29, 1
      %s535 = scalar_select %p534, %s29, 1
      %s536 = smul.addr %s535, 36
      %s537 = smul.addr %s533, 72
      %s538 = sadd.s32 %s536, %s537
      %s539 = smul.addr %s538, 4
      %s540 = scalar_lea.vmem %s2, %s539
      %p541 = scmp.lt.s32.totalorder %s28, 1
      %s542 = scalar_select %p541, %s28, 1
      %p543 = scmp.lt.s32.totalorder %s29, 1
      %s544 = scalar_select %p543, %s29, 1
      %s545 = smul.addr %s544, 2
      %s546 = smul.addr %s542, 4
      %s547 = sadd.s32 %s545, %s546
      %s548 = smul.addr %s547, 8
      %s549 = scalar_lea.vmem %s13, %s548
      %v551 = vld [vmem:[%s540] sm:$0xf]
      %v552 = vld [vmem:[%s540 + $0x4] sm:$0xf]
      %v553 = vld [vmem:[%s540 + $0x8] sm:$0x1]
      %v554 = vld [vmem:[%s540 + $0xc] sm:$0xf]
      %v555 = vld [vmem:[%s540 + $0x10] sm:$0xf]
      %v556 = vld [vmem:[%s540 + $0x14] sm:$0x1]
      %v557 = vld [vmem:[%s540 + $0x18] sm:$0xf]
      %v558 = vld [vmem:[%s540 + $0x1c] sm:$0xf]
      %v559 = vld [vmem:[%s540 + $0x20] sm:$0x1]
      %v560 = vld [vmem:[%s540 + $0x24] sm:$0xf]
      %v561 = vld [vmem:[%s540 + $0x28] sm:$0xf]
      %v562 = vld [vmem:[%s540 + $0x2c] sm:$0x1]
      %v563 = vld [vmem:[%s540 + $0x30] sm:$0xf]
      %v564 = vld [vmem:[%s540 + $0x34] sm:$0xf]
      %v565 = vld [vmem:[%s540 + $0x38] sm:$0x1]
      %v566 = vld [vmem:[%s540 + $0x3c] sm:$0xf]
      %v567 = vld [vmem:[%s540 + $0x40] sm:$0xf]
      %v568 = vld [vmem:[%s540 + $0x44] sm:$0x1]
      %vm569 = vcmask 125952
      %570 = vst.msk [vmem:[#allocation2] sm:$0xf] %vm569, %v551
      %571 = vst.msk [vmem:[#allocation2 + $0x4] sm:$0xf] %vm569, %v552
      %vm572 = vcmask 122880
      %573 = vst.msk [vmem:[#allocation2 + $0x8] sm:$0x1] %vm572, %v553
      %574 = vst.msk [vmem:[#allocation2 + $0xc] sm:$0xf] %vm569, %v554
      %575 = vst.msk [vmem:[#allocation2 + $0x10] sm:$0xf] %vm569, %v555
      %576 = vst.msk [vmem:[#allocation2 + $0x14] sm:$0x1] %vm572, %v556
      %577 = vst.msk [vmem:[#allocation2 + $0x18] sm:$0xf] %vm569, %v557
      %578 = vst.msk [vmem:[#allocation2 + $0x1c] sm:$0xf] %vm569, %v558
      %579 = vst.msk [vmem:[#allocation2 + $0x20] sm:$0x1] %vm572, %v559
      %580 = vst.msk [vmem:[#allocation2 + $0x24] sm:$0xf] %vm569, %v560
      %581 = vst.msk [vmem:[#allocation2 + $0x28] sm:$0xf] %vm569, %v561
      %582 = vst.msk [vmem:[#allocation2 + $0x2c] sm:$0x1] %vm572, %v562
      %583 = vst.msk [vmem:[#allocation2 + $0x30] sm:$0xf] %vm569, %v563
      %584 = vst.msk [vmem:[#allocation2 + $0x34] sm:$0xf] %vm569, %v564
      %585 = vst.msk [vmem:[#allocation2 + $0x38] sm:$0x1] %vm572, %v565
      %586 = vst.msk [vmem:[#allocation2 + $0x3c] sm:$0xf] %vm569, %v566
      %587 = vst.msk [vmem:[#allocation2 + $0x40] sm:$0xf] %vm569, %v567
      %588 = vst.msk [vmem:[#allocation2 + $0x44] sm:$0x1] %vm572, %v568
      %v589 = vld [vmem:[%s530] sm:$0xf]
      %v590 = vld [vmem:[%s530 + $0x4] sm:$0xf]
      %v591 = vld [vmem:[%s530 + $0x8] sm:$0x1]
      %v592 = vld [vmem:[%s530 + $0xc] sm:$0xf]
      %v593 = vld [vmem:[%s530 + $0x10] sm:$0xf]
      %v594 = vld [vmem:[%s530 + $0x14] sm:$0x1]
      %v595 = vld [vmem:[%s530 + $0x18] sm:$0xf]
      %v596 = vld [vmem:[%s530 + $0x1c] sm:$0xf]
      %v597 = vld [vmem:[%s530 + $0x20] sm:$0x1]
      %v598 = vld [vmem:[%s530 + $0x24] sm:$0xf]
      %v599 = vld [vmem:[%s530 + $0x28] sm:$0xf]
      %v600 = vld [vmem:[%s530 + $0x2c] sm:$0x1]
      %v601 = vld [vmem:[%s530 + $0x30] sm:$0xf]
      %v602 = vld [vmem:[%s530 + $0x34] sm:$0xf]
      %v603 = vld [vmem:[%s530 + $0x38] sm:$0x1]
      %v604 = vld [vmem:[%s530 + $0x3c] sm:$0xf]
      %v605 = vld [vmem:[%s530 + $0x40] sm:$0xf]
      %v606 = vld [vmem:[%s530 + $0x44] sm:$0x1]
      %v607 = vld [vmem:[%s530 + $0x48] sm:$0xf]
      %v608 = vld [vmem:[%s530 + $0x4c] sm:$0xf]
      %v609 = vld [vmem:[%s530 + $0x50] sm:$0x1]
      %v610 = vld [vmem:[%s530 + $0x54] sm:$0xf]
      %v611 = vld [vmem:[%s530 + $0x58] sm:$0xf]
      %v612 = vld [vmem:[%s530 + $0x5c] sm:$0x1]
      %s613 = scalar_lea.vmem [#allocation2], 72
      %614 = vst.msk [vmem:[%s613] sm:$0xf] %vm569, %v589
      %615 = vst.msk [vmem:[%s613 + $0x4] sm:$0xf] %vm569, %v590
      %616 = vst.msk [vmem:[%s613 + $0x8] sm:$0x1] %vm572, %v591
      %617 = vst.msk [vmem:[%s613 + $0xc] sm:$0xf] %vm569, %v592
      %618 = vst.msk [vmem:[%s613 + $0x10] sm:$0xf] %vm569, %v593
      %619 = vst.msk [vmem:[%s613 + $0x14] sm:$0x1] %vm572, %v594
      %620 = vst.msk [vmem:[%s613 + $0x18] sm:$0xf] %vm569, %v595
      %621 = vst.msk [vmem:[%s613 + $0x1c] sm:$0xf] %vm569, %v596
      %622 = vst.msk [vmem:[%s613 + $0x20] sm:$0x1] %vm572, %v597
      %623 = vst.msk [vmem:[%s613 + $0x24] sm:$0xf] %vm569, %v598
      %624 = vst.msk [vmem:[%s613 + $0x28] sm:$0xf] %vm569, %v599
      %625 = vst.msk [vmem:[%s613 + $0x2c] sm:$0x1] %vm572, %v600
      %626 = vst.msk [vmem:[%s613 + $0x30] sm:$0xf] %vm569, %v601
      %627 = vst.msk [vmem:[%s613 + $0x34] sm:$0xf] %vm569, %v602
      %628 = vst.msk [vmem:[%s613 + $0x38] sm:$0x1] %vm572, %v603
      %629 = vst.msk [vmem:[%s613 + $0x3c] sm:$0xf] %vm569, %v604
      %630 = vst.msk [vmem:[%s613 + $0x40] sm:$0xf] %vm569, %v605
      %631 = vst.msk [vmem:[%s613 + $0x44] sm:$0x1] %vm572, %v606
      %632 = vst.msk [vmem:[%s613 + $0x48] sm:$0xf] %vm569, %v607
      %633 = vst.msk [vmem:[%s613 + $0x4c] sm:$0xf] %vm569, %v608
      %634 = vst.msk [vmem:[%s613 + $0x50] sm:$0x1] %vm572, %v609
      %635 = vst.msk [vmem:[%s613 + $0x54] sm:$0xf] %vm569, %v610
      %636 = vst.msk [vmem:[%s613 + $0x58] sm:$0xf] %vm569, %v611
      %637 = vst.msk [vmem:[%s613 + $0x5c] sm:$0x1] %vm572, %v612
      %s638 = scalar_lea.vmem %s540, 72
      %v639 = vld [vmem:[%s638] sm:$0xf]
      %v640 = vld [vmem:[%s638 + $0x4] sm:$0xf]
      %v641 = vld [vmem:[%s638 + $0x8] sm:$0x1]
      %v642 = vld [vmem:[%s638 + $0xc] sm:$0xf]
      %v643 = vld [vmem:[%s638 + $0x10] sm:$0xf]
      %v644 = vld [vmem:[%s638 + $0x14] sm:$0x1]
      %v645 = vld [vmem:[%s638 + $0x18] sm:$0xf]
      %v646 = vld [vmem:[%s638 + $0x1c] sm:$0xf]
      %v647 = vld [vmem:[%s638 + $0x20] sm:$0x1]
      %v648 = vld [vmem:[%s638 + $0x24] sm:$0xf]
      %v649 = vld [vmem:[%s638 + $0x28] sm:$0xf]
      %v650 = vld [vmem:[%s638 + $0x2c] sm:$0x1]
      %v651 = vld [vmem:[%s638 + $0x30] sm:$0xf]
      %v652 = vld [vmem:[%s638 + $0x34] sm:$0xf]
      %v653 = vld [vmem:[%s638 + $0x38] sm:$0x1]
      %v654 = vld [vmem:[%s638 + $0x3c] sm:$0xf]
      %v655 = vld [vmem:[%s638 + $0x40] sm:$0xf]
      %v656 = vld [vmem:[%s638 + $0x44] sm:$0x1]
      %s657 = scalar_lea.vmem [#allocation2], 168
      %658 = vst.msk [vmem:[%s657] sm:$0xf] %vm569, %v639
      %659 = vst.msk [vmem:[%s657 + $0x4] sm:$0xf] %vm569, %v640
      %660 = vst.msk [vmem:[%s657 + $0x8] sm:$0x1] %vm572, %v641
      %661 = vst.msk [vmem:[%s657 + $0xc] sm:$0xf] %vm569, %v642
      %662 = vst.msk [vmem:[%s657 + $0x10] sm:$0xf] %vm569, %v643
      %663 = vst.msk [vmem:[%s657 + $0x14] sm:$0x1] %vm572, %v644
      %664 = vst.msk [vmem:[%s657 + $0x18] sm:$0xf] %vm569, %v645
      %665 = vst.msk [vmem:[%s657 + $0x1c] sm:$0xf] %vm569, %v646
      %666 = vst.msk [vmem:[%s657 + $0x20] sm:$0x1] %vm572, %v647
      %667 = vst.msk [vmem:[%s657 + $0x24] sm:$0xf] %vm569, %v648
      %668 = vst.msk [vmem:[%s657 + $0x28] sm:$0xf] %vm569, %v649
      %669 = vst.msk [vmem:[%s657 + $0x2c] sm:$0x1] %vm572, %v650
      %670 = vst.msk [vmem:[%s657 + $0x30] sm:$0xf] %vm569, %v651
      %671 = vst.msk [vmem:[%s657 + $0x34] sm:$0xf] %vm569, %v652
      %672 = vst.msk [vmem:[%s657 + $0x38] sm:$0x1] %vm572, %v653
      %673 = vst.msk [vmem:[%s657 + $0x3c] sm:$0xf] %vm569, %v654
      %674 = vst.msk [vmem:[%s657 + $0x40] sm:$0xf] %vm569, %v655
      %675 = vst.msk [vmem:[%s657 + $0x44] sm:$0x1] %vm572, %v656
      %vm676 = vcmask 388224
      %677 = vst.msk [vmem:[#allocation2] sm:$0xf] %vm676, 0
      %678 = vst.msk [vmem:[#allocation2 + $0x4] sm:$0xf] %vm676, 0
      %vm679 = vcmask 385152
      %680 = vst.msk [vmem:[#allocation2 + $0x8] sm:$0x1] %vm679, 0
      %s681 = scalar_lea.vmem [#allocation2], 228
      %682 = vst.msk [vmem:[%s681] sm:$0xf] %vm676, 0
      %683 = vst.msk [vmem:[%s681 + $0x4] sm:$0xf] %vm676, 0
      %684 = vst.msk [vmem:[%s681 + $0x8] sm:$0x1] %vm679, 0
      %vm685 = vcmask 385152
      %vm686 = vsmask.f32 256
      %vm687 = vmand %vm685, %vm686
      %v688 = vld [vmem:[#allocation2] sm:$0x1]
      %v689 = vsel %vm687, 0, %v688
      %690 = vst [vmem:[#allocation2] sm:$0x1] %v689
      %v691 = vld [vmem:[#allocation2 + $0xc] sm:$0x1]
      %v692 = vsel %vm687, 0, %v691
      %693 = vst [vmem:[#allocation2 + $0xc] sm:$0x1] %v692
      %v694 = vld [vmem:[#allocation2 + $0x18] sm:$0x1]
      %v695 = vsel %vm687, 0, %v694
      %696 = vst [vmem:[#allocation2 + $0x18] sm:$0x1] %v695
      %v697 = vld [vmem:[#allocation2 + $0x24] sm:$0x1]
      %v698 = vsel %vm687, 0, %v697
      %699 = vst [vmem:[#allocation2 + $0x24] sm:$0x1] %v698
      %v700 = vld [vmem:[#allocation2 + $0x30] sm:$0x1]
      %v701 = vsel %vm687, 0, %v700
      %702 = vst [vmem:[#allocation2 + $0x30] sm:$0x1] %v701
      %v703 = vld [vmem:[#allocation2 + $0x3c] sm:$0x1]
      %v704 = vsel %vm687, 0, %v703
      %705 = vst [vmem:[#allocation2 + $0x3c] sm:$0x1] %v704
      %v706 = vld [vmem:[#allocation2 + $0x48] sm:$0x1]
      %v707 = vsel %vm687, 0, %v706
      %708 = vst [vmem:[#allocation2 + $0x48] sm:$0x1] %v707
      %v709 = vld [vmem:[#allocation2 + $0x54] sm:$0x1]
      %v710 = vsel %vm687, 0, %v709
      %711 = vst [vmem:[#allocation2 + $0x54] sm:$0x1] %v710
      %v712 = vld [vmem:[#allocation2 + $0x60] sm:$0x1]
      %v713 = vsel %vm687, 0, %v712
      %714 = vst [vmem:[#allocation2 + $0x60] sm:$0x1] %v713
      %v715 = vld [vmem:[#allocation2 + $0x6c] sm:$0x1]
      %v716 = vsel %vm687, 0, %v715
      %717 = vst [vmem:[#allocation2 + $0x6c] sm:$0x1] %v716
      %v718 = vld [vmem:[#allocation2 + $0x78] sm:$0x1]
      %v719 = vsel %vm687, 0, %v718
      %720 = vst [vmem:[#allocation2 + $0x78] sm:$0x1] %v719
      %v721 = vld [vmem:[#allocation2 + $0x84] sm:$0x1]
      %v722 = vsel %vm687, 0, %v721
      %723 = vst [vmem:[#allocation2 + $0x84] sm:$0x1] %v722
      %v724 = vld [vmem:[#allocation2 + $0x90] sm:$0x1]
      %v725 = vsel %vm687, 0, %v724
      %726 = vst [vmem:[#allocation2 + $0x90] sm:$0x1] %v725
      %v727 = vld [vmem:[#allocation2 + $0x9c] sm:$0x1]
      %v728 = vsel %vm687, 0, %v727
      %729 = vst [vmem:[#allocation2 + $0x9c] sm:$0x1] %v728
      %v730 = vld [vmem:[#allocation2 + $0xa8] sm:$0x1]
      %v731 = vsel %vm687, 0, %v730
      %732 = vst [vmem:[#allocation2 + $0xa8] sm:$0x1] %v731
      %v733 = vld [vmem:[#allocation2 + $0xb4] sm:$0x1]
      %v734 = vsel %vm687, 0, %v733
      %735 = vst [vmem:[#allocation2 + $0xb4] sm:$0x1] %v734
      %v736 = vld [vmem:[#allocation2 + $0xc0] sm:$0x1]
      %v737 = vsel %vm687, 0, %v736
      %738 = vst [vmem:[#allocation2 + $0xc0] sm:$0x1] %v737
      %v739 = vld [vmem:[#allocation2 + $0xcc] sm:$0x1]
      %v740 = vsel %vm687, 0, %v739
      %741 = vst [vmem:[#allocation2 + $0xcc] sm:$0x1] %v740
      %v742 = vld [vmem:[#allocation2 + $0xd8] sm:$0x1]
      %v743 = vsel %vm687, 0, %v742
      %744 = vst [vmem:[#allocation2 + $0xd8] sm:$0x1] %v743
      %v745 = vld [vmem:[#allocation2 + $0xe4] sm:$0x1]
      %v746 = vsel %vm687, 0, %v745
      %747 = vst [vmem:[#allocation2 + $0xe4] sm:$0x1] %v746
      %vm748 = vsmask.f32 7938
      %vm749 = vmand %vm685, %vm748
      %v750 = vld [vmem:[#allocation2 + $0x8] sm:$0x1]
      %v751 = vsel %vm749, 0, %v750
      %752 = vst [vmem:[#allocation2 + $0x8] sm:$0x1] %v751
      %v753 = vld [vmem:[#allocation2 + $0x14] sm:$0x1]
      %v754 = vsel %vm749, 0, %v753
      %755 = vst [vmem:[#allocation2 + $0x14] sm:$0x1] %v754
      %v756 = vld [vmem:[#allocation2 + $0x20] sm:$0x1]
      %v757 = vsel %vm749, 0, %v756
      %758 = vst [vmem:[#allocation2 + $0x20] sm:$0x1] %v757
      %v759 = vld [vmem:[#allocation2 + $0x2c] sm:$0x1]
      %v760 = vsel %vm749, 0, %v759
      %761 = vst [vmem:[#allocation2 + $0x2c] sm:$0x1] %v760
      %v762 = vld [vmem:[#allocation2 + $0x38] sm:$0x1]
      %v763 = vsel %vm749, 0, %v762
      %764 = vst [vmem:[#allocation2 + $0x38] sm:$0x1] %v763
      %v765 = vld [vmem:[#allocation2 + $0x44] sm:$0x1]
      %v766 = vsel %vm749, 0, %v765
      %767 = vst [vmem:[#allocation2 + $0x44] sm:$0x1] %v766
      %v768 = vld [vmem:[#allocation2 + $0x50] sm:$0x1]
      %v769 = vsel %vm749, 0, %v768
      %770 = vst [vmem:[#allocation2 + $0x50] sm:$0x1] %v769
      %v771 = vld [vmem:[#allocation2 + $0x5c] sm:$0x1]
      %v772 = vsel %vm749, 0, %v771
      %773 = vst [vmem:[#allocation2 + $0x5c] sm:$0x1] %v772
      %v774 = vld [vmem:[#allocation2 + $0x68] sm:$0x1]
      %v775 = vsel %vm749, 0, %v774
      %776 = vst [vmem:[#allocation2 + $0x68] sm:$0x1] %v775
      %v777 = vld [vmem:[#allocation2 + $0x74] sm:$0x1]
      %v778 = vsel %vm749, 0, %v777
      %779 = vst [vmem:[#allocation2 + $0x74] sm:$0x1] %v778
      %v780 = vld [vmem:[#allocation2 + $0x80] sm:$0x1]
      %v781 = vsel %vm749, 0, %v780
      %782 = vst [vmem:[#allocation2 + $0x80] sm:$0x1] %v781
      %v783 = vld [vmem:[#allocation2 + $0x8c] sm:$0x1]
      %v784 = vsel %vm749, 0, %v783
      %785 = vst [vmem:[#allocation2 + $0x8c] sm:$0x1] %v784
      %v786 = vld [vmem:[#allocation2 + $0x98] sm:$0x1]
      %v787 = vsel %vm749, 0, %v786
      %788 = vst [vmem:[#allocation2 + $0x98] sm:$0x1] %v787
      %v789 = vld [vmem:[#allocation2 + $0xa4] sm:$0x1]
      %v790 = vsel %vm749, 0, %v789
      %791 = vst [vmem:[#allocation2 + $0xa4] sm:$0x1] %v790
      %v792 = vld [vmem:[#allocation2 + $0xb0] sm:$0x1]
      %v793 = vsel %vm749, 0, %v792
      %794 = vst [vmem:[#allocation2 + $0xb0] sm:$0x1] %v793
      %v795 = vld [vmem:[#allocation2 + $0xbc] sm:$0x1]
      %v796 = vsel %vm749, 0, %v795
      %797 = vst [vmem:[#allocation2 + $0xbc] sm:$0x1] %v796
      %v798 = vld [vmem:[#allocation2 + $0xc8] sm:$0x1]
      %v799 = vsel %vm749, 0, %v798
      %800 = vst [vmem:[#allocation2 + $0xc8] sm:$0x1] %v799
      %v801 = vld [vmem:[#allocation2 + $0xd4] sm:$0x1]
      %v802 = vsel %vm749, 0, %v801
      %803 = vst [vmem:[#allocation2 + $0xd4] sm:$0x1] %v802
      %v804 = vld [vmem:[#allocation2 + $0xe0] sm:$0x1]
      %v805 = vsel %vm749, 0, %v804
      %806 = vst [vmem:[#allocation2 + $0xe0] sm:$0x1] %v805
      %v807 = vld [vmem:[#allocation2 + $0xec] sm:$0x1]
      %v808 = vsel %vm749, 0, %v807
      %809 = vst [vmem:[#allocation2 + $0xec] sm:$0x1] %v808
      %p810 = scmp.eq.s32.totalorder %s29, 0
      %p811 = scmp.eq.s32.totalorder %s29, 1
      %v812 = vld [vmem:[#allocation2] sm:$0xf]
      %v813 = vld [vmem:[#allocation2 + $0x4] sm:$0xf]
      %v814 = vld [vmem:[#allocation2 + $0xc] sm:$0xf]
      %v815 = vld [vmem:[#allocation2 + $0x10] sm:$0xf]
      %v816 = vld [vmem:[#allocation2 + $0x18] sm:$0xf]
      %v817 = vld [vmem:[#allocation2 + $0x1c] sm:$0xf]
      %v818 = vld [vmem:[#allocation2 + $0x24] sm:$0xf]
      %v819 = vld [vmem:[#allocation2 + $0x28] sm:$0xf]
      %v820 = vld [vmem:[#allocation2 + $0x30] sm:$0xf]
      %v821 = vld [vmem:[#allocation2 + $0x34] sm:$0xf]
      %v822 = vld [vmem:[#allocation2 + $0x3c] sm:$0xf]
      %v823 = vld [vmem:[#allocation2 + $0x40] sm:$0xf]
      %v824 = vld [vmem:[#allocation2 + $0x48] sm:$0xf]
      %v825 = vld [vmem:[#allocation2 + $0x4c] sm:$0xf]
      %v826 = vld [vmem:[#allocation2 + $0x54] sm:$0xf]
      %v827 = vld [vmem:[#allocation2 + $0x58] sm:$0xf]
      %v828 = vld [vmem:[#allocation2 + $0x60] sm:$0xf]
      %v829 = vld [vmem:[#allocation2 + $0x64] sm:$0xf]
      %v830 = vld [vmem:[#allocation2 + $0x6c] sm:$0xf]
      %v831 = vld [vmem:[#allocation2 + $0x70] sm:$0xf]
      %v832 = vld [vmem:[#allocation2 + $0x78] sm:$0xf]
      %v833 = vld [vmem:[#allocation2 + $0x7c] sm:$0xf]
      %v834 = vld [vmem:[#allocation2 + $0x84] sm:$0xf]
      %v835 = vld [vmem:[#allocation2 + $0x88] sm:$0xf]
      %v836 = vld [vmem:[#allocation2 + $0x90] sm:$0xf]
      %v837 = vld [vmem:[#allocation2 + $0x94] sm:$0xf]
      %v838 = vld [vmem:[#allocation2 + $0x9c] sm:$0xf]
      %v839 = vld [vmem:[#allocation2 + $0xa0] sm:$0xf]
      %v840 = vld [vmem:[#allocation2 + $0xa8] sm:$0xf]
      %v841 = vld [vmem:[#allocation2 + $0xac] sm:$0xf]
      %v842 = vld [vmem:[#allocation2 + $0xb4] sm:$0xf]
      %v843 = vld [vmem:[#allocation2 + $0xb8] sm:$0xf]
      %v844 = vld [vmem:[#allocation2 + $0xc0] sm:$0xf]
      %v845 = vld [vmem:[#allocation2 + $0xc4] sm:$0xf]
      %v846 = vld [vmem:[#allocation2 + $0xcc] sm:$0xf]
      %v847 = vld [vmem:[#allocation2 + $0xd0] sm:$0xf]
      %v848 = vld [vmem:[#allocation2 + $0xd8] sm:$0xf]
      %v849 = vld [vmem:[#allocation2 + $0xdc] sm:$0xf]
      %v850 = vld [vmem:[#allocation2 + $0xe4] sm:$0xf]
      %v851 = vld [vmem:[#allocation2 + $0xe8] sm:$0xf]
      %v852 = vld [vmem:[#allocation2 + $0x8] sm:$0x1]
      %v853 = vld [vmem:[#allocation2 + $0x14] sm:$0x1]
      %v854 = vld [vmem:[#allocation2 + $0x20] sm:$0x1]
      %v855 = vld [vmem:[#allocation2 + $0x2c] sm:$0x1]
      %v856 = vld [vmem:[#allocation2 + $0x38] sm:$0x1]
      %v857 = vld [vmem:[#allocation2 + $0x44] sm:$0x1]
      %v858 = vld [vmem:[#allocation2 + $0x50] sm:$0x1]
      %v859 = vld [vmem:[#allocation2 + $0x5c] sm:$0x1]
      %v860 = vld [vmem:[#allocation2 + $0x68] sm:$0x1]
      %v861 = vld [vmem:[#allocation2 + $0x74] sm:$0x1]
      %v862 = vld [vmem:[#allocation2 + $0x80] sm:$0x1]
      %v863 = vld [vmem:[#allocation2 + $0x8c] sm:$0x1]
      %v864 = vld [vmem:[#allocation2 + $0x98] sm:$0x1]
      %v865 = vld [vmem:[#allocation2 + $0xa4] sm:$0x1]
      %v866 = vld [vmem:[#allocation2 + $0xb0] sm:$0x1]
      %v867 = vld [vmem:[#allocation2 + $0xbc] sm:$0x1]
      %v868 = vld [vmem:[#allocation2 + $0xc8] sm:$0x1]
      %v869 = vld [vmem:[#allocation2 + $0xd4] sm:$0x1]
      %v870 = vld [vmem:[#allocation2 + $0xe0] sm:$0x1]
      %v871 = vld [vmem:[#allocation2 + $0xec] sm:$0x1]
      %v872 = vld [vmem:[#allocation2] sm:$0xe]
      %v873 = vld [vmem:[#allocation2 + $0xc] sm:$0xe]
      %v874 = vld [vmem:[#allocation2 + $0x18] sm:$0xe]
      %v875 = vld [vmem:[#allocation2 + $0x24] sm:$0xe]
      %v876 = vld [vmem:[#allocation2 + $0x30] sm:$0xe]
      %v877 = vld [vmem:[#allocation2 + $0x3c] sm:$0xe]
      %v878 = vld [vmem:[#allocation2 + $0x48] sm:$0xe]
      %v879 = vld [vmem:[#allocation2 + $0x54] sm:$0xe]
      %v880 = vld [vmem:[#allocation2 + $0x60] sm:$0xe]
      %v881 = vld [vmem:[#allocation2 + $0x6c] sm:$0xe]
      %v882 = vld [vmem:[#allocation2 + $0x78] sm:$0xe]
      %v883 = vld [vmem:[#allocation2 + $0x84] sm:$0xe]
      %v884 = vld [vmem:[#allocation2 + $0x90] sm:$0xe]
      %v885 = vld [vmem:[#allocation2 + $0x9c] sm:$0xe]
      %v886 = vld [vmem:[#allocation2 + $0xa8] sm:$0xe]
      %v887 = vld [vmem:[#allocation2 + $0xb4] sm:$0xe]
      %v888 = vld [vmem:[#allocation2 + $0xc0] sm:$0xe]
      %v889 = vld [vmem:[#allocation2 + $0xcc] sm:$0xe]
      %v890 = vld [vmem:[#allocation2 + $0xd8] sm:$0xe]
      %v891 = vld [vmem:[#allocation2 + $0xe4] sm:$0xe]
      %v932 = vunpack.c.l.b16 %v812
      %v933 = vunpack.c.l.b16 %v813
      %v934 = vunpack.c.l.b16 %v814
      %v935 = vunpack.c.l.b16 %v815
      %v936 = vunpack.c.l.b16 %v816
      %v937 = vunpack.c.l.b16 %v817
      %v938 = vunpack.c.l.b16 %v818
      %v939 = vunpack.c.l.b16 %v819
      %v940 = vunpack.c.l.b16 %v820
      %v941 = vunpack.c.l.b16 %v821
      %v942 = vunpack.c.l.b16 %v822
      %v943 = vunpack.c.l.b16 %v823
      %v944 = vunpack.c.l.b16 %v824
      %v945 = vunpack.c.l.b16 %v825
      %v946 = vunpack.c.l.b16 %v826
      %v947 = vunpack.c.l.b16 %v827
      %v948 = vunpack.c.l.b16 %v828
      %v949 = vunpack.c.l.b16 %v829
      %v950 = vunpack.c.l.b16 %v830
      %v951 = vunpack.c.l.b16 %v831
      %v952 = vunpack.c.l.b16 %v832
      %v953 = vunpack.c.l.b16 %v833
      %v954 = vunpack.c.l.b16 %v834
      %v955 = vunpack.c.l.b16 %v835
      %v956 = vunpack.c.l.b16 %v836
      %v957 = vunpack.c.l.b16 %v837
      %v958 = vunpack.c.l.b16 %v838
      %v959 = vunpack.c.l.b16 %v839
      %v960 = vunpack.c.l.b16 %v840
      %v961 = vunpack.c.l.b16 %v841
      %v962 = vunpack.c.l.b16 %v842
      %v963 = vunpack.c.l.b16 %v843
      %v964 = vunpack.c.l.b16 %v844
      %v965 = vunpack.c.l.b16 %v845
      %v966 = vunpack.c.l.b16 %v846
      %v967 = vunpack.c.l.b16 %v847
      %v968 = vunpack.c.l.b16 %v848
      %v969 = vunpack.c.l.b16 %v849
      %v970 = vunpack.c.l.b16 %v850
      %v971 = vunpack.c.l.b16 %v851
      %v972 = vpack.c.b16 %v933, %v932
      %v973 = vpack.c.b16 %v935, %v934
      %v974 = vpack.c.b16 %v937, %v936
      %v975 = vpack.c.b16 %v939, %v938
      %v976 = vpack.c.b16 %v941, %v940
      %v977 = vpack.c.b16 %v943, %v942
      %v978 = vpack.c.b16 %v945, %v944
      %v979 = vpack.c.b16 %v947, %v946
      %v980 = vpack.c.b16 %v949, %v948
      %v981 = vpack.c.b16 %v951, %v950
      %v982 = vpack.c.b16 %v953, %v952
      %v983 = vpack.c.b16 %v955, %v954
      %v984 = vpack.c.b16 %v957, %v956
      %v985 = vpack.c.b16 %v959, %v958
      %v986 = vpack.c.b16 %v961, %v960
      %v987 = vpack.c.b16 %v963, %v962
      %v988 = vpack.c.b16 %v965, %v964
      %v989 = vpack.c.b16 %v967, %v966
      %v990 = vpack.c.b16 %v969, %v968
      %v991 = vpack.c.b16 %v971, %v970
      %v1012 = vunpack.c.l.b16 %v852
      %v1013 = vunpack.c.l.b16 %v853
      %v1014 = vunpack.c.l.b16 %v854
      %v1015 = vunpack.c.l.b16 %v855
      %v1016 = vunpack.c.l.b16 %v856
      %v1017 = vunpack.c.l.b16 %v857
      %v1018 = vunpack.c.l.b16 %v858
      %v1019 = vunpack.c.l.b16 %v859
      %v1020 = vunpack.c.l.b16 %v860
      %v1021 = vunpack.c.l.b16 %v861
      %v1022 = vunpack.c.l.b16 %v862
      %v1023 = vunpack.c.l.b16 %v863
      %v1024 = vunpack.c.l.b16 %v864
      %v1025 = vunpack.c.l.b16 %v865
      %v1026 = vunpack.c.l.b16 %v866
      %v1027 = vunpack.c.l.b16 %v867
      %v1028 = vunpack.c.l.b16 %v868
      %v1029 = vunpack.c.l.b16 %v869
      %v1030 = vunpack.c.l.b16 %v870
      %v1031 = vunpack.c.l.b16 %v871
      %v1032 = vpack.c.b16 %v1012, %v1012
      %v1033 = vpack.c.b16 %v1013, %v1013
      %v1034 = vpack.c.b16 %v1014, %v1014
      %v1035 = vpack.c.b16 %v1015, %v1015
      %v1036 = vpack.c.b16 %v1016, %v1016
      %v1037 = vpack.c.b16 %v1017, %v1017
      %v1038 = vpack.c.b16 %v1018, %v1018
      %v1039 = vpack.c.b16 %v1019, %v1019
      %v1040 = vpack.c.b16 %v1020, %v1020
      %v1041 = vpack.c.b16 %v1021, %v1021
      %v1042 = vpack.c.b16 %v1022, %v1022
      %v1043 = vpack.c.b16 %v1023, %v1023
      %v1044 = vpack.c.b16 %v1024, %v1024
      %v1045 = vpack.c.b16 %v1025, %v1025
      %v1046 = vpack.c.b16 %v1026, %v1026
      %v1047 = vpack.c.b16 %v1027, %v1027
      %v1048 = vpack.c.b16 %v1028, %v1028
      %v1049 = vpack.c.b16 %v1029, %v1029
      %v1050 = vpack.c.b16 %v1030, %v1030
      %v1051 = vpack.c.b16 %v1031, %v1031
      %vm1052 = vsmask.f32 7424
      %v1054 = vshrl.u32 %v972, 16
      %v1056 = vshll.u32 %v972, 16
      %v1058 = vrot.slane %v1056, 1
      %v1059 = vor.u32 %v1054, %v1058
      %v1061 = vshll.u32 %v1032, 16
      %v1063 = vrot.slane %v1061, 1
      %v1064 = vsel %vm1052, %v1059, %v1063
      %v1066 = vshrl.u32 %v973, 16
      %v1068 = vshll.u32 %v973, 16
      %v1070 = vrot.slane %v1068, 1
      %v1071 = vor.u32 %v1066, %v1070
      %v1073 = vshll.u32 %v1033, 16
      %v1075 = vrot.slane %v1073, 1
      %v1076 = vsel %vm1052, %v1071, %v1075
      %v1078 = vshrl.u32 %v974, 16
      %v1080 = vshll.u32 %v974, 16
      %v1082 = vrot.slane %v1080, 1
      %v1083 = vor.u32 %v1078, %v1082
      %v1085 = vshll.u32 %v1034, 16
      %v1087 = vrot.slane %v1085, 1
      %v1088 = vsel %vm1052, %v1083, %v1087
      %v1090 = vshrl.u32 %v975, 16
      %v1092 = vshll.u32 %v975, 16
      %v1094 = vrot.slane %v1092, 1
      %v1095 = vor.u32 %v1090, %v1094
      %v1097 = vshll.u32 %v1035, 16
      %v1099 = vrot.slane %v1097, 1
      %v1100 = vsel %vm1052, %v1095, %v1099
      %v1102 = vshrl.u32 %v976, 16
      %v1104 = vshll.u32 %v976, 16
      %v1106 = vrot.slane %v1104, 1
      %v1107 = vor.u32 %v1102, %v1106
      %v1109 = vshll.u32 %v1036, 16
      %v1111 = vrot.slane %v1109, 1
      %v1112 = vsel %vm1052, %v1107, %v1111
      %v1114 = vshrl.u32 %v977, 16
      %v1116 = vshll.u32 %v977, 16
      %v1118 = vrot.slane %v1116, 1
      %v1119 = vor.u32 %v1114, %v1118
      %v1121 = vshll.u32 %v1037, 16
      %v1123 = vrot.slane %v1121, 1
      %v1124 = vsel %vm1052, %v1119, %v1123
      %v1126 = vshrl.u32 %v978, 16
      %v1128 = vshll.u32 %v978, 16
      %v1130 = vrot.slane %v1128, 1
      %v1131 = vor.u32 %v1126, %v1130
      %v1133 = vshll.u32 %v1038, 16
      %v1135 = vrot.slane %v1133, 1
      %v1136 = vsel %vm1052, %v1131, %v1135
      %v1138 = vshrl.u32 %v979, 16
      %v1140 = vshll.u32 %v979, 16
      %v1142 = vrot.slane %v1140, 1
      %v1143 = vor.u32 %v1138, %v1142
      %v1145 = vshll.u32 %v1039, 16
      %v1147 = vrot.slane %v1145, 1
      %v1148 = vsel %vm1052, %v1143, %v1147
      %v1150 = vshrl.u32 %v980, 16
      %v1152 = vshll.u32 %v980, 16
      %v1154 = vrot.slane %v1152, 1
      %v1155 = vor.u32 %v1150, %v1154
      %v1157 = vshll.u32 %v1040, 16
      %v1159 = vrot.slane %v1157, 1
      %v1160 = vsel %vm1052, %v1155, %v1159
      %v1162 = vshrl.u32 %v981, 16
      %v1164 = vshll.u32 %v981, 16
      %v1166 = vrot.slane %v1164, 1
      %v1167 = vor.u32 %v1162, %v1166
      %v1169 = vshll.u32 %v1041, 16
      %v1171 = vrot.slane %v1169, 1
      %v1172 = vsel %vm1052, %v1167, %v1171
      %v1174 = vshrl.u32 %v982, 16
      %v1176 = vshll.u32 %v982, 16
      %v1178 = vrot.slane %v1176, 1
      %v1179 = vor.u32 %v1174, %v1178
      %v1181 = vshll.u32 %v1042, 16
      %v1183 = vrot.slane %v1181, 1
      %v1184 = vsel %vm1052, %v1179, %v1183
      %v1186 = vshrl.u32 %v983, 16
      %v1188 = vshll.u32 %v983, 16
      %v1190 = vrot.slane %v1188, 1
      %v1191 = vor.u32 %v1186, %v1190
      %v1193 = vshll.u32 %v1043, 16
      %v1195 = vrot.slane %v1193, 1
      %v1196 = vsel %vm1052, %v1191, %v1195
      %v1198 = vshrl.u32 %v984, 16
      %v1200 = vshll.u32 %v984, 16
      %v1202 = vrot.slane %v1200, 1
      %v1203 = vor.u32 %v1198, %v1202
      %v1205 = vshll.u32 %v1044, 16
      %v1207 = vrot.slane %v1205, 1
      %v1208 = vsel %vm1052, %v1203, %v1207
      %v1210 = vshrl.u32 %v985, 16
      %v1212 = vshll.u32 %v985, 16
      %v1214 = vrot.slane %v1212, 1
      %v1215 = vor.u32 %v1210, %v1214
      %v1217 = vshll.u32 %v1045, 16
      %v1219 = vrot.slane %v1217, 1
      %v1220 = vsel %vm1052, %v1215, %v1219
      %v1222 = vshrl.u32 %v986, 16
      %v1224 = vshll.u32 %v986, 16
      %v1226 = vrot.slane %v1224, 1
      %v1227 = vor.u32 %v1222, %v1226
      %v1229 = vshll.u32 %v1046, 16
      %v1231 = vrot.slane %v1229, 1
      %v1232 = vsel %vm1052, %v1227, %v1231
      %v1234 = vshrl.u32 %v987, 16
      %v1236 = vshll.u32 %v987, 16
      %v1238 = vrot.slane %v1236, 1
      %v1239 = vor.u32 %v1234, %v1238
      %v1241 = vshll.u32 %v1047, 16
      %v1243 = vrot.slane %v1241, 1
      %v1244 = vsel %vm1052, %v1239, %v1243
      %v1246 = vshrl.u32 %v988, 16
      %v1248 = vshll.u32 %v988, 16
      %v1250 = vrot.slane %v1248, 1
      %v1251 = vor.u32 %v1246, %v1250
      %v1253 = vshll.u32 %v1048, 16
      %v1255 = vrot.slane %v1253, 1
      %v1256 = vsel %vm1052, %v1251, %v1255
      %v1258 = vshrl.u32 %v989, 16
      %v1260 = vshll.u32 %v989, 16
      %v1262 = vrot.slane %v1260, 1
      %v1263 = vor.u32 %v1258, %v1262
      %v1265 = vshll.u32 %v1049, 16
      %v1267 = vrot.slane %v1265, 1
      %v1268 = vsel %vm1052, %v1263, %v1267
      %v1270 = vshrl.u32 %v990, 16
      %v1272 = vshll.u32 %v990, 16
      %v1274 = vrot.slane %v1272, 1
      %v1275 = vor.u32 %v1270, %v1274
      %v1277 = vshll.u32 %v1050, 16
      %v1279 = vrot.slane %v1277, 1
      %v1280 = vsel %vm1052, %v1275, %v1279
      %v1282 = vshrl.u32 %v991, 16
      %v1284 = vshll.u32 %v991, 16
      %v1286 = vrot.slane %v1284, 1
      %v1287 = vor.u32 %v1282, %v1286
      %v1289 = vshll.u32 %v1051, 16
      %v1291 = vrot.slane %v1289, 1
      %v1292 = vsel %vm1052, %v1287, %v1291
      %1293 = vrot.lane.b32.xlu0 %v1064, 16
      %v1294 = vpop.permute.xlu0 %1293
      %1295 = vrot.lane.b32.xlu0 %v1076, 16
      %v1296 = vpop.permute.xlu0 %1295
      %1297 = vrot.lane.b32.xlu0 %v1088, 16
      %v1298 = vpop.permute.xlu0 %1297
      %1299 = vrot.lane.b32.xlu0 %v1100, 16
      %v1300 = vpop.permute.xlu0 %1299
      %1301 = vrot.lane.b32.xlu0 %v1112, 16
      %v1302 = vpop.permute.xlu0 %1301
      %1303 = vrot.lane.b32.xlu0 %v1124, 16
      %v1304 = vpop.permute.xlu0 %1303
      %1305 = vrot.lane.b32.xlu0 %v1136, 16
      %v1306 = vpop.permute.xlu0 %1305
      %1307 = vrot.lane.b32.xlu0 %v1148, 16
      %v1308 = vpop.permute.xlu0 %1307
      %1309 = vrot.lane.b32.xlu0 %v1160, 16
      %v1310 = vpop.permute.xlu0 %1309
      %1311 = vrot.lane.b32.xlu0 %v1172, 16
      %v1312 = vpop.permute.xlu0 %1311
      %1313 = vrot.lane.b32.xlu0 %v1184, 16
      %v1314 = vpop.permute.xlu0 %1313
      %1315 = vrot.lane.b32.xlu0 %v1196, 16
      %v1316 = vpop.permute.xlu0 %1315
      %1317 = vrot.lane.b32.xlu0 %v1208, 16
      %v1318 = vpop.permute.xlu0 %1317
      %1319 = vrot.lane.b32.xlu0 %v1220, 16
      %v1320 = vpop.permute.xlu0 %1319
      %1321 = vrot.lane.b32.xlu0 %v1232, 16
      %v1322 = vpop.permute.xlu0 %1321
      %1323 = vrot.lane.b32.xlu0 %v1244, 16
      %v1324 = vpop.permute.xlu0 %1323
      %1325 = vrot.lane.b32.xlu0 %v1256, 16
      %v1326 = vpop.permute.xlu0 %1325
      %1327 = vrot.lane.b32.xlu0 %v1268, 16
      %v1328 = vpop.permute.xlu0 %1327
      %1329 = vrot.lane.b32.xlu0 %v1280, 16
      %v1330 = vpop.permute.xlu0 %1329
      %1331 = vrot.lane.b32.xlu0 %v1292, 16
      %v1332 = vpop.permute.xlu0 %1331
      %v1353 = vunpack.c.l.b16 %v872
      %v1354 = vunpack.c.l.b16 %v873
      %v1355 = vunpack.c.l.b16 %v874
      %v1356 = vunpack.c.l.b16 %v875
      %v1357 = vunpack.c.l.b16 %v876
      %v1358 = vunpack.c.l.b16 %v877
      %v1359 = vunpack.c.l.b16 %v878
      %v1360 = vunpack.c.l.b16 %v879
      %v1361 = vunpack.c.l.b16 %v880
      %v1362 = vunpack.c.l.b16 %v881
      %v1363 = vunpack.c.l.b16 %v882
      %v1364 = vunpack.c.l.b16 %v883
      %v1365 = vunpack.c.l.b16 %v884
      %v1366 = vunpack.c.l.b16 %v885
      %v1367 = vunpack.c.l.b16 %v886
      %v1368 = vunpack.c.l.b16 %v887
      %v1369 = vunpack.c.l.b16 %v888
      %v1370 = vunpack.c.l.b16 %v889
      %v1371 = vunpack.c.l.b16 %v890
      %v1372 = vunpack.c.l.b16 %v891
      %v1373 = vpack.c.b16 %v933, %v1353
      %v1374 = vpack.c.b16 %v935, %v1354
      %v1375 = vpack.c.b16 %v937, %v1355
      %v1376 = vpack.c.b16 %v939, %v1356
      %v1377 = vpack.c.b16 %v941, %v1357
      %v1378 = vpack.c.b16 %v943, %v1358
      %v1379 = vpack.c.b16 %v945, %v1359
      %v1380 = vpack.c.b16 %v947, %v1360
      %v1381 = vpack.c.b16 %v949, %v1361
      %v1382 = vpack.c.b16 %v951, %v1362
      %v1383 = vpack.c.b16 %v953, %v1363
      %v1384 = vpack.c.b16 %v955, %v1364
      %v1385 = vpack.c.b16 %v957, %v1365
      %v1386 = vpack.c.b16 %v959, %v1366
      %v1387 = vpack.c.b16 %v961, %v1367
      %v1388 = vpack.c.b16 %v963, %v1368
      %v1389 = vpack.c.b16 %v965, %v1369
      %v1390 = vpack.c.b16 %v967, %v1370
      %v1391 = vpack.c.b16 %v969, %v1371
      %v1392 = vpack.c.b16 %v971, %v1372
      %vm1393 = vcmask 1046528
      %v1394 = vrot.slane %v1373, 1
      %v1395 = vrot.slane %v1032, 1
      %v1396 = vsel %vm1393, %v1394, %v1395
      %v1397 = vrot.slane %v1374, 1
      %v1398 = vrot.slane %v1033, 1
      %v1399 = vsel %vm1393, %v1397, %v1398
      %v1400 = vrot.slane %v1375, 1
      %v1401 = vrot.slane %v1034, 1
      %v1402 = vsel %vm1393, %v1400, %v1401
      %v1403 = vrot.slane %v1376, 1
      %v1404 = vrot.slane %v1035, 1
      %v1405 = vsel %vm1393, %v1403, %v1404
      %v1406 = vrot.slane %v1377, 1
      %v1407 = vrot.slane %v1036, 1
      %v1408 = vsel %vm1393, %v1406, %v1407
      %v1409 = vrot.slane %v1378, 1
      %v1410 = vrot.slane %v1037, 1
      %v1411 = vsel %vm1393, %v1409, %v1410
      %v1412 = vrot.slane %v1379, 1
      %v1413 = vrot.slane %v1038, 1
      %v1414 = vsel %vm1393, %v1412, %v1413
      %v1415 = vrot.slane %v1380, 1
      %v1416 = vrot.slane %v1039, 1
      %v1417 = vsel %vm1393, %v1415, %v1416
      %v1418 = vrot.slane %v1381, 1
      %v1419 = vrot.slane %v1040, 1
      %v1420 = vsel %vm1393, %v1418, %v1419
      %v1421 = vrot.slane %v1382, 1
      %v1422 = vrot.slane %v1041, 1
      %v1423 = vsel %vm1393, %v1421, %v1422
      %v1424 = vrot.slane %v1383, 1
      %v1425 = vrot.slane %v1042, 1
      %v1426 = vsel %vm1393, %v1424, %v1425
      %v1427 = vrot.slane %v1384, 1
      %v1428 = vrot.slane %v1043, 1
      %v1429 = vsel %vm1393, %v1427, %v1428
      %v1430 = vrot.slane %v1385, 1
      %v1431 = vrot.slane %v1044, 1
      %v1432 = vsel %vm1393, %v1430, %v1431
      %v1433 = vrot.slane %v1386, 1
      %v1434 = vrot.slane %v1045, 1
      %v1435 = vsel %vm1393, %v1433, %v1434
      %v1436 = vrot.slane %v1387, 1
      %v1437 = vrot.slane %v1046, 1
      %v1438 = vsel %vm1393, %v1436, %v1437
      %v1439 = vrot.slane %v1388, 1
      %v1440 = vrot.slane %v1047, 1
      %v1441 = vsel %vm1393, %v1439, %v1440
      %v1442 = vrot.slane %v1389, 1
      %v1443 = vrot.slane %v1048, 1
      %v1444 = vsel %vm1393, %v1442, %v1443
      %v1445 = vrot.slane %v1390, 1
      %v1446 = vrot.slane %v1049, 1
      %v1447 = vsel %vm1393, %v1445, %v1446
      %v1448 = vrot.slane %v1391, 1
      %v1449 = vrot.slane %v1050, 1
      %v1450 = vsel %vm1393, %v1448, %v1449
      %v1451 = vrot.slane %v1392, 1
      %v1452 = vrot.slane %v1051, 1
      %v1453 = vsel %vm1393, %v1451, %v1452
      %1454 = vrot.lane.b32.xlu0 %v1396, 32
      %v1455 = vpop.permute.xlu0 %1454
      %1456 = vrot.lane.b32.xlu0 %v1399, 32
      %v1457 = vpop.permute.xlu0 %1456
      %1458 = vrot.lane.b32.xlu0 %v1402, 32
      %v1459 = vpop.permute.xlu0 %1458
      %1460 = vrot.lane.b32.xlu0 %v1405, 32
      %v1461 = vpop.permute.xlu0 %1460
      %1462 = vrot.lane.b32.xlu0 %v1408, 32
      %v1463 = vpop.permute.xlu0 %1462
      %1464 = vrot.lane.b32.xlu0 %v1411, 32
      %v1465 = vpop.permute.xlu0 %1464
      %1466 = vrot.lane.b32.xlu0 %v1414, 32
      %v1467 = vpop.permute.xlu0 %1466
      %1468 = vrot.lane.b32.xlu0 %v1417, 32
      %v1469 = vpop.permute.xlu0 %1468
      %1470 = vrot.lane.b32.xlu0 %v1420, 32
      %v1471 = vpop.permute.xlu0 %1470
      %1472 = vrot.lane.b32.xlu0 %v1423, 32
      %v1473 = vpop.permute.xlu0 %1472
      %1474 = vrot.lane.b32.xlu0 %v1426, 32
      %v1475 = vpop.permute.xlu0 %1474
      %1476 = vrot.lane.b32.xlu0 %v1429, 32
      %v1477 = vpop.permute.xlu0 %1476
      %1478 = vrot.lane.b32.xlu0 %v1432, 32
      %v1479 = vpop.permute.xlu0 %1478
      %1480 = vrot.lane.b32.xlu0 %v1435, 32
      %v1481 = vpop.permute.xlu0 %1480
      %1482 = vrot.lane.b32.xlu0 %v1438, 32
      %v1483 = vpop.permute.xlu0 %1482
      %1484 = vrot.lane.b32.xlu0 %v1441, 32
      %v1485 = vpop.permute.xlu0 %1484
      %1486 = vrot.lane.b32.xlu0 %v1444, 32
      %v1487 = vpop.permute.xlu0 %1486
      %1488 = vrot.lane.b32.xlu0 %v1447, 32
      %v1489 = vpop.permute.xlu0 %1488
      %1490 = vrot.lane.b32.xlu0 %v1450, 32
      %v1491 = vpop.permute.xlu0 %1490
      %1492 = vrot.lane.b32.xlu0 %v1453, 32
      %v1493 = vpop.permute.xlu0 %1492
      %vm1494 = vcmask 130048
      %v1496 = vsel %vm1494, %v972, %v1294
      %v1498 = vsel %vm1494, %v973, %v1296
      %v1500 = vsel %vm1494, %v974, %v1298
      %v1502 = vsel %vm1494, %v975, %v1300
      %v1504 = vsel %vm1494, %v976, %v1302
      %v1506 = vsel %vm1494, %v977, %v1304
      %v1508 = vsel %vm1494, %v978, %v1306
      %v1510 = vsel %vm1494, %v979, %v1308
      %v1512 = vsel %vm1494, %v980, %v1310
      %v1514 = vsel %vm1494, %v981, %v1312
      %v1516 = vsel %vm1494, %v982, %v1314
      %v1518 = vsel %vm1494, %v983, %v1316
      %v1520 = vsel %vm1494, %v984, %v1318
      %v1522 = vsel %vm1494, %v985, %v1320
      %v1524 = vsel %vm1494, %v986, %v1322
      %v1526 = vsel %vm1494, %v987, %v1324
      %v1528 = vsel %vm1494, %v988, %v1326
      %v1530 = vsel %vm1494, %v989, %v1328
      %v1532 = vsel %vm1494, %v990, %v1330
      %v1534 = vsel %vm1494, %v991, %v1332
      %vm1535 = vcmask 261120
      %v1537 = vsel %vm1535, %v1496, %v1455
      %v1539 = vsel %vm1535, %v1498, %v1457
      %v1541 = vsel %vm1535, %v1500, %v1459
      %v1543 = vsel %vm1535, %v1502, %v1461
      %v1545 = vsel %vm1535, %v1504, %v1463
      %v1547 = vsel %vm1535, %v1506, %v1465
      %v1549 = vsel %vm1535, %v1508, %v1467
      %v1551 = vsel %vm1535, %v1510, %v1469
      %v1553 = vsel %vm1535, %v1512, %v1471
      %v1555 = vsel %vm1535, %v1514, %v1473
      %v1557 = vsel %vm1535, %v1516, %v1475
      %v1559 = vsel %vm1535, %v1518, %v1477
      %v1561 = vsel %vm1535, %v1520, %v1479
      %v1563 = vsel %vm1535, %v1522, %v1481
      %v1565 = vsel %vm1535, %v1524, %v1483
      %v1567 = vsel %vm1535, %v1526, %v1485
      %v1569 = vsel %vm1535, %v1528, %v1487
      %v1571 = vsel %vm1535, %v1530, %v1489
      %v1573 = vsel %vm1535, %v1532, %v1491
      %v1575 = vsel %vm1535, %v1534, %v1493
      %v1576 = vld [vmem:[%s3] sm:$0xf]
      %v1577 = vld [vmem:[%s3 + $0x4] sm:$0xf]
      %v1578 = vld [vmem:[%s3 + $0x8] sm:$0xf]
      %v1579 = vld [vmem:[%s3 + $0xc] sm:$0xf]
      %v1580 = vld [vmem:[%s3 + $0x10] sm:$0xf]
      %v1581 = vld [vmem:[%s3 + $0x14] sm:$0xf]
      %v1588 = vunpack.c.l.b16 %v1576
      %v1589 = vunpack.c.l.b16 %v1577
      %v1590 = vunpack.c.l.b16 %v1578
      %v1591 = vunpack.c.l.b16 %v1579
      %v1592 = vunpack.c.l.b16 %v1580
      %v1593 = vunpack.c.l.b16 %v1581
      %v1594 = vpack.c.b16 %v1589, %v1588
      %v1595 = vpack.c.b16 %v1591, %v1590
      %v1596 = vpack.c.b16 %v1593, %v1592
      %vm1600 = vcmask 392192
      %v1601 = vsel %vm1600, %v1537, 0
      %v1603 = vsel %vm1600, %v1539, 0
      %v1605 = vsel %vm1600, %v1541, 0
      %v1607 = vsel %vm1600, %v1543, 0
      %v1609 = vsel %vm1600, %v1545, 0
      %v1611 = vsel %vm1600, %v1547, 0
      %v1613 = vsel %vm1600, %v1549, 0
      %v1615 = vsel %vm1600, %v1551, 0
      %v1617 = vsel %vm1600, %v1553, 0
      %v1619 = vsel %vm1600, %v1555, 0
      %v1621 = vsel %vm1600, %v1557, 0
      %v1623 = vsel %vm1600, %v1559, 0
      %v1625 = vsel %vm1600, %v1561, 0
      %v1627 = vsel %vm1600, %v1563, 0
      %v1629 = vsel %vm1600, %v1565, 0
      %v1631 = vsel %vm1600, %v1567, 0
      %v1633 = vsel %vm1600, %v1569, 0
      %v1635 = vsel %vm1600, %v1571, 0
      %v1637 = vsel %vm1600, %v1573, 0
      %v1639 = vsel %vm1600, %v1575, 0
      %1641 = vmatprep.subr.bf16.mxu0 0
      %1642 = vmatpush1.bf16.msra.mxu0 %v1594
      %1643 = vmatprep.subr.bf16.mxu0 0
      %1644 = vmatpush1.bf16.msra.mxu0 %v1595
      %1645 = vmatprep.subr.bf16.mxu0 0
      %1646 = vmatpush1.bf16.msra.mxu0 %v1596
      %1647 = vmatprep.subr.bf16.mxu0 0
      %1648 = vmatpush1.bf16.msra.mxu0 0
      %1649 = vmatprep.subr.bf16.mxu0 0
      %1650 = vmatpush1.bf16.msra.mxu0 0
      %1651 = vmatprep.subr.bf16.mxu0 0
      %1652 = vmatpush1.bf16.msra.mxu0 0
      %1653 = vmatprep.subr.bf16.mxu0 0
      %1654 = vmatpush1.bf16.msra.mxu0 0
      %1655 = vmatprep.subr.bf16.mxu0 0
      %1656 = vmatpush1.bf16.msra.mxu0 0
      %1657 = vmatprep.subr.bf16.mxu0 0
      %1658 = vmatpush1.bf16.msra.mxu0 0
      %1659 = vmatprep.subr.bf16.mxu0 0
      %1660 = vmatpush1.bf16.msra.mxu0 0
      %1661 = vmatprep.subr.bf16.mxu0 0
      %1662 = vmatpush1.bf16.msra.mxu0 0
      %1663 = vmatprep.subr.bf16.mxu0 0
      %1664 = vmatpush1.bf16.msra.mxu0 0
      %1665 = vmatprep.subr.bf16.mxu0 0
      %1666 = vmatpush1.bf16.msra.mxu0 0
      %1667 = vmatprep.subr.bf16.mxu0 0
      %1668 = vmatpush1.bf16.msra.mxu0 0
      %1669 = vmatprep.subr.bf16.mxu0 0
      %1670 = vmatpush1.bf16.msra.mxu0 0
      %1671 = vmatprep.subr.bf16.mxu0 0
      %1672 = vmatpush1.bf16.msra.mxu0 0
      %1673 = vmatprep.mubr.bf16.mxu0 0
      %1674 = vmatmul.mubr.bf16.gmra.mrb[0].mxu0 %v1601
      %v1675 = vpop.f32.mrb[0].mxu0
      %v1676 = vadd.f32 0.0, %v1675
      %v1677 = vpop.f32.mrb[0].mxu0
      %v1678 = vpop.f32.mrb[0].mxu0
      %v1679 = vadd.f32 0.0, %v1678
      %v1680 = vpop.f32.mrb[0].mxu0
      %1681 = vmatprep.mubr.bf16.mxu0 0
      %1682 = vmatmul.mubr.bf16.gmra.mrb[0].mxu0 %v1603
      %v1683 = vpop.f32.mrb[0].mxu0
      %v1684 = vadd.f32 0.0, %v1683
      %v1685 = vpop.f32.mrb[0].mxu0
      %v1686 = vpop.f32.mrb[0].mxu0
      %v1687 = vadd.f32 0.0, %v1686
      %v1688 = vpop.f32.mrb[0].mxu0
      %1689 = vmatprep.mubr.bf16.mxu0 0
      %1690 = vmatmul.mubr.bf16.gmra.mrb[0].mxu0 %v1605
      %v1691 = vpop.f32.mrb[0].mxu0
      %v1692 = vadd.f32 0.0, %v1691
      %v1693 = vpop.f32.mrb[0].mxu0
      %v1694 = vpop.f32.mrb[0].mxu0
      %v1695 = vadd.f32 0.0, %v1694
      %v1696 = vpop.f32.mrb[0].mxu0
      %1697 = vmatprep.mubr.bf16.mxu0 0
      %1698 = vmatmul.mubr.bf16.gmra.mrb[0].mxu0 %v1607
      %v1699 = vpop.f32.mrb[0].mxu0
      %v1700 = vadd.f32 0.0, %v1699
      %v1701 = vpop.f32.mrb[0].mxu0
      %v1702 = vpop.f32.mrb[0].mxu0
      %v1703 = vadd.f32 0.0, %v1702
      %v1704 = vpop.f32.mrb[0].mxu0
      %1705 = vmatprep.mubr.bf16.mxu0 0
      %1706 = vmatmul.mubr.bf16.gmra.mrb[0].mxu0 %v1609
      %v1707 = vpop.f32.mrb[0].mxu0
      %v1708 = vadd.f32 0.0, %v1707
      %v1709 = vpop.f32.mrb[0].mxu0
      %v1710 = vpop.f32.mrb[0].mxu0
      %v1711 = vadd.f32 0.0, %v1710
      %v1712 = vpop.f32.mrb[0].mxu0
      %1713 = vmatprep.mubr.bf16.mxu0 0
      %1714 = vmatmul.mubr.bf16.gmra.mrb[0].mxu0 %v1611
      %v1715 = vpop.f32.mrb[0].mxu0
      %v1716 = vadd.f32 0.0, %v1715
      %v1717 = vpop.f32.mrb[0].mxu0
      %v1718 = vpop.f32.mrb[0].mxu0
      %v1719 = vadd.f32 0.0, %v1718
      %v1720 = vpop.f32.mrb[0].mxu0
      %1721 = vmatprep.mubr.bf16.mxu0 0
      %1722 = vmatmul.mubr.bf16.gmra.mrb[0].mxu0 %v1613
      %v1723 = vpop.f32.mrb[0].mxu0
      %v1724 = vadd.f32 0.0, %v1723
      %v1725 = vpop.f32.mrb[0].mxu0
      %v1726 = vpop.f32.mrb[0].mxu0
      %v1727 = vadd.f32 0.0, %v1726
      %v1728 = vpop.f32.mrb[0].mxu0
      %1729 = vmatprep.mubr.bf16.mxu0 0
      %1730 = vmatmul.mubr.bf16.gmra.mrb[0].mxu0 %v1615
      %v1731 = vpop.f32.mrb[0].mxu0
      %v1732 = vadd.f32 0.0, %v1731
      %v1733 = vpop.f32.mrb[0].mxu0
      %v1734 = vpop.f32.mrb[0].mxu0
      %v1735 = vadd.f32 0.0, %v1734
      %v1736 = vpop.f32.mrb[0].mxu0
      %1737 = vmatprep.mubr.bf16.mxu0 0
      %1738 = vmatmul.mubr.bf16.gmra.mrb[0].mxu0 %v1617
      %v1739 = vpop.f32.mrb[0].mxu0
      %v1740 = vadd.f32 0.0, %v1739
      %v1741 = vpop.f32.mrb[0].mxu0
      %v1742 = vpop.f32.mrb[0].mxu0
      %v1743 = vadd.f32 0.0, %v1742
      %v1744 = vpop.f32.mrb[0].mxu0
      %1745 = vmatprep.mubr.bf16.mxu0 0
      %1746 = vmatmul.mubr.bf16.gmra.mrb[0].mxu0 %v1619
      %v1747 = vpop.f32.mrb[0].mxu0
      %v1748 = vadd.f32 0.0, %v1747
      %v1749 = vpop.f32.mrb[0].mxu0
      %v1750 = vpop.f32.mrb[0].mxu0
      %v1751 = vadd.f32 0.0, %v1750
      %v1752 = vpop.f32.mrb[0].mxu0
      %1753 = vmatprep.mubr.bf16.mxu0 0
      %1754 = vmatmul.mubr.bf16.gmra.mrb[0].mxu0 %v1621
      %v1755 = vpop.f32.mrb[0].mxu0
      %v1756 = vadd.f32 0.0, %v1755
      %v1757 = vpop.f32.mrb[0].mxu0
      %v1758 = vpop.f32.mrb[0].mxu0
      %v1759 = vadd.f32 0.0, %v1758
      %v1760 = vpop.f32.mrb[0].mxu0
      %1761 = vmatprep.mubr.bf16.mxu0 0
      %1762 = vmatmul.mubr.bf16.gmra.mrb[0].mxu0 %v1623
      %v1763 = vpop.f32.mrb[0].mxu0
      %v1764 = vadd.f32 0.0, %v1763
      %v1765 = vpop.f32.mrb[0].mxu0
      %v1766 = vpop.f32.mrb[0].mxu0
      %v1767 = vadd.f32 0.0, %v1766
      %v1768 = vpop.f32.mrb[0].mxu0
      %1769 = vmatprep.mubr.bf16.mxu0 0
      %1770 = vmatmul.mubr.bf16.gmra.mrb[0].mxu0 %v1625
      %v1771 = vpop.f32.mrb[0].mxu0
      %v1772 = vadd.f32 0.0, %v1771
      %v1773 = vpop.f32.mrb[0].mxu0
      %v1774 = vpop.f32.mrb[0].mxu0
      %v1775 = vadd.f32 0.0, %v1774
      %v1776 = vpop.f32.mrb[0].mxu0
      %1777 = vmatprep.mubr.bf16.mxu0 0
      %1778 = vmatmul.mubr.bf16.gmra.mrb[0].mxu0 %v1627
      %v1779 = vpop.f32.mrb[0].mxu0
      %v1780 = vadd.f32 0.0, %v1779
      %v1781 = vpop.f32.mrb[0].mxu0
      %v1782 = vpop.f32.mrb[0].mxu0
      %v1783 = vadd.f32 0.0, %v1782
      %v1784 = vpop.f32.mrb[0].mxu0
      %1785 = vmatprep.mubr.bf16.mxu0 0
      %1786 = vmatmul.mubr.bf16.gmra.mrb[0].mxu0 %v1629
      %v1787 = vpop.f32.mrb[0].mxu0
      %v1788 = vadd.f32 0.0, %v1787
      %v1789 = vpop.f32.mrb[0].mxu0
      %v1790 = vpop.f32.mrb[0].mxu0
      %v1791 = vadd.f32 0.0, %v1790
      %v1792 = vpop.f32.mrb[0].mxu0
      %1793 = vmatprep.mubr.bf16.mxu0 0
      %1794 = vmatmul.mubr.bf16.gmra.mrb[0].mxu0 %v1631
      %v1795 = vpop.f32.mrb[0].mxu0
      %v1796 = vadd.f32 0.0, %v1795
      %v1797 = vpop.f32.mrb[0].mxu0
      %v1798 = vpop.f32.mrb[0].mxu0
      %v1799 = vadd.f32 0.0, %v1798
      %v1800 = vpop.f32.mrb[0].mxu0
      %1801 = vmatprep.mubr.bf16.mxu0 0
      %1802 = vmatmul.mubr.bf16.gmra.mrb[0].mxu0 %v1633
      %v1803 = vpop.f32.mrb[0].mxu0
      %v1804 = vadd.f32 0.0, %v1803
      %v1805 = vpop.f32.mrb[0].mxu0
      %v1806 = vpop.f32.mrb[0].mxu0
      %v1807 = vadd.f32 0.0, %v1806
      %v1808 = vpop.f32.mrb[0].mxu0
      %1809 = vmatprep.mubr.bf16.mxu0 0
      %1810 = vmatmul.mubr.bf16.gmra.mrb[0].mxu0 %v1635
      %v1811 = vpop.f32.mrb[0].mxu0
      %v1812 = vadd.f32 0.0, %v1811
      %v1813 = vpop.f32.mrb[0].mxu0
      %v1814 = vpop.f32.mrb[0].mxu0
      %v1815 = vadd.f32 0.0, %v1814
      %v1816 = vpop.f32.mrb[0].mxu0
      %1817 = vmatprep.mubr.bf16.mxu0 0
      %1818 = vmatmul.mubr.bf16.gmra.mrb[0].mxu0 %v1637
      %v1819 = vpop.f32.mrb[0].mxu0
      %v1820 = vadd.f32 0.0, %v1819
      %v1821 = vpop.f32.mrb[0].mxu0
      %v1822 = vpop.f32.mrb[0].mxu0
      %v1823 = vadd.f32 0.0, %v1822
      %v1824 = vpop.f32.mrb[0].mxu0
      %1825 = vmatprep.mubr.bf16.mxu0 0
      %1826 = vmatmul.mubr.bf16.gmra.mrb[0].mxu0 %v1639
      %v1827 = vpop.f32.mrb[0].mxu0
      %v1828 = vadd.f32 0.0, %v1827
      %v1829 = vpop.f32.mrb[0].mxu0
      %v1830 = vpop.f32.mrb[0].mxu0
      %v1831 = vadd.f32 0.0, %v1830
      %v1832 = vpop.f32.mrb[0].mxu0
      %1833 = vdwg.mxu0
      %1870 = vrot.lane.b32.xlu0 %v1684, 120
      %v1871 = vpop.permute.xlu0 %1870
      %1872 = vrot.lane.b32.xlu0 %v1687, 120
      %v1873 = vpop.permute.xlu0 %1872
      %1874 = vrot.lane.b32.xlu0 %v1692, 120
      %v1875 = vpop.permute.xlu0 %1874
      %1876 = vrot.lane.b32.xlu0 %v1695, 120
      %v1877 = vpop.permute.xlu0 %1876
      %1878 = vrot.lane.b32.xlu0 %v1700, 120
      %v1879 = vpop.permute.xlu0 %1878
      %1880 = vrot.lane.b32.xlu0 %v1703, 120
      %v1881 = vpop.permute.xlu0 %1880
      %1882 = vrot.lane.b32.xlu0 %v1708, 120
      %v1883 = vpop.permute.xlu0 %1882
      %1884 = vrot.lane.b32.xlu0 %v1711, 120
      %v1885 = vpop.permute.xlu0 %1884
      %1886 = vrot.lane.b32.xlu0 %v1716, 120
      %v1887 = vpop.permute.xlu0 %1886
      %1888 = vrot.lane.b32.xlu0 %v1719, 120
      %v1889 = vpop.permute.xlu0 %1888
      %1890 = vrot.lane.b32.xlu0 %v1724, 120
      %v1891 = vpop.permute.xlu0 %1890
      %1892 = vrot.lane.b32.xlu0 %v1727, 120
      %v1893 = vpop.permute.xlu0 %1892
      %1894 = vrot.lane.b32.xlu0 %v1732, 120
      %v1895 = vpop.permute.xlu0 %1894
      %1896 = vrot.lane.b32.xlu0 %v1735, 120
      %v1897 = vpop.permute.xlu0 %1896
      %1898 = vrot.lane.b32.xlu0 %v1740, 120
      %v1899 = vpop.permute.xlu0 %1898
      %1900 = vrot.lane.b32.xlu0 %v1743, 120
      %v1901 = vpop.permute.xlu0 %1900
      %1902 = vrot.lane.b32.xlu0 %v1748, 120
      %v1903 = vpop.permute.xlu0 %1902
      %1904 = vrot.lane.b32.xlu0 %v1751, 120
      %v1905 = vpop.permute.xlu0 %1904
      %1906 = vrot.lane.b32.xlu0 %v1756, 120
      %v1907 = vpop.permute.xlu0 %1906
      %1908 = vrot.lane.b32.xlu0 %v1759, 120
      %v1909 = vpop.permute.xlu0 %1908
      %1910 = vrot.lane.b32.xlu0 %v1764, 120
      %v1911 = vpop.permute.xlu0 %1910
      %1912 = vrot.lane.b32.xlu0 %v1767, 120
      %v1913 = vpop.permute.xlu0 %1912
      %1914 = vrot.lane.b32.xlu0 %v1772, 120
      %v1915 = vpop.permute.xlu0 %1914
      %1916 = vrot.lane.b32.xlu0 %v1775, 120
      %v1917 = vpop.permute.xlu0 %1916
      %1918 = vrot.lane.b32.xlu0 %v1780, 120
      %v1919 = vpop.permute.xlu0 %1918
      %1920 = vrot.lane.b32.xlu0 %v1783, 120
      %v1921 = vpop.permute.xlu0 %1920
      %1922 = vrot.lane.b32.xlu0 %v1788, 120
      %v1923 = vpop.permute.xlu0 %1922
      %1924 = vrot.lane.b32.xlu0 %v1791, 120
      %v1925 = vpop.permute.xlu0 %1924
      %1926 = vrot.lane.b32.xlu0 %v1796, 120
      %v1927 = vpop.permute.xlu0 %1926
      %1928 = vrot.lane.b32.xlu0 %v1799, 120
      %v1929 = vpop.permute.xlu0 %1928
      %1930 = vrot.lane.b32.xlu0 %v1804, 120
      %v1931 = vpop.permute.xlu0 %1930
      %1932 = vrot.lane.b32.xlu0 %v1807, 120
      %v1933 = vpop.permute.xlu0 %1932
      %1934 = vrot.lane.b32.xlu0 %v1812, 120
      %v1935 = vpop.permute.xlu0 %1934
      %1936 = vrot.lane.b32.xlu0 %v1815, 120
      %v1937 = vpop.permute.xlu0 %1936
      %1938 = vrot.lane.b32.xlu0 %v1820, 120
      %v1939 = vpop.permute.xlu0 %1938
      %1940 = vrot.lane.b32.xlu0 %v1823, 120
      %v1941 = vpop.permute.xlu0 %1940
      %v1978 = vadd.f32 %v1676, %v1871
      %v1979 = vadd.f32 %v1679, %v1873
      %v1980 = vadd.f32 %v1684, %v1875
      %v1981 = vadd.f32 %v1687, %v1877
      %v1982 = vadd.f32 %v1692, %v1879
      %v1983 = vadd.f32 %v1695, %v1881
      %v1984 = vadd.f32 %v1700, %v1883
      %v1985 = vadd.f32 %v1703, %v1885
      %v1986 = vadd.f32 %v1708, %v1887
      %v1987 = vadd.f32 %v1711, %v1889
      %v1988 = vadd.f32 %v1716, %v1891
      %v1989 = vadd.f32 %v1719, %v1893
      %v1990 = vadd.f32 %v1724, %v1895
      %v1991 = vadd.f32 %v1727, %v1897
      %v1992 = vadd.f32 %v1732, %v1899
      %v1993 = vadd.f32 %v1735, %v1901
      %v1994 = vadd.f32 %v1740, %v1903
      %v1995 = vadd.f32 %v1743, %v1905
      %v1996 = vadd.f32 %v1748, %v1907
      %v1997 = vadd.f32 %v1751, %v1909
      %v1998 = vadd.f32 %v1756, %v1911
      %v1999 = vadd.f32 %v1759, %v1913
      %v2000 = vadd.f32 %v1764, %v1915
      %v2001 = vadd.f32 %v1767, %v1917
      %v2002 = vadd.f32 %v1772, %v1919
      %v2003 = vadd.f32 %v1775, %v1921
      %v2004 = vadd.f32 %v1780, %v1923
      %v2005 = vadd.f32 %v1783, %v1925
      %v2006 = vadd.f32 %v1788, %v1927
      %v2007 = vadd.f32 %v1791, %v1929
      %v2008 = vadd.f32 %v1796, %v1931
      %v2009 = vadd.f32 %v1799, %v1933
      %v2010 = vadd.f32 %v1804, %v1935
      %v2011 = vadd.f32 %v1807, %v1937
      %v2012 = vadd.f32 %v1812, %v1939
      %v2013 = vadd.f32 %v1815, %v1941
      %v2014 = vld [vmem:[%s4] sm:$0x1]
      %v2016 = vlaneseq
      %v2017 = vshrl.u32 %v2016, 7
      %v2018 = vsub.s32 0, %v2017
      %v2019 = vrot.slane %v2014, %v2018
      %2020 = vrot.lane.b32.xlu0 %v2019, 16
      %v2021 = vpop.permute.xlu0 %2020
      %v2023 = vadd.f32 %v1692, %v2021
      %v2024 = vadd.f32 %v1695, %v2021
      %v2025 = vadd.f32 %v1700, %v2021
      %v2026 = vadd.f32 %v1703, %v2021
      %v2027 = vadd.f32 %v1708, %v2021
      %v2028 = vadd.f32 %v1711, %v2021
      %v2029 = vadd.f32 %v1716, %v2021
      %v2030 = vadd.f32 %v1719, %v2021
      %v2031 = vadd.f32 %v1724, %v2021
      %v2032 = vadd.f32 %v1727, %v2021
      %v2033 = vadd.f32 %v1732, %v2021
      %v2034 = vadd.f32 %v1735, %v2021
      %v2035 = vadd.f32 %v1740, %v2021
      %v2036 = vadd.f32 %v1743, %v2021
      %v2037 = vadd.f32 %v1748, %v2021
      %v2038 = vadd.f32 %v1751, %v2021
      %v2039 = vadd.f32 %v1756, %v2021
      %v2040 = vadd.f32 %v1759, %v2021
      %v2041 = vadd.f32 %v1764, %v2021
      %v2042 = vadd.f32 %v1767, %v2021
      %v2043 = vadd.f32 %v1772, %v2021
      %v2044 = vadd.f32 %v1775, %v2021
      %v2045 = vadd.f32 %v1780, %v2021
      %v2046 = vadd.f32 %v1783, %v2021
      %v2047 = vadd.f32 %v1788, %v2021
      %v2048 = vadd.f32 %v1791, %v2021
      %v2049 = vadd.f32 %v1796, %v2021
      %v2050 = vadd.f32 %v1799, %v2021
      %v2051 = vadd.f32 %v1804, %v2021
      %v2052 = vadd.f32 %v1807, %v2021
      %v2053 = vadd.f32 %v1812, %v2021
      %v2054 = vadd.f32 %v1815, %v2021
      %v2055 = vadd.f32 %v1820, %v2021
      %v2056 = vadd.f32 %v1823, %v2021
      %v2057 = vadd.f32 %v1828, %v2021
      %v2058 = vadd.f32 %v1831, %v2021
      %2095 = vrot.lane.b32.xlu0 %v2023, 112
      %v2096 = vpop.permute.xlu0 %2095
      %2097 = vrot.lane.b32.xlu0 %v2024, 112
      %v2098 = vpop.permute.xlu0 %2097
      %2099 = vrot.lane.b32.xlu0 %v2025, 112
      %v2100 = vpop.permute.xlu0 %2099
      %2101 = vrot.lane.b32.xlu0 %v2026, 112
      %v2102 = vpop.permute.xlu0 %2101
      %2103 = vrot.lane.b32.xlu0 %v2027, 112
      %v2104 = vpop.permute.xlu0 %2103
      %2105 = vrot.lane.b32.xlu0 %v2028, 112
      %v2106 = vpop.permute.xlu0 %2105
      %2107 = vrot.lane.b32.xlu0 %v2029, 112
      %v2108 = vpop.permute.xlu0 %2107
      %2109 = vrot.lane.b32.xlu0 %v2030, 112
      %v2110 = vpop.permute.xlu0 %2109
      %2111 = vrot.lane.b32.xlu0 %v2031, 112
      %v2112 = vpop.permute.xlu0 %2111
      %2113 = vrot.lane.b32.xlu0 %v2032, 112
      %v2114 = vpop.permute.xlu0 %2113
      %2115 = vrot.lane.b32.xlu0 %v2033, 112
      %v2116 = vpop.permute.xlu0 %2115
      %2117 = vrot.lane.b32.xlu0 %v2034, 112
      %v2118 = vpop.permute.xlu0 %2117
      %2119 = vrot.lane.b32.xlu0 %v2035, 112
      %v2120 = vpop.permute.xlu0 %2119
      %2121 = vrot.lane.b32.xlu0 %v2036, 112
      %v2122 = vpop.permute.xlu0 %2121
      %2123 = vrot.lane.b32.xlu0 %v2037, 112
      %v2124 = vpop.permute.xlu0 %2123
      %2125 = vrot.lane.b32.xlu0 %v2038, 112
      %v2126 = vpop.permute.xlu0 %2125
      %2127 = vrot.lane.b32.xlu0 %v2039, 112
      %v2128 = vpop.permute.xlu0 %2127
      %2129 = vrot.lane.b32.xlu0 %v2040, 112
      %v2130 = vpop.permute.xlu0 %2129
      %2131 = vrot.lane.b32.xlu0 %v2041, 112
      %v2132 = vpop.permute.xlu0 %2131
      %2133 = vrot.lane.b32.xlu0 %v2042, 112
      %v2134 = vpop.permute.xlu0 %2133
      %2135 = vrot.lane.b32.xlu0 %v2043, 112
      %v2136 = vpop.permute.xlu0 %2135
      %2137 = vrot.lane.b32.xlu0 %v2044, 112
      %v2138 = vpop.permute.xlu0 %2137
      %2139 = vrot.lane.b32.xlu0 %v2045, 112
      %v2140 = vpop.permute.xlu0 %2139
      %2141 = vrot.lane.b32.xlu0 %v2046, 112
      %v2142 = vpop.permute.xlu0 %2141
      %2143 = vrot.lane.b32.xlu0 %v2047, 112
      %v2144 = vpop.permute.xlu0 %2143
      %2145 = vrot.lane.b32.xlu0 %v2048, 112
      %v2146 = vpop.permute.xlu0 %2145
      %2147 = vrot.lane.b32.xlu0 %v2049, 112
      %v2148 = vpop.permute.xlu0 %2147
      %2149 = vrot.lane.b32.xlu0 %v2050, 112
      %v2150 = vpop.permute.xlu0 %2149
      %2151 = vrot.lane.b32.xlu0 %v2051, 112
      %v2152 = vpop.permute.xlu0 %2151
      %2153 = vrot.lane.b32.xlu0 %v2052, 112
      %v2154 = vpop.permute.xlu0 %2153
      %2155 = vrot.lane.b32.xlu0 %v2053, 112
      %v2156 = vpop.permute.xlu0 %2155
      %2157 = vrot.lane.b32.xlu0 %v2054, 112
      %v2158 = vpop.permute.xlu0 %2157
      %2159 = vrot.lane.b32.xlu0 %v2055, 112
      %v2160 = vpop.permute.xlu0 %2159
      %2161 = vrot.lane.b32.xlu0 %v2056, 112
      %v2162 = vpop.permute.xlu0 %2161
      %2163 = vrot.lane.b32.xlu0 %v2057, 112
      %v2164 = vpop.permute.xlu0 %2163
      %2165 = vrot.lane.b32.xlu0 %v2058, 112
      %v2166 = vpop.permute.xlu0 %2165
      %v2203 = vadd.f32 %v1978, %v2096
      %v2204 = vadd.f32 %v1979, %v2098
      %v2205 = vadd.f32 %v1980, %v2100
      %v2206 = vadd.f32 %v1981, %v2102
      %v2207 = vadd.f32 %v1982, %v2104
      %v2208 = vadd.f32 %v1983, %v2106
      %v2209 = vadd.f32 %v1984, %v2108
      %v2210 = vadd.f32 %v1985, %v2110
      %v2211 = vadd.f32 %v1986, %v2112
      %v2212 = vadd.f32 %v1987, %v2114
      %v2213 = vadd.f32 %v1988, %v2116
      %v2214 = vadd.f32 %v1989, %v2118
      %v2215 = vadd.f32 %v1990, %v2120
      %v2216 = vadd.f32 %v1991, %v2122
      %v2217 = vadd.f32 %v1992, %v2124
      %v2218 = vadd.f32 %v1993, %v2126
      %v2219 = vadd.f32 %v1994, %v2128
      %v2220 = vadd.f32 %v1995, %v2130
      %v2221 = vadd.f32 %v1996, %v2132
      %v2222 = vadd.f32 %v1997, %v2134
      %v2223 = vadd.f32 %v1998, %v2136
      %v2224 = vadd.f32 %v1999, %v2138
      %v2225 = vadd.f32 %v2000, %v2140
      %v2226 = vadd.f32 %v2001, %v2142
      %v2227 = vadd.f32 %v2002, %v2144
      %v2228 = vadd.f32 %v2003, %v2146
      %v2229 = vadd.f32 %v2004, %v2148
      %v2230 = vadd.f32 %v2005, %v2150
      %v2231 = vadd.f32 %v2006, %v2152
      %v2232 = vadd.f32 %v2007, %v2154
      %v2233 = vadd.f32 %v2008, %v2156
      %v2234 = vadd.f32 %v2009, %v2158
      %v2235 = vadd.f32 %v2010, %v2160
      %v2236 = vadd.f32 %v2011, %v2162
      %v2237 = vadd.f32 %v2012, %v2164
      %v2238 = vadd.f32 %v2013, %v2166
      %vm2239 = vcmp.gt.f32.partialorder %v2203, 0.0
      %vm2240 = vcmp.gt.f32.partialorder %v2204, 0.0
      %vm2241 = vcmp.gt.f32.partialorder %v2205, 0.0
      %vm2242 = vcmp.gt.f32.partialorder %v2206, 0.0
      %vm2243 = vcmp.gt.f32.partialorder %v2207, 0.0
      %vm2244 = vcmp.gt.f32.partialorder %v2208, 0.0
      %vm2245 = vcmp.gt.f32.partialorder %v2209, 0.0
      %vm2246 = vcmp.gt.f32.partialorder %v2210, 0.0
      %vm2247 = vcmp.gt.f32.partialorder %v2211, 0.0
      %vm2248 = vcmp.gt.f32.partialorder %v2212, 0.0
      %vm2249 = vcmp.gt.f32.partialorder %v2213, 0.0
      %vm2250 = vcmp.gt.f32.partialorder %v2214, 0.0
      %vm2251 = vcmp.gt.f32.partialorder %v2215, 0.0
      %vm2252 = vcmp.gt.f32.partialorder %v2216, 0.0
      %vm2253 = vcmp.gt.f32.partialorder %v2217, 0.0
      %vm2254 = vcmp.gt.f32.partialorder %v2218, 0.0
      %vm2255 = vcmp.gt.f32.partialorder %v2219, 0.0
      %vm2256 = vcmp.gt.f32.partialorder %v2220, 0.0
      %vm2257 = vcmp.gt.f32.partialorder %v2221, 0.0
      %vm2258 = vcmp.gt.f32.partialorder %v2222, 0.0
      %vm2259 = vcmp.gt.f32.partialorder %v2223, 0.0
      %vm2260 = vcmp.gt.f32.partialorder %v2224, 0.0
      %vm2261 = vcmp.gt.f32.partialorder %v2225, 0.0
      %vm2262 = vcmp.gt.f32.partialorder %v2226, 0.0
      %vm2263 = vcmp.gt.f32.partialorder %v2227, 0.0
      %vm2264 = vcmp.gt.f32.partialorder %v2228, 0.0
      %vm2265 = vcmp.gt.f32.partialorder %v2229, 0.0
      %vm2266 = vcmp.gt.f32.partialorder %v2230, 0.0
      %vm2267 = vcmp.gt.f32.partialorder %v2231, 0.0
      %vm2268 = vcmp.gt.f32.partialorder %v2232, 0.0
      %vm2269 = vcmp.gt.f32.partialorder %v2233, 0.0
      %vm2270 = vcmp.gt.f32.partialorder %v2234, 0.0
      %vm2271 = vcmp.gt.f32.partialorder %v2235, 0.0
      %vm2272 = vcmp.gt.f32.partialorder %v2236, 0.0
      %vm2273 = vcmp.gt.f32.partialorder %v2237, 0.0
      %vm2274 = vcmp.gt.f32.partialorder %v2238, 0.0
      %v2275 = vmul.f32 %v2203, 0.2
      %v2276 = vmul.f32 %v2204, 0.2
      %v2277 = vmul.f32 %v2205, 0.2
      %v2278 = vmul.f32 %v2206, 0.2
      %v2279 = vmul.f32 %v2207, 0.2
      %v2280 = vmul.f32 %v2208, 0.2
      %v2281 = vmul.f32 %v2209, 0.2
      %v2282 = vmul.f32 %v2210, 0.2
      %v2283 = vmul.f32 %v2211, 0.2
      %v2284 = vmul.f32 %v2212, 0.2
      %v2285 = vmul.f32 %v2213, 0.2
      %v2286 = vmul.f32 %v2214, 0.2
      %v2287 = vmul.f32 %v2215, 0.2
      %v2288 = vmul.f32 %v2216, 0.2
      %v2289 = vmul.f32 %v2217, 0.2
      %v2290 = vmul.f32 %v2218, 0.2
      %v2291 = vmul.f32 %v2219, 0.2
      %v2292 = vmul.f32 %v2220, 0.2
      %v2293 = vmul.f32 %v2221, 0.2
      %v2294 = vmul.f32 %v2222, 0.2
      %v2295 = vmul.f32 %v2223, 0.2
      %v2296 = vmul.f32 %v2224, 0.2
      %v2297 = vmul.f32 %v2225, 0.2
      %v2298 = vmul.f32 %v2226, 0.2
      %v2299 = vmul.f32 %v2227, 0.2
      %v2300 = vmul.f32 %v2228, 0.2
      %v2301 = vmul.f32 %v2229, 0.2
      %v2302 = vmul.f32 %v2230, 0.2
      %v2303 = vmul.f32 %v2231, 0.2
      %v2304 = vmul.f32 %v2232, 0.2
      %v2305 = vmul.f32 %v2233, 0.2
      %v2306 = vmul.f32 %v2234, 0.2
      %v2307 = vmul.f32 %v2235, 0.2
      %v2308 = vmul.f32 %v2236, 0.2
      %v2309 = vmul.f32 %v2237, 0.2
      %v2310 = vmul.f32 %v2238, 0.2
      %v2311 = vsel %vm2239, %v2203, %v2275
      %v2312 = vsel %vm2240, %v2204, %v2276
      %v2313 = vsel %vm2241, %v2205, %v2277
      %v2314 = vsel %vm2242, %v2206, %v2278
      %v2315 = vsel %vm2243, %v2207, %v2279
      %v2316 = vsel %vm2244, %v2208, %v2280
      %v2317 = vsel %vm2245, %v2209, %v2281
      %v2318 = vsel %vm2246, %v2210, %v2282
      %v2319 = vsel %vm2247, %v2211, %v2283
      %v2320 = vsel %vm2248, %v2212, %v2284
      %v2321 = vsel %vm2249, %v2213, %v2285
      %v2322 = vsel %vm2250, %v2214, %v2286
      %v2323 = vsel %vm2251, %v2215, %v2287
      %v2324 = vsel %vm2252, %v2216, %v2288
      %v2325 = vsel %vm2253, %v2217, %v2289
      %v2326 = vsel %vm2254, %v2218, %v2290
      %v2327 = vsel %vm2255, %v2219, %v2291
      %v2328 = vsel %vm2256, %v2220, %v2292
      %v2329 = vsel %vm2257, %v2221, %v2293
      %v2330 = vsel %vm2258, %v2222, %v2294
      %v2331 = vsel %vm2259, %v2223, %v2295
      %v2332 = vsel %vm2260, %v2224, %v2296
      %v2333 = vsel %vm2261, %v2225, %v2297
      %v2334 = vsel %vm2262, %v2226, %v2298
      %v2335 = vsel %vm2263, %v2227, %v2299
      %v2336 = vsel %vm2264, %v2228, %v2300
      %v2337 = vsel %vm2265, %v2229, %v2301
      %v2338 = vsel %vm2266, %v2230, %v2302
      %v2339 = vsel %vm2267, %v2231, %v2303
      %v2340 = vsel %vm2268, %v2232, %v2304
      %v2341 = vsel %vm2269, %v2233, %v2305
      %v2342 = vsel %vm2270, %v2234, %v2306
      %v2343 = vsel %vm2271, %v2235, %v2307
      %v2344 = vsel %vm2272, %v2236, %v2308
      %v2345 = vsel %vm2273, %v2237, %v2309
      %v2346 = vsel %vm2274, %v2238, %v2310
      %v2347 = vpack.c.bf16 %v2312, %v2311
      %v2348 = vpack.c.bf16 %v2314, %v2313
      %v2349 = vpack.c.bf16 %v2316, %v2315
      %v2350 = vpack.c.bf16 %v2318, %v2317
      %v2351 = vpack.c.bf16 %v2320, %v2319
      %v2352 = vpack.c.bf16 %v2322, %v2321
      %v2353 = vpack.c.bf16 %v2324, %v2323
      %v2354 = vpack.c.bf16 %v2326, %v2325
      %v2355 = vpack.c.bf16 %v2328, %v2327
      %v2356 = vpack.c.bf16 %v2330, %v2329
      %v2357 = vpack.c.bf16 %v2332, %v2331
      %v2358 = vpack.c.bf16 %v2334, %v2333
      %v2359 = vpack.c.bf16 %v2336, %v2335
      %v2360 = vpack.c.bf16 %v2338, %v2337
      %v2361 = vpack.c.bf16 %v2340, %v2339
      %v2362 = vpack.c.bf16 %v2342, %v2341
      %v2363 = vpack.c.bf16 %v2344, %v2343
      %v2364 = vpack.c.bf16 %v2346, %v2345
      %v2383 = vunpack.c.l.b16 %v2347
      %v2384 = vunpack.c.h.b16 %v2347
      %v2385 = vunpack.c.l.b16 %v2348
      %v2386 = vunpack.c.h.b16 %v2348
      %v2387 = vunpack.c.l.b16 %v2349
      %v2388 = vunpack.c.h.b16 %v2349
      %v2389 = vunpack.c.l.b16 %v2350
      %v2390 = vunpack.c.h.b16 %v2350
      %v2391 = vunpack.c.l.b16 %v2351
      %v2392 = vunpack.c.h.b16 %v2351
      %v2393 = vunpack.c.l.b16 %v2352
      %v2394 = vunpack.c.h.b16 %v2352
      %v2395 = vunpack.c.l.b16 %v2353
      %v2396 = vunpack.c.h.b16 %v2353
      %v2397 = vunpack.c.l.b16 %v2354
      %v2398 = vunpack.c.h.b16 %v2354
      %v2399 = vunpack.c.l.b16 %v2355
      %v2400 = vunpack.c.h.b16 %v2355
      %v2401 = vunpack.c.l.b16 %v2356
      %v2402 = vunpack.c.h.b16 %v2356
      %v2403 = vunpack.c.l.b16 %v2357
      %v2404 = vunpack.c.h.b16 %v2357
      %v2405 = vunpack.c.l.b16 %v2358
      %v2406 = vunpack.c.h.b16 %v2358
      %v2407 = vunpack.c.l.b16 %v2359
      %v2408 = vunpack.c.h.b16 %v2359
      %v2409 = vunpack.c.l.b16 %v2360
      %v2410 = vunpack.c.h.b16 %v2360
      %v2411 = vunpack.c.l.b16 %v2361
      %v2412 = vunpack.c.h.b16 %v2361
      %v2413 = vunpack.c.l.b16 %v2362
      %v2414 = vunpack.c.h.b16 %v2362
      %v2415 = vunpack.c.l.b16 %v2363
      %v2416 = vunpack.c.h.b16 %v2363
      %v2417 = vunpack.c.l.b16 %v2364
      %v2418 = vunpack.c.h.b16 %v2364
      %v2419 = vpack.c.b16 %v2383, %v2383
      %v2420 = vpack.c.b16 %v2384, %v2384
      %v2421 = vpack.c.b16 %v2385, %v2385
      %v2422 = vpack.c.b16 %v2386, %v2386
      %v2423 = vpack.c.b16 %v2387, %v2387
      %v2424 = vpack.c.b16 %v2388, %v2388
      %v2425 = vpack.c.b16 %v2389, %v2389
      %v2426 = vpack.c.b16 %v2390, %v2390
      %v2427 = vpack.c.b16 %v2391, %v2391
      %v2428 = vpack.c.b16 %v2392, %v2392
      %v2429 = vpack.c.b16 %v2393, %v2393
      %v2430 = vpack.c.b16 %v2394, %v2394
      %v2431 = vpack.c.b16 %v2395, %v2395
      %v2432 = vpack.c.b16 %v2396, %v2396
      %v2433 = vpack.c.b16 %v2397, %v2397
      %v2434 = vpack.c.b16 %v2398, %v2398
      %v2435 = vpack.c.b16 %v2399, %v2399
      %v2436 = vpack.c.b16 %v2400, %v2400
      %v2437 = vpack.c.b16 %v2401, %v2401
      %v2438 = vpack.c.b16 %v2402, %v2402
      %v2439 = vpack.c.b16 %v2403, %v2403
      %v2440 = vpack.c.b16 %v2404, %v2404
      %v2441 = vpack.c.b16 %v2405, %v2405
      %v2442 = vpack.c.b16 %v2406, %v2406
      %v2443 = vpack.c.b16 %v2407, %v2407
      %v2444 = vpack.c.b16 %v2408, %v2408
      %v2445 = vpack.c.b16 %v2409, %v2409
      %v2446 = vpack.c.b16 %v2410, %v2410
      %v2447 = vpack.c.b16 %v2411, %v2411
      %v2448 = vpack.c.b16 %v2412, %v2412
      %v2449 = vpack.c.b16 %v2413, %v2413
      %v2450 = vpack.c.b16 %v2414, %v2414
      %v2451 = vpack.c.b16 %v2415, %v2415
      %v2452 = vpack.c.b16 %v2416, %v2416
      %v2453 = vpack.c.b16 %v2417, %v2417
      %v2454 = vpack.c.b16 %v2418, %v2418
      %vm2455 = vsmask.f32 4368
      %vm2456 = vmor %vm686, %vm2455
      %v2458 = vshrl.u32 %v2419, 16
      %v2460 = vrot.slane %v2458, 7
      %v2461 = vshll.u32 %v2419, 16
      %v2463 = vor.u32 %v2460, %v2461
      %v2464 = vrot.slane %v2460, 4
      %v2466 = vshrl.u32 %v2420, 16
      %v2468 = vrot.slane %v2466, 7
      %v2469 = vshll.u32 %v2420, 16
      %v2471 = vor.u32 %v2468, %v2469
      %v2472 = vsel %vm2456, %v2464, %v2471
      %v2473 = vrot.slane %v2468, 4
      %v2475 = vshrl.u32 %v2421, 16
      %v2477 = vrot.slane %v2475, 7
      %v2478 = vshll.u32 %v2421, 16
      %v2480 = vor.u32 %v2477, %v2478
      %v2481 = vrot.slane %v2477, 4
      %v2483 = vshrl.u32 %v2422, 16
      %v2485 = vrot.slane %v2483, 7
      %v2486 = vshll.u32 %v2422, 16
      %v2488 = vor.u32 %v2485, %v2486
      %v2489 = vsel %vm2456, %v2481, %v2488
      %v2490 = vrot.slane %v2485, 4
      %v2492 = vshrl.u32 %v2423, 16
      %v2494 = vrot.slane %v2492, 7
      %v2495 = vshll.u32 %v2423, 16
      %v2497 = vor.u32 %v2494, %v2495
      %v2498 = vrot.slane %v2494, 4
      %v2500 = vshrl.u32 %v2424, 16
      %v2502 = vrot.slane %v2500, 7
      %v2503 = vshll.u32 %v2424, 16
      %v2505 = vor.u32 %v2502, %v2503
      %v2506 = vsel %vm2456, %v2498, %v2505
      %v2507 = vrot.slane %v2502, 4
      %v2509 = vshrl.u32 %v2425, 16
      %v2511 = vrot.slane %v2509, 7
      %v2512 = vshll.u32 %v2425, 16
      %v2514 = vor.u32 %v2511, %v2512
      %v2515 = vrot.slane %v2511, 4
      %v2517 = vshrl.u32 %v2426, 16
      %v2519 = vrot.slane %v2517, 7
      %v2520 = vshll.u32 %v2426, 16
      %v2522 = vor.u32 %v2519, %v2520
      %v2523 = vsel %vm2456, %v2515, %v2522
      %v2524 = vrot.slane %v2519, 4
      %v2526 = vshrl.u32 %v2427, 16
      %v2528 = vrot.slane %v2526, 7
      %v2529 = vshll.u32 %v2427, 16
      %v2531 = vor.u32 %v2528, %v2529
      %v2532 = vrot.slane %v2528, 4
      %v2534 = vshrl.u32 %v2428, 16
      %v2536 = vrot.slane %v2534, 7
      %v2537 = vshll.u32 %v2428, 16
      %v2539 = vor.u32 %v2536, %v2537
      %v2540 = vsel %vm2456, %v2532, %v2539
      %v2541 = vrot.slane %v2536, 4
      %v2543 = vshrl.u32 %v2429, 16
      %v2545 = vrot.slane %v2543, 7
      %v2546 = vshll.u32 %v2429, 16
      %v2548 = vor.u32 %v2545, %v2546
      %v2549 = vrot.slane %v2545, 4
      %v2551 = vshrl.u32 %v2430, 16
      %v2553 = vrot.slane %v2551, 7
      %v2554 = vshll.u32 %v2430, 16
      %v2556 = vor.u32 %v2553, %v2554
      %v2557 = vsel %vm2456, %v2549, %v2556
      %v2558 = vrot.slane %v2553, 4
      %v2560 = vshrl.u32 %v2431, 16
      %v2562 = vrot.slane %v2560, 7
      %v2563 = vshll.u32 %v2431, 16
      %v2565 = vor.u32 %v2562, %v2563
      %v2566 = vrot.slane %v2562, 4
      %v2568 = vshrl.u32 %v2432, 16
      %v2570 = vrot.slane %v2568, 7
      %v2571 = vshll.u32 %v2432, 16
      %v2573 = vor.u32 %v2570, %v2571
      %v2574 = vsel %vm2456, %v2566, %v2573
      %v2575 = vrot.slane %v2570, 4
      %v2577 = vshrl.u32 %v2433, 16
      %v2579 = vrot.slane %v2577, 7
      %v2580 = vshll.u32 %v2433, 16
      %v2582 = vor.u32 %v2579, %v2580
      %v2583 = vrot.slane %v2579, 4
      %v2585 = vshrl.u32 %v2434, 16
      %v2587 = vrot.slane %v2585, 7
      %v2588 = vshll.u32 %v2434, 16
      %v2590 = vor.u32 %v2587, %v2588
      %v2591 = vsel %vm2456, %v2583, %v2590
      %v2592 = vrot.slane %v2587, 4
      %v2594 = vshrl.u32 %v2435, 16
      %v2596 = vrot.slane %v2594, 7
      %v2597 = vshll.u32 %v2435, 16
      %v2599 = vor.u32 %v2596, %v2597
      %v2600 = vrot.slane %v2596, 4
      %v2602 = vshrl.u32 %v2436, 16
      %v2604 = vrot.slane %v2602, 7
      %v2605 = vshll.u32 %v2436, 16
      %v2607 = vor.u32 %v2604, %v2605
      %v2608 = vsel %vm2456, %v2600, %v2607
      %v2609 = vrot.slane %v2604, 4
      %v2611 = vshrl.u32 %v2437, 16
      %v2613 = vrot.slane %v2611, 7
      %v2614 = vshll.u32 %v2437, 16
      %v2616 = vor.u32 %v2613, %v2614
      %v2617 = vrot.slane %v2613, 4
      %v2619 = vshrl.u32 %v2438, 16
      %v2621 = vrot.slane %v2619, 7
      %v2622 = vshll.u32 %v2438, 16
      %v2624 = vor.u32 %v2621, %v2622
      %v2625 = vsel %vm2456, %v2617, %v2624
      %v2626 = vrot.slane %v2621, 4
      %v2628 = vshrl.u32 %v2439, 16
      %v2630 = vrot.slane %v2628, 7
      %v2631 = vshll.u32 %v2439, 16
      %v2633 = vor.u32 %v2630, %v2631
      %v2634 = vrot.slane %v2630, 4
      %v2636 = vshrl.u32 %v2440, 16
      %v2638 = vrot.slane %v2636, 7
      %v2639 = vshll.u32 %v2440, 16
      %v2641 = vor.u32 %v2638, %v2639
      %v2642 = vsel %vm2456, %v2634, %v2641
      %v2643 = vrot.slane %v2638, 4
      %v2645 = vshrl.u32 %v2441, 16
      %v2647 = vrot.slane %v2645, 7
      %v2648 = vshll.u32 %v2441, 16
      %v2650 = vor.u32 %v2647, %v2648
      %v2651 = vrot.slane %v2647, 4
      %v2653 = vshrl.u32 %v2442, 16
      %v2655 = vrot.slane %v2653, 7
      %v2656 = vshll.u32 %v2442, 16
      %v2658 = vor.u32 %v2655, %v2656
      %v2659 = vsel %vm2456, %v2651, %v2658
      %v2660 = vrot.slane %v2655, 4
      %v2662 = vshrl.u32 %v2443, 16
      %v2664 = vrot.slane %v2662, 7
      %v2665 = vshll.u32 %v2443, 16
      %v2667 = vor.u32 %v2664, %v2665
      %v2668 = vrot.slane %v2664, 4
      %v2670 = vshrl.u32 %v2444, 16
      %v2672 = vrot.slane %v2670, 7
      %v2673 = vshll.u32 %v2444, 16
      %v2675 = vor.u32 %v2672, %v2673
      %v2676 = vsel %vm2456, %v2668, %v2675
      %v2677 = vrot.slane %v2672, 4
      %v2679 = vshrl.u32 %v2445, 16
      %v2681 = vrot.slane %v2679, 7
      %v2682 = vshll.u32 %v2445, 16
      %v2684 = vor.u32 %v2681, %v2682
      %v2685 = vrot.slane %v2681, 4
      %v2687 = vshrl.u32 %v2446, 16
      %v2689 = vrot.slane %v2687, 7
      %v2690 = vshll.u32 %v2446, 16
      %v2692 = vor.u32 %v2689, %v2690
      %v2693 = vsel %vm2456, %v2685, %v2692
      %v2694 = vrot.slane %v2689, 4
      %v2696 = vshrl.u32 %v2447, 16
      %v2698 = vrot.slane %v2696, 7
      %v2699 = vshll.u32 %v2447, 16
      %v2701 = vor.u32 %v2698, %v2699
      %v2702 = vrot.slane %v2698, 4
      %v2704 = vshrl.u32 %v2448, 16
      %v2706 = vrot.slane %v2704, 7
      %v2707 = vshll.u32 %v2448, 16
      %v2709 = vor.u32 %v2706, %v2707
      %v2710 = vsel %vm2456, %v2702, %v2709
      %v2711 = vrot.slane %v2706, 4
      %v2713 = vshrl.u32 %v2449, 16
      %v2715 = vrot.slane %v2713, 7
      %v2716 = vshll.u32 %v2449, 16
      %v2718 = vor.u32 %v2715, %v2716
      %v2719 = vrot.slane %v2715, 4
      %v2721 = vshrl.u32 %v2450, 16
      %v2723 = vrot.slane %v2721, 7
      %v2724 = vshll.u32 %v2450, 16
      %v2726 = vor.u32 %v2723, %v2724
      %v2727 = vsel %vm2456, %v2719, %v2726
      %v2728 = vrot.slane %v2723, 4
      %v2730 = vshrl.u32 %v2451, 16
      %v2732 = vrot.slane %v2730, 7
      %v2733 = vshll.u32 %v2451, 16
      %v2735 = vor.u32 %v2732, %v2733
      %v2736 = vrot.slane %v2732, 4
      %v2738 = vshrl.u32 %v2452, 16
      %v2740 = vrot.slane %v2738, 7
      %v2741 = vshll.u32 %v2452, 16
      %v2743 = vor.u32 %v2740, %v2741
      %v2744 = vsel %vm2456, %v2736, %v2743
      %v2745 = vrot.slane %v2740, 4
      %v2747 = vshrl.u32 %v2453, 16
      %v2749 = vrot.slane %v2747, 7
      %v2750 = vshll.u32 %v2453, 16
      %v2752 = vor.u32 %v2749, %v2750
      %v2753 = vrot.slane %v2749, 4
      %v2755 = vshrl.u32 %v2454, 16
      %v2757 = vrot.slane %v2755, 7
      %v2758 = vshll.u32 %v2454, 16
      %v2760 = vor.u32 %v2757, %v2758
      %v2761 = vsel %vm2456, %v2753, %v2760
      %v2762 = vrot.slane %v2757, 4
      %2763 = vrot.lane.b32.xlu0 %v2463, 16
      %v2764 = vpop.permute.xlu0 %2763
      %2765 = vrot.lane.b32.xlu0 %v2472, 16
      %v2766 = vpop.permute.xlu0 %2765
      %2767 = vrot.lane.b32.xlu0 %v2473, 16
      %v2768 = vpop.permute.xlu0 %2767
      %2769 = vrot.lane.b32.xlu0 %v2480, 16
      %v2770 = vpop.permute.xlu0 %2769
      %2771 = vrot.lane.b32.xlu0 %v2489, 16
      %v2772 = vpop.permute.xlu0 %2771
      %2773 = vrot.lane.b32.xlu0 %v2490, 16
      %v2774 = vpop.permute.xlu0 %2773
      %2775 = vrot.lane.b32.xlu0 %v2497, 16
      %v2776 = vpop.permute.xlu0 %2775
      %2777 = vrot.lane.b32.xlu0 %v2506, 16
      %v2778 = vpop.permute.xlu0 %2777
      %2779 = vrot.lane.b32.xlu0 %v2507, 16
      %v2780 = vpop.permute.xlu0 %2779
      %2781 = vrot.lane.b32.xlu0 %v2514, 16
      %v2782 = vpop.permute.xlu0 %2781
      %2783 = vrot.lane.b32.xlu0 %v2523, 16
      %v2784 = vpop.permute.xlu0 %2783
      %2785 = vrot.lane.b32.xlu0 %v2524, 16
      %v2786 = vpop.permute.xlu0 %2785
      %2787 = vrot.lane.b32.xlu0 %v2531, 16
      %v2788 = vpop.permute.xlu0 %2787
      %2789 = vrot.lane.b32.xlu0 %v2540, 16
      %v2790 = vpop.permute.xlu0 %2789
      %2791 = vrot.lane.b32.xlu0 %v2541, 16
      %v2792 = vpop.permute.xlu0 %2791
      %2793 = vrot.lane.b32.xlu0 %v2548, 16
      %v2794 = vpop.permute.xlu0 %2793
      %2795 = vrot.lane.b32.xlu0 %v2557, 16
      %v2796 = vpop.permute.xlu0 %2795
      %2797 = vrot.lane.b32.xlu0 %v2558, 16
      %v2798 = vpop.permute.xlu0 %2797
      %2799 = vrot.lane.b32.xlu0 %v2565, 16
      %v2800 = vpop.permute.xlu0 %2799
      %2801 = vrot.lane.b32.xlu0 %v2574, 16
      %v2802 = vpop.permute.xlu0 %2801
      %2803 = vrot.lane.b32.xlu0 %v2575, 16
      %v2804 = vpop.permute.xlu0 %2803
      %2805 = vrot.lane.b32.xlu0 %v2582, 16
      %v2806 = vpop.permute.xlu0 %2805
      %2807 = vrot.lane.b32.xlu0 %v2591, 16
      %v2808 = vpop.permute.xlu0 %2807
      %2809 = vrot.lane.b32.xlu0 %v2592, 16
      %v2810 = vpop.permute.xlu0 %2809
      %2811 = vrot.lane.b32.xlu0 %v2599, 16
      %v2812 = vpop.permute.xlu0 %2811
      %2813 = vrot.lane.b32.xlu0 %v2608, 16
      %v2814 = vpop.permute.xlu0 %2813
      %2815 = vrot.lane.b32.xlu0 %v2609, 16
      %v2816 = vpop.permute.xlu0 %2815
      %2817 = vrot.lane.b32.xlu0 %v2616, 16
      %v2818 = vpop.permute.xlu0 %2817
      %2819 = vrot.lane.b32.xlu0 %v2625, 16
      %v2820 = vpop.permute.xlu0 %2819
      %2821 = vrot.lane.b32.xlu0 %v2626, 16
      %v2822 = vpop.permute.xlu0 %2821
      %2823 = vrot.lane.b32.xlu0 %v2633, 16
      %v2824 = vpop.permute.xlu0 %2823
      %2825 = vrot.lane.b32.xlu0 %v2642, 16
      %v2826 = vpop.permute.xlu0 %2825
      %2827 = vrot.lane.b32.xlu0 %v2643, 16
      %v2828 = vpop.permute.xlu0 %2827
      %2829 = vrot.lane.b32.xlu0 %v2650, 16
      %v2830 = vpop.permute.xlu0 %2829
      %2831 = vrot.lane.b32.xlu0 %v2659, 16
      %v2832 = vpop.permute.xlu0 %2831
      %2833 = vrot.lane.b32.xlu0 %v2660, 16
      %v2834 = vpop.permute.xlu0 %2833
      %2835 = vrot.lane.b32.xlu0 %v2667, 16
      %v2836 = vpop.permute.xlu0 %2835
      %2837 = vrot.lane.b32.xlu0 %v2676, 16
      %v2838 = vpop.permute.xlu0 %2837
      %2839 = vrot.lane.b32.xlu0 %v2677, 16
      %v2840 = vpop.permute.xlu0 %2839
      %2841 = vrot.lane.b32.xlu0 %v2684, 16
      %v2842 = vpop.permute.xlu0 %2841
      %2843 = vrot.lane.b32.xlu0 %v2693, 16
      %v2844 = vpop.permute.xlu0 %2843
      %2845 = vrot.lane.b32.xlu0 %v2694, 16
      %v2846 = vpop.permute.xlu0 %2845
      %2847 = vrot.lane.b32.xlu0 %v2701, 16
      %v2848 = vpop.permute.xlu0 %2847
      %2849 = vrot.lane.b32.xlu0 %v2710, 16
      %v2850 = vpop.permute.xlu0 %2849
      %2851 = vrot.lane.b32.xlu0 %v2711, 16
      %v2852 = vpop.permute.xlu0 %2851
      %2853 = vrot.lane.b32.xlu0 %v2718, 16
      %v2854 = vpop.permute.xlu0 %2853
      %2855 = vrot.lane.b32.xlu0 %v2727, 16
      %v2856 = vpop.permute.xlu0 %2855
      %2857 = vrot.lane.b32.xlu0 %v2728, 16
      %v2858 = vpop.permute.xlu0 %2857
      %2859 = vrot.lane.b32.xlu0 %v2735, 16
      %v2860 = vpop.permute.xlu0 %2859
      %2861 = vrot.lane.b32.xlu0 %v2744, 16
      %v2862 = vpop.permute.xlu0 %2861
      %2863 = vrot.lane.b32.xlu0 %v2745, 16
      %v2864 = vpop.permute.xlu0 %2863
      %2865 = vrot.lane.b32.xlu0 %v2752, 16
      %v2866 = vpop.permute.xlu0 %2865
      %2867 = vrot.lane.b32.xlu0 %v2761, 16
      %v2868 = vpop.permute.xlu0 %2867
      %2869 = vrot.lane.b32.xlu0 %v2762, 16
      %v2870 = vpop.permute.xlu0 %2869
      %s2925 = scalar_lea.vmem [#allocation2], 12
      %vm2926 = vcmask 191616
      %vm2927 = vmand %vm2926, %vm748
      %v2928 = vld [vmem:[%s2925] sm:$0xf]
      %v2929 = vsel %vm2927, %v2764, %v2928
      %2930 = vst [vmem:[%s2925] sm:$0xf] %v2929
      %vm2931 = vcmask 191616
      %2932 = vst.msk [vmem:[%s2925 + $0x4] sm:$0xf] %vm2931, %v2766
      %vm2933 = vcmask 188544
      %vm2934 = vmand %vm2933, %vm686
      %v2935 = vld [vmem:[%s2925 + $0x8] sm:$0x1]
      %v2936 = vsel %vm2934, %v2768, %v2935
      %2937 = vst [vmem:[%s2925 + $0x8] sm:$0x1] %v2936
      %v2938 = vld [vmem:[%s2925 + $0xc] sm:$0xf]
      %v2939 = vsel %vm2927, %v2770, %v2938
      %2940 = vst [vmem:[%s2925 + $0xc] sm:$0xf] %v2939
      %2941 = vst.msk [vmem:[%s2925 + $0x10] sm:$0xf] %vm2931, %v2772
      %v2942 = vld [vmem:[%s2925 + $0x14] sm:$0x1]
      %v2943 = vsel %vm2934, %v2774, %v2942
      %2944 = vst [vmem:[%s2925 + $0x14] sm:$0x1] %v2943
      %v2945 = vld [vmem:[%s2925 + $0x18] sm:$0xf]
      %v2946 = vsel %vm2927, %v2776, %v2945
      %2947 = vst [vmem:[%s2925 + $0x18] sm:$0xf] %v2946
      %2948 = vst.msk [vmem:[%s2925 + $0x1c] sm:$0xf] %vm2931, %v2778
      %v2949 = vld [vmem:[%s2925 + $0x20] sm:$0x1]
      %v2950 = vsel %vm2934, %v2780, %v2949
      %2951 = vst [vmem:[%s2925 + $0x20] sm:$0x1] %v2950
      %v2952 = vld [vmem:[%s2925 + $0x24] sm:$0xf]
      %v2953 = vsel %vm2927, %v2782, %v2952
      %2954 = vst [vmem:[%s2925 + $0x24] sm:$0xf] %v2953
      %2955 = vst.msk [vmem:[%s2925 + $0x28] sm:$0xf] %vm2931, %v2784
      %v2956 = vld [vmem:[%s2925 + $0x2c] sm:$0x1]
      %v2957 = vsel %vm2934, %v2786, %v2956
      %2958 = vst [vmem:[%s2925 + $0x2c] sm:$0x1] %v2957
      %v2959 = vld [vmem:[%s2925 + $0x30] sm:$0xf]
      %v2960 = vsel %vm2927, %v2788, %v2959
      %2961 = vst [vmem:[%s2925 + $0x30] sm:$0xf] %v2960
      %2962 = vst.msk [vmem:[%s2925 + $0x34] sm:$0xf] %vm2931, %v2790
      %v2963 = vld [vmem:[%s2925 + $0x38] sm:$0x1]
      %v2964 = vsel %vm2934, %v2792, %v2963
      %2965 = vst [vmem:[%s2925 + $0x38] sm:$0x1] %v2964
      %v2966 = vld [vmem:[%s2925 + $0x3c] sm:$0xf]
      %v2967 = vsel %vm2927, %v2794, %v2966
      %2968 = vst [vmem:[%s2925 + $0x3c] sm:$0xf] %v2967
      %2969 = vst.msk [vmem:[%s2925 + $0x40] sm:$0xf] %vm2931, %v2796
      %v2970 = vld [vmem:[%s2925 + $0x44] sm:$0x1]
      %v2971 = vsel %vm2934, %v2798, %v2970
      %2972 = vst [vmem:[%s2925 + $0x44] sm:$0x1] %v2971
      %v2973 = vld [vmem:[%s2925 + $0x48] sm:$0xf]
      %v2974 = vsel %vm2927, %v2800, %v2973
      %2975 = vst [vmem:[%s2925 + $0x48] sm:$0xf] %v2974
      %2976 = vst.msk [vmem:[%s2925 + $0x4c] sm:$0xf] %vm2931, %v2802
      %v2977 = vld [vmem:[%s2925 + $0x50] sm:$0x1]
      %v2978 = vsel %vm2934, %v2804, %v2977
      %2979 = vst [vmem:[%s2925 + $0x50] sm:$0x1] %v2978
      %v2980 = vld [vmem:[%s2925 + $0x54] sm:$0xf]
      %v2981 = vsel %vm2927, %v2806, %v2980
      %2982 = vst [vmem:[%s2925 + $0x54] sm:$0xf] %v2981
      %2983 = vst.msk [vmem:[%s2925 + $0x58] sm:$0xf] %vm2931, %v2808
      %v2984 = vld [vmem:[%s2925 + $0x5c] sm:$0x1]
      %v2985 = vsel %vm2934, %v2810, %v2984
      %2986 = vst [vmem:[%s2925 + $0x5c] sm:$0x1] %v2985
      %v2987 = vld [vmem:[%s2925 + $0x60] sm:$0xf]
      %v2988 = vsel %vm2927, %v2812, %v2987
      %2989 = vst [vmem:[%s2925 + $0x60] sm:$0xf] %v2988
      %2990 = vst.msk [vmem:[%s2925 + $0x64] sm:$0xf] %vm2931, %v2814
      %v2991 = vld [vmem:[%s2925 + $0x68] sm:$0x1]
      %v2992 = vsel %vm2934, %v2816, %v2991
      %2993 = vst [vmem:[%s2925 + $0x68] sm:$0x1] %v2992
      %v2994 = vld [vmem:[%s2925 + $0x6c] sm:$0xf]
      %v2995 = vsel %vm2927, %v2818, %v2994
      %2996 = vst [vmem:[%s2925 + $0x6c] sm:$0xf] %v2995
      %2997 = vst.msk [vmem:[%s2925 + $0x70] sm:$0xf] %vm2931, %v2820
      %v2998 = vld [vmem:[%s2925 + $0x74] sm:$0x1]
      %v2999 = vsel %vm2934, %v2822, %v2998
      %3000 = vst [vmem:[%s2925 + $0x74] sm:$0x1] %v2999
      %v3001 = vld [vmem:[%s2925 + $0x78] sm:$0xf]
      %v3002 = vsel %vm2927, %v2824, %v3001
      %3003 = vst [vmem:[%s2925 + $0x78] sm:$0xf] %v3002
      %3004 = vst.msk [vmem:[%s2925 + $0x7c] sm:$0xf] %vm2931, %v2826
      %v3005 = vld [vmem:[%s2925 + $0x80] sm:$0x1]
      %v3006 = vsel %vm2934, %v2828, %v3005
      %3007 = vst [vmem:[%s2925 + $0x80] sm:$0x1] %v3006
      %v3008 = vld [vmem:[%s2925 + $0x84] sm:$0xf]
      %v3009 = vsel %vm2927, %v2830, %v3008
      %3010 = vst [vmem:[%s2925 + $0x84] sm:$0xf] %v3009
      %3011 = vst.msk [vmem:[%s2925 + $0x88] sm:$0xf] %vm2931, %v2832
      %v3012 = vld [vmem:[%s2925 + $0x8c] sm:$0x1]
      %v3013 = vsel %vm2934, %v2834, %v3012
      %3014 = vst [vmem:[%s2925 + $0x8c] sm:$0x1] %v3013
      %v3015 = vld [vmem:[%s2925 + $0x90] sm:$0xf]
      %v3016 = vsel %vm2927, %v2836, %v3015
      %3017 = vst [vmem:[%s2925 + $0x90] sm:$0xf] %v3016
      %3018 = vst.msk [vmem:[%s2925 + $0x94] sm:$0xf] %vm2931, %v2838
      %v3019 = vld [vmem:[%s2925 + $0x98] sm:$0x1]
      %v3020 = vsel %vm2934, %v2840, %v3019
      %3021 = vst [vmem:[%s2925 + $0x98] sm:$0x1] %v3020
      %v3022 = vld [vmem:[%s2925 + $0x9c] sm:$0xf]
      %v3023 = vsel %vm2927, %v2842, %v3022
      %3024 = vst [vmem:[%s2925 + $0x9c] sm:$0xf] %v3023
      %3025 = vst.msk [vmem:[%s2925 + $0xa0] sm:$0xf] %vm2931, %v2844
      %v3026 = vld [vmem:[%s2925 + $0xa4] sm:$0x1]
      %v3027 = vsel %vm2934, %v2846, %v3026
      %3028 = vst [vmem:[%s2925 + $0xa4] sm:$0x1] %v3027
      %v3029 = vld [vmem:[%s2925 + $0xa8] sm:$0xf]
      %v3030 = vsel %vm2927, %v2848, %v3029
      %3031 = vst [vmem:[%s2925 + $0xa8] sm:$0xf] %v3030
      %3032 = vst.msk [vmem:[%s2925 + $0xac] sm:$0xf] %vm2931, %v2850
      %v3033 = vld [vmem:[%s2925 + $0xb0] sm:$0x1]
      %v3034 = vsel %vm2934, %v2852, %v3033
      %3035 = vst [vmem:[%s2925 + $0xb0] sm:$0x1] %v3034
      %v3036 = vld [vmem:[%s2925 + $0xb4] sm:$0xf]
      %v3037 = vsel %vm2927, %v2854, %v3036
      %3038 = vst [vmem:[%s2925 + $0xb4] sm:$0xf] %v3037
      %3039 = vst.msk [vmem:[%s2925 + $0xb8] sm:$0xf] %vm2931, %v2856
      %v3040 = vld [vmem:[%s2925 + $0xbc] sm:$0x1]
      %v3041 = vsel %vm2934, %v2858, %v3040
      %3042 = vst [vmem:[%s2925 + $0xbc] sm:$0x1] %v3041
      %v3043 = vld [vmem:[%s2925 + $0xc0] sm:$0xf]
      %v3044 = vsel %vm2927, %v2860, %v3043
      %3045 = vst [vmem:[%s2925 + $0xc0] sm:$0xf] %v3044
      %3046 = vst.msk [vmem:[%s2925 + $0xc4] sm:$0xf] %vm2931, %v2862
      %v3047 = vld [vmem:[%s2925 + $0xc8] sm:$0x1]
      %v3048 = vsel %vm2934, %v2864, %v3047
      %3049 = vst [vmem:[%s2925 + $0xc8] sm:$0x1] %v3048
      %v3050 = vld [vmem:[%s2925 + $0xcc] sm:$0xf]
      %v3051 = vsel %vm2927, %v2866, %v3050
      %3052 = vst [vmem:[%s2925 + $0xcc] sm:$0xf] %v3051
      %3053 = vst.msk [vmem:[%s2925 + $0xd0] sm:$0xf] %vm2931, %v2868
      %v3054 = vld [vmem:[%s2925 + $0xd4] sm:$0x1]
      %v3055 = vsel %vm2934, %v2870, %v3054
      %3056 = vst [vmem:[%s2925 + $0xd4] sm:$0x1] %v3055
      // Predicated region
      $region73: #{residual_dense_block.1} parent=71 // pred_check
        %p3057 = pneg %p810
      $region74: #{residual_dense_block.1} parent=71 // pred_check_branch
        %3059 = sbr.rel (%p3057) target = $region76
      $region75: #{residual_dense_block.1} parent=71 // pred_region
        %v3060 = vld [vmem:[%s2925] sm:$0xf]
        %v3061 = vsel %vm2927, 0, %v3060
        %3062 = vst [vmem:[%s2925] sm:$0xf] %v3061
        %3063 = vst.msk [vmem:[%s2925 + $0x4] sm:$0xf] %vm2931, 0
        %v3064 = vld [vmem:[%s2925 + $0x8] sm:$0x1]
        %v3065 = vsel %vm2934, 0, %v3064
        %3066 = vst [vmem:[%s2925 + $0x8] sm:$0x1] %v3065
        %v3067 = vld [vmem:[%s2925 + $0xc] sm:$0xf]
        %v3068 = vsel %vm2927, 0, %v3067
        %3069 = vst [vmem:[%s2925 + $0xc] sm:$0xf] %v3068
        %3070 = vst.msk [vmem:[%s2925 + $0x10] sm:$0xf] %vm2931, 0
        %v3071 = vld [vmem:[%s2925 + $0x14] sm:$0x1]
        %v3072 = vsel %vm2934, 0, %v3071
        %3073 = vst [vmem:[%s2925 + $0x14] sm:$0x1] %v3072
        %v3074 = vld [vmem:[%s2925 + $0x18] sm:$0xf]
        %v3075 = vsel %vm2927, 0, %v3074
        %3076 = vst [vmem:[%s2925 + $0x18] sm:$0xf] %v3075
        %3077 = vst.msk [vmem:[%s2925 + $0x1c] sm:$0xf] %vm2931, 0
        %v3078 = vld [vmem:[%s2925 + $0x20] sm:$0x1]
        %v3079 = vsel %vm2934, 0, %v3078
        %3080 = vst [vmem:[%s2925 + $0x20] sm:$0x1] %v3079
        %v3081 = vld [vmem:[%s2925 + $0x24] sm:$0xf]
        %v3082 = vsel %vm2927, 0, %v3081
        %3083 = vst [vmem:[%s2925 + $0x24] sm:$0xf] %v3082
        %3084 = vst.msk [vmem:[%s2925 + $0x28] sm:$0xf] %vm2931, 0
        %v3085 = vld [vmem:[%s2925 + $0x2c] sm:$0x1]
        %v3086 = vsel %vm2934, 0, %v3085
        %3087 = vst [vmem:[%s2925 + $0x2c] sm:$0x1] %v3086
        %v3088 = vld [vmem:[%s2925 + $0x30] sm:$0xf]
        %v3089 = vsel %vm2927, 0, %v3088
        %3090 = vst [vmem:[%s2925 + $0x30] sm:$0xf] %v3089
        %3091 = vst.msk [vmem:[%s2925 + $0x34] sm:$0xf] %vm2931, 0
        %v3092 = vld [vmem:[%s2925 + $0x38] sm:$0x1]
        %v3093 = vsel %vm2934, 0, %v3092
        %3094 = vst [vmem:[%s2925 + $0x38] sm:$0x1] %v3093
      $region76: #{residual_dense_block.1} parent=71 // pred_fallthru
        _
      // Predicated region
      $region77: #{residual_dense_block.1} parent=71 // pred_check
        %p3095 = pneg %p811
      $region78: #{residual_dense_block.1} parent=71 // pred_check_branch
        %3097 = sbr.rel (%p3095) target = $region80
      $region79: #{residual_dense_block.1} parent=71 // pred_region
        %v3098 = vld [vmem:[%s657] sm:$0xf]
        %v3099 = vsel %vm2927, 0, %v3098
        %3100 = vst [vmem:[%s657] sm:$0xf] %v3099
        %3101 = vst.msk [vmem:[%s657 + $0x4] sm:$0xf] %vm2931, 0
        %v3102 = vld [vmem:[%s657 + $0x8] sm:$0x1]
        %v3103 = vsel %vm2934, 0, %v3102
        %3104 = vst [vmem:[%s657 + $0x8] sm:$0x1] %v3103
        %v3105 = vld [vmem:[%s657 + $0xc] sm:$0xf]
        %v3106 = vsel %vm2927, 0, %v3105
        %3107 = vst [vmem:[%s657 + $0xc] sm:$0xf] %v3106
        %3108 = vst.msk [vmem:[%s657 + $0x10] sm:$0xf] %vm2931, 0
        %v3109 = vld [vmem:[%s657 + $0x14] sm:$0x1]
        %v3110 = vsel %vm2934, 0, %v3109
        %3111 = vst [vmem:[%s657 + $0x14] sm:$0x1] %v3110
        %v3112 = vld [vmem:[%s657 + $0x18] sm:$0xf]
        %v3113 = vsel %vm2927, 0, %v3112
        %3114 = vst [vmem:[%s657 + $0x18] sm:$0xf] %v3113
        %3115 = vst.msk [vmem:[%s657 + $0x1c] sm:$0xf] %vm2931, 0
        %v3116 = vld [vmem:[%s657 + $0x20] sm:$0x1]
        %v3117 = vsel %vm2934, 0, %v3116
        %3118 = vst [vmem:[%s657 + $0x20] sm:$0x1] %v3117
        %v3119 = vld [vmem:[%s657 + $0x24] sm:$0xf]
        %v3120 = vsel %vm2927, 0, %v3119
        %3121 = vst [vmem:[%s657 + $0x24] sm:$0xf] %v3120
        %3122 = vst.msk [vmem:[%s657 + $0x28] sm:$0xf] %vm2931, 0
        %v3123 = vld [vmem:[%s657 + $0x2c] sm:$0x1]
        %v3124 = vsel %vm2934, 0, %v3123
        %3125 = vst [vmem:[%s657 + $0x2c] sm:$0x1] %v3124
        %v3126 = vld [vmem:[%s657 + $0x30] sm:$0xf]
        %v3127 = vsel %vm2927, 0, %v3126
        %3128 = vst [vmem:[%s657 + $0x30] sm:$0xf] %v3127
        %3129 = vst.msk [vmem:[%s657 + $0x34] sm:$0xf] %vm2931, 0
        %v3130 = vld [vmem:[%s657 + $0x38] sm:$0x1]
        %v3131 = vsel %vm2934, 0, %v3130
        %3132 = vst [vmem:[%s657 + $0x38] sm:$0x1] %v3131
      $region80: #{residual_dense_block.1} parent=71 // pred_fallthru
        _
      %v3133 = vld [vmem:[#allocation2] sm:$0xf]
      %v3134 = vld [vmem:[#allocation2 + $0x4] sm:$0xf]
      %v3135 = vld [vmem:[#allocation2 + $0xc] sm:$0xf]
      %v3136 = vld [vmem:[#allocation2 + $0x10] sm:$0xf]
      %v3137 = vld [vmem:[#allocation2 + $0x18] sm:$0xf]
      %v3138 = vld [vmem:[#allocation2 + $0x1c] sm:$0xf]
      %v3139 = vld [vmem:[#allocation2 + $0x24] sm:$0xf]
      %v3140 = vld [vmem:[#allocation2 + $0x28] sm:$0xf]
      %v3141 = vld [vmem:[#allocation2 + $0x30] sm:$0xf]
      %v3142 = vld [vmem:[#allocation2 + $0x34] sm:$0xf]
      %v3143 = vld [vmem:[#allocation2 + $0x3c] sm:$0xf]
      %v3144 = vld [vmem:[#allocation2 + $0x40] sm:$0xf]
      %v3145 = vld [vmem:[#allocation2 + $0x48] sm:$0xf]
      %v3146 = vld [vmem:[#allocation2 + $0x4c] sm:$0xf]
      %v3147 = vld [vmem:[#allocation2 + $0x54] sm:$0xf]
      %v3148 = vld [vmem:[#allocation2 + $0x58] sm:$0xf]
      %v3149 = vld [vmem:[#allocation2 + $0x60] sm:$0xf]
      %v3150 = vld [vmem:[#allocation2 + $0x64] sm:$0xf]
      %v3151 = vld [vmem:[#allocation2 + $0x6c] sm:$0xf]
      %v3152 = vld [vmem:[#allocation2 + $0x70] sm:$0xf]
      %v3153 = vld [vmem:[#allocation2 + $0x78] sm:$0xf]
      %v3154 = vld [vmem:[#allocation2 + $0x7c] sm:$0xf]
      %v3155 = vld [vmem:[#allocation2 + $0x84] sm:$0xf]
      %v3156 = vld [vmem:[#allocation2 + $0x88] sm:$0xf]
      %v3157 = vld [vmem:[#allocation2 + $0x90] sm:$0xf]
      %v3158 = vld [vmem:[#allocation2 + $0x94] sm:$0xf]
      %v3159 = vld [vmem:[#allocation2 + $0x9c] sm:$0xf]
      %v3160 = vld [vmem:[#allocation2 + $0xa0] sm:$0xf]
      %v3161 = vld [vmem:[#allocation2 + $0xa8] sm:$0xf]
      %v3162 = vld [vmem:[#allocation2 + $0xac] sm:$0xf]
      %v3163 = vld [vmem:[#allocation2 + $0xb4] sm:$0xf]
      %v3164 = vld [vmem:[#allocation2 + $0xb8] sm:$0xf]
      %v3165 = vld [vmem:[#allocation2 + $0xc0] sm:$0xf]
      %v3166 = vld [vmem:[#allocation2 + $0xc4] sm:$0xf]
      %v3167 = vld [vmem:[#allocation2 + $0xcc] sm:$0xf]
      %v3168 = vld [vmem:[#allocation2 + $0xd0] sm:$0xf]
      %v3169 = vld [vmem:[#allocation2 + $0xd8] sm:$0xf]
      %v3170 = vld [vmem:[#allocation2 + $0xdc] sm:$0xf]
      %v3171 = vld [vmem:[#allocation2 + $0xe4] sm:$0xf]
      %v3172 = vld [vmem:[#allocation2 + $0xe8] sm:$0xf]
      %v3173 = vld [vmem:[#allocation2 + $0x8] sm:$0x1]
      %v3174 = vld [vmem:[#allocation2 + $0x14] sm:$0x1]
      %v3175 = vld [vmem:[#allocation2 + $0x20] sm:$0x1]
      %v3176 = vld [vmem:[#allocation2 + $0x2c] sm:$0x1]
      %v3177 = vld [vmem:[#allocation2 + $0x38] sm:$0x1]
      %v3178 = vld [vmem:[#allocation2 + $0x44] sm:$0x1]
      %v3179 = vld [vmem:[#allocation2 + $0x50] sm:$0x1]
      %v3180 = vld [vmem:[#allocation2 + $0x5c] sm:$0x1]
      %v3181 = vld [vmem:[#allocation2 + $0x68] sm:$0x1]
      %v3182 = vld [vmem:[#allocation2 + $0x74] sm:$0x1]
      %v3183 = vld [vmem:[#allocation2 + $0x80] sm:$0x1]
      %v3184 = vld [vmem:[#allocation2 + $0x8c] sm:$0x1]
      %v3185 = vld [vmem:[#allocation2 + $0x98] sm:$0x1]
      %v3186 = vld [vmem:[#allocation2 + $0xa4] sm:$0x1]
      %v3187 = vld [vmem:[#allocation2 + $0xb0] sm:$0x1]
      %v3188 = vld [vmem:[#allocation2 + $0xbc] sm:$0x1]
      %v3189 = vld [vmem:[#allocation2 + $0xc8] sm:$0x1]
      %v3190 = vld [vmem:[#allocation2 + $0xd4] sm:$0x1]
      %v3191 = vld [vmem:[#allocation2 + $0xe0] sm:$0x1]
      %v3192 = vld [vmem:[#allocation2 + $0xec] sm:$0x1]
      %v3193 = vld [vmem:[#allocation2] sm:$0xe]
      %v3194 = vld [vmem:[#allocation2 + $0xc] sm:$0xe]
      %v3195 = vld [vmem:[#allocation2 + $0x18] sm:$0xe]
      %v3196 = vld [vmem:[#allocation2 + $0x24] sm:$0xe]
      %v3197 = vld [vmem:[#allocation2 + $0x30] sm:$0xe]
      %v3198 = vld [vmem:[#allocation2 + $0x3c] sm:$0xe]
      %v3199 = vld [vmem:[#allocation2 + $0x48] sm:$0xe]
      %v3200 = vld [vmem:[#allocation2 + $0x54] sm:$0xe]
      %v3201 = vld [vmem:[#allocation2 + $0x60] sm:$0xe]
      %v3202 = vld [vmem:[#allocation2 + $0x6c] sm:$0xe]
      %v3203 = vld [vmem:[#allocation2 + $0x78] sm:$0xe]
      %v3204 = vld [vmem:[#allocation2 + $0x84] sm:$0xe]
      %v3205 = vld [vmem:[#allocation2 + $0x90] sm:$0xe]
      %v3206 = vld [vmem:[#allocation2 + $0x9c] sm:$0xe]
      %v3207 = vld [vmem:[#allocation2 + $0xa8] sm:$0xe]
      %v3208 = vld [vmem:[#allocation2 + $0xb4] sm:$0xe]
      %v3209 = vld [vmem:[#allocation2 + $0xc0] sm:$0xe]
      %v3210 = vld [vmem:[#allocation2 + $0xcc] sm:$0xe]
      %v3211 = vld [vmem:[#allocation2 + $0xd8] sm:$0xe]
      %v3212 = vld [vmem:[#allocation2 + $0xe4] sm:$0xe]
      %v3253 = vunpack.c.l.b16 %v3133
      %v3254 = vunpack.c.l.b16 %v3134
      %v3255 = vunpack.c.l.b16 %v3135
      %v3256 = vunpack.c.l.b16 %v3136
      %v3257 = vunpack.c.l.b16 %v3137
      %v3258 = vunpack.c.l.b16 %v3138
      %v3259 = vunpack.c.l.b16 %v3139
      %v3260 = vunpack.c.l.b16 %v3140
      %v3261 = vunpack.c.l.b16 %v3141
      %v3262 = vunpack.c.l.b16 %v3142
      %v3263 = vunpack.c.l.b16 %v3143
      %v3264 = vunpack.c.l.b16 %v3144
      %v3265 = vunpack.c.l.b16 %v3145
      %v3266 = vunpack.c.l.b16 %v3146
      %v3267 = vunpack.c.l.b16 %v3147
      %v3268 = vunpack.c.l.b16 %v3148
      %v3269 = vunpack.c.l.b16 %v3149
      %v3270 = vunpack.c.l.b16 %v3150
      %v3271 = vunpack.c.l.b16 %v3151
      %v3272 = vunpack.c.l.b16 %v3152
      %v3273 = vunpack.c.l.b16 %v3153
      %v3274 = vunpack.c.l.b16 %v3154
      %v3275 = vunpack.c.l.b16 %v3155
      %v3276 = vunpack.c.l.b16 %v3156
      %v3277 = vunpack.c.l.b16 %v3157
      %v3278 = vunpack.c.l.b16 %v3158
      %v3279 = vunpack.c.l.b16 %v3159
      %v3280 = vunpack.c.l.b16 %v3160
      %v3281 = vunpack.c.l.b16 %v3161
      %v3282 = vunpack.c.l.b16 %v3162
      %v3283 = vunpack.c.l.b16 %v3163
      %v3284 = vunpack.c.l.b16 %v3164
      %v3285 = vunpack.c.l.b16 %v3165
      %v3286 = vunpack.c.l.b16 %v3166
      %v3287 = vunpack.c.l.b16 %v3167
      %v3288 = vunpack.c.l.b16 %v3168
      %v3289 = vunpack.c.l.b16 %v3169
      %v3290 = vunpack.c.l.b16 %v3170
      %v3291 = vunpack.c.l.b16 %v3171
      %v3292 = vunpack.c.l.b16 %v3172
      %v3293 = vpack.c.b16 %v3254, %v3253
      %v3294 = vpack.c.b16 %v3256, %v3255
      %v3295 = vpack.c.b16 %v3258, %v3257
      %v3296 = vpack.c.b16 %v3260, %v3259
      %v3297 = vpack.c.b16 %v3262, %v3261
      %v3298 = vpack.c.b16 %v3264, %v3263
      %v3299 = vpack.c.b16 %v3266, %v3265
      %v3300 = vpack.c.b16 %v3268, %v3267
      %v3301 = vpack.c.b16 %v3270, %v3269
      %v3302 = vpack.c.b16 %v3272, %v3271
      %v3303 = vpack.c.b16 %v3274, %v3273
      %v3304 = vpack.c.b16 %v3276, %v3275
      %v3305 = vpack.c.b16 %v3278, %v3277
      %v3306 = vpack.c.b16 %v3280, %v3279
      %v3307 = vpack.c.b16 %v3282, %v3281
      %v3308 = vpack.c.b16 %v3284, %v3283
      %v3309 = vpack.c.b16 %v3286, %v3285
      %v3310 = vpack.c.b16 %v3288, %v3287
      %v3311 = vpack.c.b16 %v3290, %v3289
      %v3312 = vpack.c.b16 %v3292, %v3291
      %v3333 = vunpack.c.l.b16 %v3173
      %v3334 = vunpack.c.l.b16 %v3174
      %v3335 = vunpack.c.l.b16 %v3175
      %v3336 = vunpack.c.l.b16 %v3176
      %v3337 = vunpack.c.l.b16 %v3177
      %v3338 = vunpack.c.l.b16 %v3178
      %v3339 = vunpack.c.l.b16 %v3179
      %v3340 = vunpack.c.l.b16 %v3180
      %v3341 = vunpack.c.l.b16 %v3181
      %v3342 = vunpack.c.l.b16 %v3182
      %v3343 = vunpack.c.l.b16 %v3183
      %v3344 = vunpack.c.l.b16 %v3184
      %v3345 = vunpack.c.l.b16 %v3185
      %v3346 = vunpack.c.l.b16 %v3186
      %v3347 = vunpack.c.l.b16 %v3187
      %v3348 = vunpack.c.l.b16 %v3188
      %v3349 = vunpack.c.l.b16 %v3189
      %v3350 = vunpack.c.l.b16 %v3190
      %v3351 = vunpack.c.l.b16 %v3191
      %v3352 = vunpack.c.l.b16 %v3192
      %v3353 = vpack.c.b16 %v3333, %v3333
      %v3354 = vpack.c.b16 %v3334, %v3334
      %v3355 = vpack.c.b16 %v3335, %v3335
      %v3356 = vpack.c.b16 %v3336, %v3336
      %v3357 = vpack.c.b16 %v3337, %v3337
      %v3358 = vpack.c.b16 %v3338, %v3338
      %v3359 = vpack.c.b16 %v3339, %v3339
      %v3360 = vpack.c.b16 %v3340, %v3340
      %v3361 = vpack.c.b16 %v3341, %v3341
      %v3362 = vpack.c.b16 %v3342, %v3342
      %v3363 = vpack.c.b16 %v3343, %v3343
      %v3364 = vpack.c.b16 %v3344, %v3344
      %v3365 = vpack.c.b16 %v3345, %v3345
      %v3366 = vpack.c.b16 %v3346, %v3346
      %v3367 = vpack.c.b16 %v3347, %v3347
      %v3368 = vpack.c.b16 %v3348, %v3348
      %v3369 = vpack.c.b16 %v3349, %v3349
      %v3370 = vpack.c.b16 %v3350, %v3350
      %v3371 = vpack.c.b16 %v3351, %v3351
      %v3372 = vpack.c.b16 %v3352, %v3352
      %v3374 = vshrl.u32 %v3293, 16
      %v3376 = vshll.u32 %v3293, 16
      %v3378 = vrot.slane %v3376, 1
      %v3379 = vor.u32 %v3374, %v3378
      %v3381 = vshll.u32 %v3353, 16
      %v3383 = vrot.slane %v3381, 1
      %v3384 = vsel %vm1052, %v3379, %v3383
      %v3386 = vshrl.u32 %v3294, 16
      %v3388 = vshll.u32 %v3294, 16
      %v3390 = vrot.slane %v3388, 1
      %v3391 = vor.u32 %v3386, %v3390
      %v3393 = vshll.u32 %v3354, 16
      %v3395 = vrot.slane %v3393, 1
      %v3396 = vsel %vm1052, %v3391, %v3395
      %v3398 = vshrl.u32 %v3295, 16
      %v3400 = vshll.u32 %v3295, 16
      %v3402 = vrot.slane %v3400, 1
      %v3403 = vor.u32 %v3398, %v3402
      %v3405 = vshll.u32 %v3355, 16
      %v3407 = vrot.slane %v3405, 1
      %v3408 = vsel %vm1052, %v3403, %v3407
      %v3410 = vshrl.u32 %v3296, 16
      %v3412 = vshll.u32 %v3296, 16
      %v3414 = vrot.slane %v3412, 1
      %v3415 = vor.u32 %v3410, %v3414
      %v3417 = vshll.u32 %v3356, 16
      %v3419 = vrot.slane %v3417, 1
      %v3420 = vsel %vm1052, %v3415, %v3419
      %v3422 = vshrl.u32 %v3297, 16
      %v3424 = vshll.u32 %v3297, 16
      %v3426 = vrot.slane %v3424, 1
      %v3427 = vor.u32 %v3422, %v3426
      %v3429 = vshll.u32 %v3357, 16
      %v3431 = vrot.slane %v3429, 1
      %v3432 = vsel %vm1052, %v3427, %v3431
      %v3434 = vshrl.u32 %v3298, 16
      %v3436 = vshll.u32 %v3298, 16
      %v3438 = vrot.slane %v3436, 1
      %v3439 = vor.u32 %v3434, %v3438
      %v3441 = vshll.u32 %v3358, 16
      %v3443 = vrot.slane %v3441, 1
      %v3444 = vsel %vm1052, %v3439, %v3443
      %v3446 = vshrl.u32 %v3299, 16
      %v3448 = vshll.u32 %v3299, 16
      %v3450 = vrot.slane %v3448, 1
      %v3451 = vor.u32 %v3446, %v3450
      %v3453 = vshll.u32 %v3359, 16
      %v3455 = vrot.slane %v3453, 1
      %v3456 = vsel %vm1052, %v3451, %v3455
      %v3458 = vshrl.u32 %v3300, 16
      %v3460 = vshll.u32 %v3300, 16
      %v3462 = vrot.slane %v3460, 1
      %v3463 = vor.u32 %v3458, %v3462
      %v3465 = vshll.u32 %v3360, 16
      %v3467 = vrot.slane %v3465, 1
      %v3468 = vsel %vm1052, %v3463, %v3467
      %v3470 = vshrl.u32 %v3301, 16
      %v3472 = vshll.u32 %v3301, 16
      %v3474 = vrot.slane %v3472, 1
      %v3475 = vor.u32 %v3470, %v3474
      %v3477 = vshll.u32 %v3361, 16
      %v3479 = vrot.slane %v3477, 1
      %v3480 = vsel %vm1052, %v3475, %v3479
      %v3482 = vshrl.u32 %v3302, 16
      %v3484 = vshll.u32 %v3302, 16
      %v3486 = vrot.slane %v3484, 1
      %v3487 = vor.u32 %v3482, %v3486
      %v3489 = vshll.u32 %v3362, 16
      %v3491 = vrot.slane %v3489, 1
      %v3492 = vsel %vm1052, %v3487, %v3491
      %v3494 = vshrl.u32 %v3303, 16
      %v3496 = vshll.u32 %v3303, 16
      %v3498 = vrot.slane %v3496, 1
      %v3499 = vor.u32 %v3494, %v3498
      %v3501 = vshll.u32 %v3363, 16
      %v3503 = vrot.slane %v3501, 1
      %v3504 = vsel %vm1052, %v3499, %v3503
      %v3506 = vshrl.u32 %v3304, 16
      %v3508 = vshll.u32 %v3304, 16
      %v3510 = vrot.slane %v3508, 1
      %v3511 = vor.u32 %v3506, %v3510
      %v3513 = vshll.u32 %v3364, 16
      %v3515 = vrot.slane %v3513, 1
      %v3516 = vsel %vm1052, %v3511, %v3515
      %v3518 = vshrl.u32 %v3305, 16
      %v3520 = vshll.u32 %v3305, 16
      %v3522 = vrot.slane %v3520, 1
      %v3523 = vor.u32 %v3518, %v3522
      %v3525 = vshll.u32 %v3365, 16
      %v3527 = vrot.slane %v3525, 1
      %v3528 = vsel %vm1052, %v3523, %v3527
      %v3530 = vshrl.u32 %v3306, 16
      %v3532 = vshll.u32 %v3306, 16
      %v3534 = vrot.slane %v3532, 1
      %v3535 = vor.u32 %v3530, %v3534
      %v3537 = vshll.u32 %v3366, 16
      %v3539 = vrot.slane %v3537, 1
      %v3540 = vsel %vm1052, %v3535, %v3539
      %v3542 = vshrl.u32 %v3307, 16
      %v3544 = vshll.u32 %v3307, 16
      %v3546 = vrot.slane %v3544, 1
      %v3547 = vor.u32 %v3542, %v3546
      %v3549 = vshll.u32 %v3367, 16
      %v3551 = vrot.slane %v3549, 1
      %v3552 = vsel %vm1052, %v3547, %v3551
      %v3554 = vshrl.u32 %v3308, 16
      %v3556 = vshll.u32 %v3308, 16
      %v3558 = vrot.slane %v3556, 1
      %v3559 = vor.u32 %v3554, %v3558
      %v3561 = vshll.u32 %v3368, 16
      %v3563 = vrot.slane %v3561, 1
      %v3564 = vsel %vm1052, %v3559, %v3563
      %v3566 = vshrl.u32 %v3309, 16
      %v3568 = vshll.u32 %v3309, 16
      %v3570 = vrot.slane %v3568, 1
      %v3571 = vor.u32 %v3566, %v3570
      %v3573 = vshll.u32 %v3369, 16
      %v3575 = vrot.slane %v3573, 1
      %v3576 = vsel %vm1052, %v3571, %v3575
      %v3578 = vshrl.u32 %v3310, 16
      %v3580 = vshll.u32 %v3310, 16
      %v3582 = vrot.slane %v3580, 1
      %v3583 = vor.u32 %v3578, %v3582
      %v3585 = vshll.u32 %v3370, 16
      %v3587 = vrot.slane %v3585, 1
      %v3588 = vsel %vm1052, %v3583, %v3587
      %v3590 = vshrl.u32 %v3311, 16
      %v3592 = vshll.u32 %v3311, 16
      %v3594 = vrot.slane %v3592, 1
      %v3595 = vor.u32 %v3590, %v3594
      %v3597 = vshll.u32 %v3371, 16
      %v3599 = vrot.slane %v3597, 1
      %v3600 = vsel %vm1052, %v3595, %v3599
      %v3602 = vshrl.u32 %v3312, 16
      %v3604 = vshll.u32 %v3312, 16
      %v3606 = vrot.slane %v3604, 1
      %v3607 = vor.u32 %v3602, %v3606
      %v3609 = vshll.u32 %v3372, 16
      %v3611 = vrot.slane %v3609, 1
      %v3612 = vsel %vm1052, %v3607, %v3611
      %3613 = vrot.lane.b32.xlu0 %v3384, 24
      %v3614 = vpop.permute.xlu0 %3613
      %3615 = vrot.lane.b32.xlu0 %v3396, 24
      %v3616 = vpop.permute.xlu0 %3615
      %3617 = vrot.lane.b32.xlu0 %v3408, 24
      %v3618 = vpop.permute.xlu0 %3617
      %3619 = vrot.lane.b32.xlu0 %v3420, 24
      %v3620 = vpop.permute.xlu0 %3619
      %3621 = vrot.lane.b32.xlu0 %v3432, 24
      %v3622 = vpop.permute.xlu0 %3621
      %3623 = vrot.lane.b32.xlu0 %v3444, 24
      %v3624 = vpop.permute.xlu0 %3623
      %3625 = vrot.lane.b32.xlu0 %v3456, 24
      %v3626 = vpop.permute.xlu0 %3625
      %3627 = vrot.lane.b32.xlu0 %v3468, 24
      %v3628 = vpop.permute.xlu0 %3627
      %3629 = vrot.lane.b32.xlu0 %v3480, 24
      %v3630 = vpop.permute.xlu0 %3629
      %3631 = vrot.lane.b32.xlu0 %v3492, 24
      %v3632 = vpop.permute.xlu0 %3631
      %3633 = vrot.lane.b32.xlu0 %v3504, 24
      %v3634 = vpop.permute.xlu0 %3633
      %3635 = vrot.lane.b32.xlu0 %v3516, 24
      %v3636 = vpop.permute.xlu0 %3635
      %3637 = vrot.lane.b32.xlu0 %v3528, 24
      %v3638 = vpop.permute.xlu0 %3637
      %3639 = vrot.lane.b32.xlu0 %v3540, 24
      %v3640 = vpop.permute.xlu0 %3639
      %3641 = vrot.lane.b32.xlu0 %v3552, 24
      %v3642 = vpop.permute.xlu0 %3641
      %3643 = vrot.lane.b32.xlu0 %v3564, 24
      %v3644 = vpop.permute.xlu0 %3643
      %3645 = vrot.lane.b32.xlu0 %v3576, 24
      %v3646 = vpop.permute.xlu0 %3645
      %3647 = vrot.lane.b32.xlu0 %v3588, 24
      %v3648 = vpop.permute.xlu0 %3647
      %3649 = vrot.lane.b32.xlu0 %v3600, 24
      %v3650 = vpop.permute.xlu0 %3649
      %3651 = vrot.lane.b32.xlu0 %v3612, 24
      %v3652 = vpop.permute.xlu0 %3651
      %v3673 = vunpack.c.l.b16 %v3193
      %v3674 = vunpack.c.l.b16 %v3194
      %v3675 = vunpack.c.l.b16 %v3195
      %v3676 = vunpack.c.l.b16 %v3196
      %v3677 = vunpack.c.l.b16 %v3197
      %v3678 = vunpack.c.l.b16 %v3198
      %v3679 = vunpack.c.l.b16 %v3199
      %v3680 = vunpack.c.l.b16 %v3200
      %v3681 = vunpack.c.l.b16 %v3201
      %v3682 = vunpack.c.l.b16 %v3202
      %v3683 = vunpack.c.l.b16 %v3203
      %v3684 = vunpack.c.l.b16 %v3204
      %v3685 = vunpack.c.l.b16 %v3205
      %v3686 = vunpack.c.l.b16 %v3206
      %v3687 = vunpack.c.l.b16 %v3207
      %v3688 = vunpack.c.l.b16 %v3208
      %v3689 = vunpack.c.l.b16 %v3209
      %v3690 = vunpack.c.l.b16 %v3210
      %v3691 = vunpack.c.l.b16 %v3211
      %v3692 = vunpack.c.l.b16 %v3212
      %v3693 = vpack.c.b16 %v3254, %v3673
      %v3694 = vpack.c.b16 %v3256, %v3674
      %v3695 = vpack.c.b16 %v3258, %v3675
      %v3696 = vpack.c.b16 %v3260, %v3676
      %v3697 = vpack.c.b16 %v3262, %v3677
      %v3698 = vpack.c.b16 %v3264, %v3678
      %v3699 = vpack.c.b16 %v3266, %v3679
      %v3700 = vpack.c.b16 %v3268, %v3680
      %v3701 = vpack.c.b16 %v3270, %v3681
      %v3702 = vpack.c.b16 %v3272, %v3682
      %v3703 = vpack.c.b16 %v3274, %v3683
      %v3704 = vpack.c.b16 %v3276, %v3684
      %v3705 = vpack.c.b16 %v3278, %v3685
      %v3706 = vpack.c.b16 %v3280, %v3686
      %v3707 = vpack.c.b16 %v3282, %v3687
      %v3708 = vpack.c.b16 %v3284, %v3688
      %v3709 = vpack.c.b16 %v3286, %v3689
      %v3710 = vpack.c.b16 %v3288, %v3690
      %v3711 = vpack.c.b16 %v3290, %v3691
      %v3712 = vpack.c.b16 %v3292, %v3692
      %v3713 = vrot.slane %v3693, 1
      %v3714 = vrot.slane %v3353, 1
      %v3715 = vsel %vm1393, %v3713, %v3714
      %v3716 = vrot.slane %v3694, 1
      %v3717 = vrot.slane %v3354, 1
      %v3718 = vsel %vm1393, %v3716, %v3717
      %v3719 = vrot.slane %v3695, 1
      %v3720 = vrot.slane %v3355, 1
      %v3721 = vsel %vm1393, %v3719, %v3720
      %v3722 = vrot.slane %v3696, 1
      %v3723 = vrot.slane %v3356, 1
      %v3724 = vsel %vm1393, %v3722, %v3723
      %v3725 = vrot.slane %v3697, 1
      %v3726 = vrot.slane %v3357, 1
      %v3727 = vsel %vm1393, %v3725, %v3726
      %v3728 = vrot.slane %v3698, 1
      %v3729 = vrot.slane %v3358, 1
      %v3730 = vsel %vm1393, %v3728, %v3729
      %v3731 = vrot.slane %v3699, 1
      %v3732 = vrot.slane %v3359, 1
      %v3733 = vsel %vm1393, %v3731, %v3732
      %v3734 = vrot.slane %v3700, 1
      %v3735 = vrot.slane %v3360, 1
      %v3736 = vsel %vm1393, %v3734, %v3735
      %v3737 = vrot.slane %v3701, 1
      %v3738 = vrot.slane %v3361, 1
      %v3739 = vsel %vm1393, %v3737, %v3738
      %v3740 = vrot.slane %v3702, 1
      %v3741 = vrot.slane %v3362, 1
      %v3742 = vsel %vm1393, %v3740, %v3741
      %v3743 = vrot.slane %v3703, 1
      %v3744 = vrot.slane %v3363, 1
      %v3745 = vsel %vm1393, %v3743, %v3744
      %v3746 = vrot.slane %v3704, 1
      %v3747 = vrot.slane %v3364, 1
      %v3748 = vsel %vm1393, %v3746, %v3747
      %v3749 = vrot.slane %v3705, 1
      %v3750 = vrot.slane %v3365, 1
      %v3751 = vsel %vm1393, %v3749, %v3750
      %v3752 = vrot.slane %v3706, 1
      %v3753 = vrot.slane %v3366, 1
      %v3754 = vsel %vm1393, %v3752, %v3753
      %v3755 = vrot.slane %v3707, 1
      %v3756 = vrot.slane %v3367, 1
      %v3757 = vsel %vm1393, %v3755, %v3756
      %v3758 = vrot.slane %v3708, 1
      %v3759 = vrot.slane %v3368, 1
      %v3760 = vsel %vm1393, %v3758, %v3759
      %v3761 = vrot.slane %v3709, 1
      %v3762 = vrot.slane %v3369, 1
      %v3763 = vsel %vm1393, %v3761, %v3762
      %v3764 = vrot.slane %v3710, 1
      %v3765 = vrot.slane %v3370, 1
      %v3766 = vsel %vm1393, %v3764, %v3765
      %v3767 = vrot.slane %v3711, 1
      %v3768 = vrot.slane %v3371, 1
      %v3769 = vsel %vm1393, %v3767, %v3768
      %v3770 = vrot.slane %v3712, 1
      %v3771 = vrot.slane %v3372, 1
      %v3772 = vsel %vm1393, %v3770, %v3771
      %3773 = vrot.lane.b32.xlu0 %v3715, 48
      %v3774 = vpop.permute.xlu0 %3773
      %3775 = vrot.lane.b32.xlu0 %v3718, 48
      %v3776 = vpop.permute.xlu0 %3775
      %3777 = vrot.lane.b32.xlu0 %v3721, 48
      %v3778 = vpop.permute.xlu0 %3777
      %3779 = vrot.lane.b32.xlu0 %v3724, 48
      %v3780 = vpop.permute.xlu0 %3779
      %3781 = vrot.lane.b32.xlu0 %v3727, 48
      %v3782 = vpop.permute.xlu0 %3781
      %3783 = vrot.lane.b32.xlu0 %v3730, 48
      %v3784 = vpop.permute.xlu0 %3783
      %3785 = vrot.lane.b32.xlu0 %v3733, 48
      %v3786 = vpop.permute.xlu0 %3785
      %3787 = vrot.lane.b32.xlu0 %v3736, 48
      %v3788 = vpop.permute.xlu0 %3787
      %3789 = vrot.lane.b32.xlu0 %v3739, 48
      %v3790 = vpop.permute.xlu0 %3789
      %3791 = vrot.lane.b32.xlu0 %v3742, 48
      %v3792 = vpop.permute.xlu0 %3791
      %3793 = vrot.lane.b32.xlu0 %v3745, 48
      %v3794 = vpop.permute.xlu0 %3793
      %3795 = vrot.lane.b32.xlu0 %v3748, 48
      %v3796 = vpop.permute.xlu0 %3795
      %3797 = vrot.lane.b32.xlu0 %v3751, 48
      %v3798 = vpop.permute.xlu0 %3797
      %3799 = vrot.lane.b32.xlu0 %v3754, 48
      %v3800 = vpop.permute.xlu0 %3799
      %3801 = vrot.lane.b32.xlu0 %v3757, 48
      %v3802 = vpop.permute.xlu0 %3801
      %3803 = vrot.lane.b32.xlu0 %v3760, 48
      %v3804 = vpop.permute.xlu0 %3803
      %3805 = vrot.lane.b32.xlu0 %v3763, 48
      %v3806 = vpop.permute.xlu0 %3805
      %3807 = vrot.lane.b32.xlu0 %v3766, 48
      %v3808 = vpop.permute.xlu0 %3807
      %3809 = vrot.lane.b32.xlu0 %v3769, 48
      %v3810 = vpop.permute.xlu0 %3809
      %3811 = vrot.lane.b32.xlu0 %v3772, 48
      %v3812 = vpop.permute.xlu0 %3811
      %vm3813 = vcmask 195584
      %v3815 = vsel %vm3813, %v3293, %v3614
      %v3817 = vsel %vm3813, %v3294, %v3616
      %v3819 = vsel %vm3813, %v3295, %v3618
      %v3821 = vsel %vm3813, %v3296, %v3620
      %v3823 = vsel %vm3813, %v3297, %v3622
      %v3825 = vsel %vm3813, %v3298, %v3624
      %v3827 = vsel %vm3813, %v3299, %v3626
      %v3829 = vsel %vm3813, %v3300, %v3628
      %v3831 = vsel %vm3813, %v3301, %v3630
      %v3833 = vsel %vm3813, %v3302, %v3632
      %v3835 = vsel %vm3813, %v3303, %v3634
      %v3837 = vsel %vm3813, %v3304, %v3636
      %v3839 = vsel %vm3813, %v3305, %v3638
      %v3841 = vsel %vm3813, %v3306, %v3640
      %v3843 = vsel %vm3813, %v3307, %v3642
      %v3845 = vsel %vm3813, %v3308, %v3644
      %v3847 = vsel %vm3813, %v3309, %v3646
      %v3849 = vsel %vm3813, %v3310, %v3648
      %v3851 = vsel %vm3813, %v3311, %v3650
      %v3853 = vsel %vm3813, %v3312, %v3652
      %v3855 = vsel %vm1600, %v3815, %v3774
      %v3857 = vsel %vm1600, %v3817, %v3776
      %v3859 = vsel %vm1600, %v3819, %v3778
      %v3861 = vsel %vm1600, %v3821, %v3780
      %v3863 = vsel %vm1600, %v3823, %v3782
      %v3865 = vsel %vm1600, %v3825, %v3784
      %v3867 = vsel %vm1600, %v3827, %v3786
      %v3869 = vsel %vm1600, %v3829, %v3788
      %v3871 = vsel %vm1600, %v3831, %v3790
      %v3873 = vsel %vm1600, %v3833, %v3792
      %v3875 = vsel %vm1600, %v3835, %v3794
      %v3877 = vsel %vm1600, %v3837, %v3796
      %v3879 = vsel %vm1600, %v3839, %v3798
      %v3881 = vsel %vm1600, %v3841, %v3800
      %v3883 = vsel %vm1600, %v3843, %v3802
      %v3885 = vsel %vm1600, %v3845, %v3804
      %v3887 = vsel %vm1600, %v3847, %v3806
      %v3889 = vsel %vm1600, %v3849, %v3808
      %v3891 = vsel %vm1600, %v3851, %v3810
      %v3893 = vsel %vm1600, %v3853, %v3812
      %v3894 = vld [vmem:[%s5] sm:$0xf]
      %v3895 = vld [vmem:[%s5 + $0x4] sm:$0xf]
      %v3896 = vld [vmem:[%s5 + $0x8] sm:$0xf]
      %v3897 = vld [vmem:[%s5 + $0xc] sm:$0xf]
      %v3898 = vld [vmem:[%s5 + $0x10] sm:$0xf]
      %v3899 = vld [vmem:[%s5 + $0x14] sm:$0xf]
      %v3900 = vld [vmem:[%s5 + $0x18] sm:$0xf]
      %v3901 = vld [vmem:[%s5 + $0x1c] sm:$0xf]
      %v3902 = vld [vmem:[%s5 + $0x20] sm:$0xf]
      %v3912 = vunpack.c.l.b16 %v3894
      %v3913 = vunpack.c.l.b16 %v3895
      %v3914 = vunpack.c.l.b16 %v3896
      %v3915 = vunpack.c.l.b16 %v3897
      %v3916 = vunpack.c.l.b16 %v3898
      %v3917 = vunpack.c.l.b16 %v3899
      %v3918 = vunpack.c.l.b16 %v3900
      %v3919 = vunpack.c.l.b16 %v3901
      %v3920 = vunpack.c.l.b16 %v3902
      %v3921 = vpack.c.b16 %v3913, %v3912
      %v3922 = vpack.c.b16 %v3915, %v3914
      %v3923 = vpack.c.b16 %v3917, %v3916
      %v3924 = vpack.c.b16 %v3919, %v3918
      %v3925 = vpack.c.b16 %v3920, %v3920
      %vm3930 = vcmask 588800
      %v3931 = vsel %vm3930, %v3855, 0
      %v3933 = vsel %vm3930, %v3857, 0
      %v3935 = vsel %vm3930, %v3859, 0
      %v3937 = vsel %vm3930, %v3861, 0
      %v3939 = vsel %vm3930, %v3863, 0
      %v3941 = vsel %vm3930, %v3865, 0
      %v3943 = vsel %vm3930, %v3867, 0
      %v3945 = vsel %vm3930, %v3869, 0
      %v3947 = vsel %vm3930, %v3871, 0
      %v3949 = vsel %vm3930, %v3873, 0
      %v3951 = vsel %vm3930, %v3875, 0
      %v3953 = vsel %vm3930, %v3877, 0
      %v3955 = vsel %vm3930, %v3879, 0
      %v3957 = vsel %vm3930, %v3881, 0
      %v3959 = vsel %vm3930, %v3883, 0
      %v3961 = vsel %vm3930, %v3885, 0
      %v3963 = vsel %vm3930, %v3887, 0
      %v3965 = vsel %vm3930, %v3889, 0
      %v3967 = vsel %vm3930, %v3891, 0
      %v3969 = vsel %vm3930, %v3893, 0
      %vm3971 = vcmask 1043456
      %v3973 = vsel %vm3971, %v3925, 0
      %3975 = vmatprep.subr.bf16.mxu0 0
      %3976 = vmatpush1.bf16.msra.mxu0 %v3921
      %3977 = vmatprep.subr.bf16.mxu0 0
      %3978 = vmatpush1.bf16.msra.mxu0 %v3922
      %3979 = vmatprep.subr.bf16.mxu0 0
      %3980 = vmatpush1.bf16.msra.mxu0 %v3923
      %3981 = vmatprep.subr.bf16.mxu0 0
      %3982 = vmatpush1.bf16.msra.mxu0 %v3924
      %3983 = vmatprep.subr.bf16.mxu0 0
      %3984 = vmatpush1.bf16.msra.mxu0 %v3973
      %3985 = vmatprep.subr.bf16.mxu0 0
      %3986 = vmatpush1.bf16.msra.mxu0 0
      %3987 = vmatprep.subr.bf16.mxu0 0
      %3988 = vmatpush1.bf16.msra.mxu0 0
      %3989 = vmatprep.subr.bf16.mxu0 0
      %3990 = vmatpush1.bf16.msra.mxu0 0
      %3991 = vmatprep.subr.bf16.mxu0 0
      %3992 = vmatpush1.bf16.msra.mxu0 0
      %3993 = vmatprep.subr.bf16.mxu0 0
      %3994 = vmatpush1.bf16.msra.mxu0 0
      %3995 = vmatprep.subr.bf16.mxu0 0
      %3996 = vmatpush1.bf16.msra.mxu0 0
      %3997 = vmatprep.subr.bf16.mxu0 0
      %3998 = vmatpush1.bf16.msra.mxu0 0
      %3999 = vmatprep.subr.bf16.mxu0 0
      %4000 = vmatpush1.bf16.msra.mxu0 0
      %4001 = vmatprep.subr.bf16.mxu0 0
      %4002 = vmatpush1.bf16.msra.mxu0 0
      %4003 = vmatprep.subr.bf16.mxu0 0
      %4004 = vmatpush1.bf16.msra.mxu0 0
      %4005 = vmatprep.subr.bf16.mxu0 0
      %4006 = vmatpush1.bf16.msra.mxu0 0
      %4007 = vmatprep.mubr.bf16.mxu0 0
      %4008 = vmatmul.mubr.bf16.gmra.mrb[0].mxu0 %v3931
      %v4009 = vpop.f32.mrb[0].mxu0
      %v4010 = vadd.f32 0.0, %v4009
      %v4011 = vpop.f32.mrb[0].mxu0
      %v4012 = vpop.f32.mrb[0].mxu0
      %v4013 = vadd.f32 0.0, %v4012
      %v4014 = vpop.f32.mrb[0].mxu0
      %4015 = vmatprep.mubr.bf16.mxu0 0
      %4016 = vmatmul.mubr.bf16.gmra.mrb[0].mxu0 %v3933
      %v4017 = vpop.f32.mrb[0].mxu0
      %v4018 = vadd.f32 0.0, %v4017
      %v4019 = vpop.f32.mrb[0].mxu0
      %v4020 = vpop.f32.mrb[0].mxu0
      %v4021 = vadd.f32 0.0, %v4020
      %v4022 = vpop.f32.mrb[0].mxu0
      %4023 = vmatprep.mubr.bf16.mxu0 0
      %4024 = vmatmul.mubr.bf16.gmra.mrb[0].mxu0 %v3935
      %v4025 = vpop.f32.mrb[0].mxu0
      %v4026 = vadd.f32 0.0, %v4025
      %v4027 = vpop.f32.mrb[0].mxu0
      %v4028 = vpop.f32.mrb[0].mxu0
      %v4029 = vadd.f32 0.0, %v4028
      %v4030 = vpop.f32.mrb[0].mxu0
      %4031 = vmatprep.mubr.bf16.mxu0 0
      %4032 = vmatmul.mubr.bf16.gmra.mrb[0].mxu0 %v3937
      %v4033 = vpop.f32.mrb[0].mxu0
      %v4034 = vadd.f32 0.0, %v4033
      %v4035 = vpop.f32.mrb[0].mxu0
      %v4036 = vpop.f32.mrb[0].mxu0
      %v4037 = vadd.f32 0.0, %v4036
      %v4038 = vpop.f32.mrb[0].mxu0
      %4039 = vmatprep.mubr.bf16.mxu0 0
      %4040 = vmatmul.mubr.bf16.gmra.mrb[0].mxu0 %v3939
      %v4041 = vpop.f32.mrb[0].mxu0
      %v4042 = vadd.f32 0.0, %v4041
      %v4043 = vpop.f32.mrb[0].mxu0
      %v4044 = vpop.f32.mrb[0].mxu0
      %v4045 = vadd.f32 0.0, %v4044
      %v4046 = vpop.f32.mrb[0].mxu0
      %4047 = vmatprep.mubr.bf16.mxu0 0
      %4048 = vmatmul.mubr.bf16.gmra.mrb[0].mxu0 %v3941
      %v4049 = vpop.f32.mrb[0].mxu0
      %v4050 = vadd.f32 0.0, %v4049
      %v4051 = vpop.f32.mrb[0].mxu0
      %v4052 = vpop.f32.mrb[0].mxu0
      %v4053 = vadd.f32 0.0, %v4052
      %v4054 = vpop.f32.mrb[0].mxu0
      %4055 = vmatprep.mubr.bf16.mxu0 0
      %4056 = vmatmul.mubr.bf16.gmra.mrb[0].mxu0 %v3943
      %v4057 = vpop.f32.mrb[0].mxu0
      %v4058 = vadd.f32 0.0, %v4057
      %v4059 = vpop.f32.mrb[0].mxu0
      %v4060 = vpop.f32.mrb[0].mxu0
      %v4061 = vadd.f32 0.0, %v4060
      %v4062 = vpop.f32.mrb[0].mxu0
      %4063 = vmatprep.mubr.bf16.mxu0 0
      %4064 = vmatmul.mubr.bf16.gmra.mrb[0].mxu0 %v3945
      %v4065 = vpop.f32.mrb[0].mxu0
      %v4066 = vadd.f32 0.0, %v4065
      %v4067 = vpop.f32.mrb[0].mxu0
      %v4068 = vpop.f32.mrb[0].mxu0
      %v4069 = vadd.f32 0.0, %v4068
      %v4070 = vpop.f32.mrb[0].mxu0
      %4071 = vmatprep.mubr.bf16.mxu0 0
      %4072 = vmatmul.mubr.bf16.gmra.mrb[0].mxu0 %v3947
      %v4073 = vpop.f32.mrb[0].mxu0
      %v4074 = vadd.f32 0.0, %v4073
      %v4075 = vpop.f32.mrb[0].mxu0
      %v4076 = vpop.f32.mrb[0].mxu0
      %v4077 = vadd.f32 0.0, %v4076
      %v4078 = vpop.f32.mrb[0].mxu0
      %4079 = vmatprep.mubr.bf16.mxu0 0
      %4080 = vmatmul.mubr.bf16.gmra.mrb[0].mxu0 %v3949
      %v4081 = vpop.f32.mrb[0].mxu0
      %v4082 = vadd.f32 0.0, %v4081
      %v4083 = vpop.f32.mrb[0].mxu0
      %v4084 = vpop.f32.mrb[0].mxu0
      %v4085 = vadd.f32 0.0, %v4084
      %v4086 = vpop.f32.mrb[0].mxu0
      %4087 = vmatprep.mubr.bf16.mxu0 0
      %4088 = vmatmul.mubr.bf16.gmra.mrb[0].mxu0 %v3951
      %v4089 = vpop.f32.mrb[0].mxu0
      %v4090 = vadd.f32 0.0, %v4089
      %v4091 = vpop.f32.mrb[0].mxu0
      %v4092 = vpop.f32.mrb[0].mxu0
      %v4093 = vadd.f32 0.0, %v4092
      %v4094 = vpop.f32.mrb[0].mxu0
      %4095 = vmatprep.mubr.bf16.mxu0 0
      %4096 = vmatmul.mubr.bf16.gmra.mrb[0].mxu0 %v3953
      %v4097 = vpop.f32.mrb[0].mxu0
      %v4098 = vadd.f32 0.0, %v4097
      %v4099 = vpop.f32.mrb[0].mxu0
      %v4100 = vpop.f32.mrb[0].mxu0
      %v4101 = vadd.f32 0.0, %v4100
      %v4102 = vpop.f32.mrb[0].mxu0
      %4103 = vmatprep.mubr.bf16.mxu0 0
      %4104 = vmatmul.mubr.bf16.gmra.mrb[0].mxu0 %v3955
      %v4105 = vpop.f32.mrb[0].mxu0
      %v4106 = vadd.f32 0.0, %v4105
      %v4107 = vpop.f32.mrb[0].mxu0
      %v4108 = vpop.f32.mrb[0].mxu0
      %v4109 = vadd.f32 0.0, %v4108
      %v4110 = vpop.f32.mrb[0].mxu0
      %4111 = vmatprep.mubr.bf16.mxu0 0
      %4112 = vmatmul.mubr.bf16.gmra.mrb[0].mxu0 %v3957
      %v4113 = vpop.f32.mrb[0].mxu0
      %v4114 = vadd.f32 0.0, %v4113
      %v4115 = vpop.f32.mrb[0].mxu0
      %v4116 = vpop.f32.mrb[0].mxu0
      %v4117 = vadd.f32 0.0, %v4116
      %v4118 = vpop.f32.mrb[0].mxu0
      %4119 = vmatprep.mubr.bf16.mxu0 0
      %4120 = vmatmul.mubr.bf16.gmra.mrb[0].mxu0 %v3959
      %v4121 = vpop.f32.mrb[0].mxu0
      %v4122 = vadd.f32 0.0, %v4121
      %v4123 = vpop.f32.mrb[0].mxu0
      %v4124 = vpop.f32.mrb[0].mxu0
      %v4125 = vadd.f32 0.0, %v4124
      %v4126 = vpop.f32.mrb[0].mxu0
      %4127 = vmatprep.mubr.bf16.mxu0 0
      %4128 = vmatmul.mubr.bf16.gmra.mrb[0].mxu0 %v3961
      %v4129 = vpop.f32.mrb[0].mxu0
      %v4130 = vadd.f32 0.0, %v4129
      %v4131 = vpop.f32.mrb[0].mxu0
      %v4132 = vpop.f32.mrb[0].mxu0
      %v4133 = vadd.f32 0.0, %v4132
      %v4134 = vpop.f32.mrb[0].mxu0
      %4135 = vmatprep.mubr.bf16.mxu0 0
      %4136 = vmatmul.mubr.bf16.gmra.mrb[0].mxu0 %v3963
      %v4137 = vpop.f32.mrb[0].mxu0
      %v4138 = vadd.f32 0.0, %v4137
      %v4139 = vpop.f32.mrb[0].mxu0
      %v4140 = vpop.f32.mrb[0].mxu0
      %v4141 = vadd.f32 0.0, %v4140
      %v4142 = vpop.f32.mrb[0].mxu0
      %4143 = vmatprep.mubr.bf16.mxu0 0
      %4144 = vmatmul.mubr.bf16.gmra.mrb[0].mxu0 %v3965
      %v4145 = vpop.f32.mrb[0].mxu0
      %v4146 = vadd.f32 0.0, %v4145
      %v4147 = vpop.f32.mrb[0].mxu0
      %v4148 = vpop.f32.mrb[0].mxu0
      %v4149 = vadd.f32 0.0, %v4148
      %v4150 = vpop.f32.mrb[0].mxu0
      %4151 = vmatprep.mubr.bf16.mxu0 0
      %4152 = vmatmul.mubr.bf16.gmra.mrb[0].mxu0 %v3967
      %v4153 = vpop.f32.mrb[0].mxu0
      %v4154 = vadd.f32 0.0, %v4153
      %v4155 = vpop.f32.mrb[0].mxu0
      %v4156 = vpop.f32.mrb[0].mxu0
      %v4157 = vadd.f32 0.0, %v4156
      %v4158 = vpop.f32.mrb[0].mxu0
      %4159 = vmatprep.mubr.bf16.mxu0 0
      %4160 = vmatmul.mubr.bf16.gmra.mrb[0].mxu0 %v3969
      %v4161 = vpop.f32.mrb[0].mxu0
      %v4162 = vadd.f32 0.0, %v4161
      %v4163 = vpop.f32.mrb[0].mxu0
      %v4164 = vpop.f32.mrb[0].mxu0
      %v4165 = vadd.f32 0.0, %v4164
      %v4166 = vpop.f32.mrb[0].mxu0
      %4167 = vdwg.mxu0
      %4204 = vrot.lane.b32.xlu0 %v4018, 120
      %v4205 = vpop.permute.xlu0 %4204
      %4206 = vrot.lane.b32.xlu0 %v4021, 120
      %v4207 = vpop.permute.xlu0 %4206
      %4208 = vrot.lane.b32.xlu0 %v4026, 120
      %v4209 = vpop.permute.xlu0 %4208
      %4210 = vrot.lane.b32.xlu0 %v4029, 120
      %v4211 = vpop.permute.xlu0 %4210
      %4212 = vrot.lane.b32.xlu0 %v4034, 120
      %v4213 = vpop.permute.xlu0 %4212
      %4214 = vrot.lane.b32.xlu0 %v4037, 120
      %v4215 = vpop.permute.xlu0 %4214
      %4216 = vrot.lane.b32.xlu0 %v4042, 120
      %v4217 = vpop.permute.xlu0 %4216
      %4218 = vrot.lane.b32.xlu0 %v4045, 120
      %v4219 = vpop.permute.xlu0 %4218
      %4220 = vrot.lane.b32.xlu0 %v4050, 120
      %v4221 = vpop.permute.xlu0 %4220
      %4222 = vrot.lane.b32.xlu0 %v4053, 120
      %v4223 = vpop.permute.xlu0 %4222
      %4224 = vrot.lane.b32.xlu0 %v4058, 120
      %v4225 = vpop.permute.xlu0 %4224
      %4226 = vrot.lane.b32.xlu0 %v4061, 120
      %v4227 = vpop.permute.xlu0 %4226
      %4228 = vrot.lane.b32.xlu0 %v4066, 120
      %v4229 = vpop.permute.xlu0 %4228
      %4230 = vrot.lane.b32.xlu0 %v4069, 120
      %v4231 = vpop.permute.xlu0 %4230
      %4232 = vrot.lane.b32.xlu0 %v4074, 120
      %v4233 = vpop.permute.xlu0 %4232
      %4234 = vrot.lane.b32.xlu0 %v4077, 120
      %v4235 = vpop.permute.xlu0 %4234
      %4236 = vrot.lane.b32.xlu0 %v4082, 120
      %v4237 = vpop.permute.xlu0 %4236
      %4238 = vrot.lane.b32.xlu0 %v4085, 120
      %v4239 = vpop.permute.xlu0 %4238
      %4240 = vrot.lane.b32.xlu0 %v4090, 120
      %v4241 = vpop.permute.xlu0 %4240
      %4242 = vrot.lane.b32.xlu0 %v4093, 120
      %v4243 = vpop.permute.xlu0 %4242
      %4244 = vrot.lane.b32.xlu0 %v4098, 120
      %v4245 = vpop.permute.xlu0 %4244
      %4246 = vrot.lane.b32.xlu0 %v4101, 120
      %v4247 = vpop.permute.xlu0 %4246
      %4248 = vrot.lane.b32.xlu0 %v4106, 120
      %v4249 = vpop.permute.xlu0 %4248
      %4250 = vrot.lane.b32.xlu0 %v4109, 120
      %v4251 = vpop.permute.xlu0 %4250
      %4252 = vrot.lane.b32.xlu0 %v4114, 120
      %v4253 = vpop.permute.xlu0 %4252
      %4254 = vrot.lane.b32.xlu0 %v4117, 120
      %v4255 = vpop.permute.xlu0 %4254
      %4256 = vrot.lane.b32.xlu0 %v4122, 120
      %v4257 = vpop.permute.xlu0 %4256
      %4258 = vrot.lane.b32.xlu0 %v4125, 120
      %v4259 = vpop.permute.xlu0 %4258
      %4260 = vrot.lane.b32.xlu0 %v4130, 120
      %v4261 = vpop.permute.xlu0 %4260
      %4262 = vrot.lane.b32.xlu0 %v4133, 120
      %v4263 = vpop.permute.xlu0 %4262
      %4264 = vrot.lane.b32.xlu0 %v4138, 120
      %v4265 = vpop.permute.xlu0 %4264
      %4266 = vrot.lane.b32.xlu0 %v4141, 120
      %v4267 = vpop.permute.xlu0 %4266
      %4268 = vrot.lane.b32.xlu0 %v4146, 120
      %v4269 = vpop.permute.xlu0 %4268
      %4270 = vrot.lane.b32.xlu0 %v4149, 120
      %v4271 = vpop.permute.xlu0 %4270
      %4272 = vrot.lane.b32.xlu0 %v4154, 120
      %v4273 = vpop.permute.xlu0 %4272
      %4274 = vrot.lane.b32.xlu0 %v4157, 120
      %v4275 = vpop.permute.xlu0 %4274
      %v4312 = vadd.f32 %v4010, %v4205
      %v4313 = vadd.f32 %v4013, %v4207
      %v4314 = vadd.f32 %v4018, %v4209
      %v4315 = vadd.f32 %v4021, %v4211
      %v4316 = vadd.f32 %v4026, %v4213
      %v4317 = vadd.f32 %v4029, %v4215
      %v4318 = vadd.f32 %v4034, %v4217
      %v4319 = vadd.f32 %v4037, %v4219
      %v4320 = vadd.f32 %v4042, %v4221
      %v4321 = vadd.f32 %v4045, %v4223
      %v4322 = vadd.f32 %v4050, %v4225
      %v4323 = vadd.f32 %v4053, %v4227
      %v4324 = vadd.f32 %v4058, %v4229
      %v4325 = vadd.f32 %v4061, %v4231
      %v4326 = vadd.f32 %v4066, %v4233
      %v4327 = vadd.f32 %v4069, %v4235
      %v4328 = vadd.f32 %v4074, %v4237
      %v4329 = vadd.f32 %v4077, %v4239
      %v4330 = vadd.f32 %v4082, %v4241
      %v4331 = vadd.f32 %v4085, %v4243
      %v4332 = vadd.f32 %v4090, %v4245
      %v4333 = vadd.f32 %v4093, %v4247
      %v4334 = vadd.f32 %v4098, %v4249
      %v4335 = vadd.f32 %v4101, %v4251
      %v4336 = vadd.f32 %v4106, %v4253
      %v4337 = vadd.f32 %v4109, %v4255
      %v4338 = vadd.f32 %v4114, %v4257
      %v4339 = vadd.f32 %v4117, %v4259
      %v4340 = vadd.f32 %v4122, %v4261
      %v4341 = vadd.f32 %v4125, %v4263
      %v4342 = vadd.f32 %v4130, %v4265
      %v4343 = vadd.f32 %v4133, %v4267
      %v4344 = vadd.f32 %v4138, %v4269
      %v4345 = vadd.f32 %v4141, %v4271
      %v4346 = vadd.f32 %v4146, %v4273
      %v4347 = vadd.f32 %v4149, %v4275
      %v4348 = vld [vmem:[%s6] sm:$0x1]
      %v4350 = vlaneseq
      %v4351 = vshrl.u32 %v4350, 7
      %v4352 = vsub.s32 0, %v4351
      %v4353 = vrot.slane %v4348, %v4352
      %4354 = vrot.lane.b32.xlu0 %v4353, 16
      %v4355 = vpop.permute.xlu0 %4354
      %v4357 = vadd.f32 %v4026, %v4355
      %v4358 = vadd.f32 %v4029, %v4355
      %v4359 = vadd.f32 %v4034, %v4355
      %v4360 = vadd.f32 %v4037, %v4355
      %v4361 = vadd.f32 %v4042, %v4355
      %v4362 = vadd.f32 %v4045, %v4355
      %v4363 = vadd.f32 %v4050, %v4355
      %v4364 = vadd.f32 %v4053, %v4355
      %v4365 = vadd.f32 %v4058, %v4355
      %v4366 = vadd.f32 %v4061, %v4355
      %v4367 = vadd.f32 %v4066, %v4355
      %v4368 = vadd.f32 %v4069, %v4355
      %v4369 = vadd.f32 %v4074, %v4355
      %v4370 = vadd.f32 %v4077, %v4355
      %v4371 = vadd.f32 %v4082, %v4355
      %v4372 = vadd.f32 %v4085, %v4355
      %v4373 = vadd.f32 %v4090, %v4355
      %v4374 = vadd.f32 %v4093, %v4355
      %v4375 = vadd.f32 %v4098, %v4355
      %v4376 = vadd.f32 %v4101, %v4355
      %v4377 = vadd.f32 %v4106, %v4355
      %v4378 = vadd.f32 %v4109, %v4355
      %v4379 = vadd.f32 %v4114, %v4355
      %v4380 = vadd.f32 %v4117, %v4355
      %v4381 = vadd.f32 %v4122, %v4355
      %v4382 = vadd.f32 %v4125, %v4355
      %v4383 = vadd.f32 %v4130, %v4355
      %v4384 = vadd.f32 %v4133, %v4355
      %v4385 = vadd.f32 %v4138, %v4355
      %v4386 = vadd.f32 %v4141, %v4355
      %v4387 = vadd.f32 %v4146, %v4355
      %v4388 = vadd.f32 %v4149, %v4355
      %v4389 = vadd.f32 %v4154, %v4355
      %v4390 = vadd.f32 %v4157, %v4355
      %v4391 = vadd.f32 %v4162, %v4355
      %v4392 = vadd.f32 %v4165, %v4355
      %4429 = vrot.lane.b32.xlu0 %v4357, 112
      %v4430 = vpop.permute.xlu0 %4429
      %4431 = vrot.lane.b32.xlu0 %v4358, 112
      %v4432 = vpop.permute.xlu0 %4431
      %4433 = vrot.lane.b32.xlu0 %v4359, 112
      %v4434 = vpop.permute.xlu0 %4433
      %4435 = vrot.lane.b32.xlu0 %v4360, 112
      %v4436 = vpop.permute.xlu0 %4435
      %4437 = vrot.lane.b32.xlu0 %v4361, 112
      %v4438 = vpop.permute.xlu0 %4437
      %4439 = vrot.lane.b32.xlu0 %v4362, 112
      %v4440 = vpop.permute.xlu0 %4439
      %4441 = vrot.lane.b32.xlu0 %v4363, 112
      %v4442 = vpop.permute.xlu0 %4441
      %4443 = vrot.lane.b32.xlu0 %v4364, 112
      %v4444 = vpop.permute.xlu0 %4443
      %4445 = vrot.lane.b32.xlu0 %v4365, 112
      %v4446 = vpop.permute.xlu0 %4445
      %4447 = vrot.lane.b32.xlu0 %v4366, 112
      %v4448 = vpop.permute.xlu0 %4447
      %4449 = vrot.lane.b32.xlu0 %v4367, 112
      %v4450 = vpop.permute.xlu0 %4449
      %4451 = vrot.lane.b32.xlu0 %v4368, 112
      %v4452 = vpop.permute.xlu0 %4451
      %4453 = vrot.lane.b32.xlu0 %v4369, 112
      %v4454 = vpop.permute.xlu0 %4453
      %4455 = vrot.lane.b32.xlu0 %v4370, 112
      %v4456 = vpop.permute.xlu0 %4455
      %4457 = vrot.lane.b32.xlu0 %v4371, 112
      %v4458 = vpop.permute.xlu0 %4457
      %4459 = vrot.lane.b32.xlu0 %v4372, 112
      %v4460 = vpop.permute.xlu0 %4459
      %4461 = vrot.lane.b32.xlu0 %v4373, 112
      %v4462 = vpop.permute.xlu0 %4461
      %4463 = vrot.lane.b32.xlu0 %v4374, 112
      %v4464 = vpop.permute.xlu0 %4463
      %4465 = vrot.lane.b32.xlu0 %v4375, 112
      %v4466 = vpop.permute.xlu0 %4465
      %4467 = vrot.lane.b32.xlu0 %v4376, 112
      %v4468 = vpop.permute.xlu0 %4467
      %4469 = vrot.lane.b32.xlu0 %v4377, 112
      %v4470 = vpop.permute.xlu0 %4469
      %4471 = vrot.lane.b32.xlu0 %v4378, 112
      %v4472 = vpop.permute.xlu0 %4471
      %4473 = vrot.lane.b32.xlu0 %v4379, 112
      %v4474 = vpop.permute.xlu0 %4473
      %4475 = vrot.lane.b32.xlu0 %v4380, 112
      %v4476 = vpop.permute.xlu0 %4475
      %4477 = vrot.lane.b32.xlu0 %v4381, 112
      %v4478 = vpop.permute.xlu0 %4477
      %4479 = vrot.lane.b32.xlu0 %v4382, 112
      %v4480 = vpop.permute.xlu0 %4479
      %4481 = vrot.lane.b32.xlu0 %v4383, 112
      %v4482 = vpop.permute.xlu0 %4481
      %4483 = vrot.lane.b32.xlu0 %v4384, 112
      %v4484 = vpop.permute.xlu0 %4483
      %4485 = vrot.lane.b32.xlu0 %v4385, 112
      %v4486 = vpop.permute.xlu0 %4485
      %4487 = vrot.lane.b32.xlu0 %v4386, 112
      %v4488 = vpop.permute.xlu0 %4487
      %4489 = vrot.lane.b32.xlu0 %v4387, 112
      %v4490 = vpop.permute.xlu0 %4489
      %4491 = vrot.lane.b32.xlu0 %v4388, 112
      %v4492 = vpop.permute.xlu0 %4491
      %4493 = vrot.lane.b32.xlu0 %v4389, 112
      %v4494 = vpop.permute.xlu0 %4493
      %4495 = vrot.lane.b32.xlu0 %v4390, 112
      %v4496 = vpop.permute.xlu0 %4495
      %4497 = vrot.lane.b32.xlu0 %v4391, 112
      %v4498 = vpop.permute.xlu0 %4497
      %4499 = vrot.lane.b32.xlu0 %v4392, 112
      %v4500 = vpop.permute.xlu0 %4499
      %v4537 = vadd.f32 %v4312, %v4430
      %v4538 = vadd.f32 %v4313, %v4432
      %v4539 = vadd.f32 %v4314, %v4434
      %v4540 = vadd.f32 %v4315, %v4436
      %v4541 = vadd.f32 %v4316, %v4438
      %v4542 = vadd.f32 %v4317, %v4440
      %v4543 = vadd.f32 %v4318, %v4442
      %v4544 = vadd.f32 %v4319, %v4444
      %v4545 = vadd.f32 %v4320, %v4446
      %v4546 = vadd.f32 %v4321, %v4448
      %v4547 = vadd.f32 %v4322, %v4450
      %v4548 = vadd.f32 %v4323, %v4452
      %v4549 = vadd.f32 %v4324, %v4454
      %v4550 = vadd.f32 %v4325, %v4456
      %v4551 = vadd.f32 %v4326, %v4458
      %v4552 = vadd.f32 %v4327, %v4460
      %v4553 = vadd.f32 %v4328, %v4462
      %v4554 = vadd.f32 %v4329, %v4464
      %v4555 = vadd.f32 %v4330, %v4466
      %v4556 = vadd.f32 %v4331, %v4468
      %v4557 = vadd.f32 %v4332, %v4470
      %v4558 = vadd.f32 %v4333, %v4472
      %v4559 = vadd.f32 %v4334, %v4474
      %v4560 = vadd.f32 %v4335, %v4476
      %v4561 = vadd.f32 %v4336, %v4478
      %v4562 = vadd.f32 %v4337, %v4480
      %v4563 = vadd.f32 %v4338, %v4482
      %v4564 = vadd.f32 %v4339, %v4484
      %v4565 = vadd.f32 %v4340, %v4486
      %v4566 = vadd.f32 %v4341, %v4488
      %v4567 = vadd.f32 %v4342, %v4490
      %v4568 = vadd.f32 %v4343, %v4492
      %v4569 = vadd.f32 %v4344, %v4494
      %v4570 = vadd.f32 %v4345, %v4496
      %v4571 = vadd.f32 %v4346, %v4498
      %v4572 = vadd.f32 %v4347, %v4500
      %vm4573 = vcmp.gt.f32.partialorder %v4537, 0.0
      %vm4574 = vcmp.gt.f32.partialorder %v4538, 0.0
      %vm4575 = vcmp.gt.f32.partialorder %v4539, 0.0
      %vm4576 = vcmp.gt.f32.partialorder %v4540, 0.0
      %vm4577 = vcmp.gt.f32.partialorder %v4541, 0.0
      %vm4578 = vcmp.gt.f32.partialorder %v4542, 0.0
      %vm4579 = vcmp.gt.f32.partialorder %v4543, 0.0
      %vm4580 = vcmp.gt.f32.partialorder %v4544, 0.0
      %vm4581 = vcmp.gt.f32.partialorder %v4545, 0.0
      %vm4582 = vcmp.gt.f32.partialorder %v4546, 0.0
      %vm4583 = vcmp.gt.f32.partialorder %v4547, 0.0
      %vm4584 = vcmp.gt.f32.partialorder %v4548, 0.0
      %vm4585 = vcmp.gt.f32.partialorder %v4549, 0.0
      %vm4586 = vcmp.gt.f32.partialorder %v4550, 0.0
      %vm4587 = vcmp.gt.f32.partialorder %v4551, 0.0
      %vm4588 = vcmp.gt.f32.partialorder %v4552, 0.0
      %vm4589 = vcmp.gt.f32.partialorder %v4553, 0.0
      %vm4590 = vcmp.gt.f32.partialorder %v4554, 0.0
      %vm4591 = vcmp.gt.f32.partialorder %v4555, 0.0
      %vm4592 = vcmp.gt.f32.partialorder %v4556, 0.0
      %vm4593 = vcmp.gt.f32.partialorder %v4557, 0.0
      %vm4594 = vcmp.gt.f32.partialorder %v4558, 0.0
      %vm4595 = vcmp.gt.f32.partialorder %v4559, 0.0
      %vm4596 = vcmp.gt.f32.partialorder %v4560, 0.0
      %vm4597 = vcmp.gt.f32.partialorder %v4561, 0.0
      %vm4598 = vcmp.gt.f32.partialorder %v4562, 0.0
      %vm4599 = vcmp.gt.f32.partialorder %v4563, 0.0
      %vm4600 = vcmp.gt.f32.partialorder %v4564, 0.0
      %vm4601 = vcmp.gt.f32.partialorder %v4565, 0.0
      %vm4602 = vcmp.gt.f32.partialorder %v4566, 0.0
      %vm4603 = vcmp.gt.f32.partialorder %v4567, 0.0
      %vm4604 = vcmp.gt.f32.partialorder %v4568, 0.0
      %vm4605 = vcmp.gt.f32.partialorder %v4569, 0.0
      %vm4606 = vcmp.gt.f32.partialorder %v4570, 0.0
      %vm4607 = vcmp.gt.f32.partialorder %v4571, 0.0
      %vm4608 = vcmp.gt.f32.partialorder %v4572, 0.0
      %v4609 = vmul.f32 %v4537, 0.2
      %v4610 = vmul.f32 %v4538, 0.2
      %v4611 = vmul.f32 %v4539, 0.2
      %v4612 = vmul.f32 %v4540, 0.2
      %v4613 = vmul.f32 %v4541, 0.2
      %v4614 = vmul.f32 %v4542, 0.2
      %v4615 = vmul.f32 %v4543, 0.2
      %v4616 = vmul.f32 %v4544, 0.2
      %v4617 = vmul.f32 %v4545, 0.2
      %v4618 = vmul.f32 %v4546, 0.2
      %v4619 = vmul.f32 %v4547, 0.2
      %v4620 = vmul.f32 %v4548, 0.2
      %v4621 = vmul.f32 %v4549, 0.2
      %v4622 = vmul.f32 %v4550, 0.2
      %v4623 = vmul.f32 %v4551, 0.2
      %v4624 = vmul.f32 %v4552, 0.2
      %v4625 = vmul.f32 %v4553, 0.2
      %v4626 = vmul.f32 %v4554, 0.2
      %v4627 = vmul.f32 %v4555, 0.2
      %v4628 = vmul.f32 %v4556, 0.2
      %v4629 = vmul.f32 %v4557, 0.2
      %v4630 = vmul.f32 %v4558, 0.2
      %v4631 = vmul.f32 %v4559, 0.2
      %v4632 = vmul.f32 %v4560, 0.2
      %v4633 = vmul.f32 %v4561, 0.2
      %v4634 = vmul.f32 %v4562, 0.2
      %v4635 = vmul.f32 %v4563, 0.2
      %v4636 = vmul.f32 %v4564, 0.2
      %v4637 = vmul.f32 %v4565, 0.2
      %v4638 = vmul.f32 %v4566, 0.2
      %v4639 = vmul.f32 %v4567, 0.2
      %v4640 = vmul.f32 %v4568, 0.2
      %v4641 = vmul.f32 %v4569, 0.2
      %v4642 = vmul.f32 %v4570, 0.2
      %v4643 = vmul.f32 %v4571, 0.2
      %v4644 = vmul.f32 %v4572, 0.2
      %v4645 = vsel %vm4573, %v4537, %v4609
      %v4646 = vsel %vm4574, %v4538, %v4610
      %v4647 = vsel %vm4575, %v4539, %v4611
      %v4648 = vsel %vm4576, %v4540, %v4612
      %v4649 = vsel %vm4577, %v4541, %v4613
      %v4650 = vsel %vm4578, %v4542, %v4614
      %v4651 = vsel %vm4579, %v4543, %v4615
      %v4652 = vsel %vm4580, %v4544, %v4616
      %v4653 = vsel %vm4581, %v4545, %v4617
      %v4654 = vsel %vm4582, %v4546, %v4618
      %v4655 = vsel %vm4583, %v4547, %v4619
      %v4656 = vsel %vm4584, %v4548, %v4620
      %v4657 = vsel %vm4585, %v4549, %v4621
      %v4658 = vsel %vm4586, %v4550, %v4622
      %v4659 = vsel %vm4587, %v4551, %v4623
      %v4660 = vsel %vm4588, %v4552, %v4624
      %v4661 = vsel %vm4589, %v4553, %v4625
      %v4662 = vsel %vm4590, %v4554, %v4626
      %v4663 = vsel %vm4591, %v4555, %v4627
      %v4664 = vsel %vm4592, %v4556, %v4628
      %v4665 = vsel %vm4593, %v4557, %v4629
      %v4666 = vsel %vm4594, %v4558, %v4630
      %v4667 = vsel %vm4595, %v4559, %v4631
      %v4668 = vsel %vm4596, %v4560, %v4632
      %v4669 = vsel %vm4597, %v4561, %v4633
      %v4670 = vsel %vm4598, %v4562, %v4634
      %v4671 = vsel %vm4599, %v4563, %v4635
      %v4672 = vsel %vm4600, %v4564, %v4636
      %v4673 = vsel %vm4601, %v4565, %v4637
      %v4674 = vsel %vm4602, %v4566, %v4638
      %v4675 = vsel %vm4603, %v4567, %v4639
      %v4676 = vsel %vm4604, %v4568, %v4640
      %v4677 = vsel %vm4605, %v4569, %v4641
      %v4678 = vsel %vm4606, %v4570, %v4642
      %v4679 = vsel %vm4607, %v4571, %v4643
      %v4680 = vsel %vm4608, %v4572, %v4644
      %v4681 = vpack.c.bf16 %v4646, %v4645
      %v4682 = vpack.c.bf16 %v4648, %v4647
      %v4683 = vpack.c.bf16 %v4650, %v4649
      %v4684 = vpack.c.bf16 %v4652, %v4651
      %v4685 = vpack.c.bf16 %v4654, %v4653
      %v4686 = vpack.c.bf16 %v4656, %v4655
      %v4687 = vpack.c.bf16 %v4658, %v4657
      %v4688 = vpack.c.bf16 %v4660, %v4659
      %v4689 = vpack.c.bf16 %v4662, %v4661
      %v4690 = vpack.c.bf16 %v4664, %v4663
      %v4691 = vpack.c.bf16 %v4666, %v4665
      %v4692 = vpack.c.bf16 %v4668, %v4667
      %v4693 = vpack.c.bf16 %v4670, %v4669
      %v4694 = vpack.c.bf16 %v4672, %v4671
      %v4695 = vpack.c.bf16 %v4674, %v4673
      %v4696 = vpack.c.bf16 %v4676, %v4675
      %v4697 = vpack.c.bf16 %v4678, %v4677
      %v4698 = vpack.c.bf16 %v4680, %v4679
      %v4717 = vunpack.c.l.b16 %v4681
      %v4718 = vunpack.c.h.b16 %v4681
      %v4719 = vunpack.c.l.b16 %v4682
      %v4720 = vunpack.c.h.b16 %v4682
      %v4721 = vunpack.c.l.b16 %v4683
      %v4722 = vunpack.c.h.b16 %v4683
      %v4723 = vunpack.c.l.b16 %v4684
      %v4724 = vunpack.c.h.b16 %v4684
      %v4725 = vunpack.c.l.b16 %v4685
      %v4726 = vunpack.c.h.b16 %v4685
      %v4727 = vunpack.c.l.b16 %v4686
      %v4728 = vunpack.c.h.b16 %v4686
      %v4729 = vunpack.c.l.b16 %v4687
      %v4730 = vunpack.c.h.b16 %v4687
      %v4731 = vunpack.c.l.b16 %v4688
      %v4732 = vunpack.c.h.b16 %v4688
      %v4733 = vunpack.c.l.b16 %v4689
      %v4734 = vunpack.c.h.b16 %v4689
      %v4735 = vunpack.c.l.b16 %v4690
      %v4736 = vunpack.c.h.b16 %v4690
      %v4737 = vunpack.c.l.b16 %v4691
      %v4738 = vunpack.c.h.b16 %v4691
      %v4739 = vunpack.c.l.b16 %v4692
      %v4740 = vunpack.c.h.b16 %v4692
      %v4741 = vunpack.c.l.b16 %v4693
      %v4742 = vunpack.c.h.b16 %v4693
      %v4743 = vunpack.c.l.b16 %v4694
      %v4744 = vunpack.c.h.b16 %v4694
      %v4745 = vunpack.c.l.b16 %v4695
      %v4746 = vunpack.c.h.b16 %v4695
      %v4747 = vunpack.c.l.b16 %v4696
      %v4748 = vunpack.c.h.b16 %v4696
      %v4749 = vunpack.c.l.b16 %v4697
      %v4750 = vunpack.c.h.b16 %v4697
      %v4751 = vunpack.c.l.b16 %v4698
      %v4752 = vunpack.c.h.b16 %v4698
      %v4753 = vpack.c.b16 %v4717, %v4717
      %v4754 = vpack.c.b16 %v4718, %v4718
      %v4755 = vpack.c.b16 %v4719, %v4719
      %v4756 = vpack.c.b16 %v4720, %v4720
      %v4757 = vpack.c.b16 %v4721, %v4721
      %v4758 = vpack.c.b16 %v4722, %v4722
      %v4759 = vpack.c.b16 %v4723, %v4723
      %v4760 = vpack.c.b16 %v4724, %v4724
      %v4761 = vpack.c.b16 %v4725, %v4725
      %v4762 = vpack.c.b16 %v4726, %v4726
      %v4763 = vpack.c.b16 %v4727, %v4727
      %v4764 = vpack.c.b16 %v4728, %v4728
      %v4765 = vpack.c.b16 %v4729, %v4729
      %v4766 = vpack.c.b16 %v4730, %v4730
      %v4767 = vpack.c.b16 %v4731, %v4731
      %v4768 = vpack.c.b16 %v4732, %v4732
      %v4769 = vpack.c.b16 %v4733, %v4733
      %v4770 = vpack.c.b16 %v4734, %v4734
      %v4771 = vpack.c.b16 %v4735, %v4735
      %v4772 = vpack.c.b16 %v4736, %v4736
      %v4773 = vpack.c.b16 %v4737, %v4737
      %v4774 = vpack.c.b16 %v4738, %v4738
      %v4775 = vpack.c.b16 %v4739, %v4739
      %v4776 = vpack.c.b16 %v4740, %v4740
      %v4777 = vpack.c.b16 %v4741, %v4741
      %v4778 = vpack.c.b16 %v4742, %v4742
      %v4779 = vpack.c.b16 %v4743, %v4743
      %v4780 = vpack.c.b16 %v4744, %v4744
      %v4781 = vpack.c.b16 %v4745, %v4745
      %v4782 = vpack.c.b16 %v4746, %v4746
      %v4783 = vpack.c.b16 %v4747, %v4747
      %v4784 = vpack.c.b16 %v4748, %v4748
      %v4785 = vpack.c.b16 %v4749, %v4749
      %v4786 = vpack.c.b16 %v4750, %v4750
      %v4787 = vpack.c.b16 %v4751, %v4751
      %v4788 = vpack.c.b16 %v4752, %v4752
      %v4790 = vshrl.u32 %v4753, 16
      %v4792 = vrot.slane %v4790, 7
      %v4793 = vshll.u32 %v4753, 16
      %v4795 = vor.u32 %v4792, %v4793
      %v4796 = vrot.slane %v4792, 4
      %v4798 = vshrl.u32 %v4754, 16
      %v4800 = vrot.slane %v4798, 7
      %v4801 = vshll.u32 %v4754, 16
      %v4803 = vor.u32 %v4800, %v4801
      %v4804 = vsel %vm2456, %v4796, %v4803
      %v4805 = vrot.slane %v4800, 4
      %v4807 = vshrl.u32 %v4755, 16
      %v4809 = vrot.slane %v4807, 7
      %v4810 = vshll.u32 %v4755, 16
      %v4812 = vor.u32 %v4809, %v4810
      %v4813 = vrot.slane %v4809, 4
      %v4815 = vshrl.u32 %v4756, 16
      %v4817 = vrot.slane %v4815, 7
      %v4818 = vshll.u32 %v4756, 16
      %v4820 = vor.u32 %v4817, %v4818
      %v4821 = vsel %vm2456, %v4813, %v4820
      %v4822 = vrot.slane %v4817, 4
      %v4824 = vshrl.u32 %v4757, 16
      %v4826 = vrot.slane %v4824, 7
      %v4827 = vshll.u32 %v4757, 16
      %v4829 = vor.u32 %v4826, %v4827
      %v4830 = vrot.slane %v4826, 4
      %v4832 = vshrl.u32 %v4758, 16
      %v4834 = vrot.slane %v4832, 7
      %v4835 = vshll.u32 %v4758, 16
      %v4837 = vor.u32 %v4834, %v4835
      %v4838 = vsel %vm2456, %v4830, %v4837
      %v4839 = vrot.slane %v4834, 4
      %v4841 = vshrl.u32 %v4759, 16
      %v4843 = vrot.slane %v4841, 7
      %v4844 = vshll.u32 %v4759, 16
      %v4846 = vor.u32 %v4843, %v4844
      %v4847 = vrot.slane %v4843, 4
      %v4849 = vshrl.u32 %v4760, 16
      %v4851 = vrot.slane %v4849, 7
      %v4852 = vshll.u32 %v4760, 16
      %v4854 = vor.u32 %v4851, %v4852
      %v4855 = vsel %vm2456, %v4847, %v4854
      %v4856 = vrot.slane %v4851, 4
      %v4858 = vshrl.u32 %v4761, 16
      %v4860 = vrot.slane %v4858, 7
      %v4861 = vshll.u32 %v4761, 16
      %v4863 = vor.u32 %v4860, %v4861
      %v4864 = vrot.slane %v4860, 4
      %v4866 = vshrl.u32 %v4762, 16
      %v4868 = vrot.slane %v4866, 7
      %v4869 = vshll.u32 %v4762, 16
      %v4871 = vor.u32 %v4868, %v4869
      %v4872 = vsel %vm2456, %v4864, %v4871
      %v4873 = vrot.slane %v4868, 4
      %v4875 = vshrl.u32 %v4763, 16
      %v4877 = vrot.slane %v4875, 7
      %v4878 = vshll.u32 %v4763, 16
      %v4880 = vor.u32 %v4877, %v4878
      %v4881 = vrot.slane %v4877, 4
      %v4883 = vshrl.u32 %v4764, 16
      %v4885 = vrot.slane %v4883, 7
      %v4886 = vshll.u32 %v4764, 16
      %v4888 = vor.u32 %v4885, %v4886
      %v4889 = vsel %vm2456, %v4881, %v4888
      %v4890 = vrot.slane %v4885, 4
      %v4892 = vshrl.u32 %v4765, 16
      %v4894 = vrot.slane %v4892, 7
      %v4895 = vshll.u32 %v4765, 16
      %v4897 = vor.u32 %v4894, %v4895
      %v4898 = vrot.slane %v4894, 4
      %v4900 = vshrl.u32 %v4766, 16
      %v4902 = vrot.slane %v4900, 7
      %v4903 = vshll.u32 %v4766, 16
      %v4905 = vor.u32 %v4902, %v4903
      %v4906 = vsel %vm2456, %v4898, %v4905
      %v4907 = vrot.slane %v4902, 4
      %v4909 = vshrl.u32 %v4767, 16
      %v4911 = vrot.slane %v4909, 7
      %v4912 = vshll.u32 %v4767, 16
      %v4914 = vor.u32 %v4911, %v4912
      %v4915 = vrot.slane %v4911, 4
      %v4917 = vshrl.u32 %v4768, 16
      %v4919 = vrot.slane %v4917, 7
      %v4920 = vshll.u32 %v4768, 16
      %v4922 = vor.u32 %v4919, %v4920
      %v4923 = vsel %vm2456, %v4915, %v4922
      %v4924 = vrot.slane %v4919, 4
      %v4926 = vshrl.u32 %v4769, 16
      %v4928 = vrot.slane %v4926, 7
      %v4929 = vshll.u32 %v4769, 16
      %v4931 = vor.u32 %v4928, %v4929
      %v4932 = vrot.slane %v4928, 4
      %v4934 = vshrl.u32 %v4770, 16
      %v4936 = vrot.slane %v4934, 7
      %v4937 = vshll.u32 %v4770, 16
      %v4939 = vor.u32 %v4936, %v4937
      %v4940 = vsel %vm2456, %v4932, %v4939
      %v4941 = vrot.slane %v4936, 4
      %v4943 = vshrl.u32 %v4771, 16
      %v4945 = vrot.slane %v4943, 7
      %v4946 = vshll.u32 %v4771, 16
      %v4948 = vor.u32 %v4945, %v4946
      %v4949 = vrot.slane %v4945, 4
      %v4951 = vshrl.u32 %v4772, 16
      %v4953 = vrot.slane %v4951, 7
      %v4954 = vshll.u32 %v4772, 16
      %v4956 = vor.u32 %v4953, %v4954
      %v4957 = vsel %vm2456, %v4949, %v4956
      %v4958 = vrot.slane %v4953, 4
      %v4960 = vshrl.u32 %v4773, 16
      %v4962 = vrot.slane %v4960, 7
      %v4963 = vshll.u32 %v4773, 16
      %v4965 = vor.u32 %v4962, %v4963
      %v4966 = vrot.slane %v4962, 4
      %v4968 = vshrl.u32 %v4774, 16
      %v4970 = vrot.slane %v4968, 7
      %v4971 = vshll.u32 %v4774, 16
      %v4973 = vor.u32 %v4970, %v4971
      %v4974 = vsel %vm2456, %v4966, %v4973
      %v4975 = vrot.slane %v4970, 4
      %v4977 = vshrl.u32 %v4775, 16
      %v4979 = vrot.slane %v4977, 7
      %v4980 = vshll.u32 %v4775, 16
      %v4982 = vor.u32 %v4979, %v4980
      %v4983 = vrot.slane %v4979, 4
      %v4985 = vshrl.u32 %v4776, 16
      %v4987 = vrot.slane %v4985, 7
      %v4988 = vshll.u32 %v4776, 16
      %v4990 = vor.u32 %v4987, %v4988
      %v4991 = vsel %vm2456, %v4983, %v4990
      %v4992 = vrot.slane %v4987, 4
      %v4994 = vshrl.u32 %v4777, 16
      %v4996 = vrot.slane %v4994, 7
      %v4997 = vshll.u32 %v4777, 16
      %v4999 = vor.u32 %v4996, %v4997
      %v5000 = vrot.slane %v4996, 4
      %v5002 = vshrl.u32 %v4778, 16
      %v5004 = vrot.slane %v5002, 7
      %v5005 = vshll.u32 %v4778, 16
      %v5007 = vor.u32 %v5004, %v5005
      %v5008 = vsel %vm2456, %v5000, %v5007
      %v5009 = vrot.slane %v5004, 4
      %v5011 = vshrl.u32 %v4779, 16
      %v5013 = vrot.slane %v5011, 7
      %v5014 = vshll.u32 %v4779, 16
      %v5016 = vor.u32 %v5013, %v5014
      %v5017 = vrot.slane %v5013, 4
      %v5019 = vshrl.u32 %v4780, 16
      %v5021 = vrot.slane %v5019, 7
      %v5022 = vshll.u32 %v4780, 16
      %v5024 = vor.u32 %v5021, %v5022
      %v5025 = vsel %vm2456, %v5017, %v5024
      %v5026 = vrot.slane %v5021, 4
      %v5028 = vshrl.u32 %v4781, 16
      %v5030 = vrot.slane %v5028, 7
      %v5031 = vshll.u32 %v4781, 16
      %v5033 = vor.u32 %v5030, %v5031
      %v5034 = vrot.slane %v5030, 4
      %v5036 = vshrl.u32 %v4782, 16
      %v5038 = vrot.slane %v5036, 7
      %v5039 = vshll.u32 %v4782, 16
      %v5041 = vor.u32 %v5038, %v5039
      %v5042 = vsel %vm2456, %v5034, %v5041
      %v5043 = vrot.slane %v5038, 4
      %v5045 = vshrl.u32 %v4783, 16
      %v5047 = vrot.slane %v5045, 7
      %v5048 = vshll.u32 %v4783, 16
      %v5050 = vor.u32 %v5047, %v5048
      %v5051 = vrot.slane %v5047, 4
      %v5053 = vshrl.u32 %v4784, 16
      %v5055 = vrot.slane %v5053, 7
      %v5056 = vshll.u32 %v4784, 16
      %v5058 = vor.u32 %v5055, %v5056
      %v5059 = vsel %vm2456, %v5051, %v5058
      %v5060 = vrot.slane %v5055, 4
      %v5062 = vshrl.u32 %v4785, 16
      %v5064 = vrot.slane %v5062, 7
      %v5065 = vshll.u32 %v4785, 16
      %v5067 = vor.u32 %v5064, %v5065
      %v5068 = vrot.slane %v5064, 4
      %v5070 = vshrl.u32 %v4786, 16
      %v5072 = vrot.slane %v5070, 7
      %v5073 = vshll.u32 %v4786, 16
      %v5075 = vor.u32 %v5072, %v5073
      %v5076 = vsel %vm2456, %v5068, %v5075
      %v5077 = vrot.slane %v5072, 4
      %v5079 = vshrl.u32 %v4787, 16
      %v5081 = vrot.slane %v5079, 7
      %v5082 = vshll.u32 %v4787, 16
      %v5084 = vor.u32 %v5081, %v5082
      %v5085 = vrot.slane %v5081, 4
      %v5087 = vshrl.u32 %v4788, 16
      %v5089 = vrot.slane %v5087, 7
      %v5090 = vshll.u32 %v4788, 16
      %v5092 = vor.u32 %v5089, %v5090
      %v5093 = vsel %vm2456, %v5085, %v5092
      %v5094 = vrot.slane %v5089, 4
      %5095 = vrot.lane.b32.xlu0 %v4795, 24
      %v5096 = vpop.permute.xlu0 %5095
      %5097 = vrot.lane.b32.xlu0 %v4804, 24
      %v5098 = vpop.permute.xlu0 %5097
      %5099 = vrot.lane.b32.xlu0 %v4805, 24
      %v5100 = vpop.permute.xlu0 %5099
      %5101 = vrot.lane.b32.xlu0 %v4812, 24
      %v5102 = vpop.permute.xlu0 %5101
      %5103 = vrot.lane.b32.xlu0 %v4821, 24
      %v5104 = vpop.permute.xlu0 %5103
      %5105 = vrot.lane.b32.xlu0 %v4822, 24
      %v5106 = vpop.permute.xlu0 %5105
      %5107 = vrot.lane.b32.xlu0 %v4829, 24
      %v5108 = vpop.permute.xlu0 %5107
      %5109 = vrot.lane.b32.xlu0 %v4838, 24
      %v5110 = vpop.permute.xlu0 %5109
      %5111 = vrot.lane.b32.xlu0 %v4839, 24
      %v5112 = vpop.permute.xlu0 %5111
      %5113 = vrot.lane.b32.xlu0 %v4846, 24
      %v5114 = vpop.permute.xlu0 %5113
      %5115 = vrot.lane.b32.xlu0 %v4855, 24
      %v5116 = vpop.permute.xlu0 %5115
      %5117 = vrot.lane.b32.xlu0 %v4856, 24
      %v5118 = vpop.permute.xlu0 %5117
      %5119 = vrot.lane.b32.xlu0 %v4863, 24
      %v5120 = vpop.permute.xlu0 %5119
      %5121 = vrot.lane.b32.xlu0 %v4872, 24
      %v5122 = vpop.permute.xlu0 %5121
      %5123 = vrot.lane.b32.xlu0 %v4873, 24
      %v5124 = vpop.permute.xlu0 %5123
      %5125 = vrot.lane.b32.xlu0 %v4880, 24
      %v5126 = vpop.permute.xlu0 %5125
      %5127 = vrot.lane.b32.xlu0 %v4889, 24
      %v5128 = vpop.permute.xlu0 %5127
      %5129 = vrot.lane.b32.xlu0 %v4890, 24
      %v5130 = vpop.permute.xlu0 %5129
      %5131 = vrot.lane.b32.xlu0 %v4897, 24
      %v5132 = vpop.permute.xlu0 %5131
      %5133 = vrot.lane.b32.xlu0 %v4906, 24
      %v5134 = vpop.permute.xlu0 %5133
      %5135 = vrot.lane.b32.xlu0 %v4907, 24
      %v5136 = vpop.permute.xlu0 %5135
      %5137 = vrot.lane.b32.xlu0 %v4914, 24
      %v5138 = vpop.permute.xlu0 %5137
      %5139 = vrot.lane.b32.xlu0 %v4923, 24
      %v5140 = vpop.permute.xlu0 %5139
      %5141 = vrot.lane.b32.xlu0 %v4924, 24
      %v5142 = vpop.permute.xlu0 %5141
      %5143 = vrot.lane.b32.xlu0 %v4931, 24
      %v5144 = vpop.permute.xlu0 %5143
      %5145 = vrot.lane.b32.xlu0 %v4940, 24
      %v5146 = vpop.permute.xlu0 %5145
      %5147 = vrot.lane.b32.xlu0 %v4941, 24
      %v5148 = vpop.permute.xlu0 %5147
      %5149 = vrot.lane.b32.xlu0 %v4948, 24
      %v5150 = vpop.permute.xlu0 %5149
      %5151 = vrot.lane.b32.xlu0 %v4957, 24
      %v5152 = vpop.permute.xlu0 %5151
      %5153 = vrot.lane.b32.xlu0 %v4958, 24
      %v5154 = vpop.permute.xlu0 %5153
      %5155 = vrot.lane.b32.xlu0 %v4965, 24
      %v5156 = vpop.permute.xlu0 %5155
      %5157 = vrot.lane.b32.xlu0 %v4974, 24
      %v5158 = vpop.permute.xlu0 %5157
      %5159 = vrot.lane.b32.xlu0 %v4975, 24
      %v5160 = vpop.permute.xlu0 %5159
      %5161 = vrot.lane.b32.xlu0 %v4982, 24
      %v5162 = vpop.permute.xlu0 %5161
      %5163 = vrot.lane.b32.xlu0 %v4991, 24
      %v5164 = vpop.permute.xlu0 %5163
      %5165 = vrot.lane.b32.xlu0 %v4992, 24
      %v5166 = vpop.permute.xlu0 %5165
      %5167 = vrot.lane.b32.xlu0 %v4999, 24
      %v5168 = vpop.permute.xlu0 %5167
      %5169 = vrot.lane.b32.xlu0 %v5008, 24
      %v5170 = vpop.permute.xlu0 %5169
      %5171 = vrot.lane.b32.xlu0 %v5009, 24
      %v5172 = vpop.permute.xlu0 %5171
      %5173 = vrot.lane.b32.xlu0 %v5016, 24
      %v5174 = vpop.permute.xlu0 %5173
      %5175 = vrot.lane.b32.xlu0 %v5025, 24
      %v5176 = vpop.permute.xlu0 %5175
      %5177 = vrot.lane.b32.xlu0 %v5026, 24
      %v5178 = vpop.permute.xlu0 %5177
      %5179 = vrot.lane.b32.xlu0 %v5033, 24
      %v5180 = vpop.permute.xlu0 %5179
      %5181 = vrot.lane.b32.xlu0 %v5042, 24
      %v5182 = vpop.permute.xlu0 %5181
      %5183 = vrot.lane.b32.xlu0 %v5043, 24
      %v5184 = vpop.permute.xlu0 %5183
      %5185 = vrot.lane.b32.xlu0 %v5050, 24
      %v5186 = vpop.permute.xlu0 %5185
      %5187 = vrot.lane.b32.xlu0 %v5059, 24
      %v5188 = vpop.permute.xlu0 %5187
      %5189 = vrot.lane.b32.xlu0 %v5060, 24
      %v5190 = vpop.permute.xlu0 %5189
      %5191 = vrot.lane.b32.xlu0 %v5067, 24
      %v5192 = vpop.permute.xlu0 %5191
      %5193 = vrot.lane.b32.xlu0 %v5076, 24
      %v5194 = vpop.permute.xlu0 %5193
      %5195 = vrot.lane.b32.xlu0 %v5077, 24
      %v5196 = vpop.permute.xlu0 %5195
      %5197 = vrot.lane.b32.xlu0 %v5084, 24
      %v5198 = vpop.permute.xlu0 %5197
      %5199 = vrot.lane.b32.xlu0 %v5093, 24
      %v5200 = vpop.permute.xlu0 %5199
      %5201 = vrot.lane.b32.xlu0 %v5094, 24
      %v5202 = vpop.permute.xlu0 %5201
      %vm5257 = vcmask 257216
      %vm5258 = vmand %vm5257, %vm748
      %v5259 = vld [vmem:[%s2925] sm:$0xf]
      %v5260 = vsel %vm5258, %v5096, %v5259
      %5261 = vst [vmem:[%s2925] sm:$0xf] %v5260
      %vm5262 = vcmask 257216
      %5263 = vst.msk [vmem:[%s2925 + $0x4] sm:$0xf] %vm5262, %v5098
      %vm5264 = vcmask 254144
      %vm5265 = vmand %vm5264, %vm686
      %v5266 = vld [vmem:[%s2925 + $0x8] sm:$0x1]
      %v5267 = vsel %vm5265, %v5100, %v5266
      %5268 = vst [vmem:[%s2925 + $0x8] sm:$0x1] %v5267
      %v5269 = vld [vmem:[%s2925 + $0xc] sm:$0xf]
      %v5270 = vsel %vm5258, %v5102, %v5269
      %5271 = vst [vmem:[%s2925 + $0xc] sm:$0xf] %v5270
      %5272 = vst.msk [vmem:[%s2925 + $0x10] sm:$0xf] %vm5262, %v5104
      %v5273 = vld [vmem:[%s2925 + $0x14] sm:$0x1]
      %v5274 = vsel %vm5265, %v5106, %v5273
      %5275 = vst [vmem:[%s2925 + $0x14] sm:$0x1] %v5274
      %v5276 = vld [vmem:[%s2925 + $0x18] sm:$0xf]
      %v5277 = vsel %vm5258, %v5108, %v5276
      %5278 = vst [vmem:[%s2925 + $0x18] sm:$0xf] %v5277
      %5279 = vst.msk [vmem:[%s2925 + $0x1c] sm:$0xf] %vm5262, %v5110
      %v5280 = vld [vmem:[%s2925 + $0x20] sm:$0x1]
      %v5281 = vsel %vm5265, %v5112, %v5280
      %5282 = vst [vmem:[%s2925 + $0x20] sm:$0x1] %v5281
      %v5283 = vld [vmem:[%s2925 + $0x24] sm:$0xf]
      %v5284 = vsel %vm5258, %v5114, %v5283
      %5285 = vst [vmem:[%s2925 + $0x24] sm:$0xf] %v5284
      %5286 = vst.msk [vmem:[%s2925 + $0x28] sm:$0xf] %vm5262, %v5116
      %v5287 = vld [vmem:[%s2925 + $0x2c] sm:$0x1]
      %v5288 = vsel %vm5265, %v5118, %v5287
      %5289 = vst [vmem:[%s2925 + $0x2c] sm:$0x1] %v5288
      %v5290 = vld [vmem:[%s2925 + $0x30] sm:$0xf]
      %v5291 = vsel %vm5258, %v5120, %v5290
      %5292 = vst [vmem:[%s2925 + $0x30] sm:$0xf] %v5291
      %5293 = vst.msk [vmem:[%s2925 + $0x34] sm:$0xf] %vm5262, %v5122
      %v5294 = vld [vmem:[%s2925 + $0x38] sm:$0x1]
      %v5295 = vsel %vm5265, %v5124, %v5294
      %5296 = vst [vmem:[%s2925 + $0x38] sm:$0x1] %v5295
      %v5297 = vld [vmem:[%s2925 + $0x3c] sm:$0xf]
      %v5298 = vsel %vm5258, %v5126, %v5297
      %5299 = vst [vmem:[%s2925 + $0x3c] sm:$0xf] %v5298
      %5300 = vst.msk [vmem:[%s2925 + $0x40] sm:$0xf] %vm5262, %v5128
      %v5301 = vld [vmem:[%s2925 + $0x44] sm:$0x1]
      %v5302 = vsel %vm5265, %v5130, %v5301
      %5303 = vst [vmem:[%s2925 + $0x44] sm:$0x1] %v5302
      %v5304 = vld [vmem:[%s2925 + $0x48] sm:$0xf]
      %v5305 = vsel %vm5258, %v5132, %v5304
      %5306 = vst [vmem:[%s2925 + $0x48] sm:$0xf] %v5305
      %5307 = vst.msk [vmem:[%s2925 + $0x4c] sm:$0xf] %vm5262, %v5134
      %v5308 = vld [vmem:[%s2925 + $0x50] sm:$0x1]
      %v5309 = vsel %vm5265, %v5136, %v5308
      %5310 = vst [vmem:[%s2925 + $0x50] sm:$0x1] %v5309
      %v5311 = vld [vmem:[%s2925 + $0x54] sm:$0xf]
      %v5312 = vsel %vm5258, %v5138, %v5311
      %5313 = vst [vmem:[%s2925 + $0x54] sm:$0xf] %v5312
      %5314 = vst.msk [vmem:[%s2925 + $0x58] sm:$0xf] %vm5262, %v5140
      %v5315 = vld [vmem:[%s2925 + $0x5c] sm:$0x1]
      %v5316 = vsel %vm5265, %v5142, %v5315
      %5317 = vst [vmem:[%s2925 + $0x5c] sm:$0x1] %v5316
      %v5318 = vld [vmem:[%s2925 + $0x60] sm:$0xf]
      %v5319 = vsel %vm5258, %v5144, %v5318
      %5320 = vst [vmem:[%s2925 + $0x60] sm:$0xf] %v5319
      %5321 = vst.msk [vmem:[%s2925 + $0x64] sm:$0xf] %vm5262, %v5146
      %v5322 = vld [vmem:[%s2925 + $0x68] sm:$0x1]
      %v5323 = vsel %vm5265, %v5148, %v5322
      %5324 = vst [vmem:[%s2925 + $0x68] sm:$0x1] %v5323
      %v5325 = vld [vmem:[%s2925 + $0x6c] sm:$0xf]
      %v5326 = vsel %vm5258, %v5150, %v5325
      %5327 = vst [vmem:[%s2925 + $0x6c] sm:$0xf] %v5326
      %5328 = vst.msk [vmem:[%s2925 + $0x70] sm:$0xf] %vm5262, %v5152
      %v5329 = vld [vmem:[%s2925 + $0x74] sm:$0x1]
      %v5330 = vsel %vm5265, %v5154, %v5329
      %5331 = vst [vmem:[%s2925 + $0x74] sm:$0x1] %v5330
      %v5332 = vld [vmem:[%s2925 + $0x78] sm:$0xf]
      %v5333 = vsel %vm5258, %v5156, %v5332
      %5334 = vst [vmem:[%s2925 + $0x78] sm:$0xf] %v5333
      %5335 = vst.msk [vmem:[%s2925 + $0x7c] sm:$0xf] %vm5262, %v5158
      %v5336 = vld [vmem:[%s2925 + $0x80] sm:$0x1]
      %v5337 = vsel %vm5265, %v5160, %v5336
      %5338 = vst [vmem:[%s2925 + $0x80] sm:$0x1] %v5337
      %v5339 = vld [vmem:[%s2925 + $0x84] sm:$0xf]
      %v5340 = vsel %vm5258, %v5162, %v5339
      %5341 = vst [vmem:[%s2925 + $0x84] sm:$0xf] %v5340
      %5342 = vst.msk [vmem:[%s2925 + $0x88] sm:$0xf] %vm5262, %v5164
      %v5343 = vld [vmem:[%s2925 + $0x8c] sm:$0x1]
      %v5344 = vsel %vm5265, %v5166, %v5343
      %5345 = vst [vmem:[%s2925 + $0x8c] sm:$0x1] %v5344
      %v5346 = vld [vmem:[%s2925 + $0x90] sm:$0xf]
      %v5347 = vsel %vm5258, %v5168, %v5346
      %5348 = vst [vmem:[%s2925 + $0x90] sm:$0xf] %v5347
      %5349 = vst.msk [vmem:[%s2925 + $0x94] sm:$0xf] %vm5262, %v5170
      %v5350 = vld [vmem:[%s2925 + $0x98] sm:$0x1]
      %v5351 = vsel %vm5265, %v5172, %v5350
      %5352 = vst [vmem:[%s2925 + $0x98] sm:$0x1] %v5351
      %v5353 = vld [vmem:[%s2925 + $0x9c] sm:$0xf]
      %v5354 = vsel %vm5258, %v5174, %v5353
      %5355 = vst [vmem:[%s2925 + $0x9c] sm:$0xf] %v5354
      %5356 = vst.msk [vmem:[%s2925 + $0xa0] sm:$0xf] %vm5262, %v5176
      %v5357 = vld [vmem:[%s2925 + $0xa4] sm:$0x1]
      %v5358 = vsel %vm5265, %v5178, %v5357
      %5359 = vst [vmem:[%s2925 + $0xa4] sm:$0x1] %v5358
      %v5360 = vld [vmem:[%s2925 + $0xa8] sm:$0xf]
      %v5361 = vsel %vm5258, %v5180, %v5360
      %5362 = vst [vmem:[%s2925 + $0xa8] sm:$0xf] %v5361
      %5363 = vst.msk [vmem:[%s2925 + $0xac] sm:$0xf] %vm5262, %v5182
      %v5364 = vld [vmem:[%s2925 + $0xb0] sm:$0x1]
      %v5365 = vsel %vm5265, %v5184, %v5364
      %5366 = vst [vmem:[%s2925 + $0xb0] sm:$0x1] %v5365
      %v5367 = vld [vmem:[%s2925 + $0xb4] sm:$0xf]
      %v5368 = vsel %vm5258, %v5186, %v5367
      %5369 = vst [vmem:[%s2925 + $0xb4] sm:$0xf] %v5368
      %5370 = vst.msk [vmem:[%s2925 + $0xb8] sm:$0xf] %vm5262, %v5188
      %v5371 = vld [vmem:[%s2925 + $0xbc] sm:$0x1]
      %v5372 = vsel %vm5265, %v5190, %v5371
      %5373 = vst [vmem:[%s2925 + $0xbc] sm:$0x1] %v5372
      %v5374 = vld [vmem:[%s2925 + $0xc0] sm:$0xf]
      %v5375 = vsel %vm5258, %v5192, %v5374
      %5376 = vst [vmem:[%s2925 + $0xc0] sm:$0xf] %v5375
      %5377 = vst.msk [vmem:[%s2925 + $0xc4] sm:$0xf] %vm5262, %v5194
      %v5378 = vld [vmem:[%s2925 + $0xc8] sm:$0x1]
      %v5379 = vsel %vm5265, %v5196, %v5378
      %5380 = vst [vmem:[%s2925 + $0xc8] sm:$0x1] %v5379
      %v5381 = vld [vmem:[%s2925 + $0xcc] sm:$0xf]
      %v5382 = vsel %vm5258, %v5198, %v5381
      %5383 = vst [vmem:[%s2925 + $0xcc] sm:$0xf] %v5382
      %5384 = vst.msk [vmem:[%s2925 + $0xd0] sm:$0xf] %vm5262, %v5200
      %v5385 = vld [vmem:[%s2925 + $0xd4] sm:$0x1]
      %v5386 = vsel %vm5265, %v5202, %v5385
      %5387 = vst [vmem:[%s2925 + $0xd4] sm:$0x1] %v5386
      // Predicated region
      $region81: #{residual_dense_block.1} parent=71 // pred_check
        %p5388 = pneg %p810
      $region82: #{residual_dense_block.1} parent=71 // pred_check_branch
        %5390 = sbr.rel (%p5388) target = $region84
      $region83: #{residual_dense_block.1} parent=71 // pred_region
        %v5391 = vld [vmem:[%s2925] sm:$0xf]
        %v5392 = vsel %vm5258, 0, %v5391
        %5393 = vst [vmem:[%s2925] sm:$0xf] %v5392
        %5394 = vst.msk [vmem:[%s2925 + $0x4] sm:$0xf] %vm5262, 0
        %v5395 = vld [vmem:[%s2925 + $0x8] sm:$0x1]
        %v5396 = vsel %vm5265, 0, %v5395
        %5397 = vst [vmem:[%s2925 + $0x8] sm:$0x1] %v5396
        %v5398 = vld [vmem:[%s2925 + $0xc] sm:$0xf]
        %v5399 = vsel %vm5258, 0, %v5398
        %5400 = vst [vmem:[%s2925 + $0xc] sm:$0xf] %v5399
        %5401 = vst.msk [vmem:[%s2925 + $0x10] sm:$0xf] %vm5262, 0
        %v5402 = vld [vmem:[%s2925 + $0x14] sm:$0x1]
        %v5403 = vsel %vm5265, 0, %v5402
        %5404 = vst [vmem:[%s2925 + $0x14] sm:$0x1] %v5403
        %v5405 = vld [vmem:[%s2925 + $0x18] sm:$0xf]
        %v5406 = vsel %vm5258, 0, %v5405
        %5407 = vst [vmem:[%s2925 + $0x18] sm:$0xf] %v5406
        %5408 = vst.msk [vmem:[%s2925 + $0x1c] sm:$0xf] %vm5262, 0
        %v5409 = vld [vmem:[%s2925 + $0x20] sm:$0x1]
        %v5410 = vsel %vm5265, 0, %v5409
        %5411 = vst [vmem:[%s2925 + $0x20] sm:$0x1] %v5410
        %v5412 = vld [vmem:[%s2925 + $0x24] sm:$0xf]
        %v5413 = vsel %vm5258, 0, %v5412
        %5414 = vst [vmem:[%s2925 + $0x24] sm:$0xf] %v5413
        %5415 = vst.msk [vmem:[%s2925 + $0x28] sm:$0xf] %vm5262, 0
        %v5416 = vld [vmem:[%s2925 + $0x2c] sm:$0x1]
        %v5417 = vsel %vm5265, 0, %v5416
        %5418 = vst [vmem:[%s2925 + $0x2c] sm:$0x1] %v5417
        %v5419 = vld [vmem:[%s2925 + $0x30] sm:$0xf]
        %v5420 = vsel %vm5258, 0, %v5419
        %5421 = vst [vmem:[%s2925 + $0x30] sm:$0xf] %v5420
        %5422 = vst.msk [vmem:[%s2925 + $0x34] sm:$0xf] %vm5262, 0
        %v5423 = vld [vmem:[%s2925 + $0x38] sm:$0x1]
        %v5424 = vsel %vm5265, 0, %v5423
        %5425 = vst [vmem:[%s2925 + $0x38] sm:$0x1] %v5424
      $region84: #{residual_dense_block.1} parent=71 // pred_fallthru
        _
      // Predicated region
      $region85: #{residual_dense_block.1} parent=71 // pred_check
        %p5426 = pneg %p811
      $region86: #{residual_dense_block.1} parent=71 // pred_check_branch
        %5428 = sbr.rel (%p5426) target = $region88
      $region87: #{residual_dense_block.1} parent=71 // pred_region
        %v5429 = vld [vmem:[%s657] sm:$0xf]
        %v5430 = vsel %vm5258, 0, %v5429
        %5431 = vst [vmem:[%s657] sm:$0xf] %v5430
        %5432 = vst.msk [vmem:[%s657 + $0x4] sm:$0xf] %vm5262, 0
        %v5433 = vld [vmem:[%s657 + $0x8] sm:$0x1]
        %v5434 = vsel %vm5265, 0, %v5433
        %5435 = vst [vmem:[%s657 + $0x8] sm:$0x1] %v5434
        %v5436 = vld [vmem:[%s657 + $0xc] sm:$0xf]
        %v5437 = vsel %vm5258, 0, %v5436
        %5438 = vst [vmem:[%s657 + $0xc] sm:$0xf] %v5437
        %5439 = vst.msk [vmem:[%s657 + $0x10] sm:$0xf] %vm5262, 0
        %v5440 = vld [vmem:[%s657 + $0x14] sm:$0x1]
        %v5441 = vsel %vm5265, 0, %v5440
        %5442 = vst [vmem:[%s657 + $0x14] sm:$0x1] %v5441
        %v5443 = vld [vmem:[%s657 + $0x18] sm:$0xf]
        %v5444 = vsel %vm5258, 0, %v5443
        %5445 = vst [vmem:[%s657 + $0x18] sm:$0xf] %v5444
        %5446 = vst.msk [vmem:[%s657 + $0x1c] sm:$0xf] %vm5262, 0
        %v5447 = vld [vmem:[%s657 + $0x20] sm:$0x1]
        %v5448 = vsel %vm5265, 0, %v5447
        %5449 = vst [vmem:[%s657 + $0x20] sm:$0x1] %v5448
        %v5450 = vld [vmem:[%s657 + $0x24] sm:$0xf]
        %v5451 = vsel %vm5258, 0, %v5450
        %5452 = vst [vmem:[%s657 + $0x24] sm:$0xf] %v5451
        %5453 = vst.msk [vmem:[%s657 + $0x28] sm:$0xf] %vm5262, 0
        %v5454 = vld [vmem:[%s657 + $0x2c] sm:$0x1]
        %v5455 = vsel %vm5265, 0, %v5454
        %5456 = vst [vmem:[%s657 + $0x2c] sm:$0x1] %v5455
        %v5457 = vld [vmem:[%s657 + $0x30] sm:$0xf]
        %v5458 = vsel %vm5258, 0, %v5457
        %5459 = vst [vmem:[%s657 + $0x30] sm:$0xf] %v5458
        %5460 = vst.msk [vmem:[%s657 + $0x34] sm:$0xf] %vm5262, 0
        %v5461 = vld [vmem:[%s657 + $0x38] sm:$0x1]
        %v5462 = vsel %vm5265, 0, %v5461
        %5463 = vst [vmem:[%s657 + $0x38] sm:$0x1] %v5462
      $region88: #{residual_dense_block.1} parent=71 // pred_fallthru
        _
      %v5464 = vld [vmem:[#allocation2] sm:$0xf]
      %v5465 = vld [vmem:[#allocation2 + $0x4] sm:$0xf]
      %v5466 = vld [vmem:[#allocation2 + $0xc] sm:$0xf]
      %v5467 = vld [vmem:[#allocation2 + $0x10] sm:$0xf]
      %v5468 = vld [vmem:[#allocation2 + $0x18] sm:$0xf]
      %v5469 = vld [vmem:[#allocation2 + $0x1c] sm:$0xf]
      %v5470 = vld [vmem:[#allocation2 + $0x24] sm:$0xf]
      %v5471 = vld [vmem:[#allocation2 + $0x28] sm:$0xf]
      %v5472 = vld [vmem:[#allocation2 + $0x30] sm:$0xf]
      %v5473 = vld [vmem:[#allocation2 + $0x34] sm:$0xf]
      %v5474 = vld [vmem:[#allocation2 + $0x3c] sm:$0xf]
      %v5475 = vld [vmem:[#allocation2 + $0x40] sm:$0xf]
      %v5476 = vld [vmem:[#allocation2 + $0x48] sm:$0xf]
      %v5477 = vld [vmem:[#allocation2 + $0x4c] sm:$0xf]
      %v5478 = vld [vmem:[#allocation2 + $0x54] sm:$0xf]
      %v5479 = vld [vmem:[#allocation2 + $0x58] sm:$0xf]
      %v5480 = vld [vmem:[#allocation2 + $0x60] sm:$0xf]
      %v5481 = vld [vmem:[#allocation2 + $0x64] sm:$0xf]
      %v5482 = vld [vmem:[#allocation2 + $0x6c] sm:$0xf]
      %v5483 = vld [vmem:[#allocation2 + $0x70] sm:$0xf]
      %v5484 = vld [vmem:[#allocation2 + $0x78] sm:$0xf]
      %v5485 = vld [vmem:[#allocation2 + $0x7c] sm:$0xf]
      %v5486 = vld [vmem:[#allocation2 + $0x84] sm:$0xf]
      %v5487 = vld [vmem:[#allocation2 + $0x88] sm:$0xf]
      %v5488 = vld [vmem:[#allocation2 + $0x90] sm:$0xf]
      %v5489 = vld [vmem:[#allocation2 + $0x94] sm:$0xf]
      %v5490 = vld [vmem:[#allocation2 + $0x9c] sm:$0xf]
      %v5491 = vld [vmem:[#allocation2 + $0xa0] sm:$0xf]
      %v5492 = vld [vmem:[#allocation2 + $0xa8] sm:$0xf]
      %v5493 = vld [vmem:[#allocation2 + $0xac] sm:$0xf]
      %v5494 = vld [vmem:[#allocation2 + $0xb4] sm:$0xf]
      %v5495 = vld [vmem:[#allocation2 + $0xb8] sm:$0xf]
      %v5496 = vld [vmem:[#allocation2 + $0xc0] sm:$0xf]
      %v5497 = vld [vmem:[#allocation2 + $0xc4] sm:$0xf]
      %v5498 = vld [vmem:[#allocation2 + $0xcc] sm:$0xf]
      %v5499 = vld [vmem:[#allocation2 + $0xd0] sm:$0xf]
      %v5500 = vld [vmem:[#allocation2 + $0xd8] sm:$0xf]
      %v5501 = vld [vmem:[#allocation2 + $0xdc] sm:$0xf]
      %v5502 = vld [vmem:[#allocation2 + $0xe4] sm:$0xf]
      %v5503 = vld [vmem:[#allocation2 + $0xe8] sm:$0xf]
      %v5504 = vld [vmem:[#allocation2 + $0x8] sm:$0x1]
      %v5505 = vld [vmem:[#allocation2 + $0x14] sm:$0x1]
      %v5506 = vld [vmem:[#allocation2 + $0x20] sm:$0x1]
      %v5507 = vld [vmem:[#allocation2 + $0x2c] sm:$0x1]
      %v5508 = vld [vmem:[#allocation2 + $0x38] sm:$0x1]
      %v5509 = vld [vmem:[#allocation2 + $0x44] sm:$0x1]
      %v5510 = vld [vmem:[#allocation2 + $0x50] sm:$0x1]
      %v5511 = vld [vmem:[#allocation2 + $0x5c] sm:$0x1]
      %v5512 = vld [vmem:[#allocation2 + $0x68] sm:$0x1]
      %v5513 = vld [vmem:[#allocation2 + $0x74] sm:$0x1]
      %v5514 = vld [vmem:[#allocation2 + $0x80] sm:$0x1]
      %v5515 = vld [vmem:[#allocation2 + $0x8c] sm:$0x1]
      %v5516 = vld [vmem:[#allocation2 + $0x98] sm:$0x1]
      %v5517 = vld [vmem:[#allocation2 + $0xa4] sm:$0x1]
      %v5518 = vld [vmem:[#allocation2 + $0xb0] sm:$0x1]
      %v5519 = vld [vmem:[#allocation2 + $0xbc] sm:$0x1]
      %v5520 = vld [vmem:[#allocation2 + $0xc8] sm:$0x1]
      %v5521 = vld [vmem:[#allocation2 + $0xd4] sm:$0x1]
      %v5522 = vld [vmem:[#allocation2 + $0xe0] sm:$0x1]
      %v5523 = vld [vmem:[#allocation2 + $0xec] sm:$0x1]
      %v5524 = vld [vmem:[#allocation2] sm:$0xe]
      %v5525 = vld [vmem:[#allocation2 + $0xc] sm:$0xe]
      %v5526 = vld [vmem:[#allocation2 + $0x18] sm:$0xe]
      %v5527 = vld [vmem:[#allocation2 + $0x24] sm:$0xe]
      %v5528 = vld [vmem:[#allocation2 + $0x30] sm:$0xe]
      %v5529 = vld [vmem:[#allocation2 + $0x3c] sm:$0xe]
      %v5530 = vld [vmem:[#allocation2 + $0x48] sm:$0xe]
      %v5531 = vld [vmem:[#allocation2 + $0x54] sm:$0xe]
      %v5532 = vld [vmem:[#allocation2 + $0x60] sm:$0xe]
      %v5533 = vld [vmem:[#allocation2 + $0x6c] sm:$0xe]
      %v5534 = vld [vmem:[#allocation2 + $0x78] sm:$0xe]
      %v5535 = vld [vmem:[#allocation2 + $0x84] sm:$0xe]
      %v5536 = vld [vmem:[#allocation2 + $0x90] sm:$0xe]
      %v5537 = vld [vmem:[#allocation2 + $0x9c] sm:$0xe]
      %v5538 = vld [vmem:[#allocation2 + $0xa8] sm:$0xe]
      %v5539 = vld [vmem:[#allocation2 + $0xb4] sm:$0xe]
      %v5540 = vld [vmem:[#allocation2 + $0xc0] sm:$0xe]
      %v5541 = vld [vmem:[#allocation2 + $0xcc] sm:$0xe]
      %v5542 = vld [vmem:[#allocation2 + $0xd8] sm:$0xe]
      %v5543 = vld [vmem:[#allocation2 + $0xe4] sm:$0xe]
      %v5584 = vunpack.c.l.b16 %v5464
      %v5585 = vunpack.c.l.b16 %v5465
      %v5586 = vunpack.c.l.b16 %v5466
      %v5587 = vunpack.c.l.b16 %v5467
      %v5588 = vunpack.c.l.b16 %v5468
      %v5589 = vunpack.c.l.b16 %v5469
      %v5590 = vunpack.c.l.b16 %v5470
      %v5591 = vunpack.c.l.b16 %v5471
      %v5592 = vunpack.c.l.b16 %v5472
      %v5593 = vunpack.c.l.b16 %v5473
      %v5594 = vunpack.c.l.b16 %v5474
      %v5595 = vunpack.c.l.b16 %v5475
      %v5596 = vunpack.c.l.b16 %v5476
      %v5597 = vunpack.c.l.b16 %v5477
      %v5598 = vunpack.c.l.b16 %v5478
      %v5599 = vunpack.c.l.b16 %v5479
      %v5600 = vunpack.c.l.b16 %v5480
      %v5601 = vunpack.c.l.b16 %v5481
      %v5602 = vunpack.c.l.b16 %v5482
      %v5603 = vunpack.c.l.b16 %v5483
      %v5604 = vunpack.c.l.b16 %v5484
      %v5605 = vunpack.c.l.b16 %v5485
      %v5606 = vunpack.c.l.b16 %v5486
      %v5607 = vunpack.c.l.b16 %v5487
      %v5608 = vunpack.c.l.b16 %v5488
      %v5609 = vunpack.c.l.b16 %v5489
      %v5610 = vunpack.c.l.b16 %v5490
      %v5611 = vunpack.c.l.b16 %v5491
      %v5612 = vunpack.c.l.b16 %v5492
      %v5613 = vunpack.c.l.b16 %v5493
      %v5614 = vunpack.c.l.b16 %v5494
      %v5615 = vunpack.c.l.b16 %v5495
      %v5616 = vunpack.c.l.b16 %v5496
      %v5617 = vunpack.c.l.b16 %v5497
      %v5618 = vunpack.c.l.b16 %v5498
      %v5619 = vunpack.c.l.b16 %v5499
      %v5620 = vunpack.c.l.b16 %v5500
      %v5621 = vunpack.c.l.b16 %v5501
      %v5622 = vunpack.c.l.b16 %v5502
      %v5623 = vunpack.c.l.b16 %v5503
      %v5624 = vpack.c.b16 %v5585, %v5584
      %v5625 = vpack.c.b16 %v5587, %v5586
      %v5626 = vpack.c.b16 %v5589, %v5588
      %v5627 = vpack.c.b16 %v5591, %v5590
      %v5628 = vpack.c.b16 %v5593, %v5592
      %v5629 = vpack.c.b16 %v5595, %v5594
      %v5630 = vpack.c.b16 %v5597, %v5596
      %v5631 = vpack.c.b16 %v5599, %v5598
      %v5632 = vpack.c.b16 %v5601, %v5600
      %v5633 = vpack.c.b16 %v5603, %v5602
      %v5634 = vpack.c.b16 %v5605, %v5604
      %v5635 = vpack.c.b16 %v5607, %v5606
      %v5636 = vpack.c.b16 %v5609, %v5608
      %v5637 = vpack.c.b16 %v5611, %v5610
      %v5638 = vpack.c.b16 %v5613, %v5612
      %v5639 = vpack.c.b16 %v5615, %v5614
      %v5640 = vpack.c.b16 %v5617, %v5616
      %v5641 = vpack.c.b16 %v5619, %v5618
      %v5642 = vpack.c.b16 %v5621, %v5620
      %v5643 = vpack.c.b16 %v5623, %v5622
      %v5664 = vunpack.c.l.b16 %v5504
      %v5665 = vunpack.c.l.b16 %v5505
      %v5666 = vunpack.c.l.b16 %v5506
      %v5667 = vunpack.c.l.b16 %v5507
      %v5668 = vunpack.c.l.b16 %v5508
      %v5669 = vunpack.c.l.b16 %v5509
      %v5670 = vunpack.c.l.b16 %v5510
      %v5671 = vunpack.c.l.b16 %v5511
      %v5672 = vunpack.c.l.b16 %v5512
      %v5673 = vunpack.c.l.b16 %v5513
      %v5674 = vunpack.c.l.b16 %v5514
      %v5675 = vunpack.c.l.b16 %v5515
      %v5676 = vunpack.c.l.b16 %v5516
      %v5677 = vunpack.c.l.b16 %v5517
      %v5678 = vunpack.c.l.b16 %v5518
      %v5679 = vunpack.c.l.b16 %v5519
      %v5680 = vunpack.c.l.b16 %v5520
      %v5681 = vunpack.c.l.b16 %v5521
      %v5682 = vunpack.c.l.b16 %v5522
      %v5683 = vunpack.c.l.b16 %v5523
      %v5684 = vpack.c.b16 %v5664, %v5664
      %v5685 = vpack.c.b16 %v5665, %v5665
      %v5686 = vpack.c.b16 %v5666, %v5666
      %v5687 = vpack.c.b16 %v5667, %v5667
      %v5688 = vpack.c.b16 %v5668, %v5668
      %v5689 = vpack.c.b16 %v5669, %v5669
      %v5690 = vpack.c.b16 %v5670, %v5670
      %v5691 = vpack.c.b16 %v5671, %v5671
      %v5692 = vpack.c.b16 %v5672, %v5672
      %v5693 = vpack.c.b16 %v5673, %v5673
      %v5694 = vpack.c.b16 %v5674, %v5674
      %v5695 = vpack.c.b16 %v5675, %v5675
      %v5696 = vpack.c.b16 %v5676, %v5676
      %v5697 = vpack.c.b16 %v5677, %v5677
      %v5698 = vpack.c.b16 %v5678, %v5678
      %v5699 = vpack.c.b16 %v5679, %v5679
      %v5700 = vpack.c.b16 %v5680, %v5680
      %v5701 = vpack.c.b16 %v5681, %v5681
      %v5702 = vpack.c.b16 %v5682, %v5682
      %v5703 = vpack.c.b16 %v5683, %v5683
      %v5705 = vshrl.u32 %v5624, 16
      %v5707 = vshll.u32 %v5624, 16
      %v5709 = vrot.slane %v5707, 1
      %v5710 = vor.u32 %v5705, %v5709
      %v5712 = vshll.u32 %v5684, 16
      %v5714 = vrot.slane %v5712, 1
      %v5715 = vsel %vm1052, %v5710, %v5714
      %v5717 = vshrl.u32 %v5625, 16
      %v5719 = vshll.u32 %v5625, 16
      %v5721 = vrot.slane %v5719, 1
      %v5722 = vor.u32 %v5717, %v5721
      %v5724 = vshll.u32 %v5685, 16
      %v5726 = vrot.slane %v5724, 1
      %v5727 = vsel %vm1052, %v5722, %v5726
      %v5729 = vshrl.u32 %v5626, 16
      %v5731 = vshll.u32 %v5626, 16
      %v5733 = vrot.slane %v5731, 1
      %v5734 = vor.u32 %v5729, %v5733
      %v5736 = vshll.u32 %v5686, 16
      %v5738 = vrot.slane %v5736, 1
      %v5739 = vsel %vm1052, %v5734, %v5738
      %v5741 = vshrl.u32 %v5627, 16
      %v5743 = vshll.u32 %v5627, 16
      %v5745 = vrot.slane %v5743, 1
      %v5746 = vor.u32 %v5741, %v5745
      %v5748 = vshll.u32 %v5687, 16
      %v5750 = vrot.slane %v5748, 1
      %v5751 = vsel %vm1052, %v5746, %v5750
      %v5753 = vshrl.u32 %v5628, 16
      %v5755 = vshll.u32 %v5628, 16
      %v5757 = vrot.slane %v5755, 1
      %v5758 = vor.u32 %v5753, %v5757
      %v5760 = vshll.u32 %v5688, 16
      %v5762 = vrot.slane %v5760, 1
      %v5763 = vsel %vm1052, %v5758, %v5762
      %v5765 = vshrl.u32 %v5629, 16
      %v5767 = vshll.u32 %v5629, 16
      %v5769 = vrot.slane %v5767, 1
      %v5770 = vor.u32 %v5765, %v5769
      %v5772 = vshll.u32 %v5689, 16
      %v5774 = vrot.slane %v5772, 1
      %v5775 = vsel %vm1052, %v5770, %v5774
      %v5777 = vshrl.u32 %v5630, 16
      %v5779 = vshll.u32 %v5630, 16
      %v5781 = vrot.slane %v5779, 1
      %v5782 = vor.u32 %v5777, %v5781
      %v5784 = vshll.u32 %v5690, 16
      %v5786 = vrot.slane %v5784, 1
      %v5787 = vsel %vm1052, %v5782, %v5786
      %v5789 = vshrl.u32 %v5631, 16
      %v5791 = vshll.u32 %v5631, 16
      %v5793 = vrot.slane %v5791, 1
      %v5794 = vor.u32 %v5789, %v5793
      %v5796 = vshll.u32 %v5691, 16
      %v5798 = vrot.slane %v5796, 1
      %v5799 = vsel %vm1052, %v5794, %v5798
      %v5801 = vshrl.u32 %v5632, 16
      %v5803 = vshll.u32 %v5632, 16
      %v5805 = vrot.slane %v5803, 1
      %v5806 = vor.u32 %v5801, %v5805
      %v5808 = vshll.u32 %v5692, 16
      %v5810 = vrot.slane %v5808, 1
      %v5811 = vsel %vm1052, %v5806, %v5810
      %v5813 = vshrl.u32 %v5633, 16
      %v5815 = vshll.u32 %v5633, 16
      %v5817 = vrot.slane %v5815, 1
      %v5818 = vor.u32 %v5813, %v5817
      %v5820 = vshll.u32 %v5693, 16
      %v5822 = vrot.slane %v5820, 1
      %v5823 = vsel %vm1052, %v5818, %v5822
      %v5825 = vshrl.u32 %v5634, 16
      %v5827 = vshll.u32 %v5634, 16
      %v5829 = vrot.slane %v5827, 1
      %v5830 = vor.u32 %v5825, %v5829
      %v5832 = vshll.u32 %v5694, 16
      %v5834 = vrot.slane %v5832, 1
      %v5835 = vsel %vm1052, %v5830, %v5834
      %v5837 = vshrl.u32 %v5635, 16
      %v5839 = vshll.u32 %v5635, 16
      %v5841 = vrot.slane %v5839, 1
      %v5842 = vor.u32 %v5837, %v5841
      %v5844 = vshll.u32 %v5695, 16
      %v5846 = vrot.slane %v5844, 1
      %v5847 = vsel %vm1052, %v5842, %v5846
      %v5849 = vshrl.u32 %v5636, 16
      %v5851 = vshll.u32 %v5636, 16
      %v5853 = vrot.slane %v5851, 1
      %v5854 = vor.u32 %v5849, %v5853
      %v5856 = vshll.u32 %v5696, 16
      %v5858 = vrot.slane %v5856, 1
      %v5859 = vsel %vm1052, %v5854, %v5858
      %v5861 = vshrl.u32 %v5637, 16
      %v5863 = vshll.u32 %v5637, 16
      %v5865 = vrot.slane %v5863, 1
      %v5866 = vor.u32 %v5861, %v5865
      %v5868 = vshll.u32 %v5697, 16
      %v5870 = vrot.slane %v5868, 1
      %v5871 = vsel %vm1052, %v5866, %v5870
      %v5873 = vshrl.u32 %v5638, 16
      %v5875 = vshll.u32 %v5638, 16
      %v5877 = vrot.slane %v5875, 1
      %v5878 = vor.u32 %v5873, %v5877
      %v5880 = vshll.u32 %v5698, 16
      %v5882 = vrot.slane %v5880, 1
      %v5883 = vsel %vm1052, %v5878, %v5882
      %v5885 = vshrl.u32 %v5639, 16
      %v5887 = vshll.u32 %v5639, 16
      %v5889 = vrot.slane %v5887, 1
      %v5890 = vor.u32 %v5885, %v5889
      %v5892 = vshll.u32 %v5699, 16
      %v5894 = vrot.slane %v5892, 1
      %v5895 = vsel %vm1052, %v5890, %v5894
      %v5897 = vshrl.u32 %v5640, 16
      %v5899 = vshll.u32 %v5640, 16
      %v5901 = vrot.slane %v5899, 1
      %v5902 = vor.u32 %v5897, %v5901
      %v5904 = vshll.u32 %v5700, 16
      %v5906 = vrot.slane %v5904, 1
      %v5907 = vsel %vm1052, %v5902, %v5906
      %v5909 = vshrl.u32 %v5641, 16
      %v5911 = vshll.u32 %v5641, 16
      %v5913 = vrot.slane %v5911, 1
      %v5914 = vor.u32 %v5909, %v5913
      %v5916 = vshll.u32 %v5701, 16
      %v5918 = vrot.slane %v5916, 1
      %v5919 = vsel %vm1052, %v5914, %v5918
      %v5921 = vshrl.u32 %v5642, 16
      %v5923 = vshll.u32 %v5642, 16
      %v5925 = vrot.slane %v5923, 1
      %v5926 = vor.u32 %v5921, %v5925
      %v5928 = vshll.u32 %v5702, 16
      %v5930 = vrot.slane %v5928, 1
      %v5931 = vsel %vm1052, %v5926, %v5930
      %v5933 = vshrl.u32 %v5643, 16
      %v5935 = vshll.u32 %v5643, 16
      %v5937 = vrot.slane %v5935, 1
      %v5938 = vor.u32 %v5933, %v5937
      %v5940 = vshll.u32 %v5703, 16
      %v5942 = vrot.slane %v5940, 1
      %v5943 = vsel %vm1052, %v5938, %v5942
      %5944 = vrot.lane.b32.xlu0 %v5715, 32
      %v5945 = vpop.permute.xlu0 %5944
      %5946 = vrot.lane.b32.xlu0 %v5727, 32
      %v5947 = vpop.permute.xlu0 %5946
      %5948 = vrot.lane.b32.xlu0 %v5739, 32
      %v5949 = vpop.permute.xlu0 %5948
      %5950 = vrot.lane.b32.xlu0 %v5751, 32
      %v5951 = vpop.permute.xlu0 %5950
      %5952 = vrot.lane.b32.xlu0 %v5763, 32
      %v5953 = vpop.permute.xlu0 %5952
      %5954 = vrot.lane.b32.xlu0 %v5775, 32
      %v5955 = vpop.permute.xlu0 %5954
      %5956 = vrot.lane.b32.xlu0 %v5787, 32
      %v5957 = vpop.permute.xlu0 %5956
      %5958 = vrot.lane.b32.xlu0 %v5799, 32
      %v5959 = vpop.permute.xlu0 %5958
      %5960 = vrot.lane.b32.xlu0 %v5811, 32
      %v5961 = vpop.permute.xlu0 %5960
      %5962 = vrot.lane.b32.xlu0 %v5823, 32
      %v5963 = vpop.permute.xlu0 %5962
      %5964 = vrot.lane.b32.xlu0 %v5835, 32
      %v5965 = vpop.permute.xlu0 %5964
      %5966 = vrot.lane.b32.xlu0 %v5847, 32
      %v5967 = vpop.permute.xlu0 %5966
      %5968 = vrot.lane.b32.xlu0 %v5859, 32
      %v5969 = vpop.permute.xlu0 %5968
      %5970 = vrot.lane.b32.xlu0 %v5871, 32
      %v5971 = vpop.permute.xlu0 %5970
      %5972 = vrot.lane.b32.xlu0 %v5883, 32
      %v5973 = vpop.permute.xlu0 %5972
      %5974 = vrot.lane.b32.xlu0 %v5895, 32
      %v5975 = vpop.permute.xlu0 %5974
      %5976 = vrot.lane.b32.xlu0 %v5907, 32
      %v5977 = vpop.permute.xlu0 %5976
      %5978 = vrot.lane.b32.xlu0 %v5919, 32
      %v5979 = vpop.permute.xlu0 %5978
      %5980 = vrot.lane.b32.xlu0 %v5931, 32
      %v5981 = vpop.permute.xlu0 %5980
      %5982 = vrot.lane.b32.xlu0 %v5943, 32
      %v5983 = vpop.permute.xlu0 %5982
      %v6004 = vunpack.c.l.b16 %v5524
      %v6005 = vunpack.c.l.b16 %v5525
      %v6006 = vunpack.c.l.b16 %v5526
      %v6007 = vunpack.c.l.b16 %v5527
      %v6008 = vunpack.c.l.b16 %v5528
      %v6009 = vunpack.c.l.b16 %v5529
      %v6010 = vunpack.c.l.b16 %v5530
      %v6011 = vunpack.c.l.b16 %v5531
      %v6012 = vunpack.c.l.b16 %v5532
      %v6013 = vunpack.c.l.b16 %v5533
      %v6014 = vunpack.c.l.b16 %v5534
      %v6015 = vunpack.c.l.b16 %v5535
      %v6016 = vunpack.c.l.b16 %v5536
      %v6017 = vunpack.c.l.b16 %v5537
      %v6018 = vunpack.c.l.b16 %v5538
      %v6019 = vunpack.c.l.b16 %v5539
      %v6020 = vunpack.c.l.b16 %v5540
      %v6021 = vunpack.c.l.b16 %v5541
      %v6022 = vunpack.c.l.b16 %v5542
      %v6023 = vunpack.c.l.b16 %v5543
      %v6024 = vpack.c.b16 %v5585, %v6004
      %v6025 = vpack.c.b16 %v5587, %v6005
      %v6026 = vpack.c.b16 %v5589, %v6006
      %v6027 = vpack.c.b16 %v5591, %v6007
      %v6028 = vpack.c.b16 %v5593, %v6008
      %v6029 = vpack.c.b16 %v5595, %v6009
      %v6030 = vpack.c.b16 %v5597, %v6010
      %v6031 = vpack.c.b16 %v5599, %v6011
      %v6032 = vpack.c.b16 %v5601, %v6012
      %v6033 = vpack.c.b16 %v5603, %v6013
      %v6034 = vpack.c.b16 %v5605, %v6014
      %v6035 = vpack.c.b16 %v5607, %v6015
      %v6036 = vpack.c.b16 %v5609, %v6016
      %v6037 = vpack.c.b16 %v5611, %v6017
      %v6038 = vpack.c.b16 %v5613, %v6018
      %v6039 = vpack.c.b16 %v5615, %v6019
      %v6040 = vpack.c.b16 %v5617, %v6020
      %v6041 = vpack.c.b16 %v5619, %v6021
      %v6042 = vpack.c.b16 %v5621, %v6022
      %v6043 = vpack.c.b16 %v5623, %v6023
      %v6044 = vrot.slane %v6024, 1
      %v6045 = vrot.slane %v5684, 1
      %v6046 = vsel %vm1393, %v6044, %v6045
      %v6047 = vrot.slane %v6025, 1
      %v6048 = vrot.slane %v5685, 1
      %v6049 = vsel %vm1393, %v6047, %v6048
      %v6050 = vrot.slane %v6026, 1
      %v6051 = vrot.slane %v5686, 1
      %v6052 = vsel %vm1393, %v6050, %v6051
      %v6053 = vrot.slane %v6027, 1
      %v6054 = vrot.slane %v5687, 1
      %v6055 = vsel %vm1393, %v6053, %v6054
      %v6056 = vrot.slane %v6028, 1
      %v6057 = vrot.slane %v5688, 1
      %v6058 = vsel %vm1393, %v6056, %v6057
      %v6059 = vrot.slane %v6029, 1
      %v6060 = vrot.slane %v5689, 1
      %v6061 = vsel %vm1393, %v6059, %v6060
      %v6062 = vrot.slane %v6030, 1
      %v6063 = vrot.slane %v5690, 1
      %v6064 = vsel %vm1393, %v6062, %v6063
      %v6065 = vrot.slane %v6031, 1
      %v6066 = vrot.slane %v5691, 1
      %v6067 = vsel %vm1393, %v6065, %v6066
      %v6068 = vrot.slane %v6032, 1
      %v6069 = vrot.slane %v5692, 1
      %v6070 = vsel %vm1393, %v6068, %v6069
      %v6071 = vrot.slane %v6033, 1
      %v6072 = vrot.slane %v5693, 1
      %v6073 = vsel %vm1393, %v6071, %v6072
      %v6074 = vrot.slane %v6034, 1
      %v6075 = vrot.slane %v5694, 1
      %v6076 = vsel %vm1393, %v6074, %v6075
      %v6077 = vrot.slane %v6035, 1
      %v6078 = vrot.slane %v5695, 1
      %v6079 = vsel %vm1393, %v6077, %v6078
      %v6080 = vrot.slane %v6036, 1
      %v6081 = vrot.slane %v5696, 1
      %v6082 = vsel %vm1393, %v6080, %v6081
      %v6083 = vrot.slane %v6037, 1
      %v6084 = vrot.slane %v5697, 1
      %v6085 = vsel %vm1393, %v6083, %v6084
      %v6086 = vrot.slane %v6038, 1
      %v6087 = vrot.slane %v5698, 1
      %v6088 = vsel %vm1393, %v6086, %v6087
      %v6089 = vrot.slane %v6039, 1
      %v6090 = vrot.slane %v5699, 1
      %v6091 = vsel %vm1393, %v6089, %v6090
      %v6092 = vrot.slane %v6040, 1
      %v6093 = vrot.slane %v5700, 1
      %v6094 = vsel %vm1393, %v6092, %v6093
      %v6095 = vrot.slane %v6041, 1
      %v6096 = vrot.slane %v5701, 1
      %v6097 = vsel %vm1393, %v6095, %v6096
      %v6098 = vrot.slane %v6042, 1
      %v6099 = vrot.slane %v5702, 1
      %v6100 = vsel %vm1393, %v6098, %v6099
      %v6101 = vrot.slane %v6043, 1
      %v6102 = vrot.slane %v5703, 1
      %v6103 = vsel %vm1393, %v6101, %v6102
      %6104 = vrot.lane.b32.xlu0 %v6046, 64
      %v6105 = vpop.permute.xlu0 %6104
      %6106 = vrot.lane.b32.xlu0 %v6049, 64
      %v6107 = vpop.permute.xlu0 %6106
      %6108 = vrot.lane.b32.xlu0 %v6052, 64
      %v6109 = vpop.permute.xlu0 %6108
      %6110 = vrot.lane.b32.xlu0 %v6055, 64
      %v6111 = vpop.permute.xlu0 %6110
      %6112 = vrot.lane.b32.xlu0 %v6058, 64
      %v6113 = vpop.permute.xlu0 %6112
      %6114 = vrot.lane.b32.xlu0 %v6061, 64
      %v6115 = vpop.permute.xlu0 %6114
      %6116 = vrot.lane.b32.xlu0 %v6064, 64
      %v6117 = vpop.permute.xlu0 %6116
      %6118 = vrot.lane.b32.xlu0 %v6067, 64
      %v6119 = vpop.permute.xlu0 %6118
      %6120 = vrot.lane.b32.xlu0 %v6070, 64
      %v6121 = vpop.permute.xlu0 %6120
      %6122 = vrot.lane.b32.xlu0 %v6073, 64
      %v6123 = vpop.permute.xlu0 %6122
      %6124 = vrot.lane.b32.xlu0 %v6076, 64
      %v6125 = vpop.permute.xlu0 %6124
      %6126 = vrot.lane.b32.xlu0 %v6079, 64
      %v6127 = vpop.permute.xlu0 %6126
      %6128 = vrot.lane.b32.xlu0 %v6082, 64
      %v6129 = vpop.permute.xlu0 %6128
      %6130 = vrot.lane.b32.xlu0 %v6085, 64
      %v6131 = vpop.permute.xlu0 %6130
      %6132 = vrot.lane.b32.xlu0 %v6088, 64
      %v6133 = vpop.permute.xlu0 %6132
      %6134 = vrot.lane.b32.xlu0 %v6091, 64
      %v6135 = vpop.permute.xlu0 %6134
      %6136 = vrot.lane.b32.xlu0 %v6094, 64
      %v6137 = vpop.permute.xlu0 %6136
      %6138 = vrot.lane.b32.xlu0 %v6097, 64
      %v6139 = vpop.permute.xlu0 %6138
      %6140 = vrot.lane.b32.xlu0 %v6100, 64
      %v6141 = vpop.permute.xlu0 %6140
      %6142 = vrot.lane.b32.xlu0 %v6103, 64
      %v6143 = vpop.permute.xlu0 %6142
      %v6145 = vsel %vm1535, %v5624, %v5945
      %v6147 = vsel %vm1535, %v5625, %v5947
      %v6149 = vsel %vm1535, %v5626, %v5949
      %v6151 = vsel %vm1535, %v5627, %v5951
      %v6153 = vsel %vm1535, %v5628, %v5953
      %v6155 = vsel %vm1535, %v5629, %v5955
      %v6157 = vsel %vm1535, %v5630, %v5957
      %v6159 = vsel %vm1535, %v5631, %v5959
      %v6161 = vsel %vm1535, %v5632, %v5961
      %v6163 = vsel %vm1535, %v5633, %v5963
      %v6165 = vsel %vm1535, %v5634, %v5965
      %v6167 = vsel %vm1535, %v5635, %v5967
      %v6169 = vsel %vm1535, %v5636, %v5969
      %v6171 = vsel %vm1535, %v5637, %v5971
      %v6173 = vsel %vm1535, %v5638, %v5973
      %v6175 = vsel %vm1535, %v5639, %v5975
      %v6177 = vsel %vm1535, %v5640, %v5977
      %v6179 = vsel %vm1535, %v5641, %v5979
      %v6181 = vsel %vm1535, %v5642, %v5981
      %v6183 = vsel %vm1535, %v5643, %v5983
      %vm6184 = vcmask 523264
      %v6186 = vsel %vm6184, %v6145, %v6105
      %v6188 = vsel %vm6184, %v6147, %v6107
      %v6190 = vsel %vm6184, %v6149, %v6109
      %v6192 = vsel %vm6184, %v6151, %v6111
      %v6194 = vsel %vm6184, %v6153, %v6113
      %v6196 = vsel %vm6184, %v6155, %v6115
      %v6198 = vsel %vm6184, %v6157, %v6117
      %v6200 = vsel %vm6184, %v6159, %v6119
      %v6202 = vsel %vm6184, %v6161, %v6121
      %v6204 = vsel %vm6184, %v6163, %v6123
      %v6206 = vsel %vm6184, %v6165, %v6125
      %v6208 = vsel %vm6184, %v6167, %v6127
      %v6210 = vsel %vm6184, %v6169, %v6129
      %v6212 = vsel %vm6184, %v6171, %v6131
      %v6214 = vsel %vm6184, %v6173, %v6133
      %v6216 = vsel %vm6184, %v6175, %v6135
      %v6218 = vsel %vm6184, %v6177, %v6137
      %v6220 = vsel %vm6184, %v6179, %v6139
      %v6222 = vsel %vm6184, %v6181, %v6141
      %v6224 = vsel %vm6184, %v6183, %v6143
      %v6225 = vld [vmem:[%s7] sm:$0xf]
      %v6226 = vld [vmem:[%s7 + $0x4] sm:$0xf]
      %v6227 = vld [vmem:[%s7 + $0x8] sm:$0xf]
      %v6228 = vld [vmem:[%s7 + $0xc] sm:$0xf]
      %v6229 = vld [vmem:[%s7 + $0x10] sm:$0xf]
      %v6230 = vld [vmem:[%s7 + $0x14] sm:$0xf]
      %v6231 = vld [vmem:[%s7 + $0x18] sm:$0xf]
      %v6232 = vld [vmem:[%s7 + $0x1c] sm:$0xf]
      %v6233 = vld [vmem:[%s7 + $0x20] sm:$0xf]
      %v6234 = vld [vmem:[%s7 + $0x24] sm:$0xf]
      %v6235 = vld [vmem:[%s7 + $0x28] sm:$0xf]
      %v6236 = vld [vmem:[%s7 + $0x2c] sm:$0xf]
      %v6249 = vunpack.c.l.b16 %v6225
      %v6250 = vunpack.c.l.b16 %v6226
      %v6251 = vunpack.c.l.b16 %v6227
      %v6252 = vunpack.c.l.b16 %v6228
      %v6253 = vunpack.c.l.b16 %v6229
      %v6254 = vunpack.c.l.b16 %v6230
      %v6255 = vunpack.c.l.b16 %v6231
      %v6256 = vunpack.c.l.b16 %v6232
      %v6257 = vunpack.c.l.b16 %v6233
      %v6258 = vunpack.c.l.b16 %v6234
      %v6259 = vunpack.c.l.b16 %v6235
      %v6260 = vunpack.c.l.b16 %v6236
      %v6261 = vpack.c.b16 %v6250, %v6249
      %v6262 = vpack.c.b16 %v6252, %v6251
      %v6263 = vpack.c.b16 %v6254, %v6253
      %v6264 = vpack.c.b16 %v6256, %v6255
      %v6265 = vpack.c.b16 %v6258, %v6257
      %v6266 = vpack.c.b16 %v6260, %v6259
      %vm6273 = vcmask 785408
      %v6274 = vsel %vm6273, %v6186, 0
      %v6276 = vsel %vm6273, %v6188, 0
      %v6278 = vsel %vm6273, %v6190, 0
      %v6280 = vsel %vm6273, %v6192, 0
      %v6282 = vsel %vm6273, %v6194, 0
      %v6284 = vsel %vm6273, %v6196, 0
      %v6286 = vsel %vm6273, %v6198, 0
      %v6288 = vsel %vm6273, %v6200, 0
      %v6290 = vsel %vm6273, %v6202, 0
      %v6292 = vsel %vm6273, %v6204, 0
      %v6294 = vsel %vm6273, %v6206, 0
      %v6296 = vsel %vm6273, %v6208, 0
      %v6298 = vsel %vm6273, %v6210, 0
      %v6300 = vsel %vm6273, %v6212, 0
      %v6302 = vsel %vm6273, %v6214, 0
      %v6304 = vsel %vm6273, %v6216, 0
      %v6306 = vsel %vm6273, %v6218, 0
      %v6308 = vsel %vm6273, %v6220, 0
      %v6310 = vsel %vm6273, %v6222, 0
      %v6312 = vsel %vm6273, %v6224, 0
      %6314 = vmatprep.subr.bf16.mxu0 0
      %6315 = vmatpush1.bf16.msra.mxu0 %v6261
      %6316 = vmatprep.subr.bf16.mxu0 0
      %6317 = vmatpush1.bf16.msra.mxu0 %v6262
      %6318 = vmatprep.subr.bf16.mxu0 0
      %6319 = vmatpush1.bf16.msra.mxu0 %v6263
      %6320 = vmatprep.subr.bf16.mxu0 0
      %6321 = vmatpush1.bf16.msra.mxu0 %v6264
      %6322 = vmatprep.subr.bf16.mxu0 0
      %6323 = vmatpush1.bf16.msra.mxu0 %v6265
      %6324 = vmatprep.subr.bf16.mxu0 0
      %6325 = vmatpush1.bf16.msra.mxu0 %v6266
      %6326 = vmatprep.subr.bf16.mxu0 0
      %6327 = vmatpush1.bf16.msra.mxu0 0
      %6328 = vmatprep.subr.bf16.mxu0 0
      %6329 = vmatpush1.bf16.msra.mxu0 0
      %6330 = vmatprep.subr.bf16.mxu0 0
      %6331 = vmatpush1.bf16.msra.mxu0 0
      %6332 = vmatprep.subr.bf16.mxu0 0
      %6333 = vmatpush1.bf16.msra.mxu0 0
      %6334 = vmatprep.subr.bf16.mxu0 0
      %6335 = vmatpush1.bf16.msra.mxu0 0
      %6336 = vmatprep.subr.bf16.mxu0 0
      %6337 = vmatpush1.bf16.msra.mxu0 0
      %6338 = vmatprep.subr.bf16.mxu0 0
      %6339 = vmatpush1.bf16.msra.mxu0 0
      %6340 = vmatprep.subr.bf16.mxu0 0
      %6341 = vmatpush1.bf16.msra.mxu0 0
      %6342 = vmatprep.subr.bf16.mxu0 0
      %6343 = vmatpush1.bf16.msra.mxu0 0
      %6344 = vmatprep.subr.bf16.mxu0 0
      %6345 = vmatpush1.bf16.msra.mxu0 0
      %6346 = vmatprep.mubr.bf16.mxu0 0
      %6347 = vmatmul.mubr.bf16.gmra.mrb[0].mxu0 %v6274
      %v6348 = vpop.f32.mrb[0].mxu0
      %v6349 = vadd.f32 0.0, %v6348
      %v6350 = vpop.f32.mrb[0].mxu0
      %v6351 = vpop.f32.mrb[0].mxu0
      %v6352 = vadd.f32 0.0, %v6351
      %v6353 = vpop.f32.mrb[0].mxu0
      %6354 = vmatprep.mubr.bf16.mxu0 0
      %6355 = vmatmul.mubr.bf16.gmra.mrb[0].mxu0 %v6276
      %v6356 = vpop.f32.mrb[0].mxu0
      %v6357 = vadd.f32 0.0, %v6356
      %v6358 = vpop.f32.mrb[0].mxu0
      %v6359 = vpop.f32.mrb[0].mxu0
      %v6360 = vadd.f32 0.0, %v6359
      %v6361 = vpop.f32.mrb[0].mxu0
      %6362 = vmatprep.mubr.bf16.mxu0 0
      %6363 = vmatmul.mubr.bf16.gmra.mrb[0].mxu0 %v6278
      %v6364 = vpop.f32.mrb[0].mxu0
      %v6365 = vadd.f32 0.0, %v6364
      %v6366 = vpop.f32.mrb[0].mxu0
      %v6367 = vpop.f32.mrb[0].mxu0
      %v6368 = vadd.f32 0.0, %v6367
      %v6369 = vpop.f32.mrb[0].mxu0
      %6370 = vmatprep.mubr.bf16.mxu0 0
      %6371 = vmatmul.mubr.bf16.gmra.mrb[0].mxu0 %v6280
      %v6372 = vpop.f32.mrb[0].mxu0
      %v6373 = vadd.f32 0.0, %v6372
      %v6374 = vpop.f32.mrb[0].mxu0
      %v6375 = vpop.f32.mrb[0].mxu0
      %v6376 = vadd.f32 0.0, %v6375
      %v6377 = vpop.f32.mrb[0].mxu0
      %6378 = vmatprep.mubr.bf16.mxu0 0
      %6379 = vmatmul.mubr.bf16.gmra.mrb[0].mxu0 %v6282
      %v6380 = vpop.f32.mrb[0].mxu0
      %v6381 = vadd.f32 0.0, %v6380
      %v6382 = vpop.f32.mrb[0].mxu0
      %v6383 = vpop.f32.mrb[0].mxu0
      %v6384 = vadd.f32 0.0, %v6383
      %v6385 = vpop.f32.mrb[0].mxu0
      %6386 = vmatprep.mubr.bf16.mxu0 0
      %6387 = vmatmul.mubr.bf16.gmra.mrb[0].mxu0 %v6284
      %v6388 = vpop.f32.mrb[0].mxu0
      %v6389 = vadd.f32 0.0, %v6388
      %v6390 = vpop.f32.mrb[0].mxu0
      %v6391 = vpop.f32.mrb[0].mxu0
      %v6392 = vadd.f32 0.0, %v6391
      %v6393 = vpop.f32.mrb[0].mxu0
      %6394 = vmatprep.mubr.bf16.mxu0 0
      %6395 = vmatmul.mubr.bf16.gmra.mrb[0].mxu0 %v6286
      %v6396 = vpop.f32.mrb[0].mxu0
      %v6397 = vadd.f32 0.0, %v6396
      %v6398 = vpop.f32.mrb[0].mxu0
      %v6399 = vpop.f32.mrb[0].mxu0
      %v6400 = vadd.f32 0.0, %v6399
      %v6401 = vpop.f32.mrb[0].mxu0
      %6402 = vmatprep.mubr.bf16.mxu0 0
      %6403 = vmatmul.mubr.bf16.gmra.mrb[0].mxu0 %v6288
      %v6404 = vpop.f32.mrb[0].mxu0
      %v6405 = vadd.f32 0.0, %v6404
      %v6406 = vpop.f32.mrb[0].mxu0
      %v6407 = vpop.f32.mrb[0].mxu0
      %v6408 = vadd.f32 0.0, %v6407
      %v6409 = vpop.f32.mrb[0].mxu0
      %6410 = vmatprep.mubr.bf16.mxu0 0
      %6411 = vmatmul.mubr.bf16.gmra.mrb[0].mxu0 %v6290
      %v6412 = vpop.f32.mrb[0].mxu0
      %v6413 = vadd.f32 0.0, %v6412
      %v6414 = vpop.f32.mrb[0].mxu0
      %v6415 = vpop.f32.mrb[0].mxu0
      %v6416 = vadd.f32 0.0, %v6415
      %v6417 = vpop.f32.mrb[0].mxu0
      %6418 = vmatprep.mubr.bf16.mxu0 0
      %6419 = vmatmul.mubr.bf16.gmra.mrb[0].mxu0 %v6292
      %v6420 = vpop.f32.mrb[0].mxu0
      %v6421 = vadd.f32 0.0, %v6420
      %v6422 = vpop.f32.mrb[0].mxu0
      %v6423 = vpop.f32.mrb[0].mxu0
      %v6424 = vadd.f32 0.0, %v6423
      %v6425 = vpop.f32.mrb[0].mxu0
      %6426 = vmatprep.mubr.bf16.mxu0 0
      %6427 = vmatmul.mubr.bf16.gmra.mrb[0].mxu0 %v6294
      %v6428 = vpop.f32.mrb[0].mxu0
      %v6429 = vadd.f32 0.0, %v6428
      %v6430 = vpop.f32.mrb[0].mxu0
      %v6431 = vpop.f32.mrb[0].mxu0
      %v6432 = vadd.f32 0.0, %v6431
      %v6433 = vpop.f32.mrb[0].mxu0
      %6434 = vmatprep.mubr.bf16.mxu0 0
      %6435 = vmatmul.mubr.bf16.gmra.mrb[0].mxu0 %v6296
      %v6436 = vpop.f32.mrb[0].mxu0
      %v6437 = vadd.f32 0.0, %v6436
      %v6438 = vpop.f32.mrb[0].mxu0
      %v6439 = vpop.f32.mrb[0].mxu0
      %v6440 = vadd.f32 0.0, %v6439
      %v6441 = vpop.f32.mrb[0].mxu0
      %6442 = vmatprep.mubr.bf16.mxu0 0
      %6443 = vmatmul.mubr.bf16.gmra.mrb[0].mxu0 %v6298
      %v6444 = vpop.f32.mrb[0].mxu0
      %v6445 = vadd.f32 0.0, %v6444
      %v6446 = vpop.f32.mrb[0].mxu0
      %v6447 = vpop.f32.mrb[0].mxu0
      %v6448 = vadd.f32 0.0, %v6447
      %v6449 = vpop.f32.mrb[0].mxu0
      %6450 = vmatprep.mubr.bf16.mxu0 0
      %6451 = vmatmul.mubr.bf16.gmra.mrb[0].mxu0 %v6300
      %v6452 = vpop.f32.mrb[0].mxu0
      %v6453 = vadd.f32 0.0, %v6452
      %v6454 = vpop.f32.mrb[0].mxu0
      %v6455 = vpop.f32.mrb[0].mxu0
      %v6456 = vadd.f32 0.0, %v6455
      %v6457 = vpop.f32.mrb[0].mxu0
      %6458 = vmatprep.mubr.bf16.mxu0 0
      %6459 = vmatmul.mubr.bf16.gmra.mrb[0].mxu0 %v6302
      %v6460 = vpop.f32.mrb[0].mxu0
      %v6461 = vadd.f32 0.0, %v6460
      %v6462 = vpop.f32.mrb[0].mxu0
      %v6463 = vpop.f32.mrb[0].mxu0
      %v6464 = vadd.f32 0.0, %v6463
      %v6465 = vpop.f32.mrb[0].mxu0
      %6466 = vmatprep.mubr.bf16.mxu0 0
      %6467 = vmatmul.mubr.bf16.gmra.mrb[0].mxu0 %v6304
      %v6468 = vpop.f32.mrb[0].mxu0
      %v6469 = vadd.f32 0.0, %v6468
      %v6470 = vpop.f32.mrb[0].mxu0
      %v6471 = vpop.f32.mrb[0].mxu0
      %v6472 = vadd.f32 0.0, %v6471
      %v6473 = vpop.f32.mrb[0].mxu0
      %6474 = vmatprep.mubr.bf16.mxu0 0
      %6475 = vmatmul.mubr.bf16.gmra.mrb[0].mxu0 %v6306
      %v6476 = vpop.f32.mrb[0].mxu0
      %v6477 = vadd.f32 0.0, %v6476
      %v6478 = vpop.f32.mrb[0].mxu0
      %v6479 = vpop.f32.mrb[0].mxu0
      %v6480 = vadd.f32 0.0, %v6479
      %v6481 = vpop.f32.mrb[0].mxu0
      %6482 = vmatprep.mubr.bf16.mxu0 0
      %6483 = vmatmul.mubr.bf16.gmra.mrb[0].mxu0 %v6308
      %v6484 = vpop.f32.mrb[0].mxu0
      %v6485 = vadd.f32 0.0, %v6484
      %v6486 = vpop.f32.mrb[0].mxu0
      %v6487 = vpop.f32.mrb[0].mxu0
      %v6488 = vadd.f32 0.0, %v6487
      %v6489 = vpop.f32.mrb[0].mxu0
      %6490 = vmatprep.mubr.bf16.mxu0 0
      %6491 = vmatmul.mubr.bf16.gmra.mrb[0].mxu0 %v6310
      %v6492 = vpop.f32.mrb[0].mxu0
      %v6493 = vadd.f32 0.0, %v6492
      %v6494 = vpop.f32.mrb[0].mxu0
      %v6495 = vpop.f32.mrb[0].mxu0
      %v6496 = vadd.f32 0.0, %v6495
      %v6497 = vpop.f32.mrb[0].mxu0
      %6498 = vmatprep.mubr.bf16.mxu0 0
      %6499 = vmatmul.mubr.bf16.gmra.mrb[0].mxu0 %v6312
      %v6500 = vpop.f32.mrb[0].mxu0
      %v6501 = vadd.f32 0.0, %v6500
      %v6502 = vpop.f32.mrb[0].mxu0
      %v6503 = vpop.f32.mrb[0].mxu0
      %v6504 = vadd.f32 0.0, %v6503
      %v6505 = vpop.f32.mrb[0].mxu0
      %6506 = vdwg.mxu0
      %6543 = vrot.lane.b32.xlu0 %v6357, 120
      %v6544 = vpop.permute.xlu0 %6543
      %6545 = vrot.lane.b32.xlu0 %v6360, 120
      %v6546 = vpop.permute.xlu0 %6545
      %6547 = vrot.lane.b32.xlu0 %v6365, 120
      %v6548 = vpop.permute.xlu0 %6547
      %6549 = vrot.lane.b32.xlu0 %v6368, 120
      %v6550 = vpop.permute.xlu0 %6549
      %6551 = vrot.lane.b32.xlu0 %v6373, 120
      %v6552 = vpop.permute.xlu0 %6551
      %6553 = vrot.lane.b32.xlu0 %v6376, 120
      %v6554 = vpop.permute.xlu0 %6553
      %6555 = vrot.lane.b32.xlu0 %v6381, 120
      %v6556 = vpop.permute.xlu0 %6555
      %6557 = vrot.lane.b32.xlu0 %v6384, 120
      %v6558 = vpop.permute.xlu0 %6557
      %6559 = vrot.lane.b32.xlu0 %v6389, 120
      %v6560 = vpop.permute.xlu0 %6559
      %6561 = vrot.lane.b32.xlu0 %v6392, 120
      %v6562 = vpop.permute.xlu0 %6561
      %6563 = vrot.lane.b32.xlu0 %v6397, 120
      %v6564 = vpop.permute.xlu0 %6563
      %6565 = vrot.lane.b32.xlu0 %v6400, 120
      %v6566 = vpop.permute.xlu0 %6565
      %6567 = vrot.lane.b32.xlu0 %v6405, 120
      %v6568 = vpop.permute.xlu0 %6567
      %6569 = vrot.lane.b32.xlu0 %v6408, 120
      %v6570 = vpop.permute.xlu0 %6569
      %6571 = vrot.lane.b32.xlu0 %v6413, 120
      %v6572 = vpop.permute.xlu0 %6571
      %6573 = vrot.lane.b32.xlu0 %v6416, 120
      %v6574 = vpop.permute.xlu0 %6573
      %6575 = vrot.lane.b32.xlu0 %v6421, 120
      %v6576 = vpop.permute.xlu0 %6575
      %6577 = vrot.lane.b32.xlu0 %v6424, 120
      %v6578 = vpop.permute.xlu0 %6577
      %6579 = vrot.lane.b32.xlu0 %v6429, 120
      %v6580 = vpop.permute.xlu0 %6579
      %6581 = vrot.lane.b32.xlu0 %v6432, 120
      %v6582 = vpop.permute.xlu0 %6581
      %6583 = vrot.lane.b32.xlu0 %v6437, 120
      %v6584 = vpop.permute.xlu0 %6583
      %6585 = vrot.lane.b32.xlu0 %v6440, 120
      %v6586 = vpop.permute.xlu0 %6585
      %6587 = vrot.lane.b32.xlu0 %v6445, 120
      %v6588 = vpop.permute.xlu0 %6587
      %6589 = vrot.lane.b32.xlu0 %v6448, 120
      %v6590 = vpop.permute.xlu0 %6589
      %6591 = vrot.lane.b32.xlu0 %v6453, 120
      %v6592 = vpop.permute.xlu0 %6591
      %6593 = vrot.lane.b32.xlu0 %v6456, 120
      %v6594 = vpop.permute.xlu0 %6593
      %6595 = vrot.lane.b32.xlu0 %v6461, 120
      %v6596 = vpop.permute.xlu0 %6595
      %6597 = vrot.lane.b32.xlu0 %v6464, 120
      %v6598 = vpop.permute.xlu0 %6597
      %6599 = vrot.lane.b32.xlu0 %v6469, 120
      %v6600 = vpop.permute.xlu0 %6599
      %6601 = vrot.lane.b32.xlu0 %v6472, 120
      %v6602 = vpop.permute.xlu0 %6601
      %6603 = vrot.lane.b32.xlu0 %v6477, 120
      %v6604 = vpop.permute.xlu0 %6603
      %6605 = vrot.lane.b32.xlu0 %v6480, 120
      %v6606 = vpop.permute.xlu0 %6605
      %6607 = vrot.lane.b32.xlu0 %v6485, 120
      %v6608 = vpop.permute.xlu0 %6607
      %6609 = vrot.lane.b32.xlu0 %v6488, 120
      %v6610 = vpop.permute.xlu0 %6609
      %6611 = vrot.lane.b32.xlu0 %v6493, 120
      %v6612 = vpop.permute.xlu0 %6611
      %6613 = vrot.lane.b32.xlu0 %v6496, 120
      %v6614 = vpop.permute.xlu0 %6613
      %v6651 = vadd.f32 %v6349, %v6544
      %v6652 = vadd.f32 %v6352, %v6546
      %v6653 = vadd.f32 %v6357, %v6548
      %v6654 = vadd.f32 %v6360, %v6550
      %v6655 = vadd.f32 %v6365, %v6552
      %v6656 = vadd.f32 %v6368, %v6554
      %v6657 = vadd.f32 %v6373, %v6556
      %v6658 = vadd.f32 %v6376, %v6558
      %v6659 = vadd.f32 %v6381, %v6560
      %v6660 = vadd.f32 %v6384, %v6562
      %v6661 = vadd.f32 %v6389, %v6564
      %v6662 = vadd.f32 %v6392, %v6566
      %v6663 = vadd.f32 %v6397, %v6568
      %v6664 = vadd.f32 %v6400, %v6570
      %v6665 = vadd.f32 %v6405, %v6572
      %v6666 = vadd.f32 %v6408, %v6574
      %v6667 = vadd.f32 %v6413, %v6576
      %v6668 = vadd.f32 %v6416, %v6578
      %v6669 = vadd.f32 %v6421, %v6580
      %v6670 = vadd.f32 %v6424, %v6582
      %v6671 = vadd.f32 %v6429, %v6584
      %v6672 = vadd.f32 %v6432, %v6586
      %v6673 = vadd.f32 %v6437, %v6588
      %v6674 = vadd.f32 %v6440, %v6590
      %v6675 = vadd.f32 %v6445, %v6592
      %v6676 = vadd.f32 %v6448, %v6594
      %v6677 = vadd.f32 %v6453, %v6596
      %v6678 = vadd.f32 %v6456, %v6598
      %v6679 = vadd.f32 %v6461, %v6600
      %v6680 = vadd.f32 %v6464, %v6602
      %v6681 = vadd.f32 %v6469, %v6604
      %v6682 = vadd.f32 %v6472, %v6606
      %v6683 = vadd.f32 %v6477, %v6608
      %v6684 = vadd.f32 %v6480, %v6610
      %v6685 = vadd.f32 %v6485, %v6612
      %v6686 = vadd.f32 %v6488, %v6614
      %v6687 = vld [vmem:[%s8] sm:$0x1]
      %v6689 = vlaneseq
      %v6690 = vshrl.u32 %v6689, 7
      %v6691 = vsub.s32 0, %v6690
      %v6692 = vrot.slane %v6687, %v6691
      %6693 = vrot.lane.b32.xlu0 %v6692, 16
      %v6694 = vpop.permute.xlu0 %6693
      %v6696 = vadd.f32 %v6365, %v6694
      %v6697 = vadd.f32 %v6368, %v6694
      %v6698 = vadd.f32 %v6373, %v6694
      %v6699 = vadd.f32 %v6376, %v6694
      %v6700 = vadd.f32 %v6381, %v6694
      %v6701 = vadd.f32 %v6384, %v6694
      %v6702 = vadd.f32 %v6389, %v6694
      %v6703 = vadd.f32 %v6392, %v6694
      %v6704 = vadd.f32 %v6397, %v6694
      %v6705 = vadd.f32 %v6400, %v6694
      %v6706 = vadd.f32 %v6405, %v6694
      %v6707 = vadd.f32 %v6408, %v6694
      %v6708 = vadd.f32 %v6413, %v6694
      %v6709 = vadd.f32 %v6416, %v6694
      %v6710 = vadd.f32 %v6421, %v6694
      %v6711 = vadd.f32 %v6424, %v6694
      %v6712 = vadd.f32 %v6429, %v6694
      %v6713 = vadd.f32 %v6432, %v6694
      %v6714 = vadd.f32 %v6437, %v6694
      %v6715 = vadd.f32 %v6440, %v6694
      %v6716 = vadd.f32 %v6445, %v6694
      %v6717 = vadd.f32 %v6448, %v6694
      %v6718 = vadd.f32 %v6453, %v6694
      %v6719 = vadd.f32 %v6456, %v6694
      %v6720 = vadd.f32 %v6461, %v6694
      %v6721 = vadd.f32 %v6464, %v6694
      %v6722 = vadd.f32 %v6469, %v6694
      %v6723 = vadd.f32 %v6472, %v6694
      %v6724 = vadd.f32 %v6477, %v6694
      %v6725 = vadd.f32 %v6480, %v6694
      %v6726 = vadd.f32 %v6485, %v6694
      %v6727 = vadd.f32 %v6488, %v6694
      %v6728 = vadd.f32 %v6493, %v6694
      %v6729 = vadd.f32 %v6496, %v6694
      %v6730 = vadd.f32 %v6501, %v6694
      %v6731 = vadd.f32 %v6504, %v6694
      %6768 = vrot.lane.b32.xlu0 %v6696, 112
      %v6769 = vpop.permute.xlu0 %6768
      %6770 = vrot.lane.b32.xlu0 %v6697, 112
      %v6771 = vpop.permute.xlu0 %6770
      %6772 = vrot.lane.b32.xlu0 %v6698, 112
      %v6773 = vpop.permute.xlu0 %6772
      %6774 = vrot.lane.b32.xlu0 %v6699, 112
      %v6775 = vpop.permute.xlu0 %6774
      %6776 = vrot.lane.b32.xlu0 %v6700, 112
      %v6777 = vpop.permute.xlu0 %6776
      %6778 = vrot.lane.b32.xlu0 %v6701, 112
      %v6779 = vpop.permute.xlu0 %6778
      %6780 = vrot.lane.b32.xlu0 %v6702, 112
      %v6781 = vpop.permute.xlu0 %6780
      %6782 = vrot.lane.b32.xlu0 %v6703, 112
      %v6783 = vpop.permute.xlu0 %6782
      %6784 = vrot.lane.b32.xlu0 %v6704, 112
      %v6785 = vpop.permute.xlu0 %6784
      %6786 = vrot.lane.b32.xlu0 %v6705, 112
      %v6787 = vpop.permute.xlu0 %6786
      %6788 = vrot.lane.b32.xlu0 %v6706, 112
      %v6789 = vpop.permute.xlu0 %6788
      %6790 = vrot.lane.b32.xlu0 %v6707, 112
      %v6791 = vpop.permute.xlu0 %6790
      %6792 = vrot.lane.b32.xlu0 %v6708, 112
      %v6793 = vpop.permute.xlu0 %6792
      %6794 = vrot.lane.b32.xlu0 %v6709, 112
      %v6795 = vpop.permute.xlu0 %6794
      %6796 = vrot.lane.b32.xlu0 %v6710, 112
      %v6797 = vpop.permute.xlu0 %6796
      %6798 = vrot.lane.b32.xlu0 %v6711, 112
      %v6799 = vpop.permute.xlu0 %6798
      %6800 = vrot.lane.b32.xlu0 %v6712, 112
      %v6801 = vpop.permute.xlu0 %6800
      %6802 = vrot.lane.b32.xlu0 %v6713, 112
      %v6803 = vpop.permute.xlu0 %6802
      %6804 = vrot.lane.b32.xlu0 %v6714, 112
      %v6805 = vpop.permute.xlu0 %6804
      %6806 = vrot.lane.b32.xlu0 %v6715, 112
      %v6807 = vpop.permute.xlu0 %6806
      %6808 = vrot.lane.b32.xlu0 %v6716, 112
      %v6809 = vpop.permute.xlu0 %6808
      %6810 = vrot.lane.b32.xlu0 %v6717, 112
      %v6811 = vpop.permute.xlu0 %6810
      %6812 = vrot.lane.b32.xlu0 %v6718, 112
      %v6813 = vpop.permute.xlu0 %6812
      %6814 = vrot.lane.b32.xlu0 %v6719, 112
      %v6815 = vpop.permute.xlu0 %6814
      %6816 = vrot.lane.b32.xlu0 %v6720, 112
      %v6817 = vpop.permute.xlu0 %6816
      %6818 = vrot.lane.b32.xlu0 %v6721, 112
      %v6819 = vpop.permute.xlu0 %6818
      %6820 = vrot.lane.b32.xlu0 %v6722, 112
      %v6821 = vpop.permute.xlu0 %6820
      %6822 = vrot.lane.b32.xlu0 %v6723, 112
      %v6823 = vpop.permute.xlu0 %6822
      %6824 = vrot.lane.b32.xlu0 %v6724, 112
      %v6825 = vpop.permute.xlu0 %6824
      %6826 = vrot.lane.b32.xlu0 %v6725, 112
      %v6827 = vpop.permute.xlu0 %6826
      %6828 = vrot.lane.b32.xlu0 %v6726, 112
      %v6829 = vpop.permute.xlu0 %6828
      %6830 = vrot.lane.b32.xlu0 %v6727, 112
      %v6831 = vpop.permute.xlu0 %6830
      %6832 = vrot.lane.b32.xlu0 %v6728, 112
      %v6833 = vpop.permute.xlu0 %6832
      %6834 = vrot.lane.b32.xlu0 %v6729, 112
      %v6835 = vpop.permute.xlu0 %6834
      %6836 = vrot.lane.b32.xlu0 %v6730, 112
      %v6837 = vpop.permute.xlu0 %6836
      %6838 = vrot.lane.b32.xlu0 %v6731, 112
      %v6839 = vpop.permute.xlu0 %6838
      %v6876 = vadd.f32 %v6651, %v6769
      %v6877 = vadd.f32 %v6652, %v6771
      %v6878 = vadd.f32 %v6653, %v6773
      %v6879 = vadd.f32 %v6654, %v6775
      %v6880 = vadd.f32 %v6655, %v6777
      %v6881 = vadd.f32 %v6656, %v6779
      %v6882 = vadd.f32 %v6657, %v6781
      %v6883 = vadd.f32 %v6658, %v6783
      %v6884 = vadd.f32 %v6659, %v6785
      %v6885 = vadd.f32 %v6660, %v6787
      %v6886 = vadd.f32 %v6661, %v6789
      %v6887 = vadd.f32 %v6662, %v6791
      %v6888 = vadd.f32 %v6663, %v6793
      %v6889 = vadd.f32 %v6664, %v6795
      %v6890 = vadd.f32 %v6665, %v6797
      %v6891 = vadd.f32 %v6666, %v6799
      %v6892 = vadd.f32 %v6667, %v6801
      %v6893 = vadd.f32 %v6668, %v6803
      %v6894 = vadd.f32 %v6669, %v6805
      %v6895 = vadd.f32 %v6670, %v6807
      %v6896 = vadd.f32 %v6671, %v6809
      %v6897 = vadd.f32 %v6672, %v6811
      %v6898 = vadd.f32 %v6673, %v6813
      %v6899 = vadd.f32 %v6674, %v6815
      %v6900 = vadd.f32 %v6675, %v6817
      %v6901 = vadd.f32 %v6676, %v6819
      %v6902 = vadd.f32 %v6677, %v6821
      %v6903 = vadd.f32 %v6678, %v6823
      %v6904 = vadd.f32 %v6679, %v6825
      %v6905 = vadd.f32 %v6680, %v6827
      %v6906 = vadd.f32 %v6681, %v6829
      %v6907 = vadd.f32 %v6682, %v6831
      %v6908 = vadd.f32 %v6683, %v6833
      %v6909 = vadd.f32 %v6684, %v6835
      %v6910 = vadd.f32 %v6685, %v6837
      %v6911 = vadd.f32 %v6686, %v6839
      %vm6912 = vcmp.gt.f32.partialorder %v6876, 0.0
      %vm6913 = vcmp.gt.f32.partialorder %v6877, 0.0
      %vm6914 = vcmp.gt.f32.partialorder %v6878, 0.0
      %vm6915 = vcmp.gt.f32.partialorder %v6879, 0.0
      %vm6916 = vcmp.gt.f32.partialorder %v6880, 0.0
      %vm6917 = vcmp.gt.f32.partialorder %v6881, 0.0
      %vm6918 = vcmp.gt.f32.partialorder %v6882, 0.0
      %vm6919 = vcmp.gt.f32.partialorder %v6883, 0.0
      %vm6920 = vcmp.gt.f32.partialorder %v6884, 0.0
      %vm6921 = vcmp.gt.f32.partialorder %v6885, 0.0
      %vm6922 = vcmp.gt.f32.partialorder %v6886, 0.0
      %vm6923 = vcmp.gt.f32.partialorder %v6887, 0.0
      %vm6924 = vcmp.gt.f32.partialorder %v6888, 0.0
      %vm6925 = vcmp.gt.f32.partialorder %v6889, 0.0
      %vm6926 = vcmp.gt.f32.partialorder %v6890, 0.0
      %vm6927 = vcmp.gt.f32.partialorder %v6891, 0.0
      %vm6928 = vcmp.gt.f32.partialorder %v6892, 0.0
      %vm6929 = vcmp.gt.f32.partialorder %v6893, 0.0
      %vm6930 = vcmp.gt.f32.partialorder %v6894, 0.0
      %vm6931 = vcmp.gt.f32.partialorder %v6895, 0.0
      %vm6932 = vcmp.gt.f32.partialorder %v6896, 0.0
      %vm6933 = vcmp.gt.f32.partialorder %v6897, 0.0
      %vm6934 = vcmp.gt.f32.partialorder %v6898, 0.0
      %vm6935 = vcmp.gt.f32.partialorder %v6899, 0.0
      %vm6936 = vcmp.gt.f32.partialorder %v6900, 0.0
      %vm6937 = vcmp.gt.f32.partialorder %v6901, 0.0
      %vm6938 = vcmp.gt.f32.partialorder %v6902, 0.0
      %vm6939 = vcmp.gt.f32.partialorder %v6903, 0.0
      %vm6940 = vcmp.gt.f32.partialorder %v6904, 0.0
      %vm6941 = vcmp.gt.f32.partialorder %v6905, 0.0
      %vm6942 = vcmp.gt.f32.partialorder %v6906, 0.0
      %vm6943 = vcmp.gt.f32.partialorder %v6907, 0.0
      %vm6944 = vcmp.gt.f32.partialorder %v6908, 0.0
      %vm6945 = vcmp.gt.f32.partialorder %v6909, 0.0
      %vm6946 = vcmp.gt.f32.partialorder %v6910, 0.0
      %vm6947 = vcmp.gt.f32.partialorder %v6911, 0.0
      %v6948 = vmul.f32 %v6876, 0.2
      %v6949 = vmul.f32 %v6877, 0.2
      %v6950 = vmul.f32 %v6878, 0.2
      %v6951 = vmul.f32 %v6879, 0.2
      %v6952 = vmul.f32 %v6880, 0.2
      %v6953 = vmul.f32 %v6881, 0.2
      %v6954 = vmul.f32 %v6882, 0.2
      %v6955 = vmul.f32 %v6883, 0.2
      %v6956 = vmul.f32 %v6884, 0.2
      %v6957 = vmul.f32 %v6885, 0.2
      %v6958 = vmul.f32 %v6886, 0.2
      %v6959 = vmul.f32 %v6887, 0.2
      %v6960 = vmul.f32 %v6888, 0.2
      %v6961 = vmul.f32 %v6889, 0.2
      %v6962 = vmul.f32 %v6890, 0.2
      %v6963 = vmul.f32 %v6891, 0.2
      %v6964 = vmul.f32 %v6892, 0.2
      %v6965 = vmul.f32 %v6893, 0.2
      %v6966 = vmul.f32 %v6894, 0.2
      %v6967 = vmul.f32 %v6895, 0.2
      %v6968 = vmul.f32 %v6896, 0.2
      %v6969 = vmul.f32 %v6897, 0.2
      %v6970 = vmul.f32 %v6898, 0.2
      %v6971 = vmul.f32 %v6899, 0.2
      %v6972 = vmul.f32 %v6900, 0.2
      %v6973 = vmul.f32 %v6901, 0.2
      %v6974 = vmul.f32 %v6902, 0.2
      %v6975 = vmul.f32 %v6903, 0.2
      %v6976 = vmul.f32 %v6904, 0.2
      %v6977 = vmul.f32 %v6905, 0.2
      %v6978 = vmul.f32 %v6906, 0.2
      %v6979 = vmul.f32 %v6907, 0.2
      %v6980 = vmul.f32 %v6908, 0.2
      %v6981 = vmul.f32 %v6909, 0.2
      %v6982 = vmul.f32 %v6910, 0.2
      %v6983 = vmul.f32 %v6911, 0.2
      %v6984 = vsel %vm6912, %v6876, %v6948
      %v6985 = vsel %vm6913, %v6877, %v6949
      %v6986 = vsel %vm6914, %v6878, %v6950
      %v6987 = vsel %vm6915, %v6879, %v6951
      %v6988 = vsel %vm6916, %v6880, %v6952
      %v6989 = vsel %vm6917, %v6881, %v6953
      %v6990 = vsel %vm6918, %v6882, %v6954
      %v6991 = vsel %vm6919, %v6883, %v6955
      %v6992 = vsel %vm6920, %v6884, %v6956
      %v6993 = vsel %vm6921, %v6885, %v6957
      %v6994 = vsel %vm6922, %v6886, %v6958
      %v6995 = vsel %vm6923, %v6887, %v6959
      %v6996 = vsel %vm6924, %v6888, %v6960
      %v6997 = vsel %vm6925, %v6889, %v6961
      %v6998 = vsel %vm6926, %v6890, %v6962
      %v6999 = vsel %vm6927, %v6891, %v6963
      %v7000 = vsel %vm6928, %v6892, %v6964
      %v7001 = vsel %vm6929, %v6893, %v6965
      %v7002 = vsel %vm6930, %v6894, %v6966
      %v7003 = vsel %vm6931, %v6895, %v6967
      %v7004 = vsel %vm6932, %v6896, %v6968
      %v7005 = vsel %vm6933, %v6897, %v6969
      %v7006 = vsel %vm6934, %v6898, %v6970
      %v7007 = vsel %vm6935, %v6899, %v6971
      %v7008 = vsel %vm6936, %v6900, %v6972
      %v7009 = vsel %vm6937, %v6901, %v6973
      %v7010 = vsel %vm6938, %v6902, %v6974
      %v7011 = vsel %vm6939, %v6903, %v6975
      %v7012 = vsel %vm6940, %v6904, %v6976
      %v7013 = vsel %vm6941, %v6905, %v6977
      %v7014 = vsel %vm6942, %v6906, %v6978
      %v7015 = vsel %vm6943, %v6907, %v6979
      %v7016 = vsel %vm6944, %v6908, %v6980
      %v7017 = vsel %vm6945, %v6909, %v6981
      %v7018 = vsel %vm6946, %v6910, %v6982
      %v7019 = vsel %vm6947, %v6911, %v6983
      %v7020 = vpack.c.bf16 %v6985, %v6984
      %v7021 = vpack.c.bf16 %v6987, %v6986
      %v7022 = vpack.c.bf16 %v6989, %v6988
      %v7023 = vpack.c.bf16 %v6991, %v6990
      %v7024 = vpack.c.bf16 %v6993, %v6992
      %v7025 = vpack.c.bf16 %v6995, %v6994
      %v7026 = vpack.c.bf16 %v6997, %v6996
      %v7027 = vpack.c.bf16 %v6999, %v6998
      %v7028 = vpack.c.bf16 %v7001, %v7000
      %v7029 = vpack.c.bf16 %v7003, %v7002
      %v7030 = vpack.c.bf16 %v7005, %v7004
      %v7031 = vpack.c.bf16 %v7007, %v7006
      %v7032 = vpack.c.bf16 %v7009, %v7008
      %v7033 = vpack.c.bf16 %v7011, %v7010
      %v7034 = vpack.c.bf16 %v7013, %v7012
      %v7035 = vpack.c.bf16 %v7015, %v7014
      %v7036 = vpack.c.bf16 %v7017, %v7016
      %v7037 = vpack.c.bf16 %v7019, %v7018
      %v7056 = vunpack.c.l.b16 %v7020
      %v7057 = vunpack.c.h.b16 %v7020
      %v7058 = vunpack.c.l.b16 %v7021
      %v7059 = vunpack.c.h.b16 %v7021
      %v7060 = vunpack.c.l.b16 %v7022
      %v7061 = vunpack.c.h.b16 %v7022
      %v7062 = vunpack.c.l.b16 %v7023
      %v7063 = vunpack.c.h.b16 %v7023
      %v7064 = vunpack.c.l.b16 %v7024
      %v7065 = vunpack.c.h.b16 %v7024
      %v7066 = vunpack.c.l.b16 %v7025
      %v7067 = vunpack.c.h.b16 %v7025
      %v7068 = vunpack.c.l.b16 %v7026
      %v7069 = vunpack.c.h.b16 %v7026
      %v7070 = vunpack.c.l.b16 %v7027
      %v7071 = vunpack.c.h.b16 %v7027
      %v7072 = vunpack.c.l.b16 %v7028
      %v7073 = vunpack.c.h.b16 %v7028
      %v7074 = vunpack.c.l.b16 %v7029
      %v7075 = vunpack.c.h.b16 %v7029
      %v7076 = vunpack.c.l.b16 %v7030
      %v7077 = vunpack.c.h.b16 %v7030
      %v7078 = vunpack.c.l.b16 %v7031
      %v7079 = vunpack.c.h.b16 %v7031
      %v7080 = vunpack.c.l.b16 %v7032
      %v7081 = vunpack.c.h.b16 %v7032
      %v7082 = vunpack.c.l.b16 %v7033
      %v7083 = vunpack.c.h.b16 %v7033
      %v7084 = vunpack.c.l.b16 %v7034
      %v7085 = vunpack.c.h.b16 %v7034
      %v7086 = vunpack.c.l.b16 %v7035
      %v7087 = vunpack.c.h.b16 %v7035
      %v7088 = vunpack.c.l.b16 %v7036
      %v7089 = vunpack.c.h.b16 %v7036
      %v7090 = vunpack.c.l.b16 %v7037
      %v7091 = vunpack.c.h.b16 %v7037
      %v7092 = vpack.c.b16 %v7056, %v7056
      %v7093 = vpack.c.b16 %v7057, %v7057
      %v7094 = vpack.c.b16 %v7058, %v7058
      %v7095 = vpack.c.b16 %v7059, %v7059
      %v7096 = vpack.c.b16 %v7060, %v7060
      %v7097 = vpack.c.b16 %v7061, %v7061
      %v7098 = vpack.c.b16 %v7062, %v7062
      %v7099 = vpack.c.b16 %v7063, %v7063
      %v7100 = vpack.c.b16 %v7064, %v7064
      %v7101 = vpack.c.b16 %v7065, %v7065
      %v7102 = vpack.c.b16 %v7066, %v7066
      %v7103 = vpack.c.b16 %v7067, %v7067
      %v7104 = vpack.c.b16 %v7068, %v7068
      %v7105 = vpack.c.b16 %v7069, %v7069
      %v7106 = vpack.c.b16 %v7070, %v7070
      %v7107 = vpack.c.b16 %v7071, %v7071
      %v7108 = vpack.c.b16 %v7072, %v7072
      %v7109 = vpack.c.b16 %v7073, %v7073
      %v7110 = vpack.c.b16 %v7074, %v7074
      %v7111 = vpack.c.b16 %v7075, %v7075
      %v7112 = vpack.c.b16 %v7076, %v7076
      %v7113 = vpack.c.b16 %v7077, %v7077
      %v7114 = vpack.c.b16 %v7078, %v7078
      %v7115 = vpack.c.b16 %v7079, %v7079
      %v7116 = vpack.c.b16 %v7080, %v7080
      %v7117 = vpack.c.b16 %v7081, %v7081
      %v7118 = vpack.c.b16 %v7082, %v7082
      %v7119 = vpack.c.b16 %v7083, %v7083
      %v7120 = vpack.c.b16 %v7084, %v7084
      %v7121 = vpack.c.b16 %v7085, %v7085
      %v7122 = vpack.c.b16 %v7086, %v7086
      %v7123 = vpack.c.b16 %v7087, %v7087
      %v7124 = vpack.c.b16 %v7088, %v7088
      %v7125 = vpack.c.b16 %v7089, %v7089
      %v7126 = vpack.c.b16 %v7090, %v7090
      %v7127 = vpack.c.b16 %v7091, %v7091
      %v7129 = vshrl.u32 %v7092, 16
      %v7131 = vrot.slane %v7129, 7
      %v7132 = vshll.u32 %v7092, 16
      %v7134 = vor.u32 %v7131, %v7132
      %v7135 = vrot.slane %v7131, 4
      %v7137 = vshrl.u32 %v7093, 16
      %v7139 = vrot.slane %v7137, 7
      %v7140 = vshll.u32 %v7093, 16
      %v7142 = vor.u32 %v7139, %v7140
      %v7143 = vsel %vm2456, %v7135, %v7142
      %v7144 = vrot.slane %v7139, 4
      %v7146 = vshrl.u32 %v7094, 16
      %v7148 = vrot.slane %v7146, 7
      %v7149 = vshll.u32 %v7094, 16
      %v7151 = vor.u32 %v7148, %v7149
      %v7152 = vrot.slane %v7148, 4
      %v7154 = vshrl.u32 %v7095, 16
      %v7156 = vrot.slane %v7154, 7
      %v7157 = vshll.u32 %v7095, 16
      %v7159 = vor.u32 %v7156, %v7157
      %v7160 = vsel %vm2456, %v7152, %v7159
      %v7161 = vrot.slane %v7156, 4
      %v7163 = vshrl.u32 %v7096, 16
      %v7165 = vrot.slane %v7163, 7
      %v7166 = vshll.u32 %v7096, 16
      %v7168 = vor.u32 %v7165, %v7166
      %v7169 = vrot.slane %v7165, 4
      %v7171 = vshrl.u32 %v7097, 16
      %v7173 = vrot.slane %v7171, 7
      %v7174 = vshll.u32 %v7097, 16
      %v7176 = vor.u32 %v7173, %v7174
      %v7177 = vsel %vm2456, %v7169, %v7176
      %v7178 = vrot.slane %v7173, 4
      %v7180 = vshrl.u32 %v7098, 16
      %v7182 = vrot.slane %v7180, 7
      %v7183 = vshll.u32 %v7098, 16
      %v7185 = vor.u32 %v7182, %v7183
      %v7186 = vrot.slane %v7182, 4
      %v7188 = vshrl.u32 %v7099, 16
      %v7190 = vrot.slane %v7188, 7
      %v7191 = vshll.u32 %v7099, 16
      %v7193 = vor.u32 %v7190, %v7191
      %v7194 = vsel %vm2456, %v7186, %v7193
      %v7195 = vrot.slane %v7190, 4
      %v7197 = vshrl.u32 %v7100, 16
      %v7199 = vrot.slane %v7197, 7
      %v7200 = vshll.u32 %v7100, 16
      %v7202 = vor.u32 %v7199, %v7200
      %v7203 = vrot.slane %v7199, 4
      %v7205 = vshrl.u32 %v7101, 16
      %v7207 = vrot.slane %v7205, 7
      %v7208 = vshll.u32 %v7101, 16
      %v7210 = vor.u32 %v7207, %v7208
      %v7211 = vsel %vm2456, %v7203, %v7210
      %v7212 = vrot.slane %v7207, 4
      %v7214 = vshrl.u32 %v7102, 16
      %v7216 = vrot.slane %v7214, 7
      %v7217 = vshll.u32 %v7102, 16
      %v7219 = vor.u32 %v7216, %v7217
      %v7220 = vrot.slane %v7216, 4
      %v7222 = vshrl.u32 %v7103, 16
      %v7224 = vrot.slane %v7222, 7
      %v7225 = vshll.u32 %v7103, 16
      %v7227 = vor.u32 %v7224, %v7225
      %v7228 = vsel %vm2456, %v7220, %v7227
      %v7229 = vrot.slane %v7224, 4
      %v7231 = vshrl.u32 %v7104, 16
      %v7233 = vrot.slane %v7231, 7
      %v7234 = vshll.u32 %v7104, 16
      %v7236 = vor.u32 %v7233, %v7234
      %v7237 = vrot.slane %v7233, 4
      %v7239 = vshrl.u32 %v7105, 16
      %v7241 = vrot.slane %v7239, 7
      %v7242 = vshll.u32 %v7105, 16
      %v7244 = vor.u32 %v7241, %v7242
      %v7245 = vsel %vm2456, %v7237, %v7244
      %v7246 = vrot.slane %v7241, 4
      %v7248 = vshrl.u32 %v7106, 16
      %v7250 = vrot.slane %v7248, 7
      %v7251 = vshll.u32 %v7106, 16
      %v7253 = vor.u32 %v7250, %v7251
      %v7254 = vrot.slane %v7250, 4
      %v7256 = vshrl.u32 %v7107, 16
      %v7258 = vrot.slane %v7256, 7
      %v7259 = vshll.u32 %v7107, 16
      %v7261 = vor.u32 %v7258, %v7259
      %v7262 = vsel %vm2456, %v7254, %v7261
      %v7263 = vrot.slane %v7258, 4
      %v7265 = vshrl.u32 %v7108, 16
      %v7267 = vrot.slane %v7265, 7
      %v7268 = vshll.u32 %v7108, 16
      %v7270 = vor.u32 %v7267, %v7268
      %v7271 = vrot.slane %v7267, 4
      %v7273 = vshrl.u32 %v7109, 16
      %v7275 = vrot.slane %v7273, 7
      %v7276 = vshll.u32 %v7109, 16
      %v7278 = vor.u32 %v7275, %v7276
      %v7279 = vsel %vm2456, %v7271, %v7278
      %v7280 = vrot.slane %v7275, 4
      %v7282 = vshrl.u32 %v7110, 16
      %v7284 = vrot.slane %v7282, 7
      %v7285 = vshll.u32 %v7110, 16
      %v7287 = vor.u32 %v7284, %v7285
      %v7288 = vrot.slane %v7284, 4
      %v7290 = vshrl.u32 %v7111, 16
      %v7292 = vrot.slane %v7290, 7
      %v7293 = vshll.u32 %v7111, 16
      %v7295 = vor.u32 %v7292, %v7293
      %v7296 = vsel %vm2456, %v7288, %v7295
      %v7297 = vrot.slane %v7292, 4
      %v7299 = vshrl.u32 %v7112, 16
      %v7301 = vrot.slane %v7299, 7
      %v7302 = vshll.u32 %v7112, 16
      %v7304 = vor.u32 %v7301, %v7302
      %v7305 = vrot.slane %v7301, 4
      %v7307 = vshrl.u32 %v7113, 16
      %v7309 = vrot.slane %v7307, 7
      %v7310 = vshll.u32 %v7113, 16
      %v7312 = vor.u32 %v7309, %v7310
      %v7313 = vsel %vm2456, %v7305, %v7312
      %v7314 = vrot.slane %v7309, 4
      %v7316 = vshrl.u32 %v7114, 16
      %v7318 = vrot.slane %v7316, 7
      %v7319 = vshll.u32 %v7114, 16
      %v7321 = vor.u32 %v7318, %v7319
      %v7322 = vrot.slane %v7318, 4
      %v7324 = vshrl.u32 %v7115, 16
      %v7326 = vrot.slane %v7324, 7
      %v7327 = vshll.u32 %v7115, 16
      %v7329 = vor.u32 %v7326, %v7327
      %v7330 = vsel %vm2456, %v7322, %v7329
      %v7331 = vrot.slane %v7326, 4
      %v7333 = vshrl.u32 %v7116, 16
      %v7335 = vrot.slane %v7333, 7
      %v7336 = vshll.u32 %v7116, 16
      %v7338 = vor.u32 %v7335, %v7336
      %v7339 = vrot.slane %v7335, 4
      %v7341 = vshrl.u32 %v7117, 16
      %v7343 = vrot.slane %v7341, 7
      %v7344 = vshll.u32 %v7117, 16
      %v7346 = vor.u32 %v7343, %v7344
      %v7347 = vsel %vm2456, %v7339, %v7346
      %v7348 = vrot.slane %v7343, 4
      %v7350 = vshrl.u32 %v7118, 16
      %v7352 = vrot.slane %v7350, 7
      %v7353 = vshll.u32 %v7118, 16
      %v7355 = vor.u32 %v7352, %v7353
      %v7356 = vrot.slane %v7352, 4
      %v7358 = vshrl.u32 %v7119, 16
      %v7360 = vrot.slane %v7358, 7
      %v7361 = vshll.u32 %v7119, 16
      %v7363 = vor.u32 %v7360, %v7361
      %v7364 = vsel %vm2456, %v7356, %v7363
      %v7365 = vrot.slane %v7360, 4
      %v7367 = vshrl.u32 %v7120, 16
      %v7369 = vrot.slane %v7367, 7
      %v7370 = vshll.u32 %v7120, 16
      %v7372 = vor.u32 %v7369, %v7370
      %v7373 = vrot.slane %v7369, 4
      %v7375 = vshrl.u32 %v7121, 16
      %v7377 = vrot.slane %v7375, 7
      %v7378 = vshll.u32 %v7121, 16
      %v7380 = vor.u32 %v7377, %v7378
      %v7381 = vsel %vm2456, %v7373, %v7380
      %v7382 = vrot.slane %v7377, 4
      %v7384 = vshrl.u32 %v7122, 16
      %v7386 = vrot.slane %v7384, 7
      %v7387 = vshll.u32 %v7122, 16
      %v7389 = vor.u32 %v7386, %v7387
      %v7390 = vrot.slane %v7386, 4
      %v7392 = vshrl.u32 %v7123, 16
      %v7394 = vrot.slane %v7392, 7
      %v7395 = vshll.u32 %v7123, 16
      %v7397 = vor.u32 %v7394, %v7395
      %v7398 = vsel %vm2456, %v7390, %v7397
      %v7399 = vrot.slane %v7394, 4
      %v7401 = vshrl.u32 %v7124, 16
      %v7403 = vrot.slane %v7401, 7
      %v7404 = vshll.u32 %v7124, 16
      %v7406 = vor.u32 %v7403, %v7404
      %v7407 = vrot.slane %v7403, 4
      %v7409 = vshrl.u32 %v7125, 16
      %v7411 = vrot.slane %v7409, 7
      %v7412 = vshll.u32 %v7125, 16
      %v7414 = vor.u32 %v7411, %v7412
      %v7415 = vsel %vm2456, %v7407, %v7414
      %v7416 = vrot.slane %v7411, 4
      %v7418 = vshrl.u32 %v7126, 16
      %v7420 = vrot.slane %v7418, 7
      %v7421 = vshll.u32 %v7126, 16
      %v7423 = vor.u32 %v7420, %v7421
      %v7424 = vrot.slane %v7420, 4
      %v7426 = vshrl.u32 %v7127, 16
      %v7428 = vrot.slane %v7426, 7
      %v7429 = vshll.u32 %v7127, 16
      %v7431 = vor.u32 %v7428, %v7429
      %v7432 = vsel %vm2456, %v7424, %v7431
      %v7433 = vrot.slane %v7428, 4
      %7434 = vrot.lane.b32.xlu0 %v7134, 32
      %v7435 = vpop.permute.xlu0 %7434
      %7436 = vrot.lane.b32.xlu0 %v7143, 32
      %v7437 = vpop.permute.xlu0 %7436
      %7438 = vrot.lane.b32.xlu0 %v7144, 32
      %v7439 = vpop.permute.xlu0 %7438
      %7440 = vrot.lane.b32.xlu0 %v7151, 32
      %v7441 = vpop.permute.xlu0 %7440
      %7442 = vrot.lane.b32.xlu0 %v7160, 32
      %v7443 = vpop.permute.xlu0 %7442
      %7444 = vrot.lane.b32.xlu0 %v7161, 32
      %v7445 = vpop.permute.xlu0 %7444
      %7446 = vrot.lane.b32.xlu0 %v7168, 32
      %v7447 = vpop.permute.xlu0 %7446
      %7448 = vrot.lane.b32.xlu0 %v7177, 32
      %v7449 = vpop.permute.xlu0 %7448
      %7450 = vrot.lane.b32.xlu0 %v7178, 32
      %v7451 = vpop.permute.xlu0 %7450
      %7452 = vrot.lane.b32.xlu0 %v7185, 32
      %v7453 = vpop.permute.xlu0 %7452
      %7454 = vrot.lane.b32.xlu0 %v7194, 32
      %v7455 = vpop.permute.xlu0 %7454
      %7456 = vrot.lane.b32.xlu0 %v7195, 32
      %v7457 = vpop.permute.xlu0 %7456
      %7458 = vrot.lane.b32.xlu0 %v7202, 32
      %v7459 = vpop.permute.xlu0 %7458
      %7460 = vrot.lane.b32.xlu0 %v7211, 32
      %v7461 = vpop.permute.xlu0 %7460
      %7462 = vrot.lane.b32.xlu0 %v7212, 32
      %v7463 = vpop.permute.xlu0 %7462
      %7464 = vrot.lane.b32.xlu0 %v7219, 32
      %v7465 = vpop.permute.xlu0 %7464
      %7466 = vrot.lane.b32.xlu0 %v7228, 32
      %v7467 = vpop.permute.xlu0 %7466
      %7468 = vrot.lane.b32.xlu0 %v7229, 32
      %v7469 = vpop.permute.xlu0 %7468
      %7470 = vrot.lane.b32.xlu0 %v7236, 32
      %v7471 = vpop.permute.xlu0 %7470
      %7472 = vrot.lane.b32.xlu0 %v7245, 32
      %v7473 = vpop.permute.xlu0 %7472
      %7474 = vrot.lane.b32.xlu0 %v7246, 32
      %v7475 = vpop.permute.xlu0 %7474
      %7476 = vrot.lane.b32.xlu0 %v7253, 32
      %v7477 = vpop.permute.xlu0 %7476
      %7478 = vrot.lane.b32.xlu0 %v7262, 32
      %v7479 = vpop.permute.xlu0 %7478
      %7480 = vrot.lane.b32.xlu0 %v7263, 32
      %v7481 = vpop.permute.xlu0 %7480
      %7482 = vrot.lane.b32.xlu0 %v7270, 32
      %v7483 = vpop.permute.xlu0 %7482
      %7484 = vrot.lane.b32.xlu0 %v7279, 32
      %v7485 = vpop.permute.xlu0 %7484
      %7486 = vrot.lane.b32.xlu0 %v7280, 32
      %v7487 = vpop.permute.xlu0 %7486
      %7488 = vrot.lane.b32.xlu0 %v7287, 32
      %v7489 = vpop.permute.xlu0 %7488
      %7490 = vrot.lane.b32.xlu0 %v7296, 32
      %v7491 = vpop.permute.xlu0 %7490
      %7492 = vrot.lane.b32.xlu0 %v7297, 32
      %v7493 = vpop.permute.xlu0 %7492
      %7494 = vrot.lane.b32.xlu0 %v7304, 32
      %v7495 = vpop.permute.xlu0 %7494
      %7496 = vrot.lane.b32.xlu0 %v7313, 32
      %v7497 = vpop.permute.xlu0 %7496
      %7498 = vrot.lane.b32.xlu0 %v7314, 32
      %v7499 = vpop.permute.xlu0 %7498
      %7500 = vrot.lane.b32.xlu0 %v7321, 32
      %v7501 = vpop.permute.xlu0 %7500
      %7502 = vrot.lane.b32.xlu0 %v7330, 32
      %v7503 = vpop.permute.xlu0 %7502
      %7504 = vrot.lane.b32.xlu0 %v7331, 32
      %v7505 = vpop.permute.xlu0 %7504
      %7506 = vrot.lane.b32.xlu0 %v7338, 32
      %v7507 = vpop.permute.xlu0 %7506
      %7508 = vrot.lane.b32.xlu0 %v7347, 32
      %v7509 = vpop.permute.xlu0 %7508
      %7510 = vrot.lane.b32.xlu0 %v7348, 32
      %v7511 = vpop.permute.xlu0 %7510
      %7512 = vrot.lane.b32.xlu0 %v7355, 32
      %v7513 = vpop.permute.xlu0 %7512
      %7514 = vrot.lane.b32.xlu0 %v7364, 32
      %v7515 = vpop.permute.xlu0 %7514
      %7516 = vrot.lane.b32.xlu0 %v7365, 32
      %v7517 = vpop.permute.xlu0 %7516
      %7518 = vrot.lane.b32.xlu0 %v7372, 32
      %v7519 = vpop.permute.xlu0 %7518
      %7520 = vrot.lane.b32.xlu0 %v7381, 32
      %v7521 = vpop.permute.xlu0 %7520
      %7522 = vrot.lane.b32.xlu0 %v7382, 32
      %v7523 = vpop.permute.xlu0 %7522
      %7524 = vrot.lane.b32.xlu0 %v7389, 32
      %v7525 = vpop.permute.xlu0 %7524
      %7526 = vrot.lane.b32.xlu0 %v7398, 32
      %v7527 = vpop.permute.xlu0 %7526
      %7528 = vrot.lane.b32.xlu0 %v7399, 32
      %v7529 = vpop.permute.xlu0 %7528
      %7530 = vrot.lane.b32.xlu0 %v7406, 32
      %v7531 = vpop.permute.xlu0 %7530
      %7532 = vrot.lane.b32.xlu0 %v7415, 32
      %v7533 = vpop.permute.xlu0 %7532
      %7534 = vrot.lane.b32.xlu0 %v7416, 32
      %v7535 = vpop.permute.xlu0 %7534
      %7536 = vrot.lane.b32.xlu0 %v7423, 32
      %v7537 = vpop.permute.xlu0 %7536
      %7538 = vrot.lane.b32.xlu0 %v7432, 32
      %v7539 = vpop.permute.xlu0 %7538
      %7540 = vrot.lane.b32.xlu0 %v7433, 32
      %v7541 = vpop.permute.xlu0 %7540
      %vm7596 = vcmask 322816
      %vm7597 = vmand %vm7596, %vm748
      %v7598 = vld [vmem:[%s2925] sm:$0xf]
      %v7599 = vsel %vm7597, %v7435, %v7598
      %7600 = vst [vmem:[%s2925] sm:$0xf] %v7599
      %vm7601 = vcmask 322816
      %7602 = vst.msk [vmem:[%s2925 + $0x4] sm:$0xf] %vm7601, %v7437
      %vm7603 = vcmask 319744
      %vm7604 = vmand %vm7603, %vm686
      %v7605 = vld [vmem:[%s2925 + $0x8] sm:$0x1]
      %v7606 = vsel %vm7604, %v7439, %v7605
      %7607 = vst [vmem:[%s2925 + $0x8] sm:$0x1] %v7606
      %v7608 = vld [vmem:[%s2925 + $0xc] sm:$0xf]
      %v7609 = vsel %vm7597, %v7441, %v7608
      %7610 = vst [vmem:[%s2925 + $0xc] sm:$0xf] %v7609
      %7611 = vst.msk [vmem:[%s2925 + $0x10] sm:$0xf] %vm7601, %v7443
      %v7612 = vld [vmem:[%s2925 + $0x14] sm:$0x1]
      %v7613 = vsel %vm7604, %v7445, %v7612
      %7614 = vst [vmem:[%s2925 + $0x14] sm:$0x1] %v7613
      %v7615 = vld [vmem:[%s2925 + $0x18] sm:$0xf]
      %v7616 = vsel %vm7597, %v7447, %v7615
      %7617 = vst [vmem:[%s2925 + $0x18] sm:$0xf] %v7616
      %7618 = vst.msk [vmem:[%s2925 + $0x1c] sm:$0xf] %vm7601, %v7449
      %v7619 = vld [vmem:[%s2925 + $0x20] sm:$0x1]
      %v7620 = vsel %vm7604, %v7451, %v7619
      %7621 = vst [vmem:[%s2925 + $0x20] sm:$0x1] %v7620
      %v7622 = vld [vmem:[%s2925 + $0x24] sm:$0xf]
      %v7623 = vsel %vm7597, %v7453, %v7622
      %7624 = vst [vmem:[%s2925 + $0x24] sm:$0xf] %v7623
      %7625 = vst.msk [vmem:[%s2925 + $0x28] sm:$0xf] %vm7601, %v7455
      %v7626 = vld [vmem:[%s2925 + $0x2c] sm:$0x1]
      %v7627 = vsel %vm7604, %v7457, %v7626
      %7628 = vst [vmem:[%s2925 + $0x2c] sm:$0x1] %v7627
      %v7629 = vld [vmem:[%s2925 + $0x30] sm:$0xf]
      %v7630 = vsel %vm7597, %v7459, %v7629
      %7631 = vst [vmem:[%s2925 + $0x30] sm:$0xf] %v7630
      %7632 = vst.msk [vmem:[%s2925 + $0x34] sm:$0xf] %vm7601, %v7461
      %v7633 = vld [vmem:[%s2925 + $0x38] sm:$0x1]
      %v7634 = vsel %vm7604, %v7463, %v7633
      %7635 = vst [vmem:[%s2925 + $0x38] sm:$0x1] %v7634
      %v7636 = vld [vmem:[%s2925 + $0x3c] sm:$0xf]
      %v7637 = vsel %vm7597, %v7465, %v7636
      %7638 = vst [vmem:[%s2925 + $0x3c] sm:$0xf] %v7637
      %7639 = vst.msk [vmem:[%s2925 + $0x40] sm:$0xf] %vm7601, %v7467
      %v7640 = vld [vmem:[%s2925 + $0x44] sm:$0x1]
      %v7641 = vsel %vm7604, %v7469, %v7640
      %7642 = vst [vmem:[%s2925 + $0x44] sm:$0x1] %v7641
      %v7643 = vld [vmem:[%s2925 + $0x48] sm:$0xf]
      %v7644 = vsel %vm7597, %v7471, %v7643
      %7645 = vst [vmem:[%s2925 + $0x48] sm:$0xf] %v7644
      %7646 = vst.msk [vmem:[%s2925 + $0x4c] sm:$0xf] %vm7601, %v7473
      %v7647 = vld [vmem:[%s2925 + $0x50] sm:$0x1]
      %v7648 = vsel %vm7604, %v7475, %v7647
      %7649 = vst [vmem:[%s2925 + $0x50] sm:$0x1] %v7648
      %v7650 = vld [vmem:[%s2925 + $0x54] sm:$0xf]
      %v7651 = vsel %vm7597, %v7477, %v7650
      %7652 = vst [vmem:[%s2925 + $0x54] sm:$0xf] %v7651
      %7653 = vst.msk [vmem:[%s2925 + $0x58] sm:$0xf] %vm7601, %v7479
      %v7654 = vld [vmem:[%s2925 + $0x5c] sm:$0x1]
      %v7655 = vsel %vm7604, %v7481, %v7654
      %7656 = vst [vmem:[%s2925 + $0x5c] sm:$0x1] %v7655
      %v7657 = vld [vmem:[%s2925 + $0x60] sm:$0xf]
      %v7658 = vsel %vm7597, %v7483, %v7657
      %7659 = vst [vmem:[%s2925 + $0x60] sm:$0xf] %v7658
      %7660 = vst.msk [vmem:[%s2925 + $0x64] sm:$0xf] %vm7601, %v7485
      %v7661 = vld [vmem:[%s2925 + $0x68] sm:$0x1]
      %v7662 = vsel %vm7604, %v7487, %v7661
      %7663 = vst [vmem:[%s2925 + $0x68] sm:$0x1] %v7662
      %v7664 = vld [vmem:[%s2925 + $0x6c] sm:$0xf]
      %v7665 = vsel %vm7597, %v7489, %v7664
      %7666 = vst [vmem:[%s2925 + $0x6c] sm:$0xf] %v7665
      %7667 = vst.msk [vmem:[%s2925 + $0x70] sm:$0xf] %vm7601, %v7491
      %v7668 = vld [vmem:[%s2925 + $0x74] sm:$0x1]
      %v7669 = vsel %vm7604, %v7493, %v7668
      %7670 = vst [vmem:[%s2925 + $0x74] sm:$0x1] %v7669
      %v7671 = vld [vmem:[%s2925 + $0x78] sm:$0xf]
      %v7672 = vsel %vm7597, %v7495, %v7671
      %7673 = vst [vmem:[%s2925 + $0x78] sm:$0xf] %v7672
      %7674 = vst.msk [vmem:[%s2925 + $0x7c] sm:$0xf] %vm7601, %v7497
      %v7675 = vld [vmem:[%s2925 + $0x80] sm:$0x1]
      %v7676 = vsel %vm7604, %v7499, %v7675
      %7677 = vst [vmem:[%s2925 + $0x80] sm:$0x1] %v7676
      %v7678 = vld [vmem:[%s2925 + $0x84] sm:$0xf]
      %v7679 = vsel %vm7597, %v7501, %v7678
      %7680 = vst [vmem:[%s2925 + $0x84] sm:$0xf] %v7679
      %7681 = vst.msk [vmem:[%s2925 + $0x88] sm:$0xf] %vm7601, %v7503
      %v7682 = vld [vmem:[%s2925 + $0x8c] sm:$0x1]
      %v7683 = vsel %vm7604, %v7505, %v7682
      %7684 = vst [vmem:[%s2925 + $0x8c] sm:$0x1] %v7683
      %v7685 = vld [vmem:[%s2925 + $0x90] sm:$0xf]
      %v7686 = vsel %vm7597, %v7507, %v7685
      %7687 = vst [vmem:[%s2925 + $0x90] sm:$0xf] %v7686
      %7688 = vst.msk [vmem:[%s2925 + $0x94] sm:$0xf] %vm7601, %v7509
      %v7689 = vld [vmem:[%s2925 + $0x98] sm:$0x1]
      %v7690 = vsel %vm7604, %v7511, %v7689
      %7691 = vst [vmem:[%s2925 + $0x98] sm:$0x1] %v7690
      %v7692 = vld [vmem:[%s2925 + $0x9c] sm:$0xf]
      %v7693 = vsel %vm7597, %v7513, %v7692
      %7694 = vst [vmem:[%s2925 + $0x9c] sm:$0xf] %v7693
      %7695 = vst.msk [vmem:[%s2925 + $0xa0] sm:$0xf] %vm7601, %v7515
      %v7696 = vld [vmem:[%s2925 + $0xa4] sm:$0x1]
      %v7697 = vsel %vm7604, %v7517, %v7696
      %7698 = vst [vmem:[%s2925 + $0xa4] sm:$0x1] %v7697
      %v7699 = vld [vmem:[%s2925 + $0xa8] sm:$0xf]
      %v7700 = vsel %vm7597, %v7519, %v7699
      %7701 = vst [vmem:[%s2925 + $0xa8] sm:$0xf] %v7700
      %7702 = vst.msk [vmem:[%s2925 + $0xac] sm:$0xf] %vm7601, %v7521
      %v7703 = vld [vmem:[%s2925 + $0xb0] sm:$0x1]
      %v7704 = vsel %vm7604, %v7523, %v7703
      %7705 = vst [vmem:[%s2925 + $0xb0] sm:$0x1] %v7704
      %v7706 = vld [vmem:[%s2925 + $0xb4] sm:$0xf]
      %v7707 = vsel %vm7597, %v7525, %v7706
      %7708 = vst [vmem:[%s2925 + $0xb4] sm:$0xf] %v7707
      %7709 = vst.msk [vmem:[%s2925 + $0xb8] sm:$0xf] %vm7601, %v7527
      %v7710 = vld [vmem:[%s2925 + $0xbc] sm:$0x1]
      %v7711 = vsel %vm7604, %v7529, %v7710
      %7712 = vst [vmem:[%s2925 + $0xbc] sm:$0x1] %v7711
      %v7713 = vld [vmem:[%s2925 + $0xc0] sm:$0xf]
      %v7714 = vsel %vm7597, %v7531, %v7713
      %7715 = vst [vmem:[%s2925 + $0xc0] sm:$0xf] %v7714
      %7716 = vst.msk [vmem:[%s2925 + $0xc4] sm:$0xf] %vm7601, %v7533
      %v7717 = vld [vmem:[%s2925 + $0xc8] sm:$0x1]
      %v7718 = vsel %vm7604, %v7535, %v7717
      %7719 = vst [vmem:[%s2925 + $0xc8] sm:$0x1] %v7718
      %v7720 = vld [vmem:[%s2925 + $0xcc] sm:$0xf]
      %v7721 = vsel %vm7597, %v7537, %v7720
      %7722 = vst [vmem:[%s2925 + $0xcc] sm:$0xf] %v7721
      %7723 = vst.msk [vmem:[%s2925 + $0xd0] sm:$0xf] %vm7601, %v7539
      %v7724 = vld [vmem:[%s2925 + $0xd4] sm:$0x1]
      %v7725 = vsel %vm7604, %v7541, %v7724
      %7726 = vst [vmem:[%s2925 + $0xd4] sm:$0x1] %v7725
      // Predicated region
      $region89: #{residual_dense_block.1} parent=71 // pred_check
        %p7727 = pneg %p810
      $region90: #{residual_dense_block.1} parent=71 // pred_check_branch
        %7729 = sbr.rel (%p7727) target = $region92
      $region91: #{residual_dense_block.1} parent=71 // pred_region
        %v7730 = vld [vmem:[%s2925] sm:$0xf]
        %v7731 = vsel %vm7597, 0, %v7730
        %7732 = vst [vmem:[%s2925] sm:$0xf] %v7731
        %7733 = vst.msk [vmem:[%s2925 + $0x4] sm:$0xf] %vm7601, 0
        %v7734 = vld [vmem:[%s2925 + $0x8] sm:$0x1]
        %v7735 = vsel %vm7604, 0, %v7734
        %7736 = vst [vmem:[%s2925 + $0x8] sm:$0x1] %v7735
        %v7737 = vld [vmem:[%s2925 + $0xc] sm:$0xf]
        %v7738 = vsel %vm7597, 0, %v7737
        %7739 = vst [vmem:[%s2925 + $0xc] sm:$0xf] %v7738
        %7740 = vst.msk [vmem:[%s2925 + $0x10] sm:$0xf] %vm7601, 0
        %v7741 = vld [vmem:[%s2925 + $0x14] sm:$0x1]
        %v7742 = vsel %vm7604, 0, %v7741
        %7743 = vst [vmem:[%s2925 + $0x14] sm:$0x1] %v7742
        %v7744 = vld [vmem:[%s2925 + $0x18] sm:$0xf]
        %v7745 = vsel %vm7597, 0, %v7744
        %7746 = vst [vmem:[%s2925 + $0x18] sm:$0xf] %v7745
        %7747 = vst.msk [vmem:[%s2925 + $0x1c] sm:$0xf] %vm7601, 0
        %v7748 = vld [vmem:[%s2925 + $0x20] sm:$0x1]
        %v7749 = vsel %vm7604, 0, %v7748
        %7750 = vst [vmem:[%s2925 + $0x20] sm:$0x1] %v7749
        %v7751 = vld [vmem:[%s2925 + $0x24] sm:$0xf]
        %v7752 = vsel %vm7597, 0, %v7751
        %7753 = vst [vmem:[%s2925 + $0x24] sm:$0xf] %v7752
        %7754 = vst.msk [vmem:[%s2925 + $0x28] sm:$0xf] %vm7601, 0
        %v7755 = vld [vmem:[%s2925 + $0x2c] sm:$0x1]
        %v7756 = vsel %vm7604, 0, %v7755
        %7757 = vst [vmem:[%s2925 + $0x2c] sm:$0x1] %v7756
        %v7758 = vld [vmem:[%s2925 + $0x30] sm:$0xf]
        %v7759 = vsel %vm7597, 0, %v7758
        %7760 = vst [vmem:[%s2925 + $0x30] sm:$0xf] %v7759
        %7761 = vst.msk [vmem:[%s2925 + $0x34] sm:$0xf] %vm7601, 0
        %v7762 = vld [vmem:[%s2925 + $0x38] sm:$0x1]
        %v7763 = vsel %vm7604, 0, %v7762
        %7764 = vst [vmem:[%s2925 + $0x38] sm:$0x1] %v7763
      $region92: #{residual_dense_block.1} parent=71 // pred_fallthru
        _
      // Predicated region
      $region93: #{residual_dense_block.1} parent=71 // pred_check
        %p7765 = pneg %p811
      $region94: #{residual_dense_block.1} parent=71 // pred_check_branch
        %7767 = sbr.rel (%p7765) target = $region96
      $region95: #{residual_dense_block.1} parent=71 // pred_region
        %v7768 = vld [vmem:[%s657] sm:$0xf]
        %v7769 = vsel %vm7597, 0, %v7768
        %7770 = vst [vmem:[%s657] sm:$0xf] %v7769
        %7771 = vst.msk [vmem:[%s657 + $0x4] sm:$0xf] %vm7601, 0
        %v7772 = vld [vmem:[%s657 + $0x8] sm:$0x1]
        %v7773 = vsel %vm7604, 0, %v7772
        %7774 = vst [vmem:[%s657 + $0x8] sm:$0x1] %v7773
        %v7775 = vld [vmem:[%s657 + $0xc] sm:$0xf]
        %v7776 = vsel %vm7597, 0, %v7775
        %7777 = vst [vmem:[%s657 + $0xc] sm:$0xf] %v7776
        %7778 = vst.msk [vmem:[%s657 + $0x10] sm:$0xf] %vm7601, 0
        %v7779 = vld [vmem:[%s657 + $0x14] sm:$0x1]
        %v7780 = vsel %vm7604, 0, %v7779
        %7781 = vst [vmem:[%s657 + $0x14] sm:$0x1] %v7780
        %v7782 = vld [vmem:[%s657 + $0x18] sm:$0xf]
        %v7783 = vsel %vm7597, 0, %v7782
        %7784 = vst [vmem:[%s657 + $0x18] sm:$0xf] %v7783
        %7785 = vst.msk [vmem:[%s657 + $0x1c] sm:$0xf] %vm7601, 0
        %v7786 = vld [vmem:[%s657 + $0x20] sm:$0x1]
        %v7787 = vsel %vm7604, 0, %v7786
        %7788 = vst [vmem:[%s657 + $0x20] sm:$0x1] %v7787
        %v7789 = vld [vmem:[%s657 + $0x24] sm:$0xf]
        %v7790 = vsel %vm7597, 0, %v7789
        %7791 = vst [vmem:[%s657 + $0x24] sm:$0xf] %v7790
        %7792 = vst.msk [vmem:[%s657 + $0x28] sm:$0xf] %vm7601, 0
        %v7793 = vld [vmem:[%s657 + $0x2c] sm:$0x1]
        %v7794 = vsel %vm7604, 0, %v7793
        %7795 = vst [vmem:[%s657 + $0x2c] sm:$0x1] %v7794
        %v7796 = vld [vmem:[%s657 + $0x30] sm:$0xf]
        %v7797 = vsel %vm7597, 0, %v7796
        %7798 = vst [vmem:[%s657 + $0x30] sm:$0xf] %v7797
        %7799 = vst.msk [vmem:[%s657 + $0x34] sm:$0xf] %vm7601, 0
        %v7800 = vld [vmem:[%s657 + $0x38] sm:$0x1]
        %v7801 = vsel %vm7604, 0, %v7800
        %7802 = vst [vmem:[%s657 + $0x38] sm:$0x1] %v7801
      $region96: #{residual_dense_block.1} parent=71 // pred_fallthru
        _
      %v7803 = vld [vmem:[#allocation2] sm:$0xf]
      %v7804 = vld [vmem:[#allocation2 + $0x4] sm:$0xf]
      %v7805 = vld [vmem:[#allocation2 + $0xc] sm:$0xf]
      %v7806 = vld [vmem:[#allocation2 + $0x10] sm:$0xf]
      %v7807 = vld [vmem:[#allocation2 + $0x18] sm:$0xf]
      %v7808 = vld [vmem:[#allocation2 + $0x1c] sm:$0xf]
      %v7809 = vld [vmem:[#allocation2 + $0x24] sm:$0xf]
      %v7810 = vld [vmem:[#allocation2 + $0x28] sm:$0xf]
      %v7811 = vld [vmem:[#allocation2 + $0x30] sm:$0xf]
      %v7812 = vld [vmem:[#allocation2 + $0x34] sm:$0xf]
      %v7813 = vld [vmem:[#allocation2 + $0x3c] sm:$0xf]
      %v7814 = vld [vmem:[#allocation2 + $0x40] sm:$0xf]
      %v7815 = vld [vmem:[#allocation2 + $0x48] sm:$0xf]
      %v7816 = vld [vmem:[#allocation2 + $0x4c] sm:$0xf]
      %v7817 = vld [vmem:[#allocation2 + $0x54] sm:$0xf]
      %v7818 = vld [vmem:[#allocation2 + $0x58] sm:$0xf]
      %v7819 = vld [vmem:[#allocation2 + $0x60] sm:$0xf]
      %v7820 = vld [vmem:[#allocation2 + $0x64] sm:$0xf]
      %v7821 = vld [vmem:[#allocation2 + $0x6c] sm:$0xf]
      %v7822 = vld [vmem:[#allocation2 + $0x70] sm:$0xf]
      %v7823 = vld [vmem:[#allocation2 + $0x78] sm:$0xf]
      %v7824 = vld [vmem:[#allocation2 + $0x7c] sm:$0xf]
      %v7825 = vld [vmem:[#allocation2 + $0x84] sm:$0xf]
      %v7826 = vld [vmem:[#allocation2 + $0x88] sm:$0xf]
      %v7827 = vld [vmem:[#allocation2 + $0x90] sm:$0xf]
      %v7828 = vld [vmem:[#allocation2 + $0x94] sm:$0xf]
      %v7829 = vld [vmem:[#allocation2 + $0x9c] sm:$0xf]
      %v7830 = vld [vmem:[#allocation2 + $0xa0] sm:$0xf]
      %v7831 = vld [vmem:[#allocation2 + $0xa8] sm:$0xf]
      %v7832 = vld [vmem:[#allocation2 + $0xac] sm:$0xf]
      %v7833 = vld [vmem:[#allocation2 + $0xb4] sm:$0xf]
      %v7834 = vld [vmem:[#allocation2 + $0xb8] sm:$0xf]
      %v7835 = vld [vmem:[#allocation2 + $0xc0] sm:$0xf]
      %v7836 = vld [vmem:[#allocation2 + $0xc4] sm:$0xf]
      %v7837 = vld [vmem:[#allocation2 + $0xcc] sm:$0xf]
      %v7838 = vld [vmem:[#allocation2 + $0xd0] sm:$0xf]
      %v7839 = vld [vmem:[#allocation2 + $0xd8] sm:$0xf]
      %v7840 = vld [vmem:[#allocation2 + $0xdc] sm:$0xf]
      %v7841 = vld [vmem:[#allocation2 + $0xe4] sm:$0xf]
      %v7842 = vld [vmem:[#allocation2 + $0xe8] sm:$0xf]
      %v7843 = vld [vmem:[#allocation2 + $0x8] sm:$0x1]
      %v7844 = vld [vmem:[#allocation2 + $0x14] sm:$0x1]
      %v7845 = vld [vmem:[#allocation2 + $0x20] sm:$0x1]
      %v7846 = vld [vmem:[#allocation2 + $0x2c] sm:$0x1]
      %v7847 = vld [vmem:[#allocation2 + $0x38] sm:$0x1]
      %v7848 = vld [vmem:[#allocation2 + $0x44] sm:$0x1]
      %v7849 = vld [vmem:[#allocation2 + $0x50] sm:$0x1]
      %v7850 = vld [vmem:[#allocation2 + $0x5c] sm:$0x1]
      %v7851 = vld [vmem:[#allocation2 + $0x68] sm:$0x1]
      %v7852 = vld [vmem:[#allocation2 + $0x74] sm:$0x1]
      %v7853 = vld [vmem:[#allocation2 + $0x80] sm:$0x1]
      %v7854 = vld [vmem:[#allocation2 + $0x8c] sm:$0x1]
      %v7855 = vld [vmem:[#allocation2 + $0x98] sm:$0x1]
      %v7856 = vld [vmem:[#allocation2 + $0xa4] sm:$0x1]
      %v7857 = vld [vmem:[#allocation2 + $0xb0] sm:$0x1]
      %v7858 = vld [vmem:[#allocation2 + $0xbc] sm:$0x1]
      %v7859 = vld [vmem:[#allocation2 + $0xc8] sm:$0x1]
      %v7860 = vld [vmem:[#allocation2 + $0xd4] sm:$0x1]
      %v7861 = vld [vmem:[#allocation2 + $0xe0] sm:$0x1]
      %v7862 = vld [vmem:[#allocation2 + $0xec] sm:$0x1]
      %v7863 = vld [vmem:[#allocation2] sm:$0xe]
      %v7864 = vld [vmem:[#allocation2 + $0xc] sm:$0xe]
      %v7865 = vld [vmem:[#allocation2 + $0x18] sm:$0xe]
      %v7866 = vld [vmem:[#allocation2 + $0x24] sm:$0xe]
      %v7867 = vld [vmem:[#allocation2 + $0x30] sm:$0xe]
      %v7868 = vld [vmem:[#allocation2 + $0x3c] sm:$0xe]
      %v7869 = vld [vmem:[#allocation2 + $0x48] sm:$0xe]
      %v7870 = vld [vmem:[#allocation2 + $0x54] sm:$0xe]
      %v7871 = vld [vmem:[#allocation2 + $0x60] sm:$0xe]
      %v7872 = vld [vmem:[#allocation2 + $0x6c] sm:$0xe]
      %v7873 = vld [vmem:[#allocation2 + $0x78] sm:$0xe]
      %v7874 = vld [vmem:[#allocation2 + $0x84] sm:$0xe]
      %v7875 = vld [vmem:[#allocation2 + $0x90] sm:$0xe]
      %v7876 = vld [vmem:[#allocation2 + $0x9c] sm:$0xe]
      %v7877 = vld [vmem:[#allocation2 + $0xa8] sm:$0xe]
      %v7878 = vld [vmem:[#allocation2 + $0xb4] sm:$0xe]
      %v7879 = vld [vmem:[#allocation2 + $0xc0] sm:$0xe]
      %v7880 = vld [vmem:[#allocation2 + $0xcc] sm:$0xe]
      %v7881 = vld [vmem:[#allocation2 + $0xd8] sm:$0xe]
      %v7882 = vld [vmem:[#allocation2 + $0xe4] sm:$0xe]
      %v7923 = vunpack.c.l.b16 %v7803
      %v7924 = vunpack.c.l.b16 %v7804
      %v7925 = vunpack.c.l.b16 %v7805
      %v7926 = vunpack.c.l.b16 %v7806
      %v7927 = vunpack.c.l.b16 %v7807
      %v7928 = vunpack.c.l.b16 %v7808
      %v7929 = vunpack.c.l.b16 %v7809
      %v7930 = vunpack.c.l.b16 %v7810
      %v7931 = vunpack.c.l.b16 %v7811
      %v7932 = vunpack.c.l.b16 %v7812
      %v7933 = vunpack.c.l.b16 %v7813
      %v7934 = vunpack.c.l.b16 %v7814
      %v7935 = vunpack.c.l.b16 %v7815
      %v7936 = vunpack.c.l.b16 %v7816
      %v7937 = vunpack.c.l.b16 %v7817
      %v7938 = vunpack.c.l.b16 %v7818
      %v7939 = vunpack.c.l.b16 %v7819
      %v7940 = vunpack.c.l.b16 %v7820
      %v7941 = vunpack.c.l.b16 %v7821
      %v7942 = vunpack.c.l.b16 %v7822
      %v7943 = vunpack.c.l.b16 %v7823
      %v7944 = vunpack.c.l.b16 %v7824
      %v7945 = vunpack.c.l.b16 %v7825
      %v7946 = vunpack.c.l.b16 %v7826
      %v7947 = vunpack.c.l.b16 %v7827
      %v7948 = vunpack.c.l.b16 %v7828
      %v7949 = vunpack.c.l.b16 %v7829
      %v7950 = vunpack.c.l.b16 %v7830
      %v7951 = vunpack.c.l.b16 %v7831
      %v7952 = vunpack.c.l.b16 %v7832
      %v7953 = vunpack.c.l.b16 %v7833
      %v7954 = vunpack.c.l.b16 %v7834
      %v7955 = vunpack.c.l.b16 %v7835
      %v7956 = vunpack.c.l.b16 %v7836
      %v7957 = vunpack.c.l.b16 %v7837
      %v7958 = vunpack.c.l.b16 %v7838
      %v7959 = vunpack.c.l.b16 %v7839
      %v7960 = vunpack.c.l.b16 %v7840
      %v7961 = vunpack.c.l.b16 %v7841
      %v7962 = vunpack.c.l.b16 %v7842
      %v7963 = vpack.c.b16 %v7924, %v7923
      %v7964 = vpack.c.b16 %v7926, %v7925
      %v7965 = vpack.c.b16 %v7928, %v7927
      %v7966 = vpack.c.b16 %v7930, %v7929
      %v7967 = vpack.c.b16 %v7932, %v7931
      %v7968 = vpack.c.b16 %v7934, %v7933
      %v7969 = vpack.c.b16 %v7936, %v7935
      %v7970 = vpack.c.b16 %v7938, %v7937
      %v7971 = vpack.c.b16 %v7940, %v7939
      %v7972 = vpack.c.b16 %v7942, %v7941
      %v7973 = vpack.c.b16 %v7944, %v7943
      %v7974 = vpack.c.b16 %v7946, %v7945
      %v7975 = vpack.c.b16 %v7948, %v7947
      %v7976 = vpack.c.b16 %v7950, %v7949
      %v7977 = vpack.c.b16 %v7952, %v7951
      %v7978 = vpack.c.b16 %v7954, %v7953
      %v7979 = vpack.c.b16 %v7956, %v7955
      %v7980 = vpack.c.b16 %v7958, %v7957
      %v7981 = vpack.c.b16 %v7960, %v7959
      %v7982 = vpack.c.b16 %v7962, %v7961
      %v8003 = vunpack.c.l.b16 %v7843
      %v8004 = vunpack.c.l.b16 %v7844
      %v8005 = vunpack.c.l.b16 %v7845
      %v8006 = vunpack.c.l.b16 %v7846
      %v8007 = vunpack.c.l.b16 %v7847
      %v8008 = vunpack.c.l.b16 %v7848
      %v8009 = vunpack.c.l.b16 %v7849
      %v8010 = vunpack.c.l.b16 %v7850
      %v8011 = vunpack.c.l.b16 %v7851
      %v8012 = vunpack.c.l.b16 %v7852
      %v8013 = vunpack.c.l.b16 %v7853
      %v8014 = vunpack.c.l.b16 %v7854
      %v8015 = vunpack.c.l.b16 %v7855
      %v8016 = vunpack.c.l.b16 %v7856
      %v8017 = vunpack.c.l.b16 %v7857
      %v8018 = vunpack.c.l.b16 %v7858
      %v8019 = vunpack.c.l.b16 %v7859
      %v8020 = vunpack.c.l.b16 %v7860
      %v8021 = vunpack.c.l.b16 %v7861
      %v8022 = vunpack.c.l.b16 %v7862
      %v8023 = vpack.c.b16 %v8003, %v8003
      %v8024 = vpack.c.b16 %v8004, %v8004
      %v8025 = vpack.c.b16 %v8005, %v8005
      %v8026 = vpack.c.b16 %v8006, %v8006
      %v8027 = vpack.c.b16 %v8007, %v8007
      %v8028 = vpack.c.b16 %v8008, %v8008
      %v8029 = vpack.c.b16 %v8009, %v8009
      %v8030 = vpack.c.b16 %v8010, %v8010
      %v8031 = vpack.c.b16 %v8011, %v8011
      %v8032 = vpack.c.b16 %v8012, %v8012
      %v8033 = vpack.c.b16 %v8013, %v8013
      %v8034 = vpack.c.b16 %v8014, %v8014
      %v8035 = vpack.c.b16 %v8015, %v8015
      %v8036 = vpack.c.b16 %v8016, %v8016
      %v8037 = vpack.c.b16 %v8017, %v8017
      %v8038 = vpack.c.b16 %v8018, %v8018
      %v8039 = vpack.c.b16 %v8019, %v8019
      %v8040 = vpack.c.b16 %v8020, %v8020
      %v8041 = vpack.c.b16 %v8021, %v8021
      %v8042 = vpack.c.b16 %v8022, %v8022
      %v8044 = vshrl.u32 %v7963, 16
      %v8046 = vshll.u32 %v7963, 16
      %v8048 = vrot.slane %v8046, 1
      %v8049 = vor.u32 %v8044, %v8048
      %v8051 = vshll.u32 %v8023, 16
      %v8053 = vrot.slane %v8051, 1
      %v8054 = vsel %vm1052, %v8049, %v8053
      %v8056 = vshrl.u32 %v7964, 16
      %v8058 = vshll.u32 %v7964, 16
      %v8060 = vrot.slane %v8058, 1
      %v8061 = vor.u32 %v8056, %v8060
      %v8063 = vshll.u32 %v8024, 16
      %v8065 = vrot.slane %v8063, 1
      %v8066 = vsel %vm1052, %v8061, %v8065
      %v8068 = vshrl.u32 %v7965, 16
      %v8070 = vshll.u32 %v7965, 16
      %v8072 = vrot.slane %v8070, 1
      %v8073 = vor.u32 %v8068, %v8072
      %v8075 = vshll.u32 %v8025, 16
      %v8077 = vrot.slane %v8075, 1
      %v8078 = vsel %vm1052, %v8073, %v8077
      %v8080 = vshrl.u32 %v7966, 16
      %v8082 = vshll.u32 %v7966, 16
      %v8084 = vrot.slane %v8082, 1
      %v8085 = vor.u32 %v8080, %v8084
      %v8087 = vshll.u32 %v8026, 16
      %v8089 = vrot.slane %v8087, 1
      %v8090 = vsel %vm1052, %v8085, %v8089
      %v8092 = vshrl.u32 %v7967, 16
      %v8094 = vshll.u32 %v7967, 16
      %v8096 = vrot.slane %v8094, 1
      %v8097 = vor.u32 %v8092, %v8096
      %v8099 = vshll.u32 %v8027, 16
      %v8101 = vrot.slane %v8099, 1
      %v8102 = vsel %vm1052, %v8097, %v8101
      %v8104 = vshrl.u32 %v7968, 16
      %v8106 = vshll.u32 %v7968, 16
      %v8108 = vrot.slane %v8106, 1
      %v8109 = vor.u32 %v8104, %v8108
      %v8111 = vshll.u32 %v8028, 16
      %v8113 = vrot.slane %v8111, 1
      %v8114 = vsel %vm1052, %v8109, %v8113
      %v8116 = vshrl.u32 %v7969, 16
      %v8118 = vshll.u32 %v7969, 16
      %v8120 = vrot.slane %v8118, 1
      %v8121 = vor.u32 %v8116, %v8120
      %v8123 = vshll.u32 %v8029, 16
      %v8125 = vrot.slane %v8123, 1
      %v8126 = vsel %vm1052, %v8121, %v8125
      %v8128 = vshrl.u32 %v7970, 16
      %v8130 = vshll.u32 %v7970, 16
      %v8132 = vrot.slane %v8130, 1
      %v8133 = vor.u32 %v8128, %v8132
      %v8135 = vshll.u32 %v8030, 16
      %v8137 = vrot.slane %v8135, 1
      %v8138 = vsel %vm1052, %v8133, %v8137
      %v8140 = vshrl.u32 %v7971, 16
      %v8142 = vshll.u32 %v7971, 16
      %v8144 = vrot.slane %v8142, 1
      %v8145 = vor.u32 %v8140, %v8144
      %v8147 = vshll.u32 %v8031, 16
      %v8149 = vrot.slane %v8147, 1
      %v8150 = vsel %vm1052, %v8145, %v8149
      %v8152 = vshrl.u32 %v7972, 16
      %v8154 = vshll.u32 %v7972, 16
      %v8156 = vrot.slane %v8154, 1
      %v8157 = vor.u32 %v8152, %v8156
      %v8159 = vshll.u32 %v8032, 16
      %v8161 = vrot.slane %v8159, 1
      %v8162 = vsel %vm1052, %v8157, %v8161
      %v8164 = vshrl.u32 %v7973, 16
      %v8166 = vshll.u32 %v7973, 16
      %v8168 = vrot.slane %v8166, 1
      %v8169 = vor.u32 %v8164, %v8168
      %v8171 = vshll.u32 %v8033, 16
      %v8173 = vrot.slane %v8171, 1
      %v8174 = vsel %vm1052, %v8169, %v8173
      %v8176 = vshrl.u32 %v7974, 16
      %v8178 = vshll.u32 %v7974, 16
      %v8180 = vrot.slane %v8178, 1
      %v8181 = vor.u32 %v8176, %v8180
      %v8183 = vshll.u32 %v8034, 16
      %v8185 = vrot.slane %v8183, 1
      %v8186 = vsel %vm1052, %v8181, %v8185
      %v8188 = vshrl.u32 %v7975, 16
      %v8190 = vshll.u32 %v7975, 16
      %v8192 = vrot.slane %v8190, 1
      %v8193 = vor.u32 %v8188, %v8192
      %v8195 = vshll.u32 %v8035, 16
      %v8197 = vrot.slane %v8195, 1
      %v8198 = vsel %vm1052, %v8193, %v8197
      %v8200 = vshrl.u32 %v7976, 16
      %v8202 = vshll.u32 %v7976, 16
      %v8204 = vrot.slane %v8202, 1
      %v8205 = vor.u32 %v8200, %v8204
      %v8207 = vshll.u32 %v8036, 16
      %v8209 = vrot.slane %v8207, 1
      %v8210 = vsel %vm1052, %v8205, %v8209
      %v8212 = vshrl.u32 %v7977, 16
      %v8214 = vshll.u32 %v7977, 16
      %v8216 = vrot.slane %v8214, 1
      %v8217 = vor.u32 %v8212, %v8216
      %v8219 = vshll.u32 %v8037, 16
      %v8221 = vrot.slane %v8219, 1
      %v8222 = vsel %vm1052, %v8217, %v8221
      %v8224 = vshrl.u32 %v7978, 16
      %v8226 = vshll.u32 %v7978, 16
      %v8228 = vrot.slane %v8226, 1
      %v8229 = vor.u32 %v8224, %v8228
      %v8231 = vshll.u32 %v8038, 16
      %v8233 = vrot.slane %v8231, 1
      %v8234 = vsel %vm1052, %v8229, %v8233
      %v8236 = vshrl.u32 %v7979, 16
      %v8238 = vshll.u32 %v7979, 16
      %v8240 = vrot.slane %v8238, 1
      %v8241 = vor.u32 %v8236, %v8240
      %v8243 = vshll.u32 %v8039, 16
      %v8245 = vrot.slane %v8243, 1
      %v8246 = vsel %vm1052, %v8241, %v8245
      %v8248 = vshrl.u32 %v7980, 16
      %v8250 = vshll.u32 %v7980, 16
      %v8252 = vrot.slane %v8250, 1
      %v8253 = vor.u32 %v8248, %v8252
      %v8255 = vshll.u32 %v8040, 16
      %v8257 = vrot.slane %v8255, 1
      %v8258 = vsel %vm1052, %v8253, %v8257
      %v8260 = vshrl.u32 %v7981, 16
      %v8262 = vshll.u32 %v7981, 16
      %v8264 = vrot.slane %v8262, 1
      %v8265 = vor.u32 %v8260, %v8264
      %v8267 = vshll.u32 %v8041, 16
      %v8269 = vrot.slane %v8267, 1
      %v8270 = vsel %vm1052, %v8265, %v8269
      %v8272 = vshrl.u32 %v7982, 16
      %v8274 = vshll.u32 %v7982, 16
      %v8276 = vrot.slane %v8274, 1
      %v8277 = vor.u32 %v8272, %v8276
      %v8279 = vshll.u32 %v8042, 16
      %v8281 = vrot.slane %v8279, 1
      %v8282 = vsel %vm1052, %v8277, %v8281
      %8283 = vrot.lane.b32.xlu0 %v8054, 40
      %v8284 = vpop.permute.xlu0 %8283
      %8285 = vrot.lane.b32.xlu0 %v8066, 40
      %v8286 = vpop.permute.xlu0 %8285
      %8287 = vrot.lane.b32.xlu0 %v8078, 40
      %v8288 = vpop.permute.xlu0 %8287
      %8289 = vrot.lane.b32.xlu0 %v8090, 40
      %v8290 = vpop.permute.xlu0 %8289
      %8291 = vrot.lane.b32.xlu0 %v8102, 40
      %v8292 = vpop.permute.xlu0 %8291
      %8293 = vrot.lane.b32.xlu0 %v8114, 40
      %v8294 = vpop.permute.xlu0 %8293
      %8295 = vrot.lane.b32.xlu0 %v8126, 40
      %v8296 = vpop.permute.xlu0 %8295
      %8297 = vrot.lane.b32.xlu0 %v8138, 40
      %v8298 = vpop.permute.xlu0 %8297
      %8299 = vrot.lane.b32.xlu0 %v8150, 40
      %v8300 = vpop.permute.xlu0 %8299
      %8301 = vrot.lane.b32.xlu0 %v8162, 40
      %v8302 = vpop.permute.xlu0 %8301
      %8303 = vrot.lane.b32.xlu0 %v8174, 40
      %v8304 = vpop.permute.xlu0 %8303
      %8305 = vrot.lane.b32.xlu0 %v8186, 40
      %v8306 = vpop.permute.xlu0 %8305
      %8307 = vrot.lane.b32.xlu0 %v8198, 40
      %v8308 = vpop.permute.xlu0 %8307
      %8309 = vrot.lane.b32.xlu0 %v8210, 40
      %v8310 = vpop.permute.xlu0 %8309
      %8311 = vrot.lane.b32.xlu0 %v8222, 40
      %v8312 = vpop.permute.xlu0 %8311
      %8313 = vrot.lane.b32.xlu0 %v8234, 40
      %v8314 = vpop.permute.xlu0 %8313
      %8315 = vrot.lane.b32.xlu0 %v8246, 40
      %v8316 = vpop.permute.xlu0 %8315
      %8317 = vrot.lane.b32.xlu0 %v8258, 40
      %v8318 = vpop.permute.xlu0 %8317
      %8319 = vrot.lane.b32.xlu0 %v8270, 40
      %v8320 = vpop.permute.xlu0 %8319
      %8321 = vrot.lane.b32.xlu0 %v8282, 40
      %v8322 = vpop.permute.xlu0 %8321
      %v8343 = vunpack.c.l.b16 %v7863
      %v8344 = vunpack.c.l.b16 %v7864
      %v8345 = vunpack.c.l.b16 %v7865
      %v8346 = vunpack.c.l.b16 %v7866
      %v8347 = vunpack.c.l.b16 %v7867
      %v8348 = vunpack.c.l.b16 %v7868
      %v8349 = vunpack.c.l.b16 %v7869
      %v8350 = vunpack.c.l.b16 %v7870
      %v8351 = vunpack.c.l.b16 %v7871
      %v8352 = vunpack.c.l.b16 %v7872
      %v8353 = vunpack.c.l.b16 %v7873
      %v8354 = vunpack.c.l.b16 %v7874
      %v8355 = vunpack.c.l.b16 %v7875
      %v8356 = vunpack.c.l.b16 %v7876
      %v8357 = vunpack.c.l.b16 %v7877
      %v8358 = vunpack.c.l.b16 %v7878
      %v8359 = vunpack.c.l.b16 %v7879
      %v8360 = vunpack.c.l.b16 %v7880
      %v8361 = vunpack.c.l.b16 %v7881
      %v8362 = vunpack.c.l.b16 %v7882
      %v8363 = vpack.c.b16 %v7924, %v8343
      %v8364 = vpack.c.b16 %v7926, %v8344
      %v8365 = vpack.c.b16 %v7928, %v8345
      %v8366 = vpack.c.b16 %v7930, %v8346
      %v8367 = vpack.c.b16 %v7932, %v8347
      %v8368 = vpack.c.b16 %v7934, %v8348
      %v8369 = vpack.c.b16 %v7936, %v8349
      %v8370 = vpack.c.b16 %v7938, %v8350
      %v8371 = vpack.c.b16 %v7940, %v8351
      %v8372 = vpack.c.b16 %v7942, %v8352
      %v8373 = vpack.c.b16 %v7944, %v8353
      %v8374 = vpack.c.b16 %v7946, %v8354
      %v8375 = vpack.c.b16 %v7948, %v8355
      %v8376 = vpack.c.b16 %v7950, %v8356
      %v8377 = vpack.c.b16 %v7952, %v8357
      %v8378 = vpack.c.b16 %v7954, %v8358
      %v8379 = vpack.c.b16 %v7956, %v8359
      %v8380 = vpack.c.b16 %v7958, %v8360
      %v8381 = vpack.c.b16 %v7960, %v8361
      %v8382 = vpack.c.b16 %v7962, %v8362
      %v8383 = vrot.slane %v8363, 1
      %v8384 = vrot.slane %v8023, 1
      %v8385 = vsel %vm1393, %v8383, %v8384
      %v8386 = vrot.slane %v8364, 1
      %v8387 = vrot.slane %v8024, 1
      %v8388 = vsel %vm1393, %v8386, %v8387
      %v8389 = vrot.slane %v8365, 1
      %v8390 = vrot.slane %v8025, 1
      %v8391 = vsel %vm1393, %v8389, %v8390
      %v8392 = vrot.slane %v8366, 1
      %v8393 = vrot.slane %v8026, 1
      %v8394 = vsel %vm1393, %v8392, %v8393
      %v8395 = vrot.slane %v8367, 1
      %v8396 = vrot.slane %v8027, 1
      %v8397 = vsel %vm1393, %v8395, %v8396
      %v8398 = vrot.slane %v8368, 1
      %v8399 = vrot.slane %v8028, 1
      %v8400 = vsel %vm1393, %v8398, %v8399
      %v8401 = vrot.slane %v8369, 1
      %v8402 = vrot.slane %v8029, 1
      %v8403 = vsel %vm1393, %v8401, %v8402
      %v8404 = vrot.slane %v8370, 1
      %v8405 = vrot.slane %v8030, 1
      %v8406 = vsel %vm1393, %v8404, %v8405
      %v8407 = vrot.slane %v8371, 1
      %v8408 = vrot.slane %v8031, 1
      %v8409 = vsel %vm1393, %v8407, %v8408
      %v8410 = vrot.slane %v8372, 1
      %v8411 = vrot.slane %v8032, 1
      %v8412 = vsel %vm1393, %v8410, %v8411
      %v8413 = vrot.slane %v8373, 1
      %v8414 = vrot.slane %v8033, 1
      %v8415 = vsel %vm1393, %v8413, %v8414
      %v8416 = vrot.slane %v8374, 1
      %v8417 = vrot.slane %v8034, 1
      %v8418 = vsel %vm1393, %v8416, %v8417
      %v8419 = vrot.slane %v8375, 1
      %v8420 = vrot.slane %v8035, 1
      %v8421 = vsel %vm1393, %v8419, %v8420
      %v8422 = vrot.slane %v8376, 1
      %v8423 = vrot.slane %v8036, 1
      %v8424 = vsel %vm1393, %v8422, %v8423
      %v8425 = vrot.slane %v8377, 1
      %v8426 = vrot.slane %v8037, 1
      %v8427 = vsel %vm1393, %v8425, %v8426
      %v8428 = vrot.slane %v8378, 1
      %v8429 = vrot.slane %v8038, 1
      %v8430 = vsel %vm1393, %v8428, %v8429
      %v8431 = vrot.slane %v8379, 1
      %v8432 = vrot.slane %v8039, 1
      %v8433 = vsel %vm1393, %v8431, %v8432
      %v8434 = vrot.slane %v8380, 1
      %v8435 = vrot.slane %v8040, 1
      %v8436 = vsel %vm1393, %v8434, %v8435
      %v8437 = vrot.slane %v8381, 1
      %v8438 = vrot.slane %v8041, 1
      %v8439 = vsel %vm1393, %v8437, %v8438
      %v8440 = vrot.slane %v8382, 1
      %v8441 = vrot.slane %v8042, 1
      %v8442 = vsel %vm1393, %v8440, %v8441
      %8443 = vrot.lane.b32.xlu0 %v8385, 80
      %v8444 = vpop.permute.xlu0 %8443
      %8445 = vrot.lane.b32.xlu0 %v8388, 80
      %v8446 = vpop.permute.xlu0 %8445
      %8447 = vrot.lane.b32.xlu0 %v8391, 80
      %v8448 = vpop.permute.xlu0 %8447
      %8449 = vrot.lane.b32.xlu0 %v8394, 80
      %v8450 = vpop.permute.xlu0 %8449
      %8451 = vrot.lane.b32.xlu0 %v8397, 80
      %v8452 = vpop.permute.xlu0 %8451
      %8453 = vrot.lane.b32.xlu0 %v8400, 80
      %v8454 = vpop.permute.xlu0 %8453
      %8455 = vrot.lane.b32.xlu0 %v8403, 80
      %v8456 = vpop.permute.xlu0 %8455
      %8457 = vrot.lane.b32.xlu0 %v8406, 80
      %v8458 = vpop.permute.xlu0 %8457
      %8459 = vrot.lane.b32.xlu0 %v8409, 80
      %v8460 = vpop.permute.xlu0 %8459
      %8461 = vrot.lane.b32.xlu0 %v8412, 80
      %v8462 = vpop.permute.xlu0 %8461
      %8463 = vrot.lane.b32.xlu0 %v8415, 80
      %v8464 = vpop.permute.xlu0 %8463
      %8465 = vrot.lane.b32.xlu0 %v8418, 80
      %v8466 = vpop.permute.xlu0 %8465
      %8467 = vrot.lane.b32.xlu0 %v8421, 80
      %v8468 = vpop.permute.xlu0 %8467
      %8469 = vrot.lane.b32.xlu0 %v8424, 80
      %v8470 = vpop.permute.xlu0 %8469
      %8471 = vrot.lane.b32.xlu0 %v8427, 80
      %v8472 = vpop.permute.xlu0 %8471
      %8473 = vrot.lane.b32.xlu0 %v8430, 80
      %v8474 = vpop.permute.xlu0 %8473
      %8475 = vrot.lane.b32.xlu0 %v8433, 80
      %v8476 = vpop.permute.xlu0 %8475
      %8477 = vrot.lane.b32.xlu0 %v8436, 80
      %v8478 = vpop.permute.xlu0 %8477
      %8479 = vrot.lane.b32.xlu0 %v8439, 80
      %v8480 = vpop.permute.xlu0 %8479
      %8481 = vrot.lane.b32.xlu0 %v8442, 80
      %v8482 = vpop.permute.xlu0 %8481
      %vm8483 = vcmask 326656
      %v8485 = vsel %vm8483, %v7963, %v8284
      %v8487 = vsel %vm8483, %v7964, %v8286
      %v8489 = vsel %vm8483, %v7965, %v8288
      %v8491 = vsel %vm8483, %v7966, %v8290
      %v8493 = vsel %vm8483, %v7967, %v8292
      %v8495 = vsel %vm8483, %v7968, %v8294
      %v8497 = vsel %vm8483, %v7969, %v8296
      %v8499 = vsel %vm8483, %v7970, %v8298
      %v8501 = vsel %vm8483, %v7971, %v8300
      %v8503 = vsel %vm8483, %v7972, %v8302
      %v8505 = vsel %vm8483, %v7973, %v8304
      %v8507 = vsel %vm8483, %v7974, %v8306
      %v8509 = vsel %vm8483, %v7975, %v8308
      %v8511 = vsel %vm8483, %v7976, %v8310
      %v8513 = vsel %vm8483, %v7977, %v8312
      %v8515 = vsel %vm8483, %v7978, %v8314
      %v8517 = vsel %vm8483, %v7979, %v8316
      %v8519 = vsel %vm8483, %v7980, %v8318
      %v8521 = vsel %vm8483, %v7981, %v8320
      %v8523 = vsel %vm8483, %v7982, %v8322
      %vm8524 = vcmask 654336
      %v8526 = vsel %vm8524, %v8485, %v8444
      %v8528 = vsel %vm8524, %v8487, %v8446
      %v8530 = vsel %vm8524, %v8489, %v8448
      %v8532 = vsel %vm8524, %v8491, %v8450
      %v8534 = vsel %vm8524, %v8493, %v8452
      %v8536 = vsel %vm8524, %v8495, %v8454
      %v8538 = vsel %vm8524, %v8497, %v8456
      %v8540 = vsel %vm8524, %v8499, %v8458
      %v8542 = vsel %vm8524, %v8501, %v8460
      %v8544 = vsel %vm8524, %v8503, %v8462
      %v8546 = vsel %vm8524, %v8505, %v8464
      %v8548 = vsel %vm8524, %v8507, %v8466
      %v8550 = vsel %vm8524, %v8509, %v8468
      %v8552 = vsel %vm8524, %v8511, %v8470
      %v8554 = vsel %vm8524, %v8513, %v8472
      %v8556 = vsel %vm8524, %v8515, %v8474
      %v8558 = vsel %vm8524, %v8517, %v8476
      %v8560 = vsel %vm8524, %v8519, %v8478
      %v8562 = vsel %vm8524, %v8521, %v8480
      %v8564 = vsel %vm8524, %v8523, %v8482
      %v8565 = vld [vmem:[%s9] sm:$0xf]
      %v8566 = vld [vmem:[%s9 + $0x4] sm:$0xf]
      %v8567 = vld [vmem:[%s9 + $0x8] sm:$0xf]
      %v8568 = vld [vmem:[%s9 + $0xc] sm:$0xf]
      %v8569 = vld [vmem:[%s9 + $0x10] sm:$0xf]
      %v8570 = vld [vmem:[%s9 + $0x14] sm:$0xf]
      %v8571 = vld [vmem:[%s9 + $0x18] sm:$0xf]
      %v8572 = vld [vmem:[%s9 + $0x1c] sm:$0xf]
      %v8573 = vld [vmem:[%s9 + $0x20] sm:$0xf]
      %v8574 = vld [vmem:[%s9 + $0x24] sm:$0xf]
      %v8575 = vld [vmem:[%s9 + $0x28] sm:$0xf]
      %v8576 = vld [vmem:[%s9 + $0x2c] sm:$0xf]
      %v8577 = vld [vmem:[%s9 + $0x30] sm:$0xf]
      %v8578 = vld [vmem:[%s9 + $0x34] sm:$0xf]
      %v8579 = vld [vmem:[%s9 + $0x38] sm:$0xf]
      %v8595 = vunpack.c.l.b16 %v8565
      %v8596 = vunpack.c.l.b16 %v8566
      %v8597 = vunpack.c.l.b16 %v8567
      %v8598 = vunpack.c.l.b16 %v8568
      %v8599 = vunpack.c.l.b16 %v8569
      %v8600 = vunpack.c.l.b16 %v8570
      %v8601 = vunpack.c.l.b16 %v8571
      %v8602 = vunpack.c.l.b16 %v8572
      %v8603 = vunpack.c.l.b16 %v8573
      %v8604 = vunpack.c.l.b16 %v8574
      %v8605 = vunpack.c.l.b16 %v8575
      %v8606 = vunpack.c.l.b16 %v8576
      %v8607 = vunpack.c.l.b16 %v8577
      %v8608 = vunpack.c.l.b16 %v8578
      %v8609 = vunpack.c.l.b16 %v8579
      %v8610 = vpack.c.b16 %v8596, %v8595
      %v8611 = vpack.c.b16 %v8598, %v8597
      %v8612 = vpack.c.b16 %v8600, %v8599
      %v8613 = vpack.c.b16 %v8602, %v8601
      %v8614 = vpack.c.b16 %v8604, %v8603
      %v8615 = vpack.c.b16 %v8606, %v8605
      %v8616 = vpack.c.b16 %v8608, %v8607
      %v8617 = vpack.c.b16 %v8609, %v8609
      %vm8625 = vcmask 982016
      %v8626 = vsel %vm8625, %v8526, 0
      %v8628 = vsel %vm8625, %v8528, 0
      %v8630 = vsel %vm8625, %v8530, 0
      %v8632 = vsel %vm8625, %v8532, 0
      %v8634 = vsel %vm8625, %v8534, 0
      %v8636 = vsel %vm8625, %v8536, 0
      %v8638 = vsel %vm8625, %v8538, 0
      %v8640 = vsel %vm8625, %v8540, 0
      %v8642 = vsel %vm8625, %v8542, 0
      %v8644 = vsel %vm8625, %v8544, 0
      %v8646 = vsel %vm8625, %v8546, 0
      %v8648 = vsel %vm8625, %v8548, 0
      %v8650 = vsel %vm8625, %v8550, 0
      %v8652 = vsel %vm8625, %v8552, 0
      %v8654 = vsel %vm8625, %v8554, 0
      %v8656 = vsel %vm8625, %v8556, 0
      %v8658 = vsel %vm8625, %v8558, 0
      %v8660 = vsel %vm8625, %v8560, 0
      %v8662 = vsel %vm8625, %v8562, 0
      %v8664 = vsel %vm8625, %v8564, 0
      %v8667 = vsel %vm3971, %v8617, 0
      %8669 = vmatprep.subr.bf16.mxu0 0
      %8670 = vmatpush1.bf16.msra.mxu0 %v8610
      %8671 = vmatprep.subr.bf16.mxu0 0
      %8672 = vmatpush1.bf16.msra.mxu0 %v8611
      %8673 = vmatprep.subr.bf16.mxu0 0
      %8674 = vmatpush1.bf16.msra.mxu0 %v8612
      %8675 = vmatprep.subr.bf16.mxu0 0
      %8676 = vmatpush1.bf16.msra.mxu0 %v8613
      %8677 = vmatprep.subr.bf16.mxu0 0
      %8678 = vmatpush1.bf16.msra.mxu0 %v8614
      %8679 = vmatprep.subr.bf16.mxu0 0
      %8680 = vmatpush1.bf16.msra.mxu0 %v8615
      %8681 = vmatprep.subr.bf16.mxu0 0
      %8682 = vmatpush1.bf16.msra.mxu0 %v8616
      %8683 = vmatprep.subr.bf16.mxu0 0
      %8684 = vmatpush1.bf16.msra.mxu0 %v8667
      %8685 = vmatprep.subr.bf16.mxu0 0
      %8686 = vmatpush1.bf16.msra.mxu0 0
      %8687 = vmatprep.subr.bf16.mxu0 0
      %8688 = vmatpush1.bf16.msra.mxu0 0
      %8689 = vmatprep.subr.bf16.mxu0 0
      %8690 = vmatpush1.bf16.msra.mxu0 0
      %8691 = vmatprep.subr.bf16.mxu0 0
      %8692 = vmatpush1.bf16.msra.mxu0 0
      %8693 = vmatprep.subr.bf16.mxu0 0
      %8694 = vmatpush1.bf16.msra.mxu0 0
      %8695 = vmatprep.subr.bf16.mxu0 0
      %8696 = vmatpush1.bf16.msra.mxu0 0
      %8697 = vmatprep.subr.bf16.mxu0 0
      %8698 = vmatpush1.bf16.msra.mxu0 0
      %8699 = vmatprep.subr.bf16.mxu0 0
      %8700 = vmatpush1.bf16.msra.mxu0 0
      %8701 = vmatprep.mubr.bf16.mxu0 0
      %8702 = vmatmul.mubr.bf16.gmra.mrb[0].mxu0 %v8626
      %v8703 = vpop.f32.mrb[0].mxu0
      %v8704 = vadd.f32 0.0, %v8703
      %v8705 = vpop.f32.mrb[0].mxu0
      %v8706 = vpop.f32.mrb[0].mxu0
      %v8707 = vadd.f32 0.0, %v8706
      %v8708 = vpop.f32.mrb[0].mxu0
      %8709 = vmatprep.mubr.bf16.mxu0 0
      %8710 = vmatmul.mubr.bf16.gmra.mrb[0].mxu0 %v8628
      %v8711 = vpop.f32.mrb[0].mxu0
      %v8712 = vadd.f32 0.0, %v8711
      %v8713 = vpop.f32.mrb[0].mxu0
      %v8714 = vpop.f32.mrb[0].mxu0
      %v8715 = vadd.f32 0.0, %v8714
      %v8716 = vpop.f32.mrb[0].mxu0
      %8717 = vmatprep.mubr.bf16.mxu0 0
      %8718 = vmatmul.mubr.bf16.gmra.mrb[0].mxu0 %v8630
      %v8719 = vpop.f32.mrb[0].mxu0
      %v8720 = vadd.f32 0.0, %v8719
      %v8721 = vpop.f32.mrb[0].mxu0
      %v8722 = vpop.f32.mrb[0].mxu0
      %v8723 = vadd.f32 0.0, %v8722
      %v8724 = vpop.f32.mrb[0].mxu0
      %8725 = vmatprep.mubr.bf16.mxu0 0
      %8726 = vmatmul.mubr.bf16.gmra.mrb[0].mxu0 %v8632
      %v8727 = vpop.f32.mrb[0].mxu0
      %v8728 = vadd.f32 0.0, %v8727
      %v8729 = vpop.f32.mrb[0].mxu0
      %v8730 = vpop.f32.mrb[0].mxu0
      %v8731 = vadd.f32 0.0, %v8730
      %v8732 = vpop.f32.mrb[0].mxu0
      %8733 = vmatprep.mubr.bf16.mxu0 0
      %8734 = vmatmul.mubr.bf16.gmra.mrb[0].mxu0 %v8634
      %v8735 = vpop.f32.mrb[0].mxu0
      %v8736 = vadd.f32 0.0, %v8735
      %v8737 = vpop.f32.mrb[0].mxu0
      %v8738 = vpop.f32.mrb[0].mxu0
      %v8739 = vadd.f32 0.0, %v8738
      %v8740 = vpop.f32.mrb[0].mxu0
      %8741 = vmatprep.mubr.bf16.mxu0 0
      %8742 = vmatmul.mubr.bf16.gmra.mrb[0].mxu0 %v8636
      %v8743 = vpop.f32.mrb[0].mxu0
      %v8744 = vadd.f32 0.0, %v8743
      %v8745 = vpop.f32.mrb[0].mxu0
      %v8746 = vpop.f32.mrb[0].mxu0
      %v8747 = vadd.f32 0.0, %v8746
      %v8748 = vpop.f32.mrb[0].mxu0
      %8749 = vmatprep.mubr.bf16.mxu0 0
      %8750 = vmatmul.mubr.bf16.gmra.mrb[0].mxu0 %v8638
      %v8751 = vpop.f32.mrb[0].mxu0
      %v8752 = vadd.f32 0.0, %v8751
      %v8753 = vpop.f32.mrb[0].mxu0
      %v8754 = vpop.f32.mrb[0].mxu0
      %v8755 = vadd.f32 0.0, %v8754
      %v8756 = vpop.f32.mrb[0].mxu0
      %8757 = vmatprep.mubr.bf16.mxu0 0
      %8758 = vmatmul.mubr.bf16.gmra.mrb[0].mxu0 %v8640
      %v8759 = vpop.f32.mrb[0].mxu0
      %v8760 = vadd.f32 0.0, %v8759
      %v8761 = vpop.f32.mrb[0].mxu0
      %v8762 = vpop.f32.mrb[0].mxu0
      %v8763 = vadd.f32 0.0, %v8762
      %v8764 = vpop.f32.mrb[0].mxu0
      %8765 = vmatprep.mubr.bf16.mxu0 0
      %8766 = vmatmul.mubr.bf16.gmra.mrb[0].mxu0 %v8642
      %v8767 = vpop.f32.mrb[0].mxu0
      %v8768 = vadd.f32 0.0, %v8767
      %v8769 = vpop.f32.mrb[0].mxu0
      %v8770 = vpop.f32.mrb[0].mxu0
      %v8771 = vadd.f32 0.0, %v8770
      %v8772 = vpop.f32.mrb[0].mxu0
      %8773 = vmatprep.mubr.bf16.mxu0 0
      %8774 = vmatmul.mubr.bf16.gmra.mrb[0].mxu0 %v8644
      %v8775 = vpop.f32.mrb[0].mxu0
      %v8776 = vadd.f32 0.0, %v8775
      %v8777 = vpop.f32.mrb[0].mxu0
      %v8778 = vpop.f32.mrb[0].mxu0
      %v8779 = vadd.f32 0.0, %v8778
      %v8780 = vpop.f32.mrb[0].mxu0
      %8781 = vmatprep.mubr.bf16.mxu0 0
      %8782 = vmatmul.mubr.bf16.gmra.mrb[0].mxu0 %v8646
      %v8783 = vpop.f32.mrb[0].mxu0
      %v8784 = vadd.f32 0.0, %v8783
      %v8785 = vpop.f32.mrb[0].mxu0
      %v8786 = vpop.f32.mrb[0].mxu0
      %v8787 = vadd.f32 0.0, %v8786
      %v8788 = vpop.f32.mrb[0].mxu0
      %8789 = vmatprep.mubr.bf16.mxu0 0
      %8790 = vmatmul.mubr.bf16.gmra.mrb[0].mxu0 %v8648
      %v8791 = vpop.f32.mrb[0].mxu0
      %v8792 = vadd.f32 0.0, %v8791
      %v8793 = vpop.f32.mrb[0].mxu0
      %v8794 = vpop.f32.mrb[0].mxu0
      %v8795 = vadd.f32 0.0, %v8794
      %v8796 = vpop.f32.mrb[0].mxu0
      %8797 = vmatprep.mubr.bf16.mxu0 0
      %8798 = vmatmul.mubr.bf16.gmra.mrb[0].mxu0 %v8650
      %v8799 = vpop.f32.mrb[0].mxu0
      %v8800 = vadd.f32 0.0, %v8799
      %v8801 = vpop.f32.mrb[0].mxu0
      %v8802 = vpop.f32.mrb[0].mxu0
      %v8803 = vadd.f32 0.0, %v8802
      %v8804 = vpop.f32.mrb[0].mxu0
      %8805 = vmatprep.mubr.bf16.mxu0 0
      %8806 = vmatmul.mubr.bf16.gmra.mrb[0].mxu0 %v8652
      %v8807 = vpop.f32.mrb[0].mxu0
      %v8808 = vadd.f32 0.0, %v8807
      %v8809 = vpop.f32.mrb[0].mxu0
      %v8810 = vpop.f32.mrb[0].mxu0
      %v8811 = vadd.f32 0.0, %v8810
      %v8812 = vpop.f32.mrb[0].mxu0
      %8813 = vmatprep.mubr.bf16.mxu0 0
      %8814 = vmatmul.mubr.bf16.gmra.mrb[0].mxu0 %v8654
      %v8815 = vpop.f32.mrb[0].mxu0
      %v8816 = vadd.f32 0.0, %v8815
      %v8817 = vpop.f32.mrb[0].mxu0
      %v8818 = vpop.f32.mrb[0].mxu0
      %v8819 = vadd.f32 0.0, %v8818
      %v8820 = vpop.f32.mrb[0].mxu0
      %8821 = vmatprep.mubr.bf16.mxu0 0
      %8822 = vmatmul.mubr.bf16.gmra.mrb[0].mxu0 %v8656
      %v8823 = vpop.f32.mrb[0].mxu0
      %v8824 = vadd.f32 0.0, %v8823
      %v8825 = vpop.f32.mrb[0].mxu0
      %v8826 = vpop.f32.mrb[0].mxu0
      %v8827 = vadd.f32 0.0, %v8826
      %v8828 = vpop.f32.mrb[0].mxu0
      %8829 = vmatprep.mubr.bf16.mxu0 0
      %8830 = vmatmul.mubr.bf16.gmra.mrb[0].mxu0 %v8658
      %v8831 = vpop.f32.mrb[0].mxu0
      %v8832 = vadd.f32 0.0, %v8831
      %v8833 = vpop.f32.mrb[0].mxu0
      %v8834 = vpop.f32.mrb[0].mxu0
      %v8835 = vadd.f32 0.0, %v8834
      %v8836 = vpop.f32.mrb[0].mxu0
      %8837 = vmatprep.mubr.bf16.mxu0 0
      %8838 = vmatmul.mubr.bf16.gmra.mrb[0].mxu0 %v8660
      %v8839 = vpop.f32.mrb[0].mxu0
      %v8840 = vadd.f32 0.0, %v8839
      %v8841 = vpop.f32.mrb[0].mxu0
      %v8842 = vpop.f32.mrb[0].mxu0
      %v8843 = vadd.f32 0.0, %v8842
      %v8844 = vpop.f32.mrb[0].mxu0
      %8845 = vmatprep.mubr.bf16.mxu0 0
      %8846 = vmatmul.mubr.bf16.gmra.mrb[0].mxu0 %v8662
      %v8847 = vpop.f32.mrb[0].mxu0
      %v8848 = vadd.f32 0.0, %v8847
      %v8849 = vpop.f32.mrb[0].mxu0
      %v8850 = vpop.f32.mrb[0].mxu0
      %v8851 = vadd.f32 0.0, %v8850
      %v8852 = vpop.f32.mrb[0].mxu0
      %8853 = vmatprep.mubr.bf16.mxu0 0
      %8854 = vmatmul.mubr.bf16.gmra.mrb[0].mxu0 %v8664
      %v8855 = vpop.f32.mrb[0].mxu0
      %v8856 = vadd.f32 0.0, %v8855
      %v8857 = vpop.f32.mrb[0].mxu0
      %v8858 = vpop.f32.mrb[0].mxu0
      %v8859 = vadd.f32 0.0, %v8858
      %v8860 = vpop.f32.mrb[0].mxu0
      %8861 = vdwg.mxu0
      %8898 = vrot.lane.b32.xlu0 %v8712, 120
      %v8899 = vpop.permute.xlu0 %8898
      %8900 = vrot.lane.b32.xlu0 %v8715, 120
      %v8901 = vpop.permute.xlu0 %8900
      %8902 = vrot.lane.b32.xlu0 %v8720, 120
      %v8903 = vpop.permute.xlu0 %8902
      %8904 = vrot.lane.b32.xlu0 %v8723, 120
      %v8905 = vpop.permute.xlu0 %8904
      %8906 = vrot.lane.b32.xlu0 %v8728, 120
      %v8907 = vpop.permute.xlu0 %8906
      %8908 = vrot.lane.b32.xlu0 %v8731, 120
      %v8909 = vpop.permute.xlu0 %8908
      %8910 = vrot.lane.b32.xlu0 %v8736, 120
      %v8911 = vpop.permute.xlu0 %8910
      %8912 = vrot.lane.b32.xlu0 %v8739, 120
      %v8913 = vpop.permute.xlu0 %8912
      %8914 = vrot.lane.b32.xlu0 %v8744, 120
      %v8915 = vpop.permute.xlu0 %8914
      %8916 = vrot.lane.b32.xlu0 %v8747, 120
      %v8917 = vpop.permute.xlu0 %8916
      %8918 = vrot.lane.b32.xlu0 %v8752, 120
      %v8919 = vpop.permute.xlu0 %8918
      %8920 = vrot.lane.b32.xlu0 %v8755, 120
      %v8921 = vpop.permute.xlu0 %8920
      %8922 = vrot.lane.b32.xlu0 %v8760, 120
      %v8923 = vpop.permute.xlu0 %8922
      %8924 = vrot.lane.b32.xlu0 %v8763, 120
      %v8925 = vpop.permute.xlu0 %8924
      %8926 = vrot.lane.b32.xlu0 %v8768, 120
      %v8927 = vpop.permute.xlu0 %8926
      %8928 = vrot.lane.b32.xlu0 %v8771, 120
      %v8929 = vpop.permute.xlu0 %8928
      %8930 = vrot.lane.b32.xlu0 %v8776, 120
      %v8931 = vpop.permute.xlu0 %8930
      %8932 = vrot.lane.b32.xlu0 %v8779, 120
      %v8933 = vpop.permute.xlu0 %8932
      %8934 = vrot.lane.b32.xlu0 %v8784, 120
      %v8935 = vpop.permute.xlu0 %8934
      %8936 = vrot.lane.b32.xlu0 %v8787, 120
      %v8937 = vpop.permute.xlu0 %8936
      %8938 = vrot.lane.b32.xlu0 %v8792, 120
      %v8939 = vpop.permute.xlu0 %8938
      %8940 = vrot.lane.b32.xlu0 %v8795, 120
      %v8941 = vpop.permute.xlu0 %8940
      %8942 = vrot.lane.b32.xlu0 %v8800, 120
      %v8943 = vpop.permute.xlu0 %8942
      %8944 = vrot.lane.b32.xlu0 %v8803, 120
      %v8945 = vpop.permute.xlu0 %8944
      %8946 = vrot.lane.b32.xlu0 %v8808, 120
      %v8947 = vpop.permute.xlu0 %8946
      %8948 = vrot.lane.b32.xlu0 %v8811, 120
      %v8949 = vpop.permute.xlu0 %8948
      %8950 = vrot.lane.b32.xlu0 %v8816, 120
      %v8951 = vpop.permute.xlu0 %8950
      %8952 = vrot.lane.b32.xlu0 %v8819, 120
      %v8953 = vpop.permute.xlu0 %8952
      %8954 = vrot.lane.b32.xlu0 %v8824, 120
      %v8955 = vpop.permute.xlu0 %8954
      %8956 = vrot.lane.b32.xlu0 %v8827, 120
      %v8957 = vpop.permute.xlu0 %8956
      %8958 = vrot.lane.b32.xlu0 %v8832, 120
      %v8959 = vpop.permute.xlu0 %8958
      %8960 = vrot.lane.b32.xlu0 %v8835, 120
      %v8961 = vpop.permute.xlu0 %8960
      %8962 = vrot.lane.b32.xlu0 %v8840, 120
      %v8963 = vpop.permute.xlu0 %8962
      %8964 = vrot.lane.b32.xlu0 %v8843, 120
      %v8965 = vpop.permute.xlu0 %8964
      %8966 = vrot.lane.b32.xlu0 %v8848, 120
      %v8967 = vpop.permute.xlu0 %8966
      %8968 = vrot.lane.b32.xlu0 %v8851, 120
      %v8969 = vpop.permute.xlu0 %8968
      %v9006 = vadd.f32 %v8704, %v8899
      %v9007 = vadd.f32 %v8707, %v8901
      %v9008 = vadd.f32 %v8712, %v8903
      %v9009 = vadd.f32 %v8715, %v8905
      %v9010 = vadd.f32 %v8720, %v8907
      %v9011 = vadd.f32 %v8723, %v8909
      %v9012 = vadd.f32 %v8728, %v8911
      %v9013 = vadd.f32 %v8731, %v8913
      %v9014 = vadd.f32 %v8736, %v8915
      %v9015 = vadd.f32 %v8739, %v8917
      %v9016 = vadd.f32 %v8744, %v8919
      %v9017 = vadd.f32 %v8747, %v8921
      %v9018 = vadd.f32 %v8752, %v8923
      %v9019 = vadd.f32 %v8755, %v8925
      %v9020 = vadd.f32 %v8760, %v8927
      %v9021 = vadd.f32 %v8763, %v8929
      %v9022 = vadd.f32 %v8768, %v8931
      %v9023 = vadd.f32 %v8771, %v8933
      %v9024 = vadd.f32 %v8776, %v8935
      %v9025 = vadd.f32 %v8779, %v8937
      %v9026 = vadd.f32 %v8784, %v8939
      %v9027 = vadd.f32 %v8787, %v8941
      %v9028 = vadd.f32 %v8792, %v8943
      %v9029 = vadd.f32 %v8795, %v8945
      %v9030 = vadd.f32 %v8800, %v8947
      %v9031 = vadd.f32 %v8803, %v8949
      %v9032 = vadd.f32 %v8808, %v8951
      %v9033 = vadd.f32 %v8811, %v8953
      %v9034 = vadd.f32 %v8816, %v8955
      %v9035 = vadd.f32 %v8819, %v8957
      %v9036 = vadd.f32 %v8824, %v8959
      %v9037 = vadd.f32 %v8827, %v8961
      %v9038 = vadd.f32 %v8832, %v8963
      %v9039 = vadd.f32 %v8835, %v8965
      %v9040 = vadd.f32 %v8840, %v8967
      %v9041 = vadd.f32 %v8843, %v8969
      %v9042 = vld [vmem:[%s10] sm:$0x1]
      %v9044 = vlaneseq
      %v9045 = vshrl.u32 %v9044, 7
      %v9046 = vsub.s32 0, %v9045
      %v9047 = vrot.slane %v9042, %v9046
      %9048 = vrot.lane.b32.xlu0 %v9047, 16
      %v9049 = vpop.permute.xlu0 %9048
      %v9051 = vadd.f32 %v8720, %v9049
      %v9052 = vadd.f32 %v8723, %v9049
      %v9053 = vadd.f32 %v8728, %v9049
      %v9054 = vadd.f32 %v8731, %v9049
      %v9055 = vadd.f32 %v8736, %v9049
      %v9056 = vadd.f32 %v8739, %v9049
      %v9057 = vadd.f32 %v8744, %v9049
      %v9058 = vadd.f32 %v8747, %v9049
      %v9059 = vadd.f32 %v8752, %v9049
      %v9060 = vadd.f32 %v8755, %v9049
      %v9061 = vadd.f32 %v8760, %v9049
      %v9062 = vadd.f32 %v8763, %v9049
      %v9063 = vadd.f32 %v8768, %v9049
      %v9064 = vadd.f32 %v8771, %v9049
      %v9065 = vadd.f32 %v8776, %v9049
      %v9066 = vadd.f32 %v8779, %v9049
      %v9067 = vadd.f32 %v8784, %v9049
      %v9068 = vadd.f32 %v8787, %v9049
      %v9069 = vadd.f32 %v8792, %v9049
      %v9070 = vadd.f32 %v8795, %v9049
      %v9071 = vadd.f32 %v8800, %v9049
      %v9072 = vadd.f32 %v8803, %v9049
      %v9073 = vadd.f32 %v8808, %v9049
      %v9074 = vadd.f32 %v8811, %v9049
      %v9075 = vadd.f32 %v8816, %v9049
      %v9076 = vadd.f32 %v8819, %v9049
      %v9077 = vadd.f32 %v8824, %v9049
      %v9078 = vadd.f32 %v8827, %v9049
      %v9079 = vadd.f32 %v8832, %v9049
      %v9080 = vadd.f32 %v8835, %v9049
      %v9081 = vadd.f32 %v8840, %v9049
      %v9082 = vadd.f32 %v8843, %v9049
      %v9083 = vadd.f32 %v8848, %v9049
      %v9084 = vadd.f32 %v8851, %v9049
      %v9085 = vadd.f32 %v8856, %v9049
      %v9086 = vadd.f32 %v8859, %v9049
      %9123 = vrot.lane.b32.xlu0 %v9051, 112
      %v9124 = vpop.permute.xlu0 %9123
      %9125 = vrot.lane.b32.xlu0 %v9052, 112
      %v9126 = vpop.permute.xlu0 %9125
      %9127 = vrot.lane.b32.xlu0 %v9053, 112
      %v9128 = vpop.permute.xlu0 %9127
      %9129 = vrot.lane.b32.xlu0 %v9054, 112
      %v9130 = vpop.permute.xlu0 %9129
      %9131 = vrot.lane.b32.xlu0 %v9055, 112
      %v9132 = vpop.permute.xlu0 %9131
      %9133 = vrot.lane.b32.xlu0 %v9056, 112
      %v9134 = vpop.permute.xlu0 %9133
      %9135 = vrot.lane.b32.xlu0 %v9057, 112
      %v9136 = vpop.permute.xlu0 %9135
      %9137 = vrot.lane.b32.xlu0 %v9058, 112
      %v9138 = vpop.permute.xlu0 %9137
      %9139 = vrot.lane.b32.xlu0 %v9059, 112
      %v9140 = vpop.permute.xlu0 %9139
      %9141 = vrot.lane.b32.xlu0 %v9060, 112
      %v9142 = vpop.permute.xlu0 %9141
      %9143 = vrot.lane.b32.xlu0 %v9061, 112
      %v9144 = vpop.permute.xlu0 %9143
      %9145 = vrot.lane.b32.xlu0 %v9062, 112
      %v9146 = vpop.permute.xlu0 %9145
      %9147 = vrot.lane.b32.xlu0 %v9063, 112
      %v9148 = vpop.permute.xlu0 %9147
      %9149 = vrot.lane.b32.xlu0 %v9064, 112
      %v9150 = vpop.permute.xlu0 %9149
      %9151 = vrot.lane.b32.xlu0 %v9065, 112
      %v9152 = vpop.permute.xlu0 %9151
      %9153 = vrot.lane.b32.xlu0 %v9066, 112
      %v9154 = vpop.permute.xlu0 %9153
      %9155 = vrot.lane.b32.xlu0 %v9067, 112
      %v9156 = vpop.permute.xlu0 %9155
      %9157 = vrot.lane.b32.xlu0 %v9068, 112
      %v9158 = vpop.permute.xlu0 %9157
      %9159 = vrot.lane.b32.xlu0 %v9069, 112
      %v9160 = vpop.permute.xlu0 %9159
      %9161 = vrot.lane.b32.xlu0 %v9070, 112
      %v9162 = vpop.permute.xlu0 %9161
      %9163 = vrot.lane.b32.xlu0 %v9071, 112
      %v9164 = vpop.permute.xlu0 %9163
      %9165 = vrot.lane.b32.xlu0 %v9072, 112
      %v9166 = vpop.permute.xlu0 %9165
      %9167 = vrot.lane.b32.xlu0 %v9073, 112
      %v9168 = vpop.permute.xlu0 %9167
      %9169 = vrot.lane.b32.xlu0 %v9074, 112
      %v9170 = vpop.permute.xlu0 %9169
      %9171 = vrot.lane.b32.xlu0 %v9075, 112
      %v9172 = vpop.permute.xlu0 %9171
      %9173 = vrot.lane.b32.xlu0 %v9076, 112
      %v9174 = vpop.permute.xlu0 %9173
      %9175 = vrot.lane.b32.xlu0 %v9077, 112
      %v9176 = vpop.permute.xlu0 %9175
      %9177 = vrot.lane.b32.xlu0 %v9078, 112
      %v9178 = vpop.permute.xlu0 %9177
      %9179 = vrot.lane.b32.xlu0 %v9079, 112
      %v9180 = vpop.permute.xlu0 %9179
      %9181 = vrot.lane.b32.xlu0 %v9080, 112
      %v9182 = vpop.permute.xlu0 %9181
      %9183 = vrot.lane.b32.xlu0 %v9081, 112
      %v9184 = vpop.permute.xlu0 %9183
      %9185 = vrot.lane.b32.xlu0 %v9082, 112
      %v9186 = vpop.permute.xlu0 %9185
      %9187 = vrot.lane.b32.xlu0 %v9083, 112
      %v9188 = vpop.permute.xlu0 %9187
      %9189 = vrot.lane.b32.xlu0 %v9084, 112
      %v9190 = vpop.permute.xlu0 %9189
      %9191 = vrot.lane.b32.xlu0 %v9085, 112
      %v9192 = vpop.permute.xlu0 %9191
      %9193 = vrot.lane.b32.xlu0 %v9086, 112
      %v9194 = vpop.permute.xlu0 %9193
      %v9231 = vadd.f32 %v9006, %v9124
      %v9232 = vadd.f32 %v9007, %v9126
      %v9233 = vadd.f32 %v9008, %v9128
      %v9234 = vadd.f32 %v9009, %v9130
      %v9235 = vadd.f32 %v9010, %v9132
      %v9236 = vadd.f32 %v9011, %v9134
      %v9237 = vadd.f32 %v9012, %v9136
      %v9238 = vadd.f32 %v9013, %v9138
      %v9239 = vadd.f32 %v9014, %v9140
      %v9240 = vadd.f32 %v9015, %v9142
      %v9241 = vadd.f32 %v9016, %v9144
      %v9242 = vadd.f32 %v9017, %v9146
      %v9243 = vadd.f32 %v9018, %v9148
      %v9244 = vadd.f32 %v9019, %v9150
      %v9245 = vadd.f32 %v9020, %v9152
      %v9246 = vadd.f32 %v9021, %v9154
      %v9247 = vadd.f32 %v9022, %v9156
      %v9248 = vadd.f32 %v9023, %v9158
      %v9249 = vadd.f32 %v9024, %v9160
      %v9250 = vadd.f32 %v9025, %v9162
      %v9251 = vadd.f32 %v9026, %v9164
      %v9252 = vadd.f32 %v9027, %v9166
      %v9253 = vadd.f32 %v9028, %v9168
      %v9254 = vadd.f32 %v9029, %v9170
      %v9255 = vadd.f32 %v9030, %v9172
      %v9256 = vadd.f32 %v9031, %v9174
      %v9257 = vadd.f32 %v9032, %v9176
      %v9258 = vadd.f32 %v9033, %v9178
      %v9259 = vadd.f32 %v9034, %v9180
      %v9260 = vadd.f32 %v9035, %v9182
      %v9261 = vadd.f32 %v9036, %v9184
      %v9262 = vadd.f32 %v9037, %v9186
      %v9263 = vadd.f32 %v9038, %v9188
      %v9264 = vadd.f32 %v9039, %v9190
      %v9265 = vadd.f32 %v9040, %v9192
      %v9266 = vadd.f32 %v9041, %v9194
      %vm9267 = vcmp.gt.f32.partialorder %v9231, 0.0
      %vm9268 = vcmp.gt.f32.partialorder %v9232, 0.0
      %vm9269 = vcmp.gt.f32.partialorder %v9233, 0.0
      %vm9270 = vcmp.gt.f32.partialorder %v9234, 0.0
      %vm9271 = vcmp.gt.f32.partialorder %v9235, 0.0
      %vm9272 = vcmp.gt.f32.partialorder %v9236, 0.0
      %vm9273 = vcmp.gt.f32.partialorder %v9237, 0.0
      %vm9274 = vcmp.gt.f32.partialorder %v9238, 0.0
      %vm9275 = vcmp.gt.f32.partialorder %v9239, 0.0
      %vm9276 = vcmp.gt.f32.partialorder %v9240, 0.0
      %vm9277 = vcmp.gt.f32.partialorder %v9241, 0.0
      %vm9278 = vcmp.gt.f32.partialorder %v9242, 0.0
      %vm9279 = vcmp.gt.f32.partialorder %v9243, 0.0
      %vm9280 = vcmp.gt.f32.partialorder %v9244, 0.0
      %vm9281 = vcmp.gt.f32.partialorder %v9245, 0.0
      %vm9282 = vcmp.gt.f32.partialorder %v9246, 0.0
      %vm9283 = vcmp.gt.f32.partialorder %v9247, 0.0
      %vm9284 = vcmp.gt.f32.partialorder %v9248, 0.0
      %vm9285 = vcmp.gt.f32.partialorder %v9249, 0.0
      %vm9286 = vcmp.gt.f32.partialorder %v9250, 0.0
      %vm9287 = vcmp.gt.f32.partialorder %v9251, 0.0
      %vm9288 = vcmp.gt.f32.partialorder %v9252, 0.0
      %vm9289 = vcmp.gt.f32.partialorder %v9253, 0.0
      %vm9290 = vcmp.gt.f32.partialorder %v9254, 0.0
      %vm9291 = vcmp.gt.f32.partialorder %v9255, 0.0
      %vm9292 = vcmp.gt.f32.partialorder %v9256, 0.0
      %vm9293 = vcmp.gt.f32.partialorder %v9257, 0.0
      %vm9294 = vcmp.gt.f32.partialorder %v9258, 0.0
      %vm9295 = vcmp.gt.f32.partialorder %v9259, 0.0
      %vm9296 = vcmp.gt.f32.partialorder %v9260, 0.0
      %vm9297 = vcmp.gt.f32.partialorder %v9261, 0.0
      %vm9298 = vcmp.gt.f32.partialorder %v9262, 0.0
      %vm9299 = vcmp.gt.f32.partialorder %v9263, 0.0
      %vm9300 = vcmp.gt.f32.partialorder %v9264, 0.0
      %vm9301 = vcmp.gt.f32.partialorder %v9265, 0.0
      %vm9302 = vcmp.gt.f32.partialorder %v9266, 0.0
      %v9303 = vmul.f32 %v9231, 0.2
      %v9304 = vmul.f32 %v9232, 0.2
      %v9305 = vmul.f32 %v9233, 0.2
      %v9306 = vmul.f32 %v9234, 0.2
      %v9307 = vmul.f32 %v9235, 0.2
      %v9308 = vmul.f32 %v9236, 0.2
      %v9309 = vmul.f32 %v9237, 0.2
      %v9310 = vmul.f32 %v9238, 0.2
      %v9311 = vmul.f32 %v9239, 0.2
      %v9312 = vmul.f32 %v9240, 0.2
      %v9313 = vmul.f32 %v9241, 0.2
      %v9314 = vmul.f32 %v9242, 0.2
      %v9315 = vmul.f32 %v9243, 0.2
      %v9316 = vmul.f32 %v9244, 0.2
      %v9317 = vmul.f32 %v9245, 0.2
      %v9318 = vmul.f32 %v9246, 0.2
      %v9319 = vmul.f32 %v9247, 0.2
      %v9320 = vmul.f32 %v9248, 0.2
      %v9321 = vmul.f32 %v9249, 0.2
      %v9322 = vmul.f32 %v9250, 0.2
      %v9323 = vmul.f32 %v9251, 0.2
      %v9324 = vmul.f32 %v9252, 0.2
      %v9325 = vmul.f32 %v9253, 0.2
      %v9326 = vmul.f32 %v9254, 0.2
      %v9327 = vmul.f32 %v9255, 0.2
      %v9328 = vmul.f32 %v9256, 0.2
      %v9329 = vmul.f32 %v9257, 0.2
      %v9330 = vmul.f32 %v9258, 0.2
      %v9331 = vmul.f32 %v9259, 0.2
      %v9332 = vmul.f32 %v9260, 0.2
      %v9333 = vmul.f32 %v9261, 0.2
      %v9334 = vmul.f32 %v9262, 0.2
      %v9335 = vmul.f32 %v9263, 0.2
      %v9336 = vmul.f32 %v9264, 0.2
      %v9337 = vmul.f32 %v9265, 0.2
      %v9338 = vmul.f32 %v9266, 0.2
      %v9339 = vsel %vm9267, %v9231, %v9303
      %v9340 = vsel %vm9268, %v9232, %v9304
      %v9341 = vsel %vm9269, %v9233, %v9305
      %v9342 = vsel %vm9270, %v9234, %v9306
      %v9343 = vsel %vm9271, %v9235, %v9307
      %v9344 = vsel %vm9272, %v9236, %v9308
      %v9345 = vsel %vm9273, %v9237, %v9309
      %v9346 = vsel %vm9274, %v9238, %v9310
      %v9347 = vsel %vm9275, %v9239, %v9311
      %v9348 = vsel %vm9276, %v9240, %v9312
      %v9349 = vsel %vm9277, %v9241, %v9313
      %v9350 = vsel %vm9278, %v9242, %v9314
      %v9351 = vsel %vm9279, %v9243, %v9315
      %v9352 = vsel %vm9280, %v9244, %v9316
      %v9353 = vsel %vm9281, %v9245, %v9317
      %v9354 = vsel %vm9282, %v9246, %v9318
      %v9355 = vsel %vm9283, %v9247, %v9319
      %v9356 = vsel %vm9284, %v9248, %v9320
      %v9357 = vsel %vm9285, %v9249, %v9321
      %v9358 = vsel %vm9286, %v9250, %v9322
      %v9359 = vsel %vm9287, %v9251, %v9323
      %v9360 = vsel %vm9288, %v9252, %v9324
      %v9361 = vsel %vm9289, %v9253, %v9325
      %v9362 = vsel %vm9290, %v9254, %v9326
      %v9363 = vsel %vm9291, %v9255, %v9327
      %v9364 = vsel %vm9292, %v9256, %v9328
      %v9365 = vsel %vm9293, %v9257, %v9329
      %v9366 = vsel %vm9294, %v9258, %v9330
      %v9367 = vsel %vm9295, %v9259, %v9331
      %v9368 = vsel %vm9296, %v9260, %v9332
      %v9369 = vsel %vm9297, %v9261, %v9333
      %v9370 = vsel %vm9298, %v9262, %v9334
      %v9371 = vsel %vm9299, %v9263, %v9335
      %v9372 = vsel %vm9300, %v9264, %v9336
      %v9373 = vsel %vm9301, %v9265, %v9337
      %v9374 = vsel %vm9302, %v9266, %v9338
      %v9375 = vpack.c.bf16 %v9340, %v9339
      %v9376 = vpack.c.bf16 %v9342, %v9341
      %v9377 = vpack.c.bf16 %v9344, %v9343
      %v9378 = vpack.c.bf16 %v9346, %v9345
      %v9379 = vpack.c.bf16 %v9348, %v9347
      %v9380 = vpack.c.bf16 %v9350, %v9349
      %v9381 = vpack.c.bf16 %v9352, %v9351
      %v9382 = vpack.c.bf16 %v9354, %v9353
      %v9383 = vpack.c.bf16 %v9356, %v9355
      %v9384 = vpack.c.bf16 %v9358, %v9357
      %v9385 = vpack.c.bf16 %v9360, %v9359
      %v9386 = vpack.c.bf16 %v9362, %v9361
      %v9387 = vpack.c.bf16 %v9364, %v9363
      %v9388 = vpack.c.bf16 %v9366, %v9365
      %v9389 = vpack.c.bf16 %v9368, %v9367
      %v9390 = vpack.c.bf16 %v9370, %v9369
      %v9391 = vpack.c.bf16 %v9372, %v9371
      %v9392 = vpack.c.bf16 %v9374, %v9373
      %v9411 = vunpack.c.l.b16 %v9375
      %v9412 = vunpack.c.h.b16 %v9375
      %v9413 = vunpack.c.l.b16 %v9376
      %v9414 = vunpack.c.h.b16 %v9376
      %v9415 = vunpack.c.l.b16 %v9377
      %v9416 = vunpack.c.h.b16 %v9377
      %v9417 = vunpack.c.l.b16 %v9378
      %v9418 = vunpack.c.h.b16 %v9378
      %v9419 = vunpack.c.l.b16 %v9379
      %v9420 = vunpack.c.h.b16 %v9379
      %v9421 = vunpack.c.l.b16 %v9380
      %v9422 = vunpack.c.h.b16 %v9380
      %v9423 = vunpack.c.l.b16 %v9381
      %v9424 = vunpack.c.h.b16 %v9381
      %v9425 = vunpack.c.l.b16 %v9382
      %v9426 = vunpack.c.h.b16 %v9382
      %v9427 = vunpack.c.l.b16 %v9383
      %v9428 = vunpack.c.h.b16 %v9383
      %v9429 = vunpack.c.l.b16 %v9384
      %v9430 = vunpack.c.h.b16 %v9384
      %v9431 = vunpack.c.l.b16 %v9385
      %v9432 = vunpack.c.h.b16 %v9385
      %v9433 = vunpack.c.l.b16 %v9386
      %v9434 = vunpack.c.h.b16 %v9386
      %v9435 = vunpack.c.l.b16 %v9387
      %v9436 = vunpack.c.h.b16 %v9387
      %v9437 = vunpack.c.l.b16 %v9388
      %v9438 = vunpack.c.h.b16 %v9388
      %v9439 = vunpack.c.l.b16 %v9389
      %v9440 = vunpack.c.h.b16 %v9389
      %v9441 = vunpack.c.l.b16 %v9390
      %v9442 = vunpack.c.h.b16 %v9390
      %v9443 = vunpack.c.l.b16 %v9391
      %v9444 = vunpack.c.h.b16 %v9391
      %v9445 = vunpack.c.l.b16 %v9392
      %v9446 = vunpack.c.h.b16 %v9392
      %v9447 = vpack.c.b16 %v9411, %v9411
      %v9448 = vpack.c.b16 %v9412, %v9412
      %v9449 = vpack.c.b16 %v9413, %v9413
      %v9450 = vpack.c.b16 %v9414, %v9414
      %v9451 = vpack.c.b16 %v9415, %v9415
      %v9452 = vpack.c.b16 %v9416, %v9416
      %v9453 = vpack.c.b16 %v9417, %v9417
      %v9454 = vpack.c.b16 %v9418, %v9418
      %v9455 = vpack.c.b16 %v9419, %v9419
      %v9456 = vpack.c.b16 %v9420, %v9420
      %v9457 = vpack.c.b16 %v9421, %v9421
      %v9458 = vpack.c.b16 %v9422, %v9422
      %v9459 = vpack.c.b16 %v9423, %v9423
      %v9460 = vpack.c.b16 %v9424, %v9424
      %v9461 = vpack.c.b16 %v9425, %v9425
      %v9462 = vpack.c.b16 %v9426, %v9426
      %v9463 = vpack.c.b16 %v9427, %v9427
      %v9464 = vpack.c.b16 %v9428, %v9428
      %v9465 = vpack.c.b16 %v9429, %v9429
      %v9466 = vpack.c.b16 %v9430, %v9430
      %v9467 = vpack.c.b16 %v9431, %v9431
      %v9468 = vpack.c.b16 %v9432, %v9432
      %v9469 = vpack.c.b16 %v9433, %v9433
      %v9470 = vpack.c.b16 %v9434, %v9434
      %v9471 = vpack.c.b16 %v9435, %v9435
      %v9472 = vpack.c.b16 %v9436, %v9436
      %v9473 = vpack.c.b16 %v9437, %v9437
      %v9474 = vpack.c.b16 %v9438, %v9438
      %v9475 = vpack.c.b16 %v9439, %v9439
      %v9476 = vpack.c.b16 %v9440, %v9440
      %v9477 = vpack.c.b16 %v9441, %v9441
      %v9478 = vpack.c.b16 %v9442, %v9442
      %v9479 = vpack.c.b16 %v9443, %v9443
      %v9480 = vpack.c.b16 %v9444, %v9444
      %v9481 = vpack.c.b16 %v9445, %v9445
      %v9482 = vpack.c.b16 %v9446, %v9446
      %v9484 = vshrl.u32 %v9447, 16
      %v9486 = vrot.slane %v9484, 7
      %v9487 = vshll.u32 %v9447, 16
      %v9489 = vor.u32 %v9486, %v9487
      %v9490 = vrot.slane %v9486, 4
      %v9492 = vshrl.u32 %v9448, 16
      %v9494 = vrot.slane %v9492, 7
      %v9495 = vshll.u32 %v9448, 16
      %v9497 = vor.u32 %v9494, %v9495
      %v9498 = vsel %vm2456, %v9490, %v9497
      %v9499 = vrot.slane %v9494, 4
      %v9501 = vshrl.u32 %v9449, 16
      %v9503 = vrot.slane %v9501, 7
      %v9504 = vshll.u32 %v9449, 16
      %v9506 = vor.u32 %v9503, %v9504
      %v9507 = vrot.slane %v9503, 4
      %v9509 = vshrl.u32 %v9450, 16
      %v9511 = vrot.slane %v9509, 7
      %v9512 = vshll.u32 %v9450, 16
      %v9514 = vor.u32 %v9511, %v9512
      %v9515 = vsel %vm2456, %v9507, %v9514
      %v9516 = vrot.slane %v9511, 4
      %v9518 = vshrl.u32 %v9451, 16
      %v9520 = vrot.slane %v9518, 7
      %v9521 = vshll.u32 %v9451, 16
      %v9523 = vor.u32 %v9520, %v9521
      %v9524 = vrot.slane %v9520, 4
      %v9526 = vshrl.u32 %v9452, 16
      %v9528 = vrot.slane %v9526, 7
      %v9529 = vshll.u32 %v9452, 16
      %v9531 = vor.u32 %v9528, %v9529
      %v9532 = vsel %vm2456, %v9524, %v9531
      %v9533 = vrot.slane %v9528, 4
      %v9535 = vshrl.u32 %v9453, 16
      %v9537 = vrot.slane %v9535, 7
      %v9538 = vshll.u32 %v9453, 16
      %v9540 = vor.u32 %v9537, %v9538
      %v9541 = vrot.slane %v9537, 4
      %v9543 = vshrl.u32 %v9454, 16
      %v9545 = vrot.slane %v9543, 7
      %v9546 = vshll.u32 %v9454, 16
      %v9548 = vor.u32 %v9545, %v9546
      %v9549 = vsel %vm2456, %v9541, %v9548
      %v9550 = vrot.slane %v9545, 4
      %v9552 = vshrl.u32 %v9455, 16
      %v9554 = vrot.slane %v9552, 7
      %v9555 = vshll.u32 %v9455, 16
      %v9557 = vor.u32 %v9554, %v9555
      %v9558 = vrot.slane %v9554, 4
      %v9560 = vshrl.u32 %v9456, 16
      %v9562 = vrot.slane %v9560, 7
      %v9563 = vshll.u32 %v9456, 16
      %v9565 = vor.u32 %v9562, %v9563
      %v9566 = vsel %vm2456, %v9558, %v9565
      %v9567 = vrot.slane %v9562, 4
      %v9569 = vshrl.u32 %v9457, 16
      %v9571 = vrot.slane %v9569, 7
      %v9572 = vshll.u32 %v9457, 16
      %v9574 = vor.u32 %v9571, %v9572
      %v9575 = vrot.slane %v9571, 4
      %v9577 = vshrl.u32 %v9458, 16
      %v9579 = vrot.slane %v9577, 7
      %v9580 = vshll.u32 %v9458, 16
      %v9582 = vor.u32 %v9579, %v9580
      %v9583 = vsel %vm2456, %v9575, %v9582
      %v9584 = vrot.slane %v9579, 4
      %v9586 = vshrl.u32 %v9459, 16
      %v9588 = vrot.slane %v9586, 7
      %v9589 = vshll.u32 %v9459, 16
      %v9591 = vor.u32 %v9588, %v9589
      %v9592 = vrot.slane %v9588, 4
      %v9594 = vshrl.u32 %v9460, 16
      %v9596 = vrot.slane %v9594, 7
      %v9597 = vshll.u32 %v9460, 16
      %v9599 = vor.u32 %v9596, %v9597
      %v9600 = vsel %vm2456, %v9592, %v9599
      %v9601 = vrot.slane %v9596, 4
      %v9603 = vshrl.u32 %v9461, 16
      %v9605 = vrot.slane %v9603, 7
      %v9606 = vshll.u32 %v9461, 16
      %v9608 = vor.u32 %v9605, %v9606
      %v9609 = vrot.slane %v9605, 4
      %v9611 = vshrl.u32 %v9462, 16
      %v9613 = vrot.slane %v9611, 7
      %v9614 = vshll.u32 %v9462, 16
      %v9616 = vor.u32 %v9613, %v9614
      %v9617 = vsel %vm2456, %v9609, %v9616
      %v9618 = vrot.slane %v9613, 4
      %v9620 = vshrl.u32 %v9463, 16
      %v9622 = vrot.slane %v9620, 7
      %v9623 = vshll.u32 %v9463, 16
      %v9625 = vor.u32 %v9622, %v9623
      %v9626 = vrot.slane %v9622, 4
      %v9628 = vshrl.u32 %v9464, 16
      %v9630 = vrot.slane %v9628, 7
      %v9631 = vshll.u32 %v9464, 16
      %v9633 = vor.u32 %v9630, %v9631
      %v9634 = vsel %vm2456, %v9626, %v9633
      %v9635 = vrot.slane %v9630, 4
      %v9637 = vshrl.u32 %v9465, 16
      %v9639 = vrot.slane %v9637, 7
      %v9640 = vshll.u32 %v9465, 16
      %v9642 = vor.u32 %v9639, %v9640
      %v9643 = vrot.slane %v9639, 4
      %v9645 = vshrl.u32 %v9466, 16
      %v9647 = vrot.slane %v9645, 7
      %v9648 = vshll.u32 %v9466, 16
      %v9650 = vor.u32 %v9647, %v9648
      %v9651 = vsel %vm2456, %v9643, %v9650
      %v9652 = vrot.slane %v9647, 4
      %v9654 = vshrl.u32 %v9467, 16
      %v9656 = vrot.slane %v9654, 7
      %v9657 = vshll.u32 %v9467, 16
      %v9659 = vor.u32 %v9656, %v9657
      %v9660 = vrot.slane %v9656, 4
      %v9662 = vshrl.u32 %v9468, 16
      %v9664 = vrot.slane %v9662, 7
      %v9665 = vshll.u32 %v9468, 16
      %v9667 = vor.u32 %v9664, %v9665
      %v9668 = vsel %vm2456, %v9660, %v9667
      %v9669 = vrot.slane %v9664, 4
      %v9671 = vshrl.u32 %v9469, 16
      %v9673 = vrot.slane %v9671, 7
      %v9674 = vshll.u32 %v9469, 16
      %v9676 = vor.u32 %v9673, %v9674
      %v9677 = vrot.slane %v9673, 4
      %v9679 = vshrl.u32 %v9470, 16
      %v9681 = vrot.slane %v9679, 7
      %v9682 = vshll.u32 %v9470, 16
      %v9684 = vor.u32 %v9681, %v9682
      %v9685 = vsel %vm2456, %v9677, %v9684
      %v9686 = vrot.slane %v9681, 4
      %v9688 = vshrl.u32 %v9471, 16
      %v9690 = vrot.slane %v9688, 7
      %v9691 = vshll.u32 %v9471, 16
      %v9693 = vor.u32 %v9690, %v9691
      %v9694 = vrot.slane %v9690, 4
      %v9696 = vshrl.u32 %v9472, 16
      %v9698 = vrot.slane %v9696, 7
      %v9699 = vshll.u32 %v9472, 16
      %v9701 = vor.u32 %v9698, %v9699
      %v9702 = vsel %vm2456, %v9694, %v9701
      %v9703 = vrot.slane %v9698, 4
      %v9705 = vshrl.u32 %v9473, 16
      %v9707 = vrot.slane %v9705, 7
      %v9708 = vshll.u32 %v9473, 16
      %v9710 = vor.u32 %v9707, %v9708
      %v9711 = vrot.slane %v9707, 4
      %v9713 = vshrl.u32 %v9474, 16
      %v9715 = vrot.slane %v9713, 7
      %v9716 = vshll.u32 %v9474, 16
      %v9718 = vor.u32 %v9715, %v9716
      %v9719 = vsel %vm2456, %v9711, %v9718
      %v9720 = vrot.slane %v9715, 4
      %v9722 = vshrl.u32 %v9475, 16
      %v9724 = vrot.slane %v9722, 7
      %v9725 = vshll.u32 %v9475, 16
      %v9727 = vor.u32 %v9724, %v9725
      %v9728 = vrot.slane %v9724, 4
      %v9730 = vshrl.u32 %v9476, 16
      %v9732 = vrot.slane %v9730, 7
      %v9733 = vshll.u32 %v9476, 16
      %v9735 = vor.u32 %v9732, %v9733
      %v9736 = vsel %vm2456, %v9728, %v9735
      %v9737 = vrot.slane %v9732, 4
      %v9739 = vshrl.u32 %v9477, 16
      %v9741 = vrot.slane %v9739, 7
      %v9742 = vshll.u32 %v9477, 16
      %v9744 = vor.u32 %v9741, %v9742
      %v9745 = vrot.slane %v9741, 4
      %v9747 = vshrl.u32 %v9478, 16
      %v9749 = vrot.slane %v9747, 7
      %v9750 = vshll.u32 %v9478, 16
      %v9752 = vor.u32 %v9749, %v9750
      %v9753 = vsel %vm2456, %v9745, %v9752
      %v9754 = vrot.slane %v9749, 4
      %v9756 = vshrl.u32 %v9479, 16
      %v9758 = vrot.slane %v9756, 7
      %v9759 = vshll.u32 %v9479, 16
      %v9761 = vor.u32 %v9758, %v9759
      %v9762 = vrot.slane %v9758, 4
      %v9764 = vshrl.u32 %v9480, 16
      %v9766 = vrot.slane %v9764, 7
      %v9767 = vshll.u32 %v9480, 16
      %v9769 = vor.u32 %v9766, %v9767
      %v9770 = vsel %vm2456, %v9762, %v9769
      %v9771 = vrot.slane %v9766, 4
      %v9773 = vshrl.u32 %v9481, 16
      %v9775 = vrot.slane %v9773, 7
      %v9776 = vshll.u32 %v9481, 16
      %v9778 = vor.u32 %v9775, %v9776
      %v9779 = vrot.slane %v9775, 4
      %v9781 = vshrl.u32 %v9482, 16
      %v9783 = vrot.slane %v9781, 7
      %v9784 = vshll.u32 %v9482, 16
      %v9786 = vor.u32 %v9783, %v9784
      %v9787 = vsel %vm2456, %v9779, %v9786
      %v9788 = vrot.slane %v9783, 4
      %9789 = vrot.lane.b32.xlu0 %v9489, 40
      %v9790 = vpop.permute.xlu0 %9789
      %9791 = vrot.lane.b32.xlu0 %v9498, 40
      %v9792 = vpop.permute.xlu0 %9791
      %9793 = vrot.lane.b32.xlu0 %v9499, 40
      %v9794 = vpop.permute.xlu0 %9793
      %9795 = vrot.lane.b32.xlu0 %v9506, 40
      %v9796 = vpop.permute.xlu0 %9795
      %9797 = vrot.lane.b32.xlu0 %v9515, 40
      %v9798 = vpop.permute.xlu0 %9797
      %9799 = vrot.lane.b32.xlu0 %v9516, 40
      %v9800 = vpop.permute.xlu0 %9799
      %9801 = vrot.lane.b32.xlu0 %v9523, 40
      %v9802 = vpop.permute.xlu0 %9801
      %9803 = vrot.lane.b32.xlu0 %v9532, 40
      %v9804 = vpop.permute.xlu0 %9803
      %9805 = vrot.lane.b32.xlu0 %v9533, 40
      %v9806 = vpop.permute.xlu0 %9805
      %9807 = vrot.lane.b32.xlu0 %v9540, 40
      %v9808 = vpop.permute.xlu0 %9807
      %9809 = vrot.lane.b32.xlu0 %v9549, 40
      %v9810 = vpop.permute.xlu0 %9809
      %9811 = vrot.lane.b32.xlu0 %v9550, 40
      %v9812 = vpop.permute.xlu0 %9811
      %9813 = vrot.lane.b32.xlu0 %v9557, 40
      %v9814 = vpop.permute.xlu0 %9813
      %9815 = vrot.lane.b32.xlu0 %v9566, 40
      %v9816 = vpop.permute.xlu0 %9815
      %9817 = vrot.lane.b32.xlu0 %v9567, 40
      %v9818 = vpop.permute.xlu0 %9817
      %9819 = vrot.lane.b32.xlu0 %v9574, 40
      %v9820 = vpop.permute.xlu0 %9819
      %9821 = vrot.lane.b32.xlu0 %v9583, 40
      %v9822 = vpop.permute.xlu0 %9821
      %9823 = vrot.lane.b32.xlu0 %v9584, 40
      %v9824 = vpop.permute.xlu0 %9823
      %9825 = vrot.lane.b32.xlu0 %v9591, 40
      %v9826 = vpop.permute.xlu0 %9825
      %9827 = vrot.lane.b32.xlu0 %v9600, 40
      %v9828 = vpop.permute.xlu0 %9827
      %9829 = vrot.lane.b32.xlu0 %v9601, 40
      %v9830 = vpop.permute.xlu0 %9829
      %9831 = vrot.lane.b32.xlu0 %v9608, 40
      %v9832 = vpop.permute.xlu0 %9831
      %9833 = vrot.lane.b32.xlu0 %v9617, 40
      %v9834 = vpop.permute.xlu0 %9833
      %9835 = vrot.lane.b32.xlu0 %v9618, 40
      %v9836 = vpop.permute.xlu0 %9835
      %9837 = vrot.lane.b32.xlu0 %v9625, 40
      %v9838 = vpop.permute.xlu0 %9837
      %9839 = vrot.lane.b32.xlu0 %v9634, 40
      %v9840 = vpop.permute.xlu0 %9839
      %9841 = vrot.lane.b32.xlu0 %v9635, 40
      %v9842 = vpop.permute.xlu0 %9841
      %9843 = vrot.lane.b32.xlu0 %v9642, 40
      %v9844 = vpop.permute.xlu0 %9843
      %9845 = vrot.lane.b32.xlu0 %v9651, 40
      %v9846 = vpop.permute.xlu0 %9845
      %9847 = vrot.lane.b32.xlu0 %v9652, 40
      %v9848 = vpop.permute.xlu0 %9847
      %9849 = vrot.lane.b32.xlu0 %v9659, 40
      %v9850 = vpop.permute.xlu0 %9849
      %9851 = vrot.lane.b32.xlu0 %v9668, 40
      %v9852 = vpop.permute.xlu0 %9851
      %9853 = vrot.lane.b32.xlu0 %v9669, 40
      %v9854 = vpop.permute.xlu0 %9853
      %9855 = vrot.lane.b32.xlu0 %v9676, 40
      %v9856 = vpop.permute.xlu0 %9855
      %9857 = vrot.lane.b32.xlu0 %v9685, 40
      %v9858 = vpop.permute.xlu0 %9857
      %9859 = vrot.lane.b32.xlu0 %v9686, 40
      %v9860 = vpop.permute.xlu0 %9859
      %9861 = vrot.lane.b32.xlu0 %v9693, 40
      %v9862 = vpop.permute.xlu0 %9861
      %9863 = vrot.lane.b32.xlu0 %v9702, 40
      %v9864 = vpop.permute.xlu0 %9863
      %9865 = vrot.lane.b32.xlu0 %v9703, 40
      %v9866 = vpop.permute.xlu0 %9865
      %9867 = vrot.lane.b32.xlu0 %v9710, 40
      %v9868 = vpop.permute.xlu0 %9867
      %9869 = vrot.lane.b32.xlu0 %v9719, 40
      %v9870 = vpop.permute.xlu0 %9869
      %9871 = vrot.lane.b32.xlu0 %v9720, 40
      %v9872 = vpop.permute.xlu0 %9871
      %9873 = vrot.lane.b32.xlu0 %v9727, 40
      %v9874 = vpop.permute.xlu0 %9873
      %9875 = vrot.lane.b32.xlu0 %v9736, 40
      %v9876 = vpop.permute.xlu0 %9875
      %9877 = vrot.lane.b32.xlu0 %v9737, 40
      %v9878 = vpop.permute.xlu0 %9877
      %9879 = vrot.lane.b32.xlu0 %v9744, 40
      %v9880 = vpop.permute.xlu0 %9879
      %9881 = vrot.lane.b32.xlu0 %v9753, 40
      %v9882 = vpop.permute.xlu0 %9881
      %9883 = vrot.lane.b32.xlu0 %v9754, 40
      %v9884 = vpop.permute.xlu0 %9883
      %9885 = vrot.lane.b32.xlu0 %v9761, 40
      %v9886 = vpop.permute.xlu0 %9885
      %9887 = vrot.lane.b32.xlu0 %v9770, 40
      %v9888 = vpop.permute.xlu0 %9887
      %9889 = vrot.lane.b32.xlu0 %v9771, 40
      %v9890 = vpop.permute.xlu0 %9889
      %9891 = vrot.lane.b32.xlu0 %v9778, 40
      %v9892 = vpop.permute.xlu0 %9891
      %9893 = vrot.lane.b32.xlu0 %v9787, 40
      %v9894 = vpop.permute.xlu0 %9893
      %9895 = vrot.lane.b32.xlu0 %v9788, 40
      %v9896 = vpop.permute.xlu0 %9895
      %vm9951 = vcmask 388416
      %vm9952 = vmand %vm9951, %vm748
      %v9953 = vld [vmem:[%s2925] sm:$0xf]
      %v9954 = vsel %vm9952, %v9790, %v9953
      %9955 = vst [vmem:[%s2925] sm:$0xf] %v9954
      %vm9956 = vcmask 388416
      %9957 = vst.msk [vmem:[%s2925 + $0x4] sm:$0xf] %vm9956, %v9792
      %vm9958 = vcmask 385344
      %vm9959 = vmand %vm9958, %vm686
      %v9960 = vld [vmem:[%s2925 + $0x8] sm:$0x1]
      %v9961 = vsel %vm9959, %v9794, %v9960
      %9962 = vst [vmem:[%s2925 + $0x8] sm:$0x1] %v9961
      %v9963 = vld [vmem:[%s2925 + $0xc] sm:$0xf]
      %v9964 = vsel %vm9952, %v9796, %v9963
      %9965 = vst [vmem:[%s2925 + $0xc] sm:$0xf] %v9964
      %9966 = vst.msk [vmem:[%s2925 + $0x10] sm:$0xf] %vm9956, %v9798
      %v9967 = vld [vmem:[%s2925 + $0x14] sm:$0x1]
      %v9968 = vsel %vm9959, %v9800, %v9967
      %9969 = vst [vmem:[%s2925 + $0x14] sm:$0x1] %v9968
      %v9970 = vld [vmem:[%s2925 + $0x18] sm:$0xf]
      %v9971 = vsel %vm9952, %v9802, %v9970
      %9972 = vst [vmem:[%s2925 + $0x18] sm:$0xf] %v9971
      %9973 = vst.msk [vmem:[%s2925 + $0x1c] sm:$0xf] %vm9956, %v9804
      %v9974 = vld [vmem:[%s2925 + $0x20] sm:$0x1]
      %v9975 = vsel %vm9959, %v9806, %v9974
      %9976 = vst [vmem:[%s2925 + $0x20] sm:$0x1] %v9975
      %v9977 = vld [vmem:[%s2925 + $0x24] sm:$0xf]
      %v9978 = vsel %vm9952, %v9808, %v9977
      %9979 = vst [vmem:[%s2925 + $0x24] sm:$0xf] %v9978
      %9980 = vst.msk [vmem:[%s2925 + $0x28] sm:$0xf] %vm9956, %v9810
      %v9981 = vld [vmem:[%s2925 + $0x2c] sm:$0x1]
      %v9982 = vsel %vm9959, %v9812, %v9981
      %9983 = vst [vmem:[%s2925 + $0x2c] sm:$0x1] %v9982
      %v9984 = vld [vmem:[%s2925 + $0x30] sm:$0xf]
      %v9985 = vsel %vm9952, %v9814, %v9984
      %9986 = vst [vmem:[%s2925 + $0x30] sm:$0xf] %v9985
      %9987 = vst.msk [vmem:[%s2925 + $0x34] sm:$0xf] %vm9956, %v9816
      %v9988 = vld [vmem:[%s2925 + $0x38] sm:$0x1]
      %v9989 = vsel %vm9959, %v9818, %v9988
      %9990 = vst [vmem:[%s2925 + $0x38] sm:$0x1] %v9989
      %v9991 = vld [vmem:[%s2925 + $0x3c] sm:$0xf]
      %v9992 = vsel %vm9952, %v9820, %v9991
      %9993 = vst [vmem:[%s2925 + $0x3c] sm:$0xf] %v9992
      %9994 = vst.msk [vmem:[%s2925 + $0x40] sm:$0xf] %vm9956, %v9822
      %v9995 = vld [vmem:[%s2925 + $0x44] sm:$0x1]
      %v9996 = vsel %vm9959, %v9824, %v9995
      %9997 = vst [vmem:[%s2925 + $0x44] sm:$0x1] %v9996
      %v9998 = vld [vmem:[%s2925 + $0x48] sm:$0xf]
      %v9999 = vsel %vm9952, %v9826, %v9998
      %10000 = vst [vmem:[%s2925 + $0x48] sm:$0xf] %v9999
      %10001 = vst.msk [vmem:[%s2925 + $0x4c] sm:$0xf] %vm9956, %v9828
      %v10002 = vld [vmem:[%s2925 + $0x50] sm:$0x1]
      %v10003 = vsel %vm9959, %v9830, %v10002
      %10004 = vst [vmem:[%s2925 + $0x50] sm:$0x1] %v10003
      %v10005 = vld [vmem:[%s2925 + $0x54] sm:$0xf]
      %v10006 = vsel %vm9952, %v9832, %v10005
      %10007 = vst [vmem:[%s2925 + $0x54] sm:$0xf] %v10006
      %10008 = vst.msk [vmem:[%s2925 + $0x58] sm:$0xf] %vm9956, %v9834
      %v10009 = vld [vmem:[%s2925 + $0x5c] sm:$0x1]
      %v10010 = vsel %vm9959, %v9836, %v10009
      %10011 = vst [vmem:[%s2925 + $0x5c] sm:$0x1] %v10010
      %v10012 = vld [vmem:[%s2925 + $0x60] sm:$0xf]
      %v10013 = vsel %vm9952, %v9838, %v10012
      %10014 = vst [vmem:[%s2925 + $0x60] sm:$0xf] %v10013
      %10015 = vst.msk [vmem:[%s2925 + $0x64] sm:$0xf] %vm9956, %v9840
      %v10016 = vld [vmem:[%s2925 + $0x68] sm:$0x1]
      %v10017 = vsel %vm9959, %v9842, %v10016
      %10018 = vst [vmem:[%s2925 + $0x68] sm:$0x1] %v10017
      %v10019 = vld [vmem:[%s2925 + $0x6c] sm:$0xf]
      %v10020 = vsel %vm9952, %v9844, %v10019
      %10021 = vst [vmem:[%s2925 + $0x6c] sm:$0xf] %v10020
      %10022 = vst.msk [vmem:[%s2925 + $0x70] sm:$0xf] %vm9956, %v9846
      %v10023 = vld [vmem:[%s2925 + $0x74] sm:$0x1]
      %v10024 = vsel %vm9959, %v9848, %v10023
      %10025 = vst [vmem:[%s2925 + $0x74] sm:$0x1] %v10024
      %v10026 = vld [vmem:[%s2925 + $0x78] sm:$0xf]
      %v10027 = vsel %vm9952, %v9850, %v10026
      %10028 = vst [vmem:[%s2925 + $0x78] sm:$0xf] %v10027
      %10029 = vst.msk [vmem:[%s2925 + $0x7c] sm:$0xf] %vm9956, %v9852
      %v10030 = vld [vmem:[%s2925 + $0x80] sm:$0x1]
      %v10031 = vsel %vm9959, %v9854, %v10030
      %10032 = vst [vmem:[%s2925 + $0x80] sm:$0x1] %v10031
      %v10033 = vld [vmem:[%s2925 + $0x84] sm:$0xf]
      %v10034 = vsel %vm9952, %v9856, %v10033
      %10035 = vst [vmem:[%s2925 + $0x84] sm:$0xf] %v10034
      %10036 = vst.msk [vmem:[%s2925 + $0x88] sm:$0xf] %vm9956, %v9858
      %v10037 = vld [vmem:[%s2925 + $0x8c] sm:$0x1]
      %v10038 = vsel %vm9959, %v9860, %v10037
      %10039 = vst [vmem:[%s2925 + $0x8c] sm:$0x1] %v10038
      %v10040 = vld [vmem:[%s2925 + $0x90] sm:$0xf]
      %v10041 = vsel %vm9952, %v9862, %v10040
      %10042 = vst [vmem:[%s2925 + $0x90] sm:$0xf] %v10041
      %10043 = vst.msk [vmem:[%s2925 + $0x94] sm:$0xf] %vm9956, %v9864
      %v10044 = vld [vmem:[%s2925 + $0x98] sm:$0x1]
      %v10045 = vsel %vm9959, %v9866, %v10044
      %10046 = vst [vmem:[%s2925 + $0x98] sm:$0x1] %v10045
      %v10047 = vld [vmem:[%s2925 + $0x9c] sm:$0xf]
      %v10048 = vsel %vm9952, %v9868, %v10047
      %10049 = vst [vmem:[%s2925 + $0x9c] sm:$0xf] %v10048
      %10050 = vst.msk [vmem:[%s2925 + $0xa0] sm:$0xf] %vm9956, %v9870
      %v10051 = vld [vmem:[%s2925 + $0xa4] sm:$0x1]
      %v10052 = vsel %vm9959, %v9872, %v10051
      %10053 = vst [vmem:[%s2925 + $0xa4] sm:$0x1] %v10052
      %v10054 = vld [vmem:[%s2925 + $0xa8] sm:$0xf]
      %v10055 = vsel %vm9952, %v9874, %v10054
      %10056 = vst [vmem:[%s2925 + $0xa8] sm:$0xf] %v10055
      %10057 = vst.msk [vmem:[%s2925 + $0xac] sm:$0xf] %vm9956, %v9876
      %v10058 = vld [vmem:[%s2925 + $0xb0] sm:$0x1]
      %v10059 = vsel %vm9959, %v9878, %v10058
      %10060 = vst [vmem:[%s2925 + $0xb0] sm:$0x1] %v10059
      %v10061 = vld [vmem:[%s2925 + $0xb4] sm:$0xf]
      %v10062 = vsel %vm9952, %v9880, %v10061
      %10063 = vst [vmem:[%s2925 + $0xb4] sm:$0xf] %v10062
      %10064 = vst.msk [vmem:[%s2925 + $0xb8] sm:$0xf] %vm9956, %v9882
      %v10065 = vld [vmem:[%s2925 + $0xbc] sm:$0x1]
      %v10066 = vsel %vm9959, %v9884, %v10065
      %10067 = vst [vmem:[%s2925 + $0xbc] sm:$0x1] %v10066
      %v10068 = vld [vmem:[%s2925 + $0xc0] sm:$0xf]
      %v10069 = vsel %vm9952, %v9886, %v10068
      %10070 = vst [vmem:[%s2925 + $0xc0] sm:$0xf] %v10069
      %10071 = vst.msk [vmem:[%s2925 + $0xc4] sm:$0xf] %vm9956, %v9888
      %v10072 = vld [vmem:[%s2925 + $0xc8] sm:$0x1]
      %v10073 = vsel %vm9959, %v9890, %v10072
      %10074 = vst [vmem:[%s2925 + $0xc8] sm:$0x1] %v10073
      %v10075 = vld [vmem:[%s2925 + $0xcc] sm:$0xf]
      %v10076 = vsel %vm9952, %v9892, %v10075
      %10077 = vst [vmem:[%s2925 + $0xcc] sm:$0xf] %v10076
      %10078 = vst.msk [vmem:[%s2925 + $0xd0] sm:$0xf] %vm9956, %v9894
      %v10079 = vld [vmem:[%s2925 + $0xd4] sm:$0x1]
      %v10080 = vsel %vm9959, %v9896, %v10079
      %10081 = vst [vmem:[%s2925 + $0xd4] sm:$0x1] %v10080
      // Predicated region
      $region97: #{residual_dense_block.1} parent=71 // pred_check
        %p10082 = pneg %p810
      $region98: #{residual_dense_block.1} parent=71 // pred_check_branch
        %10084 = sbr.rel (%p10082) target = $region100
      $region99: #{residual_dense_block.1} parent=71 // pred_region
        %v10085 = vld [vmem:[%s2925] sm:$0xf]
        %v10086 = vsel %vm9952, 0, %v10085
        %10087 = vst [vmem:[%s2925] sm:$0xf] %v10086
        %10088 = vst.msk [vmem:[%s2925 + $0x4] sm:$0xf] %vm9956, 0
        %v10089 = vld [vmem:[%s2925 + $0x8] sm:$0x1]
        %v10090 = vsel %vm9959, 0, %v10089
        %10091 = vst [vmem:[%s2925 + $0x8] sm:$0x1] %v10090
        %v10092 = vld [vmem:[%s2925 + $0xc] sm:$0xf]
        %v10093 = vsel %vm9952, 0, %v10092
        %10094 = vst [vmem:[%s2925 + $0xc] sm:$0xf] %v10093
        %10095 = vst.msk [vmem:[%s2925 + $0x10] sm:$0xf] %vm9956, 0
        %v10096 = vld [vmem:[%s2925 + $0x14] sm:$0x1]
        %v10097 = vsel %vm9959, 0, %v10096
        %10098 = vst [vmem:[%s2925 + $0x14] sm:$0x1] %v10097
        %v10099 = vld [vmem:[%s2925 + $0x18] sm:$0xf]
        %v10100 = vsel %vm9952, 0, %v10099
        %10101 = vst [vmem:[%s2925 + $0x18] sm:$0xf] %v10100
        %10102 = vst.msk [vmem:[%s2925 + $0x1c] sm:$0xf] %vm9956, 0
        %v10103 = vld [vmem:[%s2925 + $0x20] sm:$0x1]
        %v10104 = vsel %vm9959, 0, %v10103
        %10105 = vst [vmem:[%s2925 + $0x20] sm:$0x1] %v10104
        %v10106 = vld [vmem:[%s2925 + $0x24] sm:$0xf]
        %v10107 = vsel %vm9952, 0, %v10106
        %10108 = vst [vmem:[%s2925 + $0x24] sm:$0xf] %v10107
        %10109 = vst.msk [vmem:[%s2925 + $0x28] sm:$0xf] %vm9956, 0
        %v10110 = vld [vmem:[%s2925 + $0x2c] sm:$0x1]
        %v10111 = vsel %vm9959, 0, %v10110
        %10112 = vst [vmem:[%s2925 + $0x2c] sm:$0x1] %v10111
        %v10113 = vld [vmem:[%s2925 + $0x30] sm:$0xf]
        %v10114 = vsel %vm9952, 0, %v10113
        %10115 = vst [vmem:[%s2925 + $0x30] sm:$0xf] %v10114
        %10116 = vst.msk [vmem:[%s2925 + $0x34] sm:$0xf] %vm9956, 0
        %v10117 = vld [vmem:[%s2925 + $0x38] sm:$0x1]
        %v10118 = vsel %vm9959, 0, %v10117
        %10119 = vst [vmem:[%s2925 + $0x38] sm:$0x1] %v10118
      $region100: #{residual_dense_block.1} parent=71 // pred_fallthru
        _
      // Predicated region
      $region101: #{residual_dense_block.1} parent=71 // pred_check
        %p10120 = pneg %p811
      $region102: #{residual_dense_block.1} parent=71 // pred_check_branch
        %10122 = sbr.rel (%p10120) target = $region104
      $region103: #{residual_dense_block.1} parent=71 // pred_region
        %v10123 = vld [vmem:[%s657] sm:$0xf]
        %v10124 = vsel %vm9952, 0, %v10123
        %10125 = vst [vmem:[%s657] sm:$0xf] %v10124
        %10126 = vst.msk [vmem:[%s657 + $0x4] sm:$0xf] %vm9956, 0
        %v10127 = vld [vmem:[%s657 + $0x8] sm:$0x1]
        %v10128 = vsel %vm9959, 0, %v10127
        %10129 = vst [vmem:[%s657 + $0x8] sm:$0x1] %v10128
        %v10130 = vld [vmem:[%s657 + $0xc] sm:$0xf]
        %v10131 = vsel %vm9952, 0, %v10130
        %10132 = vst [vmem:[%s657 + $0xc] sm:$0xf] %v10131
        %10133 = vst.msk [vmem:[%s657 + $0x10] sm:$0xf] %vm9956, 0
        %v10134 = vld [vmem:[%s657 + $0x14] sm:$0x1]
        %v10135 = vsel %vm9959, 0, %v10134
        %10136 = vst [vmem:[%s657 + $0x14] sm:$0x1] %v10135
        %v10137 = vld [vmem:[%s657 + $0x18] sm:$0xf]
        %v10138 = vsel %vm9952, 0, %v10137
        %10139 = vst [vmem:[%s657 + $0x18] sm:$0xf] %v10138
        %10140 = vst.msk [vmem:[%s657 + $0x1c] sm:$0xf] %vm9956, 0
        %v10141 = vld [vmem:[%s657 + $0x20] sm:$0x1]
        %v10142 = vsel %vm9959, 0, %v10141
        %10143 = vst [vmem:[%s657 + $0x20] sm:$0x1] %v10142
        %v10144 = vld [vmem:[%s657 + $0x24] sm:$0xf]
        %v10145 = vsel %vm9952, 0, %v10144
        %10146 = vst [vmem:[%s657 + $0x24] sm:$0xf] %v10145
        %10147 = vst.msk [vmem:[%s657 + $0x28] sm:$0xf] %vm9956, 0
        %v10148 = vld [vmem:[%s657 + $0x2c] sm:$0x1]
        %v10149 = vsel %vm9959, 0, %v10148
        %10150 = vst [vmem:[%s657 + $0x2c] sm:$0x1] %v10149
        %v10151 = vld [vmem:[%s657 + $0x30] sm:$0xf]
        %v10152 = vsel %vm9952, 0, %v10151
        %10153 = vst [vmem:[%s657 + $0x30] sm:$0xf] %v10152
        %10154 = vst.msk [vmem:[%s657 + $0x34] sm:$0xf] %vm9956, 0
        %v10155 = vld [vmem:[%s657 + $0x38] sm:$0x1]
        %v10156 = vsel %vm9959, 0, %v10155
        %10157 = vst [vmem:[%s657 + $0x38] sm:$0x1] %v10156
      $region104: #{residual_dense_block.1} parent=71 // pred_fallthru
        _
      %s10158 = scalar_lea.vmem [#allocation2], 60
      %v10159 = vld [vmem:[%s10158] sm:$0xf]
      %v10160 = vld [vmem:[%s10158 + $0x4] sm:$0xf]
      %v10161 = vld [vmem:[%s10158 + $0xc] sm:$0xf]
      %v10162 = vld [vmem:[%s10158 + $0x10] sm:$0xf]
      %v10163 = vld [vmem:[%s10158 + $0x18] sm:$0xf]
      %v10164 = vld [vmem:[%s10158 + $0x1c] sm:$0xf]
      %v10165 = vld [vmem:[%s10158 + $0x24] sm:$0xf]
      %v10166 = vld [vmem:[%s10158 + $0x28] sm:$0xf]
      %v10167 = vld [vmem:[%s10158 + $0x30] sm:$0xf]
      %v10168 = vld [vmem:[%s10158 + $0x34] sm:$0xf]
      %v10169 = vld [vmem:[%s10158 + $0x3c] sm:$0xf]
      %v10170 = vld [vmem:[%s10158 + $0x40] sm:$0xf]
      %v10171 = vld [vmem:[%s10158 + $0x48] sm:$0xf]
      %v10172 = vld [vmem:[%s10158 + $0x4c] sm:$0xf]
      %v10173 = vld [vmem:[%s10158 + $0x54] sm:$0xf]
      %v10174 = vld [vmem:[%s10158 + $0x58] sm:$0xf]
      %v10175 = vld [vmem:[%s10158 + $0x60] sm:$0xf]
      %v10176 = vld [vmem:[%s10158 + $0x64] sm:$0xf]
      %v10177 = vld [vmem:[%s10158 + $0x6c] sm:$0xf]
      %v10178 = vld [vmem:[%s10158 + $0x70] sm:$0xf]
      %v10179 = vld [vmem:[%s10158 + $0x8] sm:$0x1]
      %v10180 = vld [vmem:[%s10158 + $0x14] sm:$0x1]
      %v10181 = vld [vmem:[%s10158 + $0x20] sm:$0x1]
      %v10182 = vld [vmem:[%s10158 + $0x2c] sm:$0x1]
      %v10183 = vld [vmem:[%s10158 + $0x38] sm:$0x1]
      %v10184 = vld [vmem:[%s10158 + $0x44] sm:$0x1]
      %v10185 = vld [vmem:[%s10158 + $0x50] sm:$0x1]
      %v10186 = vld [vmem:[%s10158 + $0x5c] sm:$0x1]
      %v10187 = vld [vmem:[%s10158 + $0x68] sm:$0x1]
      %v10188 = vld [vmem:[%s10158 + $0x74] sm:$0x1]
      %v10189 = vld [vmem:[%s10158] sm:$0xe]
      %v10190 = vld [vmem:[%s10158 + $0xc] sm:$0xe]
      %v10191 = vld [vmem:[%s10158 + $0x18] sm:$0xe]
      %v10192 = vld [vmem:[%s10158 + $0x24] sm:$0xe]
      %v10193 = vld [vmem:[%s10158 + $0x30] sm:$0xe]
      %v10194 = vld [vmem:[%s10158 + $0x3c] sm:$0xe]
      %v10195 = vld [vmem:[%s10158 + $0x48] sm:$0xe]
      %v10196 = vld [vmem:[%s10158 + $0x54] sm:$0xe]
      %v10197 = vld [vmem:[%s10158 + $0x60] sm:$0xe]
      %v10198 = vld [vmem:[%s10158 + $0x6c] sm:$0xe]
      %v10219 = vunpack.c.l.b16 %v10159
      %v10220 = vunpack.c.l.b16 %v10160
      %v10221 = vunpack.c.l.b16 %v10161
      %v10222 = vunpack.c.l.b16 %v10162
      %v10223 = vunpack.c.l.b16 %v10163
      %v10224 = vunpack.c.l.b16 %v10164
      %v10225 = vunpack.c.l.b16 %v10165
      %v10226 = vunpack.c.l.b16 %v10166
      %v10227 = vunpack.c.l.b16 %v10167
      %v10228 = vunpack.c.l.b16 %v10168
      %v10229 = vunpack.c.l.b16 %v10169
      %v10230 = vunpack.c.l.b16 %v10170
      %v10231 = vunpack.c.l.b16 %v10171
      %v10232 = vunpack.c.l.b16 %v10172
      %v10233 = vunpack.c.l.b16 %v10173
      %v10234 = vunpack.c.l.b16 %v10174
      %v10235 = vunpack.c.l.b16 %v10175
      %v10236 = vunpack.c.l.b16 %v10176
      %v10237 = vunpack.c.l.b16 %v10177
      %v10238 = vunpack.c.l.b16 %v10178
      %v10239 = vpack.c.b16 %v10220, %v10219
      %v10240 = vpack.c.b16 %v10222, %v10221
      %v10241 = vpack.c.b16 %v10224, %v10223
      %v10242 = vpack.c.b16 %v10226, %v10225
      %v10243 = vpack.c.b16 %v10228, %v10227
      %v10244 = vpack.c.b16 %v10230, %v10229
      %v10245 = vpack.c.b16 %v10232, %v10231
      %v10246 = vpack.c.b16 %v10234, %v10233
      %v10247 = vpack.c.b16 %v10236, %v10235
      %v10248 = vpack.c.b16 %v10238, %v10237
      %v10259 = vunpack.c.l.b16 %v10179
      %v10260 = vunpack.c.l.b16 %v10180
      %v10261 = vunpack.c.l.b16 %v10181
      %v10262 = vunpack.c.l.b16 %v10182
      %v10263 = vunpack.c.l.b16 %v10183
      %v10264 = vunpack.c.l.b16 %v10184
      %v10265 = vunpack.c.l.b16 %v10185
      %v10266 = vunpack.c.l.b16 %v10186
      %v10267 = vunpack.c.l.b16 %v10187
      %v10268 = vunpack.c.l.b16 %v10188
      %v10269 = vpack.c.b16 %v10259, %v10259
      %v10270 = vpack.c.b16 %v10260, %v10260
      %v10271 = vpack.c.b16 %v10261, %v10261
      %v10272 = vpack.c.b16 %v10262, %v10262
      %v10273 = vpack.c.b16 %v10263, %v10263
      %v10274 = vpack.c.b16 %v10264, %v10264
      %v10275 = vpack.c.b16 %v10265, %v10265
      %v10276 = vpack.c.b16 %v10266, %v10266
      %v10277 = vpack.c.b16 %v10267, %v10267
      %v10278 = vpack.c.b16 %v10268, %v10268
      %v10280 = vshrl.u32 %v10239, 16
      %v10282 = vshll.u32 %v10239, 16
      %v10284 = vrot.slane %v10282, 1
      %v10285 = vor.u32 %v10280, %v10284
      %v10287 = vshll.u32 %v10269, 16
      %v10289 = vrot.slane %v10287, 1
      %v10290 = vsel %vm1052, %v10285, %v10289
      %v10292 = vshrl.u32 %v10240, 16
      %v10294 = vshll.u32 %v10240, 16
      %v10296 = vrot.slane %v10294, 1
      %v10297 = vor.u32 %v10292, %v10296
      %v10299 = vshll.u32 %v10270, 16
      %v10301 = vrot.slane %v10299, 1
      %v10302 = vsel %vm1052, %v10297, %v10301
      %v10304 = vshrl.u32 %v10241, 16
      %v10306 = vshll.u32 %v10241, 16
      %v10308 = vrot.slane %v10306, 1
      %v10309 = vor.u32 %v10304, %v10308
      %v10311 = vshll.u32 %v10271, 16
      %v10313 = vrot.slane %v10311, 1
      %v10314 = vsel %vm1052, %v10309, %v10313
      %v10316 = vshrl.u32 %v10242, 16
      %v10318 = vshll.u32 %v10242, 16
      %v10320 = vrot.slane %v10318, 1
      %v10321 = vor.u32 %v10316, %v10320
      %v10323 = vshll.u32 %v10272, 16
      %v10325 = vrot.slane %v10323, 1
      %v10326 = vsel %vm1052, %v10321, %v10325
      %v10328 = vshrl.u32 %v10243, 16
      %v10330 = vshll.u32 %v10243, 16
      %v10332 = vrot.slane %v10330, 1
      %v10333 = vor.u32 %v10328, %v10332
      %v10335 = vshll.u32 %v10273, 16
      %v10337 = vrot.slane %v10335, 1
      %v10338 = vsel %vm1052, %v10333, %v10337
      %v10340 = vshrl.u32 %v10244, 16
      %v10342 = vshll.u32 %v10244, 16
      %v10344 = vrot.slane %v10342, 1
      %v10345 = vor.u32 %v10340, %v10344
      %v10347 = vshll.u32 %v10274, 16
      %v10349 = vrot.slane %v10347, 1
      %v10350 = vsel %vm1052, %v10345, %v10349
      %v10352 = vshrl.u32 %v10245, 16
      %v10354 = vshll.u32 %v10245, 16
      %v10356 = vrot.slane %v10354, 1
      %v10357 = vor.u32 %v10352, %v10356
      %v10359 = vshll.u32 %v10275, 16
      %v10361 = vrot.slane %v10359, 1
      %v10362 = vsel %vm1052, %v10357, %v10361
      %v10364 = vshrl.u32 %v10246, 16
      %v10366 = vshll.u32 %v10246, 16
      %v10368 = vrot.slane %v10366, 1
      %v10369 = vor.u32 %v10364, %v10368
      %v10371 = vshll.u32 %v10276, 16
      %v10373 = vrot.slane %v10371, 1
      %v10374 = vsel %vm1052, %v10369, %v10373
      %v10376 = vshrl.u32 %v10247, 16
      %v10378 = vshll.u32 %v10247, 16
      %v10380 = vrot.slane %v10378, 1
      %v10381 = vor.u32 %v10376, %v10380
      %v10383 = vshll.u32 %v10277, 16
      %v10385 = vrot.slane %v10383, 1
      %v10386 = vsel %vm1052, %v10381, %v10385
      %v10388 = vshrl.u32 %v10248, 16
      %v10390 = vshll.u32 %v10248, 16
      %v10392 = vrot.slane %v10390, 1
      %v10393 = vor.u32 %v10388, %v10392
      %v10395 = vshll.u32 %v10278, 16
      %v10397 = vrot.slane %v10395, 1
      %v10398 = vsel %vm1052, %v10393, %v10397
      %10399 = vrot.lane.b32.xlu0 %v10290, 48
      %v10400 = vpop.permute.xlu0 %10399
      %10401 = vrot.lane.b32.xlu0 %v10302, 48
      %v10402 = vpop.permute.xlu0 %10401
      %10403 = vrot.lane.b32.xlu0 %v10314, 48
      %v10404 = vpop.permute.xlu0 %10403
      %10405 = vrot.lane.b32.xlu0 %v10326, 48
      %v10406 = vpop.permute.xlu0 %10405
      %10407 = vrot.lane.b32.xlu0 %v10338, 48
      %v10408 = vpop.permute.xlu0 %10407
      %10409 = vrot.lane.b32.xlu0 %v10350, 48
      %v10410 = vpop.permute.xlu0 %10409
      %10411 = vrot.lane.b32.xlu0 %v10362, 48
      %v10412 = vpop.permute.xlu0 %10411
      %10413 = vrot.lane.b32.xlu0 %v10374, 48
      %v10414 = vpop.permute.xlu0 %10413
      %10415 = vrot.lane.b32.xlu0 %v10386, 48
      %v10416 = vpop.permute.xlu0 %10415
      %10417 = vrot.lane.b32.xlu0 %v10398, 48
      %v10418 = vpop.permute.xlu0 %10417
      %v10429 = vunpack.c.l.b16 %v10189
      %v10430 = vunpack.c.l.b16 %v10190
      %v10431 = vunpack.c.l.b16 %v10191
      %v10432 = vunpack.c.l.b16 %v10192
      %v10433 = vunpack.c.l.b16 %v10193
      %v10434 = vunpack.c.l.b16 %v10194
      %v10435 = vunpack.c.l.b16 %v10195
      %v10436 = vunpack.c.l.b16 %v10196
      %v10437 = vunpack.c.l.b16 %v10197
      %v10438 = vunpack.c.l.b16 %v10198
      %v10439 = vpack.c.b16 %v10220, %v10429
      %v10440 = vpack.c.b16 %v10222, %v10430
      %v10441 = vpack.c.b16 %v10224, %v10431
      %v10442 = vpack.c.b16 %v10226, %v10432
      %v10443 = vpack.c.b16 %v10228, %v10433
      %v10444 = vpack.c.b16 %v10230, %v10434
      %v10445 = vpack.c.b16 %v10232, %v10435
      %v10446 = vpack.c.b16 %v10234, %v10436
      %v10447 = vpack.c.b16 %v10236, %v10437
      %v10448 = vpack.c.b16 %v10238, %v10438
      %v10449 = vrot.slane %v10439, 1
      %v10450 = vrot.slane %v10269, 1
      %v10451 = vsel %vm1393, %v10449, %v10450
      %v10452 = vrot.slane %v10440, 1
      %v10453 = vrot.slane %v10270, 1
      %v10454 = vsel %vm1393, %v10452, %v10453
      %v10455 = vrot.slane %v10441, 1
      %v10456 = vrot.slane %v10271, 1
      %v10457 = vsel %vm1393, %v10455, %v10456
      %v10458 = vrot.slane %v10442, 1
      %v10459 = vrot.slane %v10272, 1
      %v10460 = vsel %vm1393, %v10458, %v10459
      %v10461 = vrot.slane %v10443, 1
      %v10462 = vrot.slane %v10273, 1
      %v10463 = vsel %vm1393, %v10461, %v10462
      %v10464 = vrot.slane %v10444, 1
      %v10465 = vrot.slane %v10274, 1
      %v10466 = vsel %vm1393, %v10464, %v10465
      %v10467 = vrot.slane %v10445, 1
      %v10468 = vrot.slane %v10275, 1
      %v10469 = vsel %vm1393, %v10467, %v10468
      %v10470 = vrot.slane %v10446, 1
      %v10471 = vrot.slane %v10276, 1
      %v10472 = vsel %vm1393, %v10470, %v10471
      %v10473 = vrot.slane %v10447, 1
      %v10474 = vrot.slane %v10277, 1
      %v10475 = vsel %vm1393, %v10473, %v10474
      %v10476 = vrot.slane %v10448, 1
      %v10477 = vrot.slane %v10278, 1
      %v10478 = vsel %vm1393, %v10476, %v10477
      %10479 = vrot.lane.b32.xlu0 %v10451, 96
      %v10480 = vpop.permute.xlu0 %10479
      %10481 = vrot.lane.b32.xlu0 %v10454, 96
      %v10482 = vpop.permute.xlu0 %10481
      %10483 = vrot.lane.b32.xlu0 %v10457, 96
      %v10484 = vpop.permute.xlu0 %10483
      %10485 = vrot.lane.b32.xlu0 %v10460, 96
      %v10486 = vpop.permute.xlu0 %10485
      %10487 = vrot.lane.b32.xlu0 %v10463, 96
      %v10488 = vpop.permute.xlu0 %10487
      %10489 = vrot.lane.b32.xlu0 %v10466, 96
      %v10490 = vpop.permute.xlu0 %10489
      %10491 = vrot.lane.b32.xlu0 %v10469, 96
      %v10492 = vpop.permute.xlu0 %10491
      %10493 = vrot.lane.b32.xlu0 %v10472, 96
      %v10494 = vpop.permute.xlu0 %10493
      %10495 = vrot.lane.b32.xlu0 %v10475, 96
      %v10496 = vpop.permute.xlu0 %10495
      %10497 = vrot.lane.b32.xlu0 %v10478, 96
      %v10498 = vpop.permute.xlu0 %10497
      %v10500 = vsel %vm1600, %v10239, %v10400
      %v10502 = vsel %vm1600, %v10240, %v10402
      %v10504 = vsel %vm1600, %v10241, %v10404
      %v10506 = vsel %vm1600, %v10242, %v10406
      %v10508 = vsel %vm1600, %v10243, %v10408
      %v10510 = vsel %vm1600, %v10244, %v10410
      %v10512 = vsel %vm1600, %v10245, %v10412
      %v10514 = vsel %vm1600, %v10246, %v10414
      %v10516 = vsel %vm1600, %v10247, %v10416
      %v10518 = vsel %vm1600, %v10248, %v10418
      %v10520 = vsel %vm6273, %v10500, %v10480
      %v10523 = vsel %vm6273, %v10502, %v10482
      %v10526 = vsel %vm6273, %v10504, %v10484
      %v10529 = vsel %vm6273, %v10506, %v10486
      %v10532 = vsel %vm6273, %v10508, %v10488
      %v10535 = vsel %vm6273, %v10510, %v10490
      %v10538 = vsel %vm6273, %v10512, %v10492
      %v10541 = vsel %vm6273, %v10514, %v10494
      %v10544 = vsel %vm6273, %v10516, %v10496
      %v10547 = vsel %vm6273, %v10518, %v10498
      %v10549 = vld [vmem:[%s11] sm:$0xf]
      %v10550 = vld [vmem:[%s11 + $0x4] sm:$0xf]
      %v10551 = vld [vmem:[%s11 + $0x8] sm:$0xf]
      %v10552 = vld [vmem:[%s11 + $0xc] sm:$0xf]
      %v10553 = vld [vmem:[%s11 + $0x10] sm:$0xf]
      %v10554 = vld [vmem:[%s11 + $0x14] sm:$0xf]
      %v10555 = vld [vmem:[%s11 + $0x18] sm:$0xf]
      %v10556 = vld [vmem:[%s11 + $0x1c] sm:$0xf]
      %v10557 = vld [vmem:[%s11 + $0x20] sm:$0xf]
      %v10558 = vld [vmem:[%s11 + $0x24] sm:$0xf]
      %v10559 = vld [vmem:[%s11 + $0x28] sm:$0xf]
      %v10560 = vld [vmem:[%s11 + $0x2c] sm:$0xf]
      %v10561 = vld [vmem:[%s11 + $0x30] sm:$0xf]
      %v10562 = vld [vmem:[%s11 + $0x34] sm:$0xf]
      %v10563 = vld [vmem:[%s11 + $0x38] sm:$0xf]
      %v10564 = vld [vmem:[%s11 + $0x3c] sm:$0xf]
      %v10565 = vld [vmem:[%s11 + $0x40] sm:$0xf]
      %v10566 = vld [vmem:[%s11 + $0x44] sm:$0xf]
      %v10585 = vunpack.c.l.b16 %v10549
      %v10586 = vunpack.c.l.b16 %v10550
      %v10587 = vunpack.c.l.b16 %v10551
      %v10588 = vunpack.c.l.b16 %v10552
      %v10589 = vunpack.c.l.b16 %v10553
      %v10590 = vunpack.c.l.b16 %v10554
      %v10591 = vunpack.c.l.b16 %v10555
      %v10592 = vunpack.c.l.b16 %v10556
      %v10593 = vunpack.c.l.b16 %v10557
      %v10594 = vunpack.c.l.b16 %v10558
      %v10595 = vunpack.c.l.b16 %v10559
      %v10596 = vunpack.c.l.b16 %v10560
      %v10597 = vunpack.c.l.b16 %v10561
      %v10598 = vunpack.c.l.b16 %v10562
      %v10599 = vunpack.c.l.b16 %v10563
      %v10600 = vunpack.c.l.b16 %v10564
      %v10601 = vunpack.c.l.b16 %v10565
      %v10602 = vunpack.c.l.b16 %v10566
      %v10603 = vpack.c.b16 %v10586, %v10585
      %v10604 = vpack.c.b16 %v10588, %v10587
      %v10605 = vpack.c.b16 %v10590, %v10589
      %v10606 = vpack.c.b16 %v10592, %v10591
      %v10607 = vpack.c.b16 %v10594, %v10593
      %v10608 = vpack.c.b16 %v10596, %v10595
      %v10609 = vpack.c.b16 %v10598, %v10597
      %v10610 = vpack.c.b16 %v10600, %v10599
      %v10611 = vpack.c.b16 %v10602, %v10601
      %v10621 = vsel %vm1494, %v10480, 0
      %v10623 = vsel %vm1494, %v10482, 0
      %v10625 = vsel %vm1494, %v10484, 0
      %v10627 = vsel %vm1494, %v10486, 0
      %v10629 = vsel %vm1494, %v10488, 0
      %v10631 = vsel %vm1494, %v10490, 0
      %v10633 = vsel %vm1494, %v10492, 0
      %v10635 = vsel %vm1494, %v10494, 0
      %v10637 = vsel %vm1494, %v10496, 0
      %v10639 = vsel %vm1494, %v10498, 0
      %10641 = vmatprep.subr.bf16.mxu0 0
      %10642 = vmatpush1.bf16.msra.mxu0 %v10603
      %10643 = vmatprep.subr.bf16.mxu0 0
      %10644 = vmatpush1.bf16.msra.mxu0 %v10604
      %10645 = vmatprep.subr.bf16.mxu0 0
      %10646 = vmatpush1.bf16.msra.mxu0 %v10605
      %10647 = vmatprep.subr.bf16.mxu0 0
      %10648 = vmatpush1.bf16.msra.mxu0 %v10606
      %10649 = vmatprep.subr.bf16.mxu0 0
      %10650 = vmatpush1.bf16.msra.mxu0 %v10607
      %10651 = vmatprep.subr.bf16.mxu0 0
      %10652 = vmatpush1.bf16.msra.mxu0 %v10608
      %10653 = vmatprep.subr.bf16.mxu0 0
      %10654 = vmatpush1.bf16.msra.mxu0 %v10609
      %10655 = vmatprep.subr.bf16.mxu0 0
      %10656 = vmatpush1.bf16.msra.mxu0 %v10610
      %10657 = vmatprep.subr.bf16.mxu0 0
      %10658 = vmatpush1.bf16.msra.mxu0 %v10611
      %10659 = vmatprep.subr.bf16.mxu0 0
      %10660 = vmatpush1.bf16.msra.mxu0 0
      %10661 = vmatprep.subr.bf16.mxu0 0
      %10662 = vmatpush1.bf16.msra.mxu0 0
      %10663 = vmatprep.subr.bf16.mxu0 0
      %10664 = vmatpush1.bf16.msra.mxu0 0
      %10665 = vmatprep.subr.bf16.mxu0 0
      %10666 = vmatpush1.bf16.msra.mxu0 0
      %10667 = vmatprep.subr.bf16.mxu0 0
      %10668 = vmatpush1.bf16.msra.mxu0 0
      %10669 = vmatprep.subr.bf16.mxu0 0
      %10670 = vmatpush1.bf16.msra.mxu0 0
      %10671 = vmatprep.subr.bf16.mxu0 0
      %10672 = vmatpush1.bf16.msra.mxu0 0
      %10673 = vmatprep.mubr.bf16.mxu0 %v10621
      %10674 = vmatmul.mubr.bf16.gmra.mrb[0].mxu0 %v10520
      %v10675 = vpop.f32.mrb[0].mxu0
      %v10676 = vadd.f32 0.0, %v10675
      %v10677 = vpop.f32.mrb[0].mxu0
      %v10678 = vpop.f32.mrb[0].mxu0
      %v10679 = vadd.f32 0.0, %v10678
      %v10680 = vpop.f32.mrb[0].mxu0
      %10681 = vmatprep.mubr.bf16.mxu0 %v10623
      %10682 = vmatmul.mubr.bf16.gmra.mrb[0].mxu0 %v10523
      %v10683 = vpop.f32.mrb[0].mxu0
      %v10684 = vadd.f32 0.0, %v10683
      %v10685 = vpop.f32.mrb[0].mxu0
      %v10686 = vpop.f32.mrb[0].mxu0
      %v10687 = vadd.f32 0.0, %v10686
      %v10688 = vpop.f32.mrb[0].mxu0
      %10689 = vmatprep.mubr.bf16.mxu0 %v10625
      %10690 = vmatmul.mubr.bf16.gmra.mrb[0].mxu0 %v10526
      %v10691 = vpop.f32.mrb[0].mxu0
      %v10692 = vadd.f32 0.0, %v10691
      %v10693 = vpop.f32.mrb[0].mxu0
      %v10694 = vpop.f32.mrb[0].mxu0
      %v10695 = vadd.f32 0.0, %v10694
      %v10696 = vpop.f32.mrb[0].mxu0
      %10697 = vmatprep.mubr.bf16.mxu0 %v10627
      %10698 = vmatmul.mubr.bf16.gmra.mrb[0].mxu0 %v10529
      %v10699 = vpop.f32.mrb[0].mxu0
      %v10700 = vadd.f32 0.0, %v10699
      %v10701 = vpop.f32.mrb[0].mxu0
      %v10702 = vpop.f32.mrb[0].mxu0
      %v10703 = vadd.f32 0.0, %v10702
      %v10704 = vpop.f32.mrb[0].mxu0
      %10705 = vmatprep.mubr.bf16.mxu0 %v10629
      %10706 = vmatmul.mubr.bf16.gmra.mrb[0].mxu0 %v10532
      %v10707 = vpop.f32.mrb[0].mxu0
      %v10708 = vadd.f32 0.0, %v10707
      %v10709 = vpop.f32.mrb[0].mxu0
      %v10710 = vpop.f32.mrb[0].mxu0
      %v10711 = vadd.f32 0.0, %v10710
      %v10712 = vpop.f32.mrb[0].mxu0
      %10713 = vmatprep.mubr.bf16.mxu0 %v10631
      %10714 = vmatmul.mubr.bf16.gmra.mrb[0].mxu0 %v10535
      %v10715 = vpop.f32.mrb[0].mxu0
      %v10716 = vadd.f32 0.0, %v10715
      %v10717 = vpop.f32.mrb[0].mxu0
      %v10718 = vpop.f32.mrb[0].mxu0
      %v10719 = vadd.f32 0.0, %v10718
      %v10720 = vpop.f32.mrb[0].mxu0
      %10721 = vmatprep.mubr.bf16.mxu0 %v10633
      %10722 = vmatmul.mubr.bf16.gmra.mrb[0].mxu0 %v10538
      %v10723 = vpop.f32.mrb[0].mxu0
      %v10724 = vadd.f32 0.0, %v10723
      %v10725 = vpop.f32.mrb[0].mxu0
      %v10726 = vpop.f32.mrb[0].mxu0
      %v10727 = vadd.f32 0.0, %v10726
      %v10728 = vpop.f32.mrb[0].mxu0
      %10729 = vmatprep.mubr.bf16.mxu0 %v10635
      %10730 = vmatmul.mubr.bf16.gmra.mrb[0].mxu0 %v10541
      %v10731 = vpop.f32.mrb[0].mxu0
      %v10732 = vadd.f32 0.0, %v10731
      %v10733 = vpop.f32.mrb[0].mxu0
      %v10734 = vpop.f32.mrb[0].mxu0
      %v10735 = vadd.f32 0.0, %v10734
      %v10736 = vpop.f32.mrb[0].mxu0
      %10737 = vmatprep.mubr.bf16.mxu0 %v10637
      %10738 = vmatmul.mubr.bf16.gmra.mrb[0].mxu0 %v10544
      %v10739 = vpop.f32.mrb[0].mxu0
      %v10740 = vadd.f32 0.0, %v10739
      %v10741 = vpop.f32.mrb[0].mxu0
      %v10742 = vpop.f32.mrb[0].mxu0
      %v10743 = vadd.f32 0.0, %v10742
      %v10744 = vpop.f32.mrb[0].mxu0
      %10745 = vmatprep.mubr.bf16.mxu0 %v10639
      %10746 = vmatmul.mubr.bf16.gmra.mrb[0].mxu0 %v10547
      %v10747 = vpop.f32.mrb[0].mxu0
      %v10748 = vadd.f32 0.0, %v10747
      %v10749 = vpop.f32.mrb[0].mxu0
      %v10750 = vpop.f32.mrb[0].mxu0
      %v10751 = vadd.f32 0.0, %v10750
      %v10752 = vpop.f32.mrb[0].mxu0
      %10753 = vdwg.mxu0
      %10770 = vrot.lane.b32.xlu0 %v10684, 112
      %v10771 = vpop.permute.xlu0 %10770
      %10772 = vrot.lane.b32.xlu0 %v10687, 112
      %v10773 = vpop.permute.xlu0 %10772
      %10774 = vrot.lane.b32.xlu0 %v10692, 112
      %v10775 = vpop.permute.xlu0 %10774
      %10776 = vrot.lane.b32.xlu0 %v10695, 112
      %v10777 = vpop.permute.xlu0 %10776
      %10778 = vrot.lane.b32.xlu0 %v10700, 112
      %v10779 = vpop.permute.xlu0 %10778
      %10780 = vrot.lane.b32.xlu0 %v10703, 112
      %v10781 = vpop.permute.xlu0 %10780
      %10782 = vrot.lane.b32.xlu0 %v10708, 112
      %v10783 = vpop.permute.xlu0 %10782
      %10784 = vrot.lane.b32.xlu0 %v10711, 112
      %v10785 = vpop.permute.xlu0 %10784
      %10786 = vrot.lane.b32.xlu0 %v10716, 112
      %v10787 = vpop.permute.xlu0 %10786
      %10788 = vrot.lane.b32.xlu0 %v10719, 112
      %v10789 = vpop.permute.xlu0 %10788
      %10790 = vrot.lane.b32.xlu0 %v10724, 112
      %v10791 = vpop.permute.xlu0 %10790
      %10792 = vrot.lane.b32.xlu0 %v10727, 112
      %v10793 = vpop.permute.xlu0 %10792
      %10794 = vrot.lane.b32.xlu0 %v10732, 112
      %v10795 = vpop.permute.xlu0 %10794
      %10796 = vrot.lane.b32.xlu0 %v10735, 112
      %v10797 = vpop.permute.xlu0 %10796
      %10798 = vrot.lane.b32.xlu0 %v10740, 112
      %v10799 = vpop.permute.xlu0 %10798
      %10800 = vrot.lane.b32.xlu0 %v10743, 112
      %v10801 = vpop.permute.xlu0 %10800
      %v10818 = vadd.f32 %v10676, %v10771
      %v10819 = vadd.f32 %v10679, %v10773
      %v10820 = vadd.f32 %v10684, %v10775
      %v10821 = vadd.f32 %v10687, %v10777
      %v10822 = vadd.f32 %v10692, %v10779
      %v10823 = vadd.f32 %v10695, %v10781
      %v10824 = vadd.f32 %v10700, %v10783
      %v10825 = vadd.f32 %v10703, %v10785
      %v10826 = vadd.f32 %v10708, %v10787
      %v10827 = vadd.f32 %v10711, %v10789
      %v10828 = vadd.f32 %v10716, %v10791
      %v10829 = vadd.f32 %v10719, %v10793
      %v10830 = vadd.f32 %v10724, %v10795
      %v10831 = vadd.f32 %v10727, %v10797
      %v10832 = vadd.f32 %v10732, %v10799
      %v10833 = vadd.f32 %v10735, %v10801
      %v10834 = vld [vmem:[%s12] sm:$0x1]
      %v10836 = vlaneseq
      %v10837 = vshrl.u32 %v10836, 7
      %v10838 = vsub.s32 0, %v10837
      %v10839 = vrot.slane %v10834, %v10838
      %10840 = vrot.lane.b32.xlu0 %v10839, 32
      %v10841 = vpop.permute.xlu0 %10840
      %v10843 = vadd.f32 %v10692, %v10841
      %v10844 = vadd.f32 %v10695, %v10841
      %v10845 = vadd.f32 %v10700, %v10841
      %v10846 = vadd.f32 %v10703, %v10841
      %v10847 = vadd.f32 %v10708, %v10841
      %v10848 = vadd.f32 %v10711, %v10841
      %v10849 = vadd.f32 %v10716, %v10841
      %v10850 = vadd.f32 %v10719, %v10841
      %v10851 = vadd.f32 %v10724, %v10841
      %v10852 = vadd.f32 %v10727, %v10841
      %v10853 = vadd.f32 %v10732, %v10841
      %v10854 = vadd.f32 %v10735, %v10841
      %v10855 = vadd.f32 %v10740, %v10841
      %v10856 = vadd.f32 %v10743, %v10841
      %v10857 = vadd.f32 %v10748, %v10841
      %v10858 = vadd.f32 %v10751, %v10841
      %10875 = vrot.lane.b32.xlu0 %v10843, 96
      %v10876 = vpop.permute.xlu0 %10875
      %10877 = vrot.lane.b32.xlu0 %v10844, 96
      %v10878 = vpop.permute.xlu0 %10877
      %10879 = vrot.lane.b32.xlu0 %v10845, 96
      %v10880 = vpop.permute.xlu0 %10879
      %10881 = vrot.lane.b32.xlu0 %v10846, 96
      %v10882 = vpop.permute.xlu0 %10881
      %10883 = vrot.lane.b32.xlu0 %v10847, 96
      %v10884 = vpop.permute.xlu0 %10883
      %10885 = vrot.lane.b32.xlu0 %v10848, 96
      %v10886 = vpop.permute.xlu0 %10885
      %10887 = vrot.lane.b32.xlu0 %v10849, 96
      %v10888 = vpop.permute.xlu0 %10887
      %10889 = vrot.lane.b32.xlu0 %v10850, 96
      %v10890 = vpop.permute.xlu0 %10889
      %10891 = vrot.lane.b32.xlu0 %v10851, 96
      %v10892 = vpop.permute.xlu0 %10891
      %10893 = vrot.lane.b32.xlu0 %v10852, 96
      %v10894 = vpop.permute.xlu0 %10893
      %10895 = vrot.lane.b32.xlu0 %v10853, 96
      %v10896 = vpop.permute.xlu0 %10895
      %10897 = vrot.lane.b32.xlu0 %v10854, 96
      %v10898 = vpop.permute.xlu0 %10897
      %10899 = vrot.lane.b32.xlu0 %v10855, 96
      %v10900 = vpop.permute.xlu0 %10899
      %10901 = vrot.lane.b32.xlu0 %v10856, 96
      %v10902 = vpop.permute.xlu0 %10901
      %10903 = vrot.lane.b32.xlu0 %v10857, 96
      %v10904 = vpop.permute.xlu0 %10903
      %10905 = vrot.lane.b32.xlu0 %v10858, 96
      %v10906 = vpop.permute.xlu0 %10905
      %v10923 = vadd.f32 %v10818, %v10876
      %v10924 = vadd.f32 %v10819, %v10878
      %v10925 = vadd.f32 %v10820, %v10880
      %v10926 = vadd.f32 %v10821, %v10882
      %v10927 = vadd.f32 %v10822, %v10884
      %v10928 = vadd.f32 %v10823, %v10886
      %v10929 = vadd.f32 %v10824, %v10888
      %v10930 = vadd.f32 %v10825, %v10890
      %v10931 = vadd.f32 %v10826, %v10892
      %v10932 = vadd.f32 %v10827, %v10894
      %v10933 = vadd.f32 %v10828, %v10896
      %v10934 = vadd.f32 %v10829, %v10898
      %v10935 = vadd.f32 %v10830, %v10900
      %v10936 = vadd.f32 %v10831, %v10902
      %v10937 = vadd.f32 %v10832, %v10904
      %v10938 = vadd.f32 %v10833, %v10906
      %v10939 = vld [vmem:[%s520] sm:$0xff]
      %v10940 = vld [vmem:[%s520 + $0x8] sm:$0xff]
      %v10941 = vcombine.low %v10923, %v10927
      %v10942 = vcombine.high %v10923, %v10927
      %v10944 = vunpack.c.l.s4 1983009808
      %v10945 = vunpack.c.0.s8 %v10944
      %v10946 = vlaneseq
      %v10947 = vshrl.u32 %v10946, 7
      %v10948 = vsub.s32 %v10945, %v10947
      %v10949 = vrot.slane %v10941, %v10948
      %v10951 = vunpack.c.l.s4 1983009808
      %v10952 = vunpack.c.0.s8 %v10951
      %v10953 = vlaneseq
      %v10954 = vshrl.u32 %v10953, 7
      %v10955 = vsub.s32 %v10952, %v10954
      %v10956 = vrot.slane %v10942, %v10955
      %v10957 = vcombine.low %v10925, %v10929
      %v10958 = vcombine.high %v10925, %v10929
      %v10960 = vunpack.c.l.s4 1983009808
      %v10961 = vunpack.c.0.s8 %v10960
      %v10962 = vlaneseq
      %v10963 = vshrl.u32 %v10962, 7
      %v10964 = vsub.s32 %v10961, %v10963
      %v10965 = vrot.slane %v10957, %v10964
      %v10967 = vunpack.c.l.s4 1983009808
      %v10968 = vunpack.c.0.s8 %v10967
      %v10969 = vlaneseq
      %v10970 = vshrl.u32 %v10969, 7
      %v10971 = vsub.s32 %v10968, %v10970
      %v10972 = vrot.slane %v10958, %v10971
      %v10973 = vcombine.low %v10931, %v10935
      %v10974 = vcombine.high %v10931, %v10935
      %v10976 = vunpack.c.l.s4 1983009808
      %v10977 = vunpack.c.0.s8 %v10976
      %v10978 = vlaneseq
      %v10979 = vshrl.u32 %v10978, 7
      %v10980 = vsub.s32 %v10977, %v10979
      %v10981 = vrot.slane %v10973, %v10980
      %v10983 = vunpack.c.l.s4 1983009808
      %v10984 = vunpack.c.0.s8 %v10983
      %v10985 = vlaneseq
      %v10986 = vshrl.u32 %v10985, 7
      %v10987 = vsub.s32 %v10984, %v10986
      %v10988 = vrot.slane %v10974, %v10987
      %v10989 = vcombine.low %v10933, %v10937
      %v10990 = vcombine.high %v10933, %v10937
      %v10992 = vunpack.c.l.s4 1983009808
      %v10993 = vunpack.c.0.s8 %v10992
      %v10994 = vlaneseq
      %v10995 = vshrl.u32 %v10994, 7
      %v10996 = vsub.s32 %v10993, %v10995
      %v10997 = vrot.slane %v10989, %v10996
      %v10999 = vunpack.c.l.s4 1983009808
      %v11000 = vunpack.c.0.s8 %v10999
      %v11001 = vlaneseq
      %v11002 = vshrl.u32 %v11001, 7
      %v11003 = vsub.s32 %v11000, %v11002
      %v11004 = vrot.slane %v10990, %v11003
      %v11005 = vcombine.low %v10949, %v10965
      %v11006 = vcombine.high %v10949, %v10965
      %v11008 = vunpack.c.l.s4 1934713408
      %v11009 = vunpack.c.0.s8 %v11008
      %v11010 = vlaneseq
      %v11011 = vshrl.u32 %v11010, 7
      %v11012 = vsub.s32 %v11009, %v11011
      %v11013 = vrot.slane %v11005, %v11012
      %v11015 = vunpack.c.l.s4 1934713408
      %v11016 = vunpack.c.0.s8 %v11015
      %v11017 = vlaneseq
      %v11018 = vshrl.u32 %v11017, 7
      %v11019 = vsub.s32 %v11016, %v11018
      %v11020 = vrot.slane %v11006, %v11019
      %v11021 = vcombine.low %v10956, %v10972
      %v11022 = vcombine.high %v10956, %v10972
      %v11024 = vunpack.c.l.s4 1934713408
      %v11025 = vunpack.c.0.s8 %v11024
      %v11026 = vlaneseq
      %v11027 = vshrl.u32 %v11026, 7
      %v11028 = vsub.s32 %v11025, %v11027
      %v11029 = vrot.slane %v11021, %v11028
      %v11031 = vunpack.c.l.s4 1934713408
      %v11032 = vunpack.c.0.s8 %v11031
      %v11033 = vlaneseq
      %v11034 = vshrl.u32 %v11033, 7
      %v11035 = vsub.s32 %v11032, %v11034
      %v11036 = vrot.slane %v11022, %v11035
      %v11037 = vcombine.low %v10981, %v10997
      %v11038 = vcombine.high %v10981, %v10997
      %v11040 = vunpack.c.l.s4 1934713408
      %v11041 = vunpack.c.0.s8 %v11040
      %v11042 = vlaneseq
      %v11043 = vshrl.u32 %v11042, 7
      %v11044 = vsub.s32 %v11041, %v11043
      %v11045 = vrot.slane %v11037, %v11044
      %v11047 = vunpack.c.l.s4 1934713408
      %v11048 = vunpack.c.0.s8 %v11047
      %v11049 = vlaneseq
      %v11050 = vshrl.u32 %v11049, 7
      %v11051 = vsub.s32 %v11048, %v11050
      %v11052 = vrot.slane %v11038, %v11051
      %v11053 = vcombine.low %v10988, %v11004
      %v11054 = vcombine.high %v10988, %v11004
      %v11056 = vunpack.c.l.s4 1934713408
      %v11057 = vunpack.c.0.s8 %v11056
      %v11058 = vlaneseq
      %v11059 = vshrl.u32 %v11058, 7
      %v11060 = vsub.s32 %v11057, %v11059
      %v11061 = vrot.slane %v11053, %v11060
      %v11063 = vunpack.c.l.s4 1934713408
      %v11064 = vunpack.c.0.s8 %v11063
      %v11065 = vlaneseq
      %v11066 = vshrl.u32 %v11065, 7
      %v11067 = vsub.s32 %v11064, %v11066
      %v11068 = vrot.slane %v11054, %v11067
      %v11069 = vcombine.low %v11013, %v11045
      %v11070 = vcombine.high %v11013, %v11045
      %v11071 = vcombine.low %v11020, %v11052
      %v11072 = vcombine.high %v11020, %v11052
      %v11073 = vcombine.low %v11029, %v11061
      %v11074 = vcombine.high %v11029, %v11061
      %v11075 = vcombine.low %v11036, %v11068
      %v11076 = vcombine.high %v11036, %v11068
      %v11077 = vcombine.low %v10924, %v10928
      %v11078 = vcombine.high %v10924, %v10928
      %v11080 = vunpack.c.l.s4 1983009808
      %v11081 = vunpack.c.0.s8 %v11080
      %v11082 = vlaneseq
      %v11083 = vshrl.u32 %v11082, 7
      %v11084 = vsub.s32 %v11081, %v11083
      %v11085 = vrot.slane %v11077, %v11084
      %v11087 = vunpack.c.l.s4 1983009808
      %v11088 = vunpack.c.0.s8 %v11087
      %v11089 = vlaneseq
      %v11090 = vshrl.u32 %v11089, 7
      %v11091 = vsub.s32 %v11088, %v11090
      %v11092 = vrot.slane %v11078, %v11091
      %v11093 = vcombine.low %v10926, %v10930
      %v11094 = vcombine.high %v10926, %v10930
      %v11096 = vunpack.c.l.s4 1983009808
      %v11097 = vunpack.c.0.s8 %v11096
      %v11098 = vlaneseq
      %v11099 = vshrl.u32 %v11098, 7
      %v11100 = vsub.s32 %v11097, %v11099
      %v11101 = vrot.slane %v11093, %v11100
      %v11103 = vunpack.c.l.s4 1983009808
      %v11104 = vunpack.c.0.s8 %v11103
      %v11105 = vlaneseq
      %v11106 = vshrl.u32 %v11105, 7
      %v11107 = vsub.s32 %v11104, %v11106
      %v11108 = vrot.slane %v11094, %v11107
      %v11109 = vcombine.low %v10932, %v10936
      %v11110 = vcombine.high %v10932, %v10936
      %v11112 = vunpack.c.l.s4 1983009808
      %v11113 = vunpack.c.0.s8 %v11112
      %v11114 = vlaneseq
      %v11115 = vshrl.u32 %v11114, 7
      %v11116 = vsub.s32 %v11113, %v11115
      %v11117 = vrot.slane %v11109, %v11116
      %v11119 = vunpack.c.l.s4 1983009808
      %v11120 = vunpack.c.0.s8 %v11119
      %v11121 = vlaneseq
      %v11122 = vshrl.u32 %v11121, 7
      %v11123 = vsub.s32 %v11120, %v11122
      %v11124 = vrot.slane %v11110, %v11123
      %v11125 = vcombine.low %v10934, %v10938
      %v11126 = vcombine.high %v10934, %v10938
      %v11128 = vunpack.c.l.s4 1983009808
      %v11129 = vunpack.c.0.s8 %v11128
      %v11130 = vlaneseq
      %v11131 = vshrl.u32 %v11130, 7
      %v11132 = vsub.s32 %v11129, %v11131
      %v11133 = vrot.slane %v11125, %v11132
      %v11135 = vunpack.c.l.s4 1983009808
      %v11136 = vunpack.c.0.s8 %v11135
      %v11137 = vlaneseq
      %v11138 = vshrl.u32 %v11137, 7
      %v11139 = vsub.s32 %v11136, %v11138
      %v11140 = vrot.slane %v11126, %v11139
      %v11141 = vcombine.low %v11085, %v11101
      %v11142 = vcombine.high %v11085, %v11101
      %v11144 = vunpack.c.l.s4 1934713408
      %v11145 = vunpack.c.0.s8 %v11144
      %v11146 = vlaneseq
      %v11147 = vshrl.u32 %v11146, 7
      %v11148 = vsub.s32 %v11145, %v11147
      %v11149 = vrot.slane %v11141, %v11148
      %v11151 = vunpack.c.l.s4 1934713408
      %v11152 = vunpack.c.0.s8 %v11151
      %v11153 = vlaneseq
      %v11154 = vshrl.u32 %v11153, 7
      %v11155 = vsub.s32 %v11152, %v11154
      %v11156 = vrot.slane %v11142, %v11155
      %v11157 = vcombine.low %v11092, %v11108
      %v11158 = vcombine.high %v11092, %v11108
      %v11160 = vunpack.c.l.s4 1934713408
      %v11161 = vunpack.c.0.s8 %v11160
      %v11162 = vlaneseq
      %v11163 = vshrl.u32 %v11162, 7
      %v11164 = vsub.s32 %v11161, %v11163
      %v11165 = vrot.slane %v11157, %v11164
      %v11167 = vunpack.c.l.s4 1934713408
      %v11168 = vunpack.c.0.s8 %v11167
      %v11169 = vlaneseq
      %v11170 = vshrl.u32 %v11169, 7
      %v11171 = vsub.s32 %v11168, %v11170
      %v11172 = vrot.slane %v11158, %v11171
      %v11173 = vcombine.low %v11117, %v11133
      %v11174 = vcombine.high %v11117, %v11133
      %v11176 = vunpack.c.l.s4 1934713408
      %v11177 = vunpack.c.0.s8 %v11176
      %v11178 = vlaneseq
      %v11179 = vshrl.u32 %v11178, 7
      %v11180 = vsub.s32 %v11177, %v11179
      %v11181 = vrot.slane %v11173, %v11180
      %v11183 = vunpack.c.l.s4 1934713408
      %v11184 = vunpack.c.0.s8 %v11183
      %v11185 = vlaneseq
      %v11186 = vshrl.u32 %v11185, 7
      %v11187 = vsub.s32 %v11184, %v11186
      %v11188 = vrot.slane %v11174, %v11187
      %v11189 = vcombine.low %v11124, %v11140
      %v11190 = vcombine.high %v11124, %v11140
      %v11192 = vunpack.c.l.s4 1934713408
      %v11193 = vunpack.c.0.s8 %v11192
      %v11194 = vlaneseq
      %v11195 = vshrl.u32 %v11194, 7
      %v11196 = vsub.s32 %v11193, %v11195
      %v11197 = vrot.slane %v11189, %v11196
      %v11199 = vunpack.c.l.s4 1934713408
      %v11200 = vunpack.c.0.s8 %v11199
      %v11201 = vlaneseq
      %v11202 = vshrl.u32 %v11201, 7
      %v11203 = vsub.s32 %v11200, %v11202
      %v11204 = vrot.slane %v11190, %v11203
      %v11205 = vcombine.low %v11149, %v11181
      %v11206 = vcombine.high %v11149, %v11181
      %v11207 = vcombine.low %v11156, %v11188
      %v11208 = vcombine.high %v11156, %v11188
      %v11209 = vcombine.low %v11165, %v11197
      %v11210 = vcombine.high %v11165, %v11197
      %v11211 = vcombine.low %v11172, %v11204
      %v11212 = vcombine.high %v11172, %v11204
      %11214 = vrot.lane.b32.xlu0 %v11070, 16
      %v11215 = vpop.permute.xlu0 %11214
      %11218 = vrot.lane.b32.xlu0 %v11071, 32
      %v11219 = vpop.permute.xlu0 %11218
      %11222 = vrot.lane.b32.xlu0 %v11072, 48
      %v11223 = vpop.permute.xlu0 %11222
      %11226 = vrot.lane.b32.xlu0 %v11073, 64
      %v11227 = vpop.permute.xlu0 %11226
      %11230 = vrot.lane.b32.xlu0 %v11074, 80
      %v11231 = vpop.permute.xlu0 %11230
      %11234 = vrot.lane.b32.xlu0 %v11075, 96
      %v11235 = vpop.permute.xlu0 %11234
      %11238 = vrot.lane.b32.xlu0 %v11076, 112
      %v11239 = vpop.permute.xlu0 %11238
      %11242 = vrot.lane.b32.xlu0 %v11206, 16
      %v11243 = vpop.permute.xlu0 %11242
      %11246 = vrot.lane.b32.xlu0 %v11207, 32
      %v11247 = vpop.permute.xlu0 %11246
      %11250 = vrot.lane.b32.xlu0 %v11208, 48
      %v11251 = vpop.permute.xlu0 %11250
      %11254 = vrot.lane.b32.xlu0 %v11209, 64
      %v11255 = vpop.permute.xlu0 %11254
      %11258 = vrot.lane.b32.xlu0 %v11210, 80
      %v11259 = vpop.permute.xlu0 %11258
      %11262 = vrot.lane.b32.xlu0 %v11211, 96
      %v11263 = vpop.permute.xlu0 %11262
      %11266 = vrot.lane.b32.xlu0 %v11212, 112
      %v11267 = vpop.permute.xlu0 %11266
      %v11269 = vsel %vm1494, %v11069, %v11215
      %v11270 = vsel %vm1535, %v11269, %v11219
      %v11271 = vsel %vm1600, %v11270, %v11223
      %v11272 = vsel %vm6184, %v11271, %v11227
      %v11273 = vsel %vm8524, %v11272, %v11231
      %v11274 = vsel %vm6273, %v11273, %v11235
      %vm11275 = vcmask 916480
      %v11276 = vsel %vm11275, %v11274, %v11239
      %v11277 = vsel %vm1494, %v11205, %v11243
      %v11278 = vsel %vm1535, %v11277, %v11247
      %v11279 = vsel %vm1600, %v11278, %v11251
      %v11280 = vsel %vm6184, %v11279, %v11255
      %v11281 = vsel %vm8524, %v11280, %v11259
      %v11282 = vsel %vm6273, %v11281, %v11263
      %v11283 = vsel %vm11275, %v11282, %v11267
      %v11284 = vmul.f32 %v11276, 0.2
      %v11285 = vmul.f32 %v11283, 0.2
      %v11286 = vadd.f32 %v10939, %v11284
      %v11287 = vadd.f32 %v10940, %v11285
      %11288 = vst [vmem:[%s549] sm:$0xff] %v11286
      %11289 = vst [vmem:[%s549 + $0x8] sm:$0xff] %v11287
      %p11290 = scmp.lt.s32.totalorder %s28, 1
      %s11291 = scalar_select %p11290, %s28, 1
      %p11292 = scmp.lt.s32.totalorder %s29, 1
      %s11293 = scalar_select %p11292, %s29, 1
      %s11294 = smul.addr %s11293, 2
      %s11295 = smul.addr %s11291, 4
      %s11296 = sadd.s32 %s11294, %s11295
      %s11297 = smul.addr %s11296, 8
      %s11298 = scalar_lea.vmem %s13, %s11297
      // Predicated region
      $region105: #{residual_dense_block.1} parent=71 // pred_check
        %p11299 = pneg %p350
      $region106: #{residual_dense_block.1} parent=71 // pred_check_branch
        %11301 = sbr.rel (%p11299) target = $region108
      $region107: #{residual_dense_block.1} parent=71 // pred_region
        _
      $region108: #{residual_dense_block.1} parent=71 // pred_fallthru
        _
    $region72: #{residual_dense_block.1} parent=5 // pred_fallthru
      _
    %p11302 = scmp.le.s32.totalorder 2, %s19
    // Predicated region
    $region109: #{residual_dense_block.1} parent=5 // pred_check
      %p11303 = pneg %p11302
    $region110: #{residual_dense_block.1} parent=5 // pred_check_branch
      %11305 = sbr.rel (%p11303) target = $region112
    $region111: #{residual_dense_block.1} parent=5 // pred_region
      %s11306 = ssub.s32 %s19, 2
      // Predicated region
      $region113: #{residual_dense_block.1} parent=111 // pred_check
        %p11307 = pneg %p356
      $region114: #{residual_dense_block.1} parent=111 // pred_check_branch
        %11309 = sbr.rel (%p11307) target = $region116
      $region115: #{residual_dense_block.1} parent=111 // pred_region
        %p11310 = scmp.lt.s32.totalorder %s30, 1
        %s11311 = scalar_select %p11310, %s30, 1
        %p11312 = scmp.lt.s32.totalorder %s31, 1
        %s11313 = scalar_select %p11312, %s31, 1
        %s11314 = smul.addr %s11313, 2
        %s11315 = smul.addr %s11311, 4
        %s11316 = sadd.s32 %s11314, %s11315
        %s11317 = smul.addr %s11316, 8
        %s11318 = scalar_lea.vmem %s13, %s11317
      $region116: #{residual_dense_block.1} parent=111 // pred_fallthru
        _
    $region112: #{residual_dense_block.1} parent=5 // pred_fallthru
      _
  $region6: #{residual_dense_block.1} parent=0 // loop_footer
    %s23 = sadd.s32 1, %s19
  $region7: #{residual_dense_block.1} parent=0 // loop_footer_branch
    %18 = sbr.rel target = $region3
  $region8: #{residual_dense_block.1} parent=0 // loop_exit
    _

</llo_original>
